<compile_context>
chip_gen: v7x
topology: tpu7x:2x2x1
jax: 0.10.0
libtpu: 0.0.40
codegen_flags: <defaults>
</compile_context>

<pallas_src>
import functools

import jax
import jax.numpy as jnp
import numpy as np
from jax.experimental import pallas as pl
from jax.experimental.pallas import tpu as pltpu

# Use full-f32 MXU passes so the kernel matches the pure-JAX reference tightly.
jax.config.update("jax_default_matmul_precision", "highest")


def _sigmoid(z):
    return 1.0 / (1.0 + jnp.exp(-z))


def _gated_gnn_kernel(matrix_ref, feats_ref,
                      w1x_ref, w1u_ref, b1_ref,
                      w2x_ref, w2u_ref, b2_ref,
                      w3x_ref, w3u_ref, b3_ref,
                      out_ref, *, steps, outmess, dim):
    A = matrix_ref[0].astype(jnp.float32)       # (N, N)
    h = feats_ref[0].astype(jnp.float32)        # (N, D)

    w1x = w1x_ref[...]; w1u = w1u_ref[...]; b1 = b1_ref[...]
    w2x = w2x_ref[...]; w2u = w2u_ref[...]; b2 = b2_ref[...]
    w3x = w3x_ref[...]; w3u = w3u_ref[...]; b3 = b3_ref[...]

    def matmul(a, b):
        return jnp.dot(a, b, preferred_element_type=jnp.float32)

    def proj_x(in_f, out_f, wx):
        # fc*_w(cat([in_f, out_f], -1)) == in_f @ wx[:D] + out_f @ wx[D:]
        if outmess:
            return matmul(in_f, wx[:dim, :]) + matmul(out_f, wx[dim:, :])
        return matmul(in_f, wx)

    for _ in range(steps):                       # static unroll (steps is small)
        in_f = matmul(A, h)                      # in_matrix @ feats
        if outmess:
            # out_matrix @ feats == A.T @ h, via dot_general contracting A's
            # first axis (avoids an explicit XLU transpose).
            out_f = jax.lax.dot_general(
                A, h, (((0,), (0,)), ((), ())),
                preferred_element_type=jnp.float32)
        else:
            out_f = None
        t1 = _sigmoid(proj_x(in_f, out_f, w1x) + matmul(h, w1u) + b1)
        t2 = _sigmoid(proj_x(in_f, out_f, w2x) + matmul(h, w2u) + b2)
        t3 = jnp.tanh(proj_x(in_f, out_f, w3x) + matmul(t2 * h, w3u) + b3)
        h = (1.0 - t1) * h + t1 * t3

    out_ref[0] = h.astype(out_ref.dtype)


def gated_gnn(feats, matrix, params, *, steps, outmess):
    """Pallas TPU implementation of GatedGNN.forward(feats, matrix)."""
    feats = jnp.asarray(feats, jnp.float32)      # (B, N, D)
    matrix = jnp.asarray(matrix, jnp.float32)    # (B, N, N)
    B, N, D = feats.shape
    xdim = 2 * D if outmess else D

    # Weights stored as (in, out) = Linear.weight.T; biases of the paired
    # Linears combine additively and are reshaped to (1, D) 2-D VMEM blocks.
    def w(name):
        return jnp.asarray(params[name], jnp.float32)

    w1x, w1u = w("w1x"), w("w1u")
    w2x, w2u = w("w2x"), w("w2u")
    w3x, w3u = w("w3x"), w("w3u")
    b1 = (w("b1w") + w("b1u")).reshape(1, D)
    b2 = (w("b2w") + w("b2u")).reshape(1, D)
    b3 = (w("b3w") + w("b3u")).reshape(1, D)

    kernel = functools.partial(
        _gated_gnn_kernel, steps=int(steps), outmess=bool(outmess), dim=int(D)
    )

    def rep2(shape):
        return pl.BlockSpec(shape, lambda b: (0, 0))

    out = pl.pallas_call(
        kernel,
        out_shape=jax.ShapeDtypeStruct((B, N, D), jnp.float32),
        grid_spec=pltpu.PrefetchScalarGridSpec(
            num_scalar_prefetch=0,
            grid=(B,),
            in_specs=[
                pl.BlockSpec((1, N, N), lambda b: (b, 0, 0)),   # matrix
                pl.BlockSpec((1, N, D), lambda b: (b, 0, 0)),   # feats
                rep2((xdim, D)), rep2((D, D)), rep2((1, D)),    # gate 1
                rep2((xdim, D)), rep2((D, D)), rep2((1, D)),    # gate 2
                rep2((xdim, D)), rep2((D, D)), rep2((1, D)),    # gate 3
            ],
            out_specs=pl.BlockSpec((1, N, D), lambda b: (b, 0, 0)),
        ),
        compiler_params=pltpu.CompilerParams(
            dimension_semantics=("parallel",),
        ),
    )(matrix, feats, w1x, w1u, b1, w2x, w2u, b2, w3x, w3u, b3)
    return out


def gated_gnn_ref(feats, matrix, p, *, steps, outmess):
    """Pure-JAX reference matching the PyTorch module."""
    h = feats
    in_m = matrix
    out_m = jnp.swapaxes(matrix, 1, 2)
    for _ in range(steps):
        in_f = jnp.einsum("bij,bjd->bid", in_m, h)
        out_f = jnp.einsum("bij,bjd->bid", out_m, h)
        x = jnp.concatenate([in_f, out_f], axis=-1) if outmess else in_f
        t1 = _sigmoid(x @ p["w1x"] + p["b1w"] + h @ p["w1u"] + p["b1u"])
        t2 = _sigmoid(x @ p["w2x"] + p["b2w"] + h @ p["w2u"] + p["b2u"])
        t3 = jnp.tanh(x @ p["w3x"] + p["b3w"] + (t2 * h) @ p["w3u"] + p["b3u"])
        h = (1.0 - t1) * h + t1 * t3
    return h


if __name__ == "__main__":
    key = jax.random.PRNGKey(0)
    B, N, D = 2, 8, 32
    steps, outmess = 2, True
    xdim = 2 * D if outmess else D

    keys = jax.random.split(key, 14)
    feats = jax.random.normal(keys[0], (B, N, D), jnp.float32)
    # Row-stochastic adjacency, typical for SALGL label-graph message passing.
    matrix = jax.nn.softmax(
        jax.random.normal(keys[1], (B, N, N), jnp.float32), axis=-1
    )

    def lin(k, fan_in, shape):
        lim = 1.0 / float(np.sqrt(fan_in))
        return jax.random.uniform(k, shape, jnp.float32, -lim, lim)

    params = {
        "w1x": lin(keys[2], xdim, (xdim, D)), "b1w": lin(keys[3], xdim, (D,)),
        "w1u": lin(keys[4], D, (D, D)),       "b1u": lin(keys[5], D, (D,)),
        "w2x": lin(keys[6], xdim, (xdim, D)), "b2w": lin(keys[7], xdim, (D,)),
        "w2u": lin(keys[8], D, (D, D)),       "b2u": lin(keys[9], D, (D,)),
        "w3x": lin(keys[10], xdim, (xdim, D)), "b3w": lin(keys[11], xdim, (D,)),
        "w3u": lin(keys[12], D, (D, D)),       "b3u": lin(keys[13], D, (D,)),
    }

    out = gated_gnn(feats, matrix, params, steps=steps, outmess=outmess)
    out = jax.block_until_ready(out)

    ref = jax.block_until_ready(
        gated_gnn_ref(feats, matrix, params, steps=steps, outmess=outmess)
    )
    err = float(np.max(np.abs(np.asarray(out) - np.asarray(ref))))
    assert np.allclose(np.asarray(out), np.asarray(ref), rtol=1e-3, atol=1e-4), err
    print("KERNEL_OK")
</pallas_src>

<mosaic_0001>
module attributes {stable_mosaic.version = 11 : i64} {
  func.func @_gated_gnn_kernel(%arg0: i32, %arg1: memref<1x8x8xf32, #tpu.memory_space<vmem>>, %arg2: memref<1x8x32xf32, #tpu.memory_space<vmem>>, %arg3: memref<64x32xf32, #tpu.memory_space<vmem>>, %arg4: memref<32x32xf32, #tpu.memory_space<vmem>>, %arg5: memref<1x32xf32, #tpu.memory_space<vmem>>, %arg6: memref<64x32xf32, #tpu.memory_space<vmem>>, %arg7: memref<32x32xf32, #tpu.memory_space<vmem>>, %arg8: memref<1x32xf32, #tpu.memory_space<vmem>>, %arg9: memref<64x32xf32, #tpu.memory_space<vmem>>, %arg10: memref<32x32xf32, #tpu.memory_space<vmem>>, %arg11: memref<1x32xf32, #tpu.memory_space<vmem>>, %arg12: memref<1x8x32xf32, #tpu.memory_space<vmem>>) attributes {dimension_semantics = [#tpu.dimension_semantics<parallel>], iteration_bounds = array<i64: 2>, scalar_prefetch = 0 : i64, scratch_operands = 0 : i64, tpu.core_type = #tpu.core_type<tc>, window_params = [{transform_indices = @transform_0, window_bounds = array<i64: 1, 8, 8>}, {transform_indices = @transform_1, window_bounds = array<i64: 1, 8, 32>}, {pipeline_mode = #tpu.pipeline_mode<synchronous>, transform_indices = @transform_2, window_bounds = array<i64: 64, 32>}, {pipeline_mode = #tpu.pipeline_mode<synchronous>, transform_indices = @transform_3, window_bounds = array<i64: 32, 32>}, {pipeline_mode = #tpu.pipeline_mode<synchronous>, transform_indices = @transform_4, window_bounds = array<i64: 1, 32>}, {pipeline_mode = #tpu.pipeline_mode<synchronous>, transform_indices = @transform_5, window_bounds = array<i64: 64, 32>}, {pipeline_mode = #tpu.pipeline_mode<synchronous>, transform_indices = @transform_6, window_bounds = array<i64: 32, 32>}, {pipeline_mode = #tpu.pipeline_mode<synchronous>, transform_indices = @transform_7, window_bounds = array<i64: 1, 32>}, {pipeline_mode = #tpu.pipeline_mode<synchronous>, transform_indices = @transform_8, window_bounds = array<i64: 64, 32>}, {pipeline_mode = #tpu.pipeline_mode<synchronous>, transform_indices = @transform_9, window_bounds = array<i64: 32, 32>}, {pipeline_mode = #tpu.pipeline_mode<synchronous>, transform_indices = @transform_10, window_bounds = array<i64: 1, 32>}, {transform_indices = @transform_11, window_bounds = array<i64: 1, 8, 32>}]} {
    %c0 = arith.constant 0 : index
    %c0_0 = arith.constant 0 : index
    %c0_1 = arith.constant 0 : index
    %0 = vector.load %arg1[%c0, %c0_0, %c0_1] : memref<1x8x8xf32, #tpu.memory_space<vmem>>, vector<1x8x8xf32>
    %1 = vector.shape_cast %0 : vector<1x8x8xf32> to vector<8x8xf32>
    %c0_2 = arith.constant 0 : index
    %c0_3 = arith.constant 0 : index
    %c0_4 = arith.constant 0 : index
    %2 = vector.load %arg2[%c0_2, %c0_3, %c0_4] : memref<1x8x32xf32, #tpu.memory_space<vmem>>, vector<1x8x32xf32>
    %3 = vector.shape_cast %2 : vector<1x8x32xf32> to vector<8x32xf32>
    %c0_5 = arith.constant 0 : index
    %c0_6 = arith.constant 0 : index
    %4 = vector.load %arg3[%c0_5, %c0_6] : memref<64x32xf32, #tpu.memory_space<vmem>>, vector<64x32xf32>
    %c0_7 = arith.constant 0 : index
    %c0_8 = arith.constant 0 : index
    %5 = vector.load %arg4[%c0_7, %c0_8] : memref<32x32xf32, #tpu.memory_space<vmem>>, vector<32x32xf32>
    %c0_9 = arith.constant 0 : index
    %c0_10 = arith.constant 0 : index
    %6 = vector.load %arg5[%c0_9, %c0_10] : memref<1x32xf32, #tpu.memory_space<vmem>>, vector<1x32xf32>
    %c0_11 = arith.constant 0 : index
    %c0_12 = arith.constant 0 : index
    %7 = vector.load %arg6[%c0_11, %c0_12] : memref<64x32xf32, #tpu.memory_space<vmem>>, vector<64x32xf32>
    %c0_13 = arith.constant 0 : index
    %c0_14 = arith.constant 0 : index
    %8 = vector.load %arg7[%c0_13, %c0_14] : memref<32x32xf32, #tpu.memory_space<vmem>>, vector<32x32xf32>
    %c0_15 = arith.constant 0 : index
    %c0_16 = arith.constant 0 : index
    %9 = vector.load %arg8[%c0_15, %c0_16] : memref<1x32xf32, #tpu.memory_space<vmem>>, vector<1x32xf32>
    %c0_17 = arith.constant 0 : index
    %c0_18 = arith.constant 0 : index
    %10 = vector.load %arg9[%c0_17, %c0_18] : memref<64x32xf32, #tpu.memory_space<vmem>>, vector<64x32xf32>
    %c0_19 = arith.constant 0 : index
    %c0_20 = arith.constant 0 : index
    %11 = vector.load %arg10[%c0_19, %c0_20] : memref<32x32xf32, #tpu.memory_space<vmem>>, vector<32x32xf32>
    %c0_21 = arith.constant 0 : index
    %c0_22 = arith.constant 0 : index
    %12 = vector.load %arg11[%c0_21, %c0_22] : memref<1x32xf32, #tpu.memory_space<vmem>>, vector<1x32xf32>
    %cst = arith.constant dense<0.000000e+00> : vector<8x32xf32>
    %13 = tpu.matmul %1, %3, %cst {dimension_numbers = #tpu.dot_dimension_numbers<[1], [0], [0], [1], [0, 0, 1, 1], [], []>, precision = #tpu.contract_precision<fp32>} : vector<8x8xf32>, vector<8x32xf32>, vector<8x32xf32> -> vector<8x32xf32>
    %cst_23 = arith.constant dense<0.000000e+00> : vector<8x32xf32>
    %14 = tpu.matmul %1, %3, %cst_23 {dimension_numbers = #tpu.dot_dimension_numbers<[0], [0], [1], [1], [0, 1, 1, 1], [], []>, precision = #tpu.contract_precision<fp32>} : vector<8x8xf32>, vector<8x32xf32>, vector<8x32xf32> -> vector<8x32xf32>
    %15 = vector.extract_strided_slice %4 {offsets = [0, 0], sizes = [32, 32], strides = [1, 1]} : vector<64x32xf32> to vector<32x32xf32>
    %cst_24 = arith.constant dense<0.000000e+00> : vector<8x32xf32>
    %16 = tpu.matmul %13, %15, %cst_24 {dimension_numbers = #tpu.dot_dimension_numbers<[1], [0], [0], [1], [0, 0, 1, 1], [], []>, precision = #tpu.contract_precision<fp32>} : vector<8x32xf32>, vector<32x32xf32>, vector<8x32xf32> -> vector<8x32xf32>
    %17 = vector.extract_strided_slice %4 {offsets = [32, 0], sizes = [32, 32], strides = [1, 1]} : vector<64x32xf32> to vector<32x32xf32>
    %cst_25 = arith.constant dense<0.000000e+00> : vector<8x32xf32>
    %18 = tpu.matmul %14, %17, %cst_25 {dimension_numbers = #tpu.dot_dimension_numbers<[1], [0], [0], [1], [0, 0, 1, 1], [], []>, precision = #tpu.contract_precision<fp32>} : vector<8x32xf32>, vector<32x32xf32>, vector<8x32xf32> -> vector<8x32xf32>
    %19 = arith.addf %16, %18 : vector<8x32xf32>
    %cst_26 = arith.constant dense<0.000000e+00> : vector<8x32xf32>
    %20 = tpu.matmul %3, %5, %cst_26 {dimension_numbers = #tpu.dot_dimension_numbers<[1], [0], [0], [1], [0, 0, 1, 1], [], []>, precision = #tpu.contract_precision<fp32>} : vector<8x32xf32>, vector<32x32xf32>, vector<8x32xf32> -> vector<8x32xf32>
    %21 = arith.addf %19, %20 : vector<8x32xf32>
    %22 = vector.broadcast %6 : vector<1x32xf32> to vector<8x32xf32>
    %23 = arith.addf %21, %22 : vector<8x32xf32>
    %cst_27 = arith.constant 0.000000e+00 : f32
    %24 = vector.broadcast %cst_27 : f32 to vector<8x32xf32>
    %25 = arith.subf %24, %23 : vector<8x32xf32>
    %26 = math.exp %25 : vector<8x32xf32>
    %cst_28 = arith.constant 1.000000e+00 : f32
    %27 = vector.broadcast %cst_28 : f32 to vector<8x32xf32>
    %28 = arith.addf %27, %26 : vector<8x32xf32>
    %cst_29 = arith.constant 1.000000e+00 : f32
    %29 = vector.broadcast %cst_29 : f32 to vector<8x32xf32>
    %30 = arith.divf %29, %28 : vector<8x32xf32>
    %31 = vector.extract_strided_slice %7 {offsets = [0, 0], sizes = [32, 32], strides = [1, 1]} : vector<64x32xf32> to vector<32x32xf32>
    %cst_30 = arith.constant dense<0.000000e+00> : vector<8x32xf32>
    %32 = tpu.matmul %13, %31, %cst_30 {dimension_numbers = #tpu.dot_dimension_numbers<[1], [0], [0], [1], [0, 0, 1, 1], [], []>, precision = #tpu.contract_precision<fp32>} : vector<8x32xf32>, vector<32x32xf32>, vector<8x32xf32> -> vector<8x32xf32>
    %33 = vector.extract_strided_slice %7 {offsets = [32, 0], sizes = [32, 32], strides = [1, 1]} : vector<64x32xf32> to vector<32x32xf32>
    %cst_31 = arith.constant dense<0.000000e+00> : vector<8x32xf32>
    %34 = tpu.matmul %14, %33, %cst_31 {dimension_numbers = #tpu.dot_dimension_numbers<[1], [0], [0], [1], [0, 0, 1, 1], [], []>, precision = #tpu.contract_precision<fp32>} : vector<8x32xf32>, vector<32x32xf32>, vector<8x32xf32> -> vector<8x32xf32>
    %35 = arith.addf %32, %34 : vector<8x32xf32>
    %cst_32 = arith.constant dense<0.000000e+00> : vector<8x32xf32>
    %36 = tpu.matmul %3, %8, %cst_32 {dimension_numbers = #tpu.dot_dimension_numbers<[1], [0], [0], [1], [0, 0, 1, 1], [], []>, precision = #tpu.contract_precision<fp32>} : vector<8x32xf32>, vector<32x32xf32>, vector<8x32xf32> -> vector<8x32xf32>
    %37 = arith.addf %35, %36 : vector<8x32xf32>
    %38 = vector.broadcast %9 : vector<1x32xf32> to vector<8x32xf32>
    %39 = arith.addf %37, %38 : vector<8x32xf32>
    %cst_33 = arith.constant 0.000000e+00 : f32
    %40 = vector.broadcast %cst_33 : f32 to vector<8x32xf32>
    %41 = arith.subf %40, %39 : vector<8x32xf32>
    %42 = math.exp %41 : vector<8x32xf32>
    %cst_34 = arith.constant 1.000000e+00 : f32
    %43 = vector.broadcast %cst_34 : f32 to vector<8x32xf32>
    %44 = arith.addf %43, %42 : vector<8x32xf32>
    %cst_35 = arith.constant 1.000000e+00 : f32
    %45 = vector.broadcast %cst_35 : f32 to vector<8x32xf32>
    %46 = arith.divf %45, %44 : vector<8x32xf32>
    %47 = vector.extract_strided_slice %10 {offsets = [0, 0], sizes = [32, 32], strides = [1, 1]} : vector<64x32xf32> to vector<32x32xf32>
    %cst_36 = arith.constant dense<0.000000e+00> : vector<8x32xf32>
    %48 = tpu.matmul %13, %47, %cst_36 {dimension_numbers = #tpu.dot_dimension_numbers<[1], [0], [0], [1], [0, 0, 1, 1], [], []>, precision = #tpu.contract_precision<fp32>} : vector<8x32xf32>, vector<32x32xf32>, vector<8x32xf32> -> vector<8x32xf32>
    %49 = vector.extract_strided_slice %10 {offsets = [32, 0], sizes = [32, 32], strides = [1, 1]} : vector<64x32xf32> to vector<32x32xf32>
    %cst_37 = arith.constant dense<0.000000e+00> : vector<8x32xf32>
    %50 = tpu.matmul %14, %49, %cst_37 {dimension_numbers = #tpu.dot_dimension_numbers<[1], [0], [0], [1], [0, 0, 1, 1], [], []>, precision = #tpu.contract_precision<fp32>} : vector<8x32xf32>, vector<32x32xf32>, vector<8x32xf32> -> vector<8x32xf32>
    %51 = arith.addf %48, %50 : vector<8x32xf32>
    %52 = arith.mulf %46, %3 : vector<8x32xf32>
    %cst_38 = arith.constant dense<0.000000e+00> : vector<8x32xf32>
    %53 = tpu.matmul %52, %11, %cst_38 {dimension_numbers = #tpu.dot_dimension_numbers<[1], [0], [0], [1], [0, 0, 1, 1], [], []>, precision = #tpu.contract_precision<fp32>} : vector<8x32xf32>, vector<32x32xf32>, vector<8x32xf32> -> vector<8x32xf32>
    %54 = arith.addf %51, %53 : vector<8x32xf32>
    %55 = vector.broadcast %12 : vector<1x32xf32> to vector<8x32xf32>
    %56 = arith.addf %54, %55 : vector<8x32xf32>
    %57 = math.tanh %56 : vector<8x32xf32>
    %cst_39 = arith.constant 1.000000e+00 : f32
    %58 = vector.broadcast %cst_39 : f32 to vector<8x32xf32>
    %59 = arith.subf %58, %30 : vector<8x32xf32>
    %60 = arith.mulf %59, %3 : vector<8x32xf32>
    %61 = arith.mulf %30, %57 : vector<8x32xf32>
    %62 = arith.addf %60, %61 : vector<8x32xf32>
    %cst_40 = arith.constant dense<0.000000e+00> : vector<8x32xf32>
    %63 = tpu.matmul %1, %62, %cst_40 {dimension_numbers = #tpu.dot_dimension_numbers<[1], [0], [0], [1], [0, 0, 1, 1], [], []>, precision = #tpu.contract_precision<fp32>} : vector<8x8xf32>, vector<8x32xf32>, vector<8x32xf32> -> vector<8x32xf32>
    %cst_41 = arith.constant dense<0.000000e+00> : vector<8x32xf32>
    %64 = tpu.matmul %1, %62, %cst_41 {dimension_numbers = #tpu.dot_dimension_numbers<[0], [0], [1], [1], [0, 1, 1, 1], [], []>, precision = #tpu.contract_precision<fp32>} : vector<8x8xf32>, vector<8x32xf32>, vector<8x32xf32> -> vector<8x32xf32>
    %65 = vector.extract_strided_slice %4 {offsets = [0, 0], sizes = [32, 32], strides = [1, 1]} : vector<64x32xf32> to vector<32x32xf32>
    %cst_42 = arith.constant dense<0.000000e+00> : vector<8x32xf32>
    %66 = tpu.matmul %63, %65, %cst_42 {dimension_numbers = #tpu.dot_dimension_numbers<[1], [0], [0], [1], [0, 0, 1, 1], [], []>, precision = #tpu.contract_precision<fp32>} : vector<8x32xf32>, vector<32x32xf32>, vector<8x32xf32> -> vector<8x32xf32>
    %67 = vector.extract_strided_slice %4 {offsets = [32, 0], sizes = [32, 32], strides = [1, 1]} : vector<64x32xf32> to vector<32x32xf32>
    %cst_43 = arith.constant dense<0.000000e+00> : vector<8x32xf32>
    %68 = tpu.matmul %64, %67, %cst_43 {dimension_numbers = #tpu.dot_dimension_numbers<[1], [0], [0], [1], [0, 0, 1, 1], [], []>, precision = #tpu.contract_precision<fp32>} : vector<8x32xf32>, vector<32x32xf32>, vector<8x32xf32> -> vector<8x32xf32>
    %69 = arith.addf %66, %68 : vector<8x32xf32>
    %cst_44 = arith.constant dense<0.000000e+00> : vector<8x32xf32>
    %70 = tpu.matmul %62, %5, %cst_44 {dimension_numbers = #tpu.dot_dimension_numbers<[1], [0], [0], [1], [0, 0, 1, 1], [], []>, precision = #tpu.contract_precision<fp32>} : vector<8x32xf32>, vector<32x32xf32>, vector<8x32xf32> -> vector<8x32xf32>
    %71 = arith.addf %69, %70 : vector<8x32xf32>
    %72 = vector.broadcast %6 : vector<1x32xf32> to vector<8x32xf32>
    %73 = arith.addf %71, %72 : vector<8x32xf32>
    %cst_45 = arith.constant 0.000000e+00 : f32
    %74 = vector.broadcast %cst_45 : f32 to vector<8x32xf32>
    %75 = arith.subf %74, %73 : vector<8x32xf32>
    %76 = math.exp %75 : vector<8x32xf32>
    %cst_46 = arith.constant 1.000000e+00 : f32
    %77 = vector.broadcast %cst_46 : f32 to vector<8x32xf32>
    %78 = arith.addf %77, %76 : vector<8x32xf32>
    %cst_47 = arith.constant 1.000000e+00 : f32
    %79 = vector.broadcast %cst_47 : f32 to vector<8x32xf32>
    %80 = arith.divf %79, %78 : vector<8x32xf32>
    %81 = vector.extract_strided_slice %7 {offsets = [0, 0], sizes = [32, 32], strides = [1, 1]} : vector<64x32xf32> to vector<32x32xf32>
    %cst_48 = arith.constant dense<0.000000e+00> : vector<8x32xf32>
    %82 = tpu.matmul %63, %81, %cst_48 {dimension_numbers = #tpu.dot_dimension_numbers<[1], [0], [0], [1], [0, 0, 1, 1], [], []>, precision = #tpu.contract_precision<fp32>} : vector<8x32xf32>, vector<32x32xf32>, vector<8x32xf32> -> vector<8x32xf32>
    %83 = vector.extract_strided_slice %7 {offsets = [32, 0], sizes = [32, 32], strides = [1, 1]} : vector<64x32xf32> to vector<32x32xf32>
    %cst_49 = arith.constant dense<0.000000e+00> : vector<8x32xf32>
    %84 = tpu.matmul %64, %83, %cst_49 {dimension_numbers = #tpu.dot_dimension_numbers<[1], [0], [0], [1], [0, 0, 1, 1], [], []>, precision = #tpu.contract_precision<fp32>} : vector<8x32xf32>, vector<32x32xf32>, vector<8x32xf32> -> vector<8x32xf32>
    %85 = arith.addf %82, %84 : vector<8x32xf32>
    %cst_50 = arith.constant dense<0.000000e+00> : vector<8x32xf32>
    %86 = tpu.matmul %62, %8, %cst_50 {dimension_numbers = #tpu.dot_dimension_numbers<[1], [0], [0], [1], [0, 0, 1, 1], [], []>, precision = #tpu.contract_precision<fp32>} : vector<8x32xf32>, vector<32x32xf32>, vector<8x32xf32> -> vector<8x32xf32>
    %87 = arith.addf %85, %86 : vector<8x32xf32>
    %88 = vector.broadcast %9 : vector<1x32xf32> to vector<8x32xf32>
    %89 = arith.addf %87, %88 : vector<8x32xf32>
    %cst_51 = arith.constant 0.000000e+00 : f32
    %90 = vector.broadcast %cst_51 : f32 to vector<8x32xf32>
    %91 = arith.subf %90, %89 : vector<8x32xf32>
    %92 = math.exp %91 : vector<8x32xf32>
    %cst_52 = arith.constant 1.000000e+00 : f32
    %93 = vector.broadcast %cst_52 : f32 to vector<8x32xf32>
    %94 = arith.addf %93, %92 : vector<8x32xf32>
    %cst_53 = arith.constant 1.000000e+00 : f32
    %95 = vector.broadcast %cst_53 : f32 to vector<8x32xf32>
    %96 = arith.divf %95, %94 : vector<8x32xf32>
    %97 = vector.extract_strided_slice %10 {offsets = [0, 0], sizes = [32, 32], strides = [1, 1]} : vector<64x32xf32> to vector<32x32xf32>
    %cst_54 = arith.constant dense<0.000000e+00> : vector<8x32xf32>
    %98 = tpu.matmul %63, %97, %cst_54 {dimension_numbers = #tpu.dot_dimension_numbers<[1], [0], [0], [1], [0, 0, 1, 1], [], []>, precision = #tpu.contract_precision<fp32>} : vector<8x32xf32>, vector<32x32xf32>, vector<8x32xf32> -> vector<8x32xf32>
    %99 = vector.extract_strided_slice %10 {offsets = [32, 0], sizes = [32, 32], strides = [1, 1]} : vector<64x32xf32> to vector<32x32xf32>
    %cst_55 = arith.constant dense<0.000000e+00> : vector<8x32xf32>
    %100 = tpu.matmul %64, %99, %cst_55 {dimension_numbers = #tpu.dot_dimension_numbers<[1], [0], [0], [1], [0, 0, 1, 1], [], []>, precision = #tpu.contract_precision<fp32>} : vector<8x32xf32>, vector<32x32xf32>, vector<8x32xf32> -> vector<8x32xf32>
    %101 = arith.addf %98, %100 : vector<8x32xf32>
    %102 = arith.mulf %96, %62 : vector<8x32xf32>
    %cst_56 = arith.constant dense<0.000000e+00> : vector<8x32xf32>
    %103 = tpu.matmul %102, %11, %cst_56 {dimension_numbers = #tpu.dot_dimension_numbers<[1], [0], [0], [1], [0, 0, 1, 1], [], []>, precision = #tpu.contract_precision<fp32>} : vector<8x32xf32>, vector<32x32xf32>, vector<8x32xf32> -> vector<8x32xf32>
    %104 = arith.addf %101, %103 : vector<8x32xf32>
    %105 = vector.broadcast %12 : vector<1x32xf32> to vector<8x32xf32>
    %106 = arith.addf %104, %105 : vector<8x32xf32>
    %107 = math.tanh %106 : vector<8x32xf32>
    %cst_57 = arith.constant 1.000000e+00 : f32
    %108 = vector.broadcast %cst_57 : f32 to vector<8x32xf32>
    %109 = arith.subf %108, %80 : vector<8x32xf32>
    %110 = arith.mulf %109, %62 : vector<8x32xf32>
    %111 = arith.mulf %80, %107 : vector<8x32xf32>
    %112 = arith.addf %110, %111 : vector<8x32xf32>
    %c0_58 = arith.constant 0 : index
    %c0_59 = arith.constant 0 : index
    %c0_60 = arith.constant 0 : index
    %113 = vector.load %arg12[%c0_58, %c0_59, %c0_60] : memref<1x8x32xf32, #tpu.memory_space<vmem>>, vector<1x8x32xf32>
    %114 = vector.shape_cast %113 : vector<1x8x32xf32> to vector<8x32xf32>
    %115 = vector.shape_cast %112 : vector<8x32xf32> to vector<1x8x32xf32>
    tpu.vector_store %arg12[%c0_58, %c0_59, %c0_60], %115 {strides = array<i32>} : memref<1x8x32xf32, #tpu.memory_space<vmem>>, vector<1x8x32xf32>,
    return
  }
  func.func @transform_0(%arg0: i32) -> (i32, i32, i32) {
    %c0_i32 = arith.constant 0 : i32
    %c0_i32_0 = arith.constant 0 : i32
    %c0_i32_1 = arith.constant 0 : i32
    return %arg0, %c0_i32, %c0_i32_0 : i32, i32, i32
  }
  func.func @transform_1(%arg0: i32) -> (i32, i32, i32) {
    %c0_i32 = arith.constant 0 : i32
    %c0_i32_0 = arith.constant 0 : i32
    %c0_i32_1 = arith.constant 0 : i32
    return %arg0, %c0_i32, %c0_i32_0 : i32, i32, i32
  }
  func.func @transform_2(%arg0: i32) -> (i32, i32) {
    %c0_i32 = arith.constant 0 : i32
    %c0_i32_0 = arith.constant 0 : i32
    %c0_i32_1 = arith.constant 0 : i32
    return %c0_i32, %c0_i32_0 : i32, i32
  }
  func.func @transform_3(%arg0: i32) -> (i32, i32) {
    %c0_i32 = arith.constant 0 : i32
    %c0_i32_0 = arith.constant 0 : i32
    %c0_i32_1 = arith.constant 0 : i32
    return %c0_i32, %c0_i32_0 : i32, i32
  }
  func.func @transform_4(%arg0: i32) -> (i32, i32) {
    %c0_i32 = arith.constant 0 : i32
    %c0_i32_0 = arith.constant 0 : i32
    %c0_i32_1 = arith.constant 0 : i32
    return %c0_i32, %c0_i32_0 : i32, i32
  }
  func.func @transform_5(%arg0: i32) -> (i32, i32) {
    %c0_i32 = arith.constant 0 : i32
    %c0_i32_0 = arith.constant 0 : i32
    %c0_i32_1 = arith.constant 0 : i32
    return %c0_i32, %c0_i32_0 : i32, i32
  }
  func.func @transform_6(%arg0: i32) -> (i32, i32) {
    %c0_i32 = arith.constant 0 : i32
    %c0_i32_0 = arith.constant 0 : i32
    %c0_i32_1 = arith.constant 0 : i32
    return %c0_i32, %c0_i32_0 : i32, i32
  }
  func.func @transform_7(%arg0: i32) -> (i32, i32) {
    %c0_i32 = arith.constant 0 : i32
    %c0_i32_0 = arith.constant 0 : i32
    %c0_i32_1 = arith.constant 0 : i32
    return %c0_i32, %c0_i32_0 : i32, i32
  }
  func.func @transform_8(%arg0: i32) -> (i32, i32) {
    %c0_i32 = arith.constant 0 : i32
    %c0_i32_0 = arith.constant 0 : i32
    %c0_i32_1 = arith.constant 0 : i32
    return %c0_i32, %c0_i32_0 : i32, i32
  }
  func.func @transform_9(%arg0: i32) -> (i32, i32) {
    %c0_i32 = arith.constant 0 : i32
    %c0_i32_0 = arith.constant 0 : i32
    %c0_i32_1 = arith.constant 0 : i32
    return %c0_i32, %c0_i32_0 : i32, i32
  }
  func.func @transform_10(%arg0: i32) -> (i32, i32) {
    %c0_i32 = arith.constant 0 : i32
    %c0_i32_0 = arith.constant 0 : i32
    %c0_i32_1 = arith.constant 0 : i32
    return %c0_i32, %c0_i32_0 : i32, i32
  }
  func.func @transform_11(%arg0: i32) -> (i32, i32, i32) {
    %c0_i32 = arith.constant 0 : i32
    %c0_i32_0 = arith.constant 0 : i32
    %c0_i32_1 = arith.constant 0 : i32
    return %arg0, %c0_i32, %c0_i32_0 : i32, i32, i32
  }
}

</mosaic_0001>

<llo_original>
// kernel: tpu_custom_call.1
$region0: #{tpu_custom_call.1}
  #allocation0 [shape = 'u32[]', space=smem, size = 0x4, offset = 0x4, fixed_abs, tag = 'smem constant byte address 0x4 - core index']
  #allocation1 [shape = 'u32[144,128]{1,0:T(1,128)}', space=vmem, size = 0x12000, scoped, tag = 'internal scratch']
  %s0 = inlined_call_operand.vmem [shape: f32[2,8,8], index: 0, kind: input, shape index: {}]
  %s1 = inlined_call_operand.vmem [shape: f32[2,8,32], index: 1, kind: input, shape index: {}]
  %s2 = inlined_call_operand.vmem [shape: f32[64,32], index: 2, kind: input, shape index: {}]
  %s3 = inlined_call_operand.vmem [shape: f32[32,32], index: 3, kind: input, shape index: {}]
  %s4 = inlined_call_operand.vmem [shape: f32[1,32], index: 4, kind: input, shape index: {}]
  %s5 = inlined_call_operand.vmem [shape: f32[64,32], index: 5, kind: input, shape index: {}]
  %s6 = inlined_call_operand.vmem [shape: f32[32,32], index: 6, kind: input, shape index: {}]
  %s7 = inlined_call_operand.vmem [shape: f32[1,32], index: 7, kind: input, shape index: {}]
  %s8 = inlined_call_operand.vmem [shape: f32[64,32], index: 8, kind: input, shape index: {}]
  %s9 = inlined_call_operand.vmem [shape: f32[32,32], index: 9, kind: input, shape index: {}]
  %s10 = inlined_call_operand.vmem [shape: f32[1,32], index: 10, kind: input, shape index: {}]
  %s11 = inlined_call_operand.hbm [shape: f32[2,8,32], index: 11, kind: output, shape index: {}]
  %s12 = sld [smem:[#allocation0]]
  $region77: #{tpu_custom_call.1} parent=0
    _
  %s14 = ssub.s32 1, %s12
  %s15 = scalar_select 0, %s14, %s12
  $region1: #{tpu_custom_call.1} parent=0
    #allocation2 [shape = 'u8[8192]{0}', space=vmem, size = 0x2000, scoped, tag = 'output window, operand 0']
    #allocation3 [shape = 's32[2]{0}', space=sflag, size = 0x8, scoped, tag = 'scoped memory for tpu_custom_call.1']
    %16 = vsyncpa [#allocation3], 0
    %s17 = scalar_lea.sflag [#allocation3], 1
    %18 = vsyncpa %s17, 0
    loop: start=0, step=1, limit=4
    $region2: #{tpu_custom_call.1} parent=1 // loop_pre_header
      _
    $region3: #{tpu_custom_call.1} parent=1 // loop_header
      %s20 = sphi 0, %s24
      %p21 = scmp.ge.s32.totalorder %s20, 4
      %s30 = sphi 0, %s32
      %s33 = sphi 0, %s30
      %s34 = sphi 0, %s33
      %s50 = sphi 0, %s34
      %s56 = sphi 0, %s58
      %s59 = sphi 0, %s56
      %s60 = sphi 0, %s59
      %s76 = sphi 0, %s60
      %s80 = sphi 0, %s80
      %s82 = sphi 0, %s80
      %s83 = sphi 0, %s82
      %s97 = sphi 0, %s83
      %s101 = sphi 0, %s101
      %s103 = sphi 0, %s101
      %s104 = sphi 0, %s103
      %s118 = sphi 0, %s104
      %s122 = sphi 0, %s122
      %s124 = sphi 0, %s122
      %s125 = sphi 0, %s124
      %s139 = sphi 0, %s125
      %s143 = sphi 0, %s143
      %s145 = sphi 0, %s143
      %s146 = sphi 0, %s145
      %s160 = sphi 0, %s146
      %s164 = sphi 0, %s164
      %s166 = sphi 0, %s164
      %s167 = sphi 0, %s166
      %s181 = sphi 0, %s167
      %s185 = sphi 0, %s185
      %s187 = sphi 0, %s185
      %s188 = sphi 0, %s187
      %s202 = sphi 0, %s188
      %s206 = sphi 0, %s206
      %s208 = sphi 0, %s206
      %s209 = sphi 0, %s208
      %s223 = sphi 0, %s209
      %s227 = sphi 0, %s227
      %s229 = sphi 0, %s227
      %s230 = sphi 0, %s229
      %s244 = sphi 0, %s230
      %s248 = sphi 0, %s248
      %s250 = sphi 0, %s248
      %s251 = sphi 0, %s250
      %s265 = sphi 0, %s251
      %s271 = sphi 0, %s273
      %s274 = sphi 0, %s271
      %s275 = sphi 0, %s274
      %s291 = sphi 0, %s275
    $region4: #{tpu_custom_call.1} parent=1 // loop_header_branch
      %23 = sbr.rel (%p21) target = $region8
    $region5: #{tpu_custom_call.1} parent=1 // loop_body
      %s25 = ssub.s32 %s20, 1
      %s26 = ssub.s32 %s20, 2
      %s27 = sadd.s32 %s20, 1
      %s28 = ssub.s32 %s20, %s27
      %p29 = scmp.eq.s32.totalorder %s28, 0
      %s31 = sadd.s32 %s30, 1
      %s32 = scalar_select %p29, %s30, %s31
      %p35 = pneg %p29
      %p36 = scmp.eq.s32.totalorder %s20, 1
      %p37 = por %p35, %p36
      %p38 = scmp.ne.s32.totalorder %s30, %s33
      %p39 = scmp.eq.s32.totalorder %s20, 0
      %p40 = por %p38, %p39
      %p41 = scmp.ne.s32.totalorder %s30, %s33
      %p42 = scmp.eq.s32.totalorder %s25, 1
      %p43 = por %p41, %p42
      %p44 = scmp.ne.s32.totalorder %s33, %s34
      %p45 = scmp.eq.s32.totalorder %s25, 0
      %p46 = por %p44, %p45
      %p47 = scmp.ne.s32.totalorder %s33, %s34
      %p48 = scmp.eq.s32.totalorder %s26, 1
      %p49 = por %p47, %p48
      %p51 = scmp.ne.s32.totalorder %s34, %s50
      %p52 = scmp.eq.s32.totalorder %s26, 0
      %p53 = por %p51, %p52
      %s54 = ssub.s32 %s20, %s27
      %p55 = scmp.eq.s32.totalorder %s54, 0
      %s57 = sadd.s32 %s56, 1
      %s58 = scalar_select %p55, %s56, %s57
      %p61 = pneg %p55
      %p62 = scmp.eq.s32.totalorder %s20, 1
      %p63 = por %p61, %p62
      %p64 = scmp.ne.s32.totalorder %s56, %s59
      %p65 = scmp.eq.s32.totalorder %s20, 0
      %p66 = por %p64, %p65
      %p67 = scmp.ne.s32.totalorder %s56, %s59
      %p68 = scmp.eq.s32.totalorder %s25, 1
      %p69 = por %p67, %p68
      %p70 = scmp.ne.s32.totalorder %s59, %s60
      %p71 = scmp.eq.s32.totalorder %s25, 0
      %p72 = por %p70, %p71
      %p73 = scmp.ne.s32.totalorder %s59, %s60
      %p74 = scmp.eq.s32.totalorder %s26, 1
      %p75 = por %p73, %p74
      %p77 = scmp.ne.s32.totalorder %s60, %s76
      %p78 = scmp.eq.s32.totalorder %s26, 0
      %p79 = por %p77, %p78
      %s81 = sadd.s32 %s80, 1
      %p84 = scmp.eq.s32.totalorder %s20, 1
      %p85 = scmp.ne.s32.totalorder %s80, %s82
      %p86 = scmp.eq.s32.totalorder %s20, 0
      %p87 = por %p85, %p86
      %p88 = scmp.ne.s32.totalorder %s80, %s82
      %p89 = scmp.eq.s32.totalorder %s25, 1
      %p90 = por %p88, %p89
      %p91 = scmp.ne.s32.totalorder %s82, %s83
      %p92 = scmp.eq.s32.totalorder %s25, 0
      %p93 = por %p91, %p92
      %p94 = scmp.ne.s32.totalorder %s82, %s83
      %p95 = scmp.eq.s32.totalorder %s26, 1
      %p96 = por %p94, %p95
      %p98 = scmp.ne.s32.totalorder %s83, %s97
      %p99 = scmp.eq.s32.totalorder %s26, 0
      %p100 = por %p98, %p99
      %s102 = sadd.s32 %s101, 1
      %p105 = scmp.eq.s32.totalorder %s20, 1
      %p106 = scmp.ne.s32.totalorder %s101, %s103
      %p107 = scmp.eq.s32.totalorder %s20, 0
      %p108 = por %p106, %p107
      %p109 = scmp.ne.s32.totalorder %s101, %s103
      %p110 = scmp.eq.s32.totalorder %s25, 1
      %p111 = por %p109, %p110
      %p112 = scmp.ne.s32.totalorder %s103, %s104
      %p113 = scmp.eq.s32.totalorder %s25, 0
      %p114 = por %p112, %p113
      %p115 = scmp.ne.s32.totalorder %s103, %s104
      %p116 = scmp.eq.s32.totalorder %s26, 1
      %p117 = por %p115, %p116
      %p119 = scmp.ne.s32.totalorder %s104, %s118
      %p120 = scmp.eq.s32.totalorder %s26, 0
      %p121 = por %p119, %p120
      %s123 = sadd.s32 %s122, 1
      %p126 = scmp.eq.s32.totalorder %s20, 1
      %p127 = scmp.ne.s32.totalorder %s122, %s124
      %p128 = scmp.eq.s32.totalorder %s20, 0
      %p129 = por %p127, %p128
      %p130 = scmp.ne.s32.totalorder %s122, %s124
      %p131 = scmp.eq.s32.totalorder %s25, 1
      %p132 = por %p130, %p131
      %p133 = scmp.ne.s32.totalorder %s124, %s125
      %p134 = scmp.eq.s32.totalorder %s25, 0
      %p135 = por %p133, %p134
      %p136 = scmp.ne.s32.totalorder %s124, %s125
      %p137 = scmp.eq.s32.totalorder %s26, 1
      %p138 = por %p136, %p137
      %p140 = scmp.ne.s32.totalorder %s125, %s139
      %p141 = scmp.eq.s32.totalorder %s26, 0
      %p142 = por %p140, %p141
      %s144 = sadd.s32 %s143, 1
      %p147 = scmp.eq.s32.totalorder %s20, 1
      %p148 = scmp.ne.s32.totalorder %s143, %s145
      %p149 = scmp.eq.s32.totalorder %s20, 0
      %p150 = por %p148, %p149
      %p151 = scmp.ne.s32.totalorder %s143, %s145
      %p152 = scmp.eq.s32.totalorder %s25, 1
      %p153 = por %p151, %p152
      %p154 = scmp.ne.s32.totalorder %s145, %s146
      %p155 = scmp.eq.s32.totalorder %s25, 0
      %p156 = por %p154, %p155
      %p157 = scmp.ne.s32.totalorder %s145, %s146
      %p158 = scmp.eq.s32.totalorder %s26, 1
      %p159 = por %p157, %p158
      %p161 = scmp.ne.s32.totalorder %s146, %s160
      %p162 = scmp.eq.s32.totalorder %s26, 0
      %p163 = por %p161, %p162
      %s165 = sadd.s32 %s164, 1
      %p168 = scmp.eq.s32.totalorder %s20, 1
      %p169 = scmp.ne.s32.totalorder %s164, %s166
      %p170 = scmp.eq.s32.totalorder %s20, 0
      %p171 = por %p169, %p170
      %p172 = scmp.ne.s32.totalorder %s164, %s166
      %p173 = scmp.eq.s32.totalorder %s25, 1
      %p174 = por %p172, %p173
      %p175 = scmp.ne.s32.totalorder %s166, %s167
      %p176 = scmp.eq.s32.totalorder %s25, 0
      %p177 = por %p175, %p176
      %p178 = scmp.ne.s32.totalorder %s166, %s167
      %p179 = scmp.eq.s32.totalorder %s26, 1
      %p180 = por %p178, %p179
      %p182 = scmp.ne.s32.totalorder %s167, %s181
      %p183 = scmp.eq.s32.totalorder %s26, 0
      %p184 = por %p182, %p183
      %s186 = sadd.s32 %s185, 1
      %p189 = scmp.eq.s32.totalorder %s20, 1
      %p190 = scmp.ne.s32.totalorder %s185, %s187
      %p191 = scmp.eq.s32.totalorder %s20, 0
      %p192 = por %p190, %p191
      %p193 = scmp.ne.s32.totalorder %s185, %s187
      %p194 = scmp.eq.s32.totalorder %s25, 1
      %p195 = por %p193, %p194
      %p196 = scmp.ne.s32.totalorder %s187, %s188
      %p197 = scmp.eq.s32.totalorder %s25, 0
      %p198 = por %p196, %p197
      %p199 = scmp.ne.s32.totalorder %s187, %s188
      %p200 = scmp.eq.s32.totalorder %s26, 1
      %p201 = por %p199, %p200
      %p203 = scmp.ne.s32.totalorder %s188, %s202
      %p204 = scmp.eq.s32.totalorder %s26, 0
      %p205 = por %p203, %p204
      %s207 = sadd.s32 %s206, 1
      %p210 = scmp.eq.s32.totalorder %s20, 1
      %p211 = scmp.ne.s32.totalorder %s206, %s208
      %p212 = scmp.eq.s32.totalorder %s20, 0
      %p213 = por %p211, %p212
      %p214 = scmp.ne.s32.totalorder %s206, %s208
      %p215 = scmp.eq.s32.totalorder %s25, 1
      %p216 = por %p214, %p215
      %p217 = scmp.ne.s32.totalorder %s208, %s209
      %p218 = scmp.eq.s32.totalorder %s25, 0
      %p219 = por %p217, %p218
      %p220 = scmp.ne.s32.totalorder %s208, %s209
      %p221 = scmp.eq.s32.totalorder %s26, 1
      %p222 = por %p220, %p221
      %p224 = scmp.ne.s32.totalorder %s209, %s223
      %p225 = scmp.eq.s32.totalorder %s26, 0
      %p226 = por %p224, %p225
      %s228 = sadd.s32 %s227, 1
      %p231 = scmp.eq.s32.totalorder %s20, 1
      %p232 = scmp.ne.s32.totalorder %s227, %s229
      %p233 = scmp.eq.s32.totalorder %s20, 0
      %p234 = por %p232, %p233
      %p235 = scmp.ne.s32.totalorder %s227, %s229
      %p236 = scmp.eq.s32.totalorder %s25, 1
      %p237 = por %p235, %p236
      %p238 = scmp.ne.s32.totalorder %s229, %s230
      %p239 = scmp.eq.s32.totalorder %s25, 0
      %p240 = por %p238, %p239
      %p241 = scmp.ne.s32.totalorder %s229, %s230
      %p242 = scmp.eq.s32.totalorder %s26, 1
      %p243 = por %p241, %p242
      %p245 = scmp.ne.s32.totalorder %s230, %s244
      %p246 = scmp.eq.s32.totalorder %s26, 0
      %p247 = por %p245, %p246
      %s249 = sadd.s32 %s248, 1
      %p252 = scmp.eq.s32.totalorder %s20, 1
      %p253 = scmp.ne.s32.totalorder %s248, %s250
      %p254 = scmp.eq.s32.totalorder %s20, 0
      %p255 = por %p253, %p254
      %p256 = scmp.ne.s32.totalorder %s248, %s250
      %p257 = scmp.eq.s32.totalorder %s25, 1
      %p258 = por %p256, %p257
      %p259 = scmp.ne.s32.totalorder %s250, %s251
      %p260 = scmp.eq.s32.totalorder %s25, 0
      %p261 = por %p259, %p260
      %p262 = scmp.ne.s32.totalorder %s250, %s251
      %p263 = scmp.eq.s32.totalorder %s26, 1
      %p264 = por %p262, %p263
      %p266 = scmp.ne.s32.totalorder %s251, %s265
      %p267 = scmp.eq.s32.totalorder %s26, 0
      %p268 = por %p266, %p267
      %s269 = ssub.s32 %s20, %s27
      %p270 = scmp.eq.s32.totalorder %s269, 0
      %s272 = sadd.s32 %s271, 1
      %s273 = scalar_select %p270, %s271, %s272
      %p276 = pneg %p270
      %p277 = scmp.eq.s32.totalorder %s20, 1
      %p278 = por %p276, %p277
      %p279 = scmp.ne.s32.totalorder %s271, %s274
      %p280 = scmp.eq.s32.totalorder %s20, 0
      %p281 = por %p279, %p280
      %p282 = scmp.ne.s32.totalorder %s271, %s274
      %p283 = scmp.eq.s32.totalorder %s25, 1
      %p284 = por %p282, %p283
      %p285 = scmp.ne.s32.totalorder %s274, %s275
      %p286 = scmp.eq.s32.totalorder %s25, 0
      %p287 = por %p285, %p286
      %p288 = scmp.ne.s32.totalorder %s274, %s275
      %p289 = scmp.eq.s32.totalorder %s26, 1
      %p290 = por %p288, %p289
      %p292 = scmp.ne.s32.totalorder %s275, %s291
      %p293 = scmp.eq.s32.totalorder %s26, 0
      %p294 = por %p292, %p293
      %p295 = scmp.le.s32.totalorder 1, %s20
      %p296 = scmp.lt.s32.totalorder %s20, 3
      %p297 = pnand %p295, %p296
      %p298 = pneg %p297
      // Predicated region
      $region9: #{tpu_custom_call.1} parent=5 // pred_check
        _
      $region10: #{tpu_custom_call.1} parent=5 // pred_check_branch
        %300 = sbr.rel (%p297) target = $region12
      $region11: #{tpu_custom_call.1} parent=5 // pred_region
        %s301 = ssub.s32 %s20, 1
        // Predicated region
        $region13: #{tpu_custom_call.1} parent=11 // pred_check
          %p302 = pneg %p93
        $region14: #{tpu_custom_call.1} parent=11 // pred_check_branch
          %304 = sbr.rel (%p302) target = $region16
        $region15: #{tpu_custom_call.1} parent=11 // pred_region
          _
        $region16: #{tpu_custom_call.1} parent=11 // pred_fallthru
          _
        // Predicated region
        $region17: #{tpu_custom_call.1} parent=11 // pred_check
          %p305 = pneg %p114
        $region18: #{tpu_custom_call.1} parent=11 // pred_check_branch
          %307 = sbr.rel (%p305) target = $region20
        $region19: #{tpu_custom_call.1} parent=11 // pred_region
          _
        $region20: #{tpu_custom_call.1} parent=11 // pred_fallthru
          _
        // Predicated region
        $region21: #{tpu_custom_call.1} parent=11 // pred_check
          %p308 = pneg %p135
        $region22: #{tpu_custom_call.1} parent=11 // pred_check_branch
          %310 = sbr.rel (%p308) target = $region24
        $region23: #{tpu_custom_call.1} parent=11 // pred_region
          _
        $region24: #{tpu_custom_call.1} parent=11 // pred_fallthru
          _
        // Predicated region
        $region25: #{tpu_custom_call.1} parent=11 // pred_check
          %p311 = pneg %p156
        $region26: #{tpu_custom_call.1} parent=11 // pred_check_branch
          %313 = sbr.rel (%p311) target = $region28
        $region27: #{tpu_custom_call.1} parent=11 // pred_region
          _
        $region28: #{tpu_custom_call.1} parent=11 // pred_fallthru
          _
        // Predicated region
        $region29: #{tpu_custom_call.1} parent=11 // pred_check
          %p314 = pneg %p177
        $region30: #{tpu_custom_call.1} parent=11 // pred_check_branch
          %316 = sbr.rel (%p314) target = $region32
        $region31: #{tpu_custom_call.1} parent=11 // pred_region
          _
        $region32: #{tpu_custom_call.1} parent=11 // pred_fallthru
          _
        // Predicated region
        $region33: #{tpu_custom_call.1} parent=11 // pred_check
          %p317 = pneg %p198
        $region34: #{tpu_custom_call.1} parent=11 // pred_check_branch
          %319 = sbr.rel (%p317) target = $region36
        $region35: #{tpu_custom_call.1} parent=11 // pred_region
          _
        $region36: #{tpu_custom_call.1} parent=11 // pred_fallthru
          _
        // Predicated region
        $region37: #{tpu_custom_call.1} parent=11 // pred_check
          %p320 = pneg %p219
        $region38: #{tpu_custom_call.1} parent=11 // pred_check_branch
          %322 = sbr.rel (%p320) target = $region40
        $region39: #{tpu_custom_call.1} parent=11 // pred_region
          _
        $region40: #{tpu_custom_call.1} parent=11 // pred_fallthru
          _
        // Predicated region
        $region41: #{tpu_custom_call.1} parent=11 // pred_check
          %p323 = pneg %p240
        $region42: #{tpu_custom_call.1} parent=11 // pred_check_branch
          %325 = sbr.rel (%p323) target = $region44
        $region43: #{tpu_custom_call.1} parent=11 // pred_region
          _
        $region44: #{tpu_custom_call.1} parent=11 // pred_fallthru
          _
        // Predicated region
        $region45: #{tpu_custom_call.1} parent=11 // pred_check
          %p326 = pneg %p261
        $region46: #{tpu_custom_call.1} parent=11 // pred_check_branch
          %328 = sbr.rel (%p326) target = $region48
        $region47: #{tpu_custom_call.1} parent=11 // pred_region
          _
        $region48: #{tpu_custom_call.1} parent=11 // pred_fallthru
          _
      $region12: #{tpu_custom_call.1} parent=5 // pred_fallthru
        _
      %p329 = scmp.lt.s32.totalorder %s20, 2
      // Predicated region
      $region49: #{tpu_custom_call.1} parent=5 // pred_check
        %p330 = pneg %p329
      $region50: #{tpu_custom_call.1} parent=5 // pred_check_branch
        %332 = sbr.rel (%p330) target = $region52
      $region51: #{tpu_custom_call.1} parent=5 // pred_region
        // Predicated region
        $region53: #{tpu_custom_call.1} parent=51 // pred_check
          %p333 = pneg %p40
        $region54: #{tpu_custom_call.1} parent=51 // pred_check_branch
          %335 = sbr.rel (%p333) target = $region56
        $region55: #{tpu_custom_call.1} parent=51 // pred_region
          %p336 = scmp.lt.s32.totalorder %s20, 1
          %s337 = scalar_select %p336, %s20, 1
          %s338 = smul.addr %s337, 8
          %s339 = scalar_lea.vmem %s0, %s338
        $region56: #{tpu_custom_call.1} parent=51 // pred_fallthru
          _
        // Predicated region
        $region57: #{tpu_custom_call.1} parent=51 // pred_check
          %p340 = pneg %p66
        $region58: #{tpu_custom_call.1} parent=51 // pred_check_branch
          %342 = sbr.rel (%p340) target = $region60
        $region59: #{tpu_custom_call.1} parent=51 // pred_region
          %p343 = scmp.lt.s32.totalorder %s20, 1
          %s344 = scalar_select %p343, %s20, 1
          %s345 = smul.addr %s344, 8
          %s346 = scalar_lea.vmem %s1, %s345
        $region60: #{tpu_custom_call.1} parent=51 // pred_fallthru
          _
      $region52: #{tpu_custom_call.1} parent=5 // pred_fallthru
        _
      %p347 = scmp.le.s32.totalorder 1, %s20
      %p348 = scmp.lt.s32.totalorder %s20, 3
      %p349 = pnand %p347, %p348
      %p350 = pneg %p349
      // Predicated region
      $region61: #{tpu_custom_call.1} parent=5 // pred_check
        _
      $region62: #{tpu_custom_call.1} parent=5 // pred_check_branch
        %352 = sbr.rel (%p349) target = $region64
      $region63: #{tpu_custom_call.1} parent=5 // pred_region
        %s353 = ssub.s32 %s20, 1
        %p354 = scmp.lt.s32.totalorder %s25, 1
        %s355 = scalar_select %p354, %s25, 1
        %s356 = smul.addr %s355, 8
        %s357 = scalar_lea.vmem %s0, %s356
        %p358 = pneg %p46
        %p359 = pneg %p43
        %p360 = scmp.lt.s32.totalorder %s25, 1
        %s361 = scalar_select %p360, %s25, 1
        %s362 = smul.addr %s361, 8
        %s363 = scalar_lea.vmem %s1, %s362
        %p364 = pneg %p72
        %p365 = pneg %p69
        %p366 = pneg %p93
        %p367 = pneg %p90
        %p368 = pneg %p114
        %p369 = pneg %p111
        %p370 = pneg %p135
        %p371 = pneg %p132
        %p372 = pneg %p156
        %p373 = pneg %p153
        %p374 = pneg %p177
        %p375 = pneg %p174
        %p376 = pneg %p198
        %p377 = pneg %p195
        %p378 = pneg %p219
        %p379 = pneg %p216
        %p380 = pneg %p240
        %p381 = pneg %p237
        %p382 = pneg %p261
        %p383 = pneg %p258
        %p384 = pneg %p287
        %p385 = pneg %p284
        %s386 = sand.u32 %s274, 1
        %s387 = scalar_lea.sflag [#allocation3], %s386
        %s388 = sand.u32 %s274, 1
        %s389 = smul.addr %s388, 8
        %s390 = scalar_lea.vmem [#allocation2], %s389
        %p391 = scmp.lt.s32.totalorder %s25, 1
        %s392 = scalar_select %p391, %s25, 1
        %s393 = smul.addr %s392, 8
        %s394 = scalar_lea.vmem %s0, %s393
        %p395 = scmp.lt.s32.totalorder %s25, 1
        %s396 = scalar_select %p395, %s25, 1
        %s397 = smul.addr %s396, 8
        %s398 = scalar_lea.vmem %s1, %s397
        %v399 = vld [vmem:[%s394] sm:$0xff]
        %v400 = vld [vmem:[%s398] sm:$0xff]
        %v401 = vld [vmem:[%s2] sm:$0xff]
        %v402 = vld [vmem:[%s2 + $0x8] sm:$0xff]
        %v403 = vld [vmem:[%s2 + $0x10] sm:$0xff]
        %v404 = vld [vmem:[%s2 + $0x18] sm:$0xff]
        %v405 = vld [vmem:[%s2 + $0x20] sm:$0xff]
        %v406 = vld [vmem:[%s2 + $0x28] sm:$0xff]
        %v407 = vld [vmem:[%s2 + $0x30] sm:$0xff]
        %v408 = vld [vmem:[%s2 + $0x38] sm:$0xff]
        %v409 = vld [vmem:[%s3] sm:$0xff]
        %v410 = vld [vmem:[%s3 + $0x8] sm:$0xff]
        %v411 = vld [vmem:[%s3 + $0x10] sm:$0xff]
        %v412 = vld [vmem:[%s3 + $0x18] sm:$0xff]
        %v413 = vld [vmem:[%s4] sm:$0x1]
        %v414 = vld [vmem:[%s5] sm:$0xff]
        %v415 = vld [vmem:[%s5 + $0x8] sm:$0xff]
        %v416 = vld [vmem:[%s5 + $0x10] sm:$0xff]
        %v417 = vld [vmem:[%s5 + $0x18] sm:$0xff]
        %v418 = vld [vmem:[%s5 + $0x20] sm:$0xff]
        %v419 = vld [vmem:[%s5 + $0x28] sm:$0xff]
        %v420 = vld [vmem:[%s5 + $0x30] sm:$0xff]
        %v421 = vld [vmem:[%s5 + $0x38] sm:$0xff]
        %v422 = vld [vmem:[%s6] sm:$0xff]
        %v423 = vld [vmem:[%s6 + $0x8] sm:$0xff]
        %v424 = vld [vmem:[%s6 + $0x10] sm:$0xff]
        %v425 = vld [vmem:[%s6 + $0x18] sm:$0xff]
        %v426 = vld [vmem:[%s7] sm:$0x1]
        %v427 = vld [vmem:[%s8] sm:$0xff]
        %v428 = vld [vmem:[%s8 + $0x8] sm:$0xff]
        %v429 = vld [vmem:[%s8 + $0x10] sm:$0xff]
        %v430 = vld [vmem:[%s8 + $0x18] sm:$0xff]
        %v431 = vld [vmem:[%s8 + $0x20] sm:$0xff]
        %v432 = vld [vmem:[%s8 + $0x28] sm:$0xff]
        %v433 = vld [vmem:[%s8 + $0x30] sm:$0xff]
        %v434 = vld [vmem:[%s8 + $0x38] sm:$0xff]
        %v435 = vld [vmem:[%s9] sm:$0xff]
        %v436 = vld [vmem:[%s9 + $0x8] sm:$0xff]
        %v437 = vld [vmem:[%s9 + $0x10] sm:$0xff]
        %v438 = vld [vmem:[%s9 + $0x18] sm:$0xff]
        %v439 = vld [vmem:[%s10] sm:$0x1]
        %vm440 = vcmask 64512
        %v442 = vsel %vm440, %v399, 0
        %444 = vmatprep.subr.mxu0 0.0
        %v445 = vand.u32 %v400, 4294901760
        %446 = vmatpush1.msra.mxu0 %v445
        %447 = vmatprep.subr.mxu0 0.0
        %448 = vmatpush1.msra.mxu0 0.0
        %449 = vmatprep.subr.mxu0 0.0
        %450 = vmatpush1.msra.mxu0 0.0
        %451 = vmatprep.subr.mxu0 0.0
        %452 = vmatpush1.msra.mxu0 0.0
        %453 = vmatprep.subr.mxu0 0.0
        %454 = vmatpush1.msra.mxu0 0.0
        %455 = vmatprep.subr.mxu0 0.0
        %456 = vmatpush1.msra.mxu0 0.0
        %457 = vmatprep.subr.mxu0 0.0
        %458 = vmatpush1.msra.mxu0 0.0
        %459 = vmatprep.subr.mxu0 0.0
        %460 = vmatpush1.msra.mxu0 0.0
        %461 = vmatprep.subr.mxu0 0.0
        %462 = vmatpush1.msra.mxu0 0.0
        %463 = vmatprep.subr.mxu0 0.0
        %464 = vmatpush1.msra.mxu0 0.0
        %465 = vmatprep.subr.mxu0 0.0
        %466 = vmatpush1.msra.mxu0 0.0
        %467 = vmatprep.subr.mxu0 0.0
        %468 = vmatpush1.msra.mxu0 0.0
        %469 = vmatprep.subr.mxu0 0.0
        %470 = vmatpush1.msra.mxu0 0.0
        %471 = vmatprep.subr.mxu0 0.0
        %472 = vmatpush1.msra.mxu0 0.0
        %473 = vmatprep.subr.mxu0 0.0
        %474 = vmatpush1.msra.mxu0 0.0
        %475 = vmatprep.subr.mxu0 0.0
        %476 = vmatpush1.msra.mxu0 0.0
        %477 = vmatprep.subr.mxu0 0.0
        %478 = vmatpush1.msra.mxu0 0.0
        %479 = vmatprep.subr.mxu0 0.0
        %480 = vmatpush1.msra.mxu0 0.0
        %481 = vmatprep.subr.mxu0 0.0
        %482 = vmatpush1.msra.mxu0 0.0
        %483 = vmatprep.subr.mxu0 0.0
        %484 = vmatpush1.msra.mxu0 0.0
        %485 = vmatprep.subr.mxu0 0.0
        %486 = vmatpush1.msra.mxu0 0.0
        %487 = vmatprep.subr.mxu0 0.0
        %488 = vmatpush1.msra.mxu0 0.0
        %489 = vmatprep.subr.mxu0 0.0
        %490 = vmatpush1.msra.mxu0 0.0
        %491 = vmatprep.subr.mxu0 0.0
        %492 = vmatpush1.msra.mxu0 0.0
        %493 = vmatprep.subr.mxu0 0.0
        %494 = vmatpush1.msra.mxu0 0.0
        %495 = vmatprep.subr.mxu0 0.0
        %496 = vmatpush1.msra.mxu0 0.0
        %497 = vmatprep.subr.mxu0 0.0
        %498 = vmatpush1.msra.mxu0 0.0
        %499 = vmatprep.subr.mxu0 0.0
        %500 = vmatpush1.msra.mxu0 0.0
        %501 = vmatprep.subr.mxu0 0.0
        %502 = vmatpush1.msra.mxu0 0.0
        %503 = vmatprep.subr.mxu0 0.0
        %504 = vmatpush1.msra.mxu0 0.0
        %505 = vmatprep.subr.mxu0 0.0
        %506 = vmatpush1.msra.mxu0 0.0
        %507 = vmatprep.subr.mxu0 0.0
        %508 = vmatpush1.msra.mxu0 0.0
        %509 = vmatprep.mubr.f32.mxu0 0.0
        %v510 = vand.u32 %v442, 4294901760
        %v511 = vsub.f32 %v442, %v510
        %v512 = vand.u32 %v511, 4294901760
        %v513 = vsub.f32 %v511, %v512
        %v514 = vand.u32 %v513, 4294901760
        %515 = vmatmul.mubr.f32.gmra.mrb[0].mxu0 %v514
        %v516 = vpop.f32.mrb[0].mxu0
        %v517 = vadd.f32 0.0, %v516
        %v518 = vpop.f32.mrb[0].mxu0
        %519 = vdwg.mxu0
        %520 = vmatprep.subr.mxu0 0.0
        %v521 = vand.u32 %v400, 4294901760
        %v522 = vsub.f32 %v400, %v521
        %v523 = vand.u32 %v522, 4294901760
        %v524 = vsub.f32 %v522, %v523
        %v525 = vand.u32 %v524, 4294901760
        %526 = vmatpush1.msra.mxu0 %v525
        %527 = vmatprep.subr.mxu0 0.0
        %528 = vmatpush1.msra.mxu0 0.0
        %529 = vmatprep.subr.mxu0 0.0
        %530 = vmatpush1.msra.mxu0 0.0
        %531 = vmatprep.subr.mxu0 0.0
        %532 = vmatpush1.msra.mxu0 0.0
        %533 = vmatprep.subr.mxu0 0.0
        %534 = vmatpush1.msra.mxu0 0.0
        %535 = vmatprep.subr.mxu0 0.0
        %536 = vmatpush1.msra.mxu0 0.0
        %537 = vmatprep.subr.mxu0 0.0
        %538 = vmatpush1.msra.mxu0 0.0
        %539 = vmatprep.subr.mxu0 0.0
        %540 = vmatpush1.msra.mxu0 0.0
        %541 = vmatprep.subr.mxu0 0.0
        %542 = vmatpush1.msra.mxu0 0.0
        %543 = vmatprep.subr.mxu0 0.0
        %544 = vmatpush1.msra.mxu0 0.0
        %545 = vmatprep.subr.mxu0 0.0
        %546 = vmatpush1.msra.mxu0 0.0
        %547 = vmatprep.subr.mxu0 0.0
        %548 = vmatpush1.msra.mxu0 0.0
        %549 = vmatprep.subr.mxu0 0.0
        %550 = vmatpush1.msra.mxu0 0.0
        %551 = vmatprep.subr.mxu0 0.0
        %552 = vmatpush1.msra.mxu0 0.0
        %553 = vmatprep.subr.mxu0 0.0
        %554 = vmatpush1.msra.mxu0 0.0
        %555 = vmatprep.subr.mxu0 0.0
        %556 = vmatpush1.msra.mxu0 0.0
        %557 = vmatprep.subr.mxu0 0.0
        %558 = vmatpush1.msra.mxu0 0.0
        %559 = vmatprep.subr.mxu0 0.0
        %560 = vmatpush1.msra.mxu0 0.0
        %561 = vmatprep.subr.mxu0 0.0
        %562 = vmatpush1.msra.mxu0 0.0
        %563 = vmatprep.subr.mxu0 0.0
        %564 = vmatpush1.msra.mxu0 0.0
        %565 = vmatprep.subr.mxu0 0.0
        %566 = vmatpush1.msra.mxu0 0.0
        %567 = vmatprep.subr.mxu0 0.0
        %568 = vmatpush1.msra.mxu0 0.0
        %569 = vmatprep.subr.mxu0 0.0
        %570 = vmatpush1.msra.mxu0 0.0
        %571 = vmatprep.subr.mxu0 0.0
        %572 = vmatpush1.msra.mxu0 0.0
        %573 = vmatprep.subr.mxu0 0.0
        %574 = vmatpush1.msra.mxu0 0.0
        %575 = vmatprep.subr.mxu0 0.0
        %576 = vmatpush1.msra.mxu0 0.0
        %577 = vmatprep.subr.mxu0 0.0
        %578 = vmatpush1.msra.mxu0 0.0
        %579 = vmatprep.subr.mxu0 0.0
        %580 = vmatpush1.msra.mxu0 0.0
        %581 = vmatprep.subr.mxu0 0.0
        %582 = vmatpush1.msra.mxu0 0.0
        %583 = vmatprep.subr.mxu0 0.0
        %584 = vmatpush1.msra.mxu0 0.0
        %585 = vmatprep.subr.mxu0 0.0
        %586 = vmatpush1.msra.mxu0 0.0
        %587 = vmatprep.subr.mxu0 0.0
        %588 = vmatpush1.msra.mxu0 0.0
        %589 = vmatprep.mubr.f32.mxu0 0.0
        %v590 = vand.u32 %v442, 4294901760
        %591 = vmatmul.mubr.f32.gmra.mrb[0].mxu0 %v590
        %v592 = vpop.f32.mrb[0].mxu0
        %v593 = vadd.f32 %v517, %v592
        %v594 = vpop.f32.mrb[0].mxu0
        %595 = vdwg.mxu0
        %596 = vmatprep.subr.mxu0 0.0
        %v597 = vand.u32 %v400, 4294901760
        %v598 = vsub.f32 %v400, %v597
        %599 = vmatpush1.msra.mxu0 %v598
        %600 = vmatprep.subr.mxu0 0.0
        %601 = vmatpush1.msra.mxu0 0.0
        %602 = vmatprep.subr.mxu0 0.0
        %603 = vmatpush1.msra.mxu0 0.0
        %604 = vmatprep.subr.mxu0 0.0
        %605 = vmatpush1.msra.mxu0 0.0
        %606 = vmatprep.subr.mxu0 0.0
        %607 = vmatpush1.msra.mxu0 0.0
        %608 = vmatprep.subr.mxu0 0.0
        %609 = vmatpush1.msra.mxu0 0.0
        %610 = vmatprep.subr.mxu0 0.0
        %611 = vmatpush1.msra.mxu0 0.0
        %612 = vmatprep.subr.mxu0 0.0
        %613 = vmatpush1.msra.mxu0 0.0
        %614 = vmatprep.subr.mxu0 0.0
        %615 = vmatpush1.msra.mxu0 0.0
        %616 = vmatprep.subr.mxu0 0.0
        %617 = vmatpush1.msra.mxu0 0.0
        %618 = vmatprep.subr.mxu0 0.0
        %619 = vmatpush1.msra.mxu0 0.0
        %620 = vmatprep.subr.mxu0 0.0
        %621 = vmatpush1.msra.mxu0 0.0
        %622 = vmatprep.subr.mxu0 0.0
        %623 = vmatpush1.msra.mxu0 0.0
        %624 = vmatprep.subr.mxu0 0.0
        %625 = vmatpush1.msra.mxu0 0.0
        %626 = vmatprep.subr.mxu0 0.0
        %627 = vmatpush1.msra.mxu0 0.0
        %628 = vmatprep.subr.mxu0 0.0
        %629 = vmatpush1.msra.mxu0 0.0
        %630 = vmatprep.subr.mxu0 0.0
        %631 = vmatpush1.msra.mxu0 0.0
        %632 = vmatprep.subr.mxu0 0.0
        %633 = vmatpush1.msra.mxu0 0.0
        %634 = vmatprep.subr.mxu0 0.0
        %635 = vmatpush1.msra.mxu0 0.0
        %636 = vmatprep.subr.mxu0 0.0
        %637 = vmatpush1.msra.mxu0 0.0
        %638 = vmatprep.subr.mxu0 0.0
        %639 = vmatpush1.msra.mxu0 0.0
        %640 = vmatprep.subr.mxu0 0.0
        %641 = vmatpush1.msra.mxu0 0.0
        %642 = vmatprep.subr.mxu0 0.0
        %643 = vmatpush1.msra.mxu0 0.0
        %644 = vmatprep.subr.mxu0 0.0
        %645 = vmatpush1.msra.mxu0 0.0
        %646 = vmatprep.subr.mxu0 0.0
        %647 = vmatpush1.msra.mxu0 0.0
        %648 = vmatprep.subr.mxu0 0.0
        %649 = vmatpush1.msra.mxu0 0.0
        %650 = vmatprep.subr.mxu0 0.0
        %651 = vmatpush1.msra.mxu0 0.0
        %652 = vmatprep.subr.mxu0 0.0
        %653 = vmatpush1.msra.mxu0 0.0
        %654 = vmatprep.subr.mxu0 0.0
        %655 = vmatpush1.msra.mxu0 0.0
        %656 = vmatprep.subr.mxu0 0.0
        %657 = vmatpush1.msra.mxu0 0.0
        %658 = vmatprep.subr.mxu0 0.0
        %659 = vmatpush1.msra.mxu0 0.0
        %660 = vmatprep.subr.mxu0 0.0
        %661 = vmatpush1.msra.mxu0 0.0
        %662 = vmatprep.mubr.f32.mxu0 0.0
        %v663 = vand.u32 %v442, 4294901760
        %v664 = vsub.f32 %v442, %v663
        %665 = vmatmul.mubr.f32.gmra.mrb[0].mxu0 %v664
        %v666 = vpop.f32.mrb[0].mxu0
        %v667 = vadd.f32 %v593, %v666
        %v668 = vpop.f32.mrb[0].mxu0
        %669 = vdwg.mxu0
        %670 = vmatprep.subr.mxu0 0.0
        %v671 = vand.u32 %v400, 4294901760
        %672 = vmatpush1.msra.mxu0 %v671
        %673 = vmatprep.subr.mxu0 0.0
        %674 = vmatpush1.msra.mxu0 0.0
        %675 = vmatprep.subr.mxu0 0.0
        %676 = vmatpush1.msra.mxu0 0.0
        %677 = vmatprep.subr.mxu0 0.0
        %678 = vmatpush1.msra.mxu0 0.0
        %679 = vmatprep.subr.mxu0 0.0
        %680 = vmatpush1.msra.mxu0 0.0
        %681 = vmatprep.subr.mxu0 0.0
        %682 = vmatpush1.msra.mxu0 0.0
        %683 = vmatprep.subr.mxu0 0.0
        %684 = vmatpush1.msra.mxu0 0.0
        %685 = vmatprep.subr.mxu0 0.0
        %686 = vmatpush1.msra.mxu0 0.0
        %687 = vmatprep.subr.mxu0 0.0
        %688 = vmatpush1.msra.mxu0 0.0
        %689 = vmatprep.subr.mxu0 0.0
        %690 = vmatpush1.msra.mxu0 0.0
        %691 = vmatprep.subr.mxu0 0.0
        %692 = vmatpush1.msra.mxu0 0.0
        %693 = vmatprep.subr.mxu0 0.0
        %694 = vmatpush1.msra.mxu0 0.0
        %695 = vmatprep.subr.mxu0 0.0
        %696 = vmatpush1.msra.mxu0 0.0
        %697 = vmatprep.subr.mxu0 0.0
        %698 = vmatpush1.msra.mxu0 0.0
        %699 = vmatprep.subr.mxu0 0.0
        %700 = vmatpush1.msra.mxu0 0.0
        %701 = vmatprep.subr.mxu0 0.0
        %702 = vmatpush1.msra.mxu0 0.0
        %703 = vmatprep.subr.mxu0 0.0
        %704 = vmatpush1.msra.mxu0 0.0
        %705 = vmatprep.subr.mxu0 0.0
        %706 = vmatpush1.msra.mxu0 0.0
        %707 = vmatprep.subr.mxu0 0.0
        %708 = vmatpush1.msra.mxu0 0.0
        %709 = vmatprep.subr.mxu0 0.0
        %710 = vmatpush1.msra.mxu0 0.0
        %711 = vmatprep.subr.mxu0 0.0
        %712 = vmatpush1.msra.mxu0 0.0
        %713 = vmatprep.subr.mxu0 0.0
        %714 = vmatpush1.msra.mxu0 0.0
        %715 = vmatprep.subr.mxu0 0.0
        %716 = vmatpush1.msra.mxu0 0.0
        %717 = vmatprep.subr.mxu0 0.0
        %718 = vmatpush1.msra.mxu0 0.0
        %719 = vmatprep.subr.mxu0 0.0
        %720 = vmatpush1.msra.mxu0 0.0
        %721 = vmatprep.subr.mxu0 0.0
        %722 = vmatpush1.msra.mxu0 0.0
        %723 = vmatprep.subr.mxu0 0.0
        %724 = vmatpush1.msra.mxu0 0.0
        %725 = vmatprep.subr.mxu0 0.0
        %726 = vmatpush1.msra.mxu0 0.0
        %727 = vmatprep.subr.mxu0 0.0
        %728 = vmatpush1.msra.mxu0 0.0
        %729 = vmatprep.subr.mxu0 0.0
        %730 = vmatpush1.msra.mxu0 0.0
        %731 = vmatprep.subr.mxu0 0.0
        %732 = vmatpush1.msra.mxu0 0.0
        %733 = vmatprep.subr.mxu0 0.0
        %734 = vmatpush1.msra.mxu0 0.0
        %735 = vmatprep.mubr.f32.mxu0 0.0
        %v736 = vand.u32 %v442, 4294901760
        %v737 = vsub.f32 %v442, %v736
        %v738 = vand.u32 %v737, 4294901760
        %739 = vmatmul.mubr.f32.gmra.mrb[0].mxu0 %v738
        %v740 = vpop.f32.mrb[0].mxu0
        %v741 = vadd.f32 %v667, %v740
        %v742 = vpop.f32.mrb[0].mxu0
        %743 = vdwg.mxu0
        %744 = vmatprep.subr.mxu0 0.0
        %v745 = vand.u32 %v400, 4294901760
        %v746 = vsub.f32 %v400, %v745
        %v747 = vand.u32 %v746, 4294901760
        %748 = vmatpush1.msra.mxu0 %v747
        %749 = vmatprep.subr.mxu0 0.0
        %750 = vmatpush1.msra.mxu0 0.0
        %751 = vmatprep.subr.mxu0 0.0
        %752 = vmatpush1.msra.mxu0 0.0
        %753 = vmatprep.subr.mxu0 0.0
        %754 = vmatpush1.msra.mxu0 0.0
        %755 = vmatprep.subr.mxu0 0.0
        %756 = vmatpush1.msra.mxu0 0.0
        %757 = vmatprep.subr.mxu0 0.0
        %758 = vmatpush1.msra.mxu0 0.0
        %759 = vmatprep.subr.mxu0 0.0
        %760 = vmatpush1.msra.mxu0 0.0
        %761 = vmatprep.subr.mxu0 0.0
        %762 = vmatpush1.msra.mxu0 0.0
        %763 = vmatprep.subr.mxu0 0.0
        %764 = vmatpush1.msra.mxu0 0.0
        %765 = vmatprep.subr.mxu0 0.0
        %766 = vmatpush1.msra.mxu0 0.0
        %767 = vmatprep.subr.mxu0 0.0
        %768 = vmatpush1.msra.mxu0 0.0
        %769 = vmatprep.subr.mxu0 0.0
        %770 = vmatpush1.msra.mxu0 0.0
        %771 = vmatprep.subr.mxu0 0.0
        %772 = vmatpush1.msra.mxu0 0.0
        %773 = vmatprep.subr.mxu0 0.0
        %774 = vmatpush1.msra.mxu0 0.0
        %775 = vmatprep.subr.mxu0 0.0
        %776 = vmatpush1.msra.mxu0 0.0
        %777 = vmatprep.subr.mxu0 0.0
        %778 = vmatpush1.msra.mxu0 0.0
        %779 = vmatprep.subr.mxu0 0.0
        %780 = vmatpush1.msra.mxu0 0.0
        %781 = vmatprep.subr.mxu0 0.0
        %782 = vmatpush1.msra.mxu0 0.0
        %783 = vmatprep.subr.mxu0 0.0
        %784 = vmatpush1.msra.mxu0 0.0
        %785 = vmatprep.subr.mxu0 0.0
        %786 = vmatpush1.msra.mxu0 0.0
        %787 = vmatprep.subr.mxu0 0.0
        %788 = vmatpush1.msra.mxu0 0.0
        %789 = vmatprep.subr.mxu0 0.0
        %790 = vmatpush1.msra.mxu0 0.0
        %791 = vmatprep.subr.mxu0 0.0
        %792 = vmatpush1.msra.mxu0 0.0
        %793 = vmatprep.subr.mxu0 0.0
        %794 = vmatpush1.msra.mxu0 0.0
        %795 = vmatprep.subr.mxu0 0.0
        %796 = vmatpush1.msra.mxu0 0.0
        %797 = vmatprep.subr.mxu0 0.0
        %798 = vmatpush1.msra.mxu0 0.0
        %799 = vmatprep.subr.mxu0 0.0
        %800 = vmatpush1.msra.mxu0 0.0
        %801 = vmatprep.subr.mxu0 0.0
        %802 = vmatpush1.msra.mxu0 0.0
        %803 = vmatprep.subr.mxu0 0.0
        %804 = vmatpush1.msra.mxu0 0.0
        %805 = vmatprep.subr.mxu0 0.0
        %806 = vmatpush1.msra.mxu0 0.0
        %807 = vmatprep.subr.mxu0 0.0
        %808 = vmatpush1.msra.mxu0 0.0
        %809 = vmatprep.subr.mxu0 0.0
        %810 = vmatpush1.msra.mxu0 0.0
        %811 = vmatprep.mubr.f32.mxu0 0.0
        %v812 = vand.u32 %v442, 4294901760
        %813 = vmatmul.mubr.f32.gmra.mrb[0].mxu0 %v812
        %v814 = vpop.f32.mrb[0].mxu0
        %v815 = vadd.f32 %v741, %v814
        %v816 = vpop.f32.mrb[0].mxu0
        %817 = vdwg.mxu0
        %818 = vmatprep.subr.mxu0 0.0
        %v819 = vand.u32 %v400, 4294901760
        %820 = vmatpush1.msra.mxu0 %v819
        %821 = vmatprep.subr.mxu0 0.0
        %822 = vmatpush1.msra.mxu0 0.0
        %823 = vmatprep.subr.mxu0 0.0
        %824 = vmatpush1.msra.mxu0 0.0
        %825 = vmatprep.subr.mxu0 0.0
        %826 = vmatpush1.msra.mxu0 0.0
        %827 = vmatprep.subr.mxu0 0.0
        %828 = vmatpush1.msra.mxu0 0.0
        %829 = vmatprep.subr.mxu0 0.0
        %830 = vmatpush1.msra.mxu0 0.0
        %831 = vmatprep.subr.mxu0 0.0
        %832 = vmatpush1.msra.mxu0 0.0
        %833 = vmatprep.subr.mxu0 0.0
        %834 = vmatpush1.msra.mxu0 0.0
        %835 = vmatprep.subr.mxu0 0.0
        %836 = vmatpush1.msra.mxu0 0.0
        %837 = vmatprep.subr.mxu0 0.0
        %838 = vmatpush1.msra.mxu0 0.0
        %839 = vmatprep.subr.mxu0 0.0
        %840 = vmatpush1.msra.mxu0 0.0
        %841 = vmatprep.subr.mxu0 0.0
        %842 = vmatpush1.msra.mxu0 0.0
        %843 = vmatprep.subr.mxu0 0.0
        %844 = vmatpush1.msra.mxu0 0.0
        %845 = vmatprep.subr.mxu0 0.0
        %846 = vmatpush1.msra.mxu0 0.0
        %847 = vmatprep.subr.mxu0 0.0
        %848 = vmatpush1.msra.mxu0 0.0
        %849 = vmatprep.subr.mxu0 0.0
        %850 = vmatpush1.msra.mxu0 0.0
        %851 = vmatprep.subr.mxu0 0.0
        %852 = vmatpush1.msra.mxu0 0.0
        %853 = vmatprep.subr.mxu0 0.0
        %854 = vmatpush1.msra.mxu0 0.0
        %855 = vmatprep.subr.mxu0 0.0
        %856 = vmatpush1.msra.mxu0 0.0
        %857 = vmatprep.subr.mxu0 0.0
        %858 = vmatpush1.msra.mxu0 0.0
        %859 = vmatprep.subr.mxu0 0.0
        %860 = vmatpush1.msra.mxu0 0.0
        %861 = vmatprep.subr.mxu0 0.0
        %862 = vmatpush1.msra.mxu0 0.0
        %863 = vmatprep.subr.mxu0 0.0
        %864 = vmatpush1.msra.mxu0 0.0
        %865 = vmatprep.subr.mxu0 0.0
        %866 = vmatpush1.msra.mxu0 0.0
        %867 = vmatprep.subr.mxu0 0.0
        %868 = vmatpush1.msra.mxu0 0.0
        %869 = vmatprep.subr.mxu0 0.0
        %870 = vmatpush1.msra.mxu0 0.0
        %871 = vmatprep.subr.mxu0 0.0
        %872 = vmatpush1.msra.mxu0 0.0
        %873 = vmatprep.subr.mxu0 0.0
        %874 = vmatpush1.msra.mxu0 0.0
        %875 = vmatprep.subr.mxu0 0.0
        %876 = vmatpush1.msra.mxu0 0.0
        %877 = vmatprep.subr.mxu0 0.0
        %878 = vmatpush1.msra.mxu0 0.0
        %879 = vmatprep.subr.mxu0 0.0
        %880 = vmatpush1.msra.mxu0 0.0
        %881 = vmatprep.subr.mxu0 0.0
        %882 = vmatpush1.msra.mxu0 0.0
        %883 = vmatprep.mubr.f32.mxu0 0.0
        %v884 = vand.u32 %v442, 4294901760
        %885 = vmatmul.mubr.f32.gmra.mrb[0].mxu0 %v884
        %v886 = vpop.f32.mrb[0].mxu0
        %v887 = vadd.f32 %v815, %v886
        %v888 = vpop.f32.mrb[0].mxu0
        %889 = vdwg.mxu0
        %890 = vxpose.xlu0.b32.start [1/16] %v399, 128
        %891 = vxpose.xlu0.b32.cont [2/16] 0.0, 128
        %892 = vxpose.xlu0.b32.cont [3/16] 0.0, 128
        %893 = vxpose.xlu0.b32.cont [4/16] 0.0, 128
        %894 = vxpose.xlu0.b32.cont [5/16] 0.0, 128
        %895 = vxpose.xlu0.b32.cont [6/16] 0.0, 128
        %896 = vxpose.xlu0.b32.cont [7/16] 0.0, 128
        %897 = vxpose.xlu0.b32.cont [8/16] 0.0, 128
        %898 = vxpose.xlu0.b32.cont [9/16] 0.0, 128
        %899 = vxpose.xlu0.b32.cont [10/16] 0.0, 128
        %900 = vxpose.xlu0.b32.cont [11/16] 0.0, 128
        %901 = vxpose.xlu0.b32.cont [12/16] 0.0, 128
        %902 = vxpose.xlu0.b32.cont [13/16] 0.0, 128
        %903 = vxpose.xlu0.b32.cont [14/16] 0.0, 128
        %904 = vxpose.xlu0.b32.cont [15/16] 0.0, 128
        %905 = vxpose.xlu0.b32.end [16/16] 0.0, 128
        %v906 = vpop.trf.xlu0
        %v907 = vpop.trf.xlu0
        %v908 = vpop.trf.xlu0
        %v909 = vpop.trf.xlu0
        %v910 = vpop.trf.xlu0
        %v911 = vpop.trf.xlu0
        %v912 = vpop.trf.xlu0
        %v913 = vpop.trf.xlu0
        %v914 = vpop.trf.xlu0
        %v915 = vpop.trf.xlu0
        %v916 = vpop.trf.xlu0
        %v917 = vpop.trf.xlu0
        %v918 = vpop.trf.xlu0
        %v919 = vpop.trf.xlu0
        %v920 = vpop.trf.xlu0
        %v921 = vpop.trf.xlu0
        %v923 = vsel %vm440, %v906, 0
        %925 = vmatprep.subr.mxu0 0.0
        %v926 = vand.u32 %v400, 4294901760
        %927 = vmatpush1.msra.mxu0 %v926
        %928 = vmatprep.subr.mxu0 0.0
        %929 = vmatpush1.msra.mxu0 0.0
        %930 = vmatprep.subr.mxu0 0.0
        %931 = vmatpush1.msra.mxu0 0.0
        %932 = vmatprep.subr.mxu0 0.0
        %933 = vmatpush1.msra.mxu0 0.0
        %934 = vmatprep.subr.mxu0 0.0
        %935 = vmatpush1.msra.mxu0 0.0
        %936 = vmatprep.subr.mxu0 0.0
        %937 = vmatpush1.msra.mxu0 0.0
        %938 = vmatprep.subr.mxu0 0.0
        %939 = vmatpush1.msra.mxu0 0.0
        %940 = vmatprep.subr.mxu0 0.0
        %941 = vmatpush1.msra.mxu0 0.0
        %942 = vmatprep.subr.mxu0 0.0
        %943 = vmatpush1.msra.mxu0 0.0
        %944 = vmatprep.subr.mxu0 0.0
        %945 = vmatpush1.msra.mxu0 0.0
        %946 = vmatprep.subr.mxu0 0.0
        %947 = vmatpush1.msra.mxu0 0.0
        %948 = vmatprep.subr.mxu0 0.0
        %949 = vmatpush1.msra.mxu0 0.0
        %950 = vmatprep.subr.mxu0 0.0
        %951 = vmatpush1.msra.mxu0 0.0
        %952 = vmatprep.subr.mxu0 0.0
        %953 = vmatpush1.msra.mxu0 0.0
        %954 = vmatprep.subr.mxu0 0.0
        %955 = vmatpush1.msra.mxu0 0.0
        %956 = vmatprep.subr.mxu0 0.0
        %957 = vmatpush1.msra.mxu0 0.0
        %958 = vmatprep.subr.mxu0 0.0
        %959 = vmatpush1.msra.mxu0 0.0
        %960 = vmatprep.subr.mxu0 0.0
        %961 = vmatpush1.msra.mxu0 0.0
        %962 = vmatprep.subr.mxu0 0.0
        %963 = vmatpush1.msra.mxu0 0.0
        %964 = vmatprep.subr.mxu0 0.0
        %965 = vmatpush1.msra.mxu0 0.0
        %966 = vmatprep.subr.mxu0 0.0
        %967 = vmatpush1.msra.mxu0 0.0
        %968 = vmatprep.subr.mxu0 0.0
        %969 = vmatpush1.msra.mxu0 0.0
        %970 = vmatprep.subr.mxu0 0.0
        %971 = vmatpush1.msra.mxu0 0.0
        %972 = vmatprep.subr.mxu0 0.0
        %973 = vmatpush1.msra.mxu0 0.0
        %974 = vmatprep.subr.mxu0 0.0
        %975 = vmatpush1.msra.mxu0 0.0
        %976 = vmatprep.subr.mxu0 0.0
        %977 = vmatpush1.msra.mxu0 0.0
        %978 = vmatprep.subr.mxu0 0.0
        %979 = vmatpush1.msra.mxu0 0.0
        %980 = vmatprep.subr.mxu0 0.0
        %981 = vmatpush1.msra.mxu0 0.0
        %982 = vmatprep.subr.mxu0 0.0
        %983 = vmatpush1.msra.mxu0 0.0
        %984 = vmatprep.subr.mxu0 0.0
        %985 = vmatpush1.msra.mxu0 0.0
        %986 = vmatprep.subr.mxu0 0.0
        %987 = vmatpush1.msra.mxu0 0.0
        %988 = vmatprep.subr.mxu0 0.0
        %989 = vmatpush1.msra.mxu0 0.0
        %990 = vmatprep.mubr.f32.mxu0 0.0
        %v991 = vand.u32 %v923, 4294901760
        %v992 = vsub.f32 %v923, %v991
        %v993 = vand.u32 %v992, 4294901760
        %v994 = vsub.f32 %v992, %v993
        %v995 = vand.u32 %v994, 4294901760
        %996 = vmatmul.mubr.f32.gmra.mrb[0].mxu0 %v995
        %v997 = vpop.f32.mrb[0].mxu0
        %v998 = vadd.f32 0.0, %v997
        %v999 = vpop.f32.mrb[0].mxu0
        %1000 = vdwg.mxu0
        %1001 = vmatprep.subr.mxu0 0.0
        %v1002 = vand.u32 %v400, 4294901760
        %v1003 = vsub.f32 %v400, %v1002
        %v1004 = vand.u32 %v1003, 4294901760
        %v1005 = vsub.f32 %v1003, %v1004
        %v1006 = vand.u32 %v1005, 4294901760
        %1007 = vmatpush1.msra.mxu0 %v1006
        %1008 = vmatprep.subr.mxu0 0.0
        %1009 = vmatpush1.msra.mxu0 0.0
        %1010 = vmatprep.subr.mxu0 0.0
        %1011 = vmatpush1.msra.mxu0 0.0
        %1012 = vmatprep.subr.mxu0 0.0
        %1013 = vmatpush1.msra.mxu0 0.0
        %1014 = vmatprep.subr.mxu0 0.0
        %1015 = vmatpush1.msra.mxu0 0.0
        %1016 = vmatprep.subr.mxu0 0.0
        %1017 = vmatpush1.msra.mxu0 0.0
        %1018 = vmatprep.subr.mxu0 0.0
        %1019 = vmatpush1.msra.mxu0 0.0
        %1020 = vmatprep.subr.mxu0 0.0
        %1021 = vmatpush1.msra.mxu0 0.0
        %1022 = vmatprep.subr.mxu0 0.0
        %1023 = vmatpush1.msra.mxu0 0.0
        %1024 = vmatprep.subr.mxu0 0.0
        %1025 = vmatpush1.msra.mxu0 0.0
        %1026 = vmatprep.subr.mxu0 0.0
        %1027 = vmatpush1.msra.mxu0 0.0
        %1028 = vmatprep.subr.mxu0 0.0
        %1029 = vmatpush1.msra.mxu0 0.0
        %1030 = vmatprep.subr.mxu0 0.0
        %1031 = vmatpush1.msra.mxu0 0.0
        %1032 = vmatprep.subr.mxu0 0.0
        %1033 = vmatpush1.msra.mxu0 0.0
        %1034 = vmatprep.subr.mxu0 0.0
        %1035 = vmatpush1.msra.mxu0 0.0
        %1036 = vmatprep.subr.mxu0 0.0
        %1037 = vmatpush1.msra.mxu0 0.0
        %1038 = vmatprep.subr.mxu0 0.0
        %1039 = vmatpush1.msra.mxu0 0.0
        %1040 = vmatprep.subr.mxu0 0.0
        %1041 = vmatpush1.msra.mxu0 0.0
        %1042 = vmatprep.subr.mxu0 0.0
        %1043 = vmatpush1.msra.mxu0 0.0
        %1044 = vmatprep.subr.mxu0 0.0
        %1045 = vmatpush1.msra.mxu0 0.0
        %1046 = vmatprep.subr.mxu0 0.0
        %1047 = vmatpush1.msra.mxu0 0.0
        %1048 = vmatprep.subr.mxu0 0.0
        %1049 = vmatpush1.msra.mxu0 0.0
        %1050 = vmatprep.subr.mxu0 0.0
        %1051 = vmatpush1.msra.mxu0 0.0
        %1052 = vmatprep.subr.mxu0 0.0
        %1053 = vmatpush1.msra.mxu0 0.0
        %1054 = vmatprep.subr.mxu0 0.0
        %1055 = vmatpush1.msra.mxu0 0.0
        %1056 = vmatprep.subr.mxu0 0.0
        %1057 = vmatpush1.msra.mxu0 0.0
        %1058 = vmatprep.subr.mxu0 0.0
        %1059 = vmatpush1.msra.mxu0 0.0
        %1060 = vmatprep.subr.mxu0 0.0
        %1061 = vmatpush1.msra.mxu0 0.0
        %1062 = vmatprep.subr.mxu0 0.0
        %1063 = vmatpush1.msra.mxu0 0.0
        %1064 = vmatprep.subr.mxu0 0.0
        %1065 = vmatpush1.msra.mxu0 0.0
        %1066 = vmatprep.subr.mxu0 0.0
        %1067 = vmatpush1.msra.mxu0 0.0
        %1068 = vmatprep.subr.mxu0 0.0
        %1069 = vmatpush1.msra.mxu0 0.0
        %1070 = vmatprep.mubr.f32.mxu0 0.0
        %v1071 = vand.u32 %v923, 4294901760
        %1072 = vmatmul.mubr.f32.gmra.mrb[0].mxu0 %v1071
        %v1073 = vpop.f32.mrb[0].mxu0
        %v1074 = vadd.f32 %v998, %v1073
        %v1075 = vpop.f32.mrb[0].mxu0
        %1076 = vdwg.mxu0
        %1077 = vmatprep.subr.mxu0 0.0
        %v1078 = vand.u32 %v400, 4294901760
        %v1079 = vsub.f32 %v400, %v1078
        %1080 = vmatpush1.msra.mxu0 %v1079
        %1081 = vmatprep.subr.mxu0 0.0
        %1082 = vmatpush1.msra.mxu0 0.0
        %1083 = vmatprep.subr.mxu0 0.0
        %1084 = vmatpush1.msra.mxu0 0.0
        %1085 = vmatprep.subr.mxu0 0.0
        %1086 = vmatpush1.msra.mxu0 0.0
        %1087 = vmatprep.subr.mxu0 0.0
        %1088 = vmatpush1.msra.mxu0 0.0
        %1089 = vmatprep.subr.mxu0 0.0
        %1090 = vmatpush1.msra.mxu0 0.0
        %1091 = vmatprep.subr.mxu0 0.0
        %1092 = vmatpush1.msra.mxu0 0.0
        %1093 = vmatprep.subr.mxu0 0.0
        %1094 = vmatpush1.msra.mxu0 0.0
        %1095 = vmatprep.subr.mxu0 0.0
        %1096 = vmatpush1.msra.mxu0 0.0
        %1097 = vmatprep.subr.mxu0 0.0
        %1098 = vmatpush1.msra.mxu0 0.0
        %1099 = vmatprep.subr.mxu0 0.0
        %1100 = vmatpush1.msra.mxu0 0.0
        %1101 = vmatprep.subr.mxu0 0.0
        %1102 = vmatpush1.msra.mxu0 0.0
        %1103 = vmatprep.subr.mxu0 0.0
        %1104 = vmatpush1.msra.mxu0 0.0
        %1105 = vmatprep.subr.mxu0 0.0
        %1106 = vmatpush1.msra.mxu0 0.0
        %1107 = vmatprep.subr.mxu0 0.0
        %1108 = vmatpush1.msra.mxu0 0.0
        %1109 = vmatprep.subr.mxu0 0.0
        %1110 = vmatpush1.msra.mxu0 0.0
        %1111 = vmatprep.subr.mxu0 0.0
        %1112 = vmatpush1.msra.mxu0 0.0
        %1113 = vmatprep.subr.mxu0 0.0
        %1114 = vmatpush1.msra.mxu0 0.0
        %1115 = vmatprep.subr.mxu0 0.0
        %1116 = vmatpush1.msra.mxu0 0.0
        %1117 = vmatprep.subr.mxu0 0.0
        %1118 = vmatpush1.msra.mxu0 0.0
        %1119 = vmatprep.subr.mxu0 0.0
        %1120 = vmatpush1.msra.mxu0 0.0
        %1121 = vmatprep.subr.mxu0 0.0
        %1122 = vmatpush1.msra.mxu0 0.0
        %1123 = vmatprep.subr.mxu0 0.0
        %1124 = vmatpush1.msra.mxu0 0.0
        %1125 = vmatprep.subr.mxu0 0.0
        %1126 = vmatpush1.msra.mxu0 0.0
        %1127 = vmatprep.subr.mxu0 0.0
        %1128 = vmatpush1.msra.mxu0 0.0
        %1129 = vmatprep.subr.mxu0 0.0
        %1130 = vmatpush1.msra.mxu0 0.0
        %1131 = vmatprep.subr.mxu0 0.0
        %1132 = vmatpush1.msra.mxu0 0.0
        %1133 = vmatprep.subr.mxu0 0.0
        %1134 = vmatpush1.msra.mxu0 0.0
        %1135 = vmatprep.subr.mxu0 0.0
        %1136 = vmatpush1.msra.mxu0 0.0
        %1137 = vmatprep.subr.mxu0 0.0
        %1138 = vmatpush1.msra.mxu0 0.0
        %1139 = vmatprep.subr.mxu0 0.0
        %1140 = vmatpush1.msra.mxu0 0.0
        %1141 = vmatprep.subr.mxu0 0.0
        %1142 = vmatpush1.msra.mxu0 0.0
        %1143 = vmatprep.mubr.f32.mxu0 0.0
        %v1144 = vand.u32 %v923, 4294901760
        %v1145 = vsub.f32 %v923, %v1144
        %1146 = vmatmul.mubr.f32.gmra.mrb[0].mxu0 %v1145
        %v1147 = vpop.f32.mrb[0].mxu0
        %v1148 = vadd.f32 %v1074, %v1147
        %v1149 = vpop.f32.mrb[0].mxu0
        %1150 = vdwg.mxu0
        %1151 = vmatprep.subr.mxu0 0.0
        %v1152 = vand.u32 %v400, 4294901760
        %1153 = vmatpush1.msra.mxu0 %v1152
        %1154 = vmatprep.subr.mxu0 0.0
        %1155 = vmatpush1.msra.mxu0 0.0
        %1156 = vmatprep.subr.mxu0 0.0
        %1157 = vmatpush1.msra.mxu0 0.0
        %1158 = vmatprep.subr.mxu0 0.0
        %1159 = vmatpush1.msra.mxu0 0.0
        %1160 = vmatprep.subr.mxu0 0.0
        %1161 = vmatpush1.msra.mxu0 0.0
        %1162 = vmatprep.subr.mxu0 0.0
        %1163 = vmatpush1.msra.mxu0 0.0
        %1164 = vmatprep.subr.mxu0 0.0
        %1165 = vmatpush1.msra.mxu0 0.0
        %1166 = vmatprep.subr.mxu0 0.0
        %1167 = vmatpush1.msra.mxu0 0.0
        %1168 = vmatprep.subr.mxu0 0.0
        %1169 = vmatpush1.msra.mxu0 0.0
        %1170 = vmatprep.subr.mxu0 0.0
        %1171 = vmatpush1.msra.mxu0 0.0
        %1172 = vmatprep.subr.mxu0 0.0
        %1173 = vmatpush1.msra.mxu0 0.0
        %1174 = vmatprep.subr.mxu0 0.0
        %1175 = vmatpush1.msra.mxu0 0.0
        %1176 = vmatprep.subr.mxu0 0.0
        %1177 = vmatpush1.msra.mxu0 0.0
        %1178 = vmatprep.subr.mxu0 0.0
        %1179 = vmatpush1.msra.mxu0 0.0
        %1180 = vmatprep.subr.mxu0 0.0
        %1181 = vmatpush1.msra.mxu0 0.0
        %1182 = vmatprep.subr.mxu0 0.0
        %1183 = vmatpush1.msra.mxu0 0.0
        %1184 = vmatprep.subr.mxu0 0.0
        %1185 = vmatpush1.msra.mxu0 0.0
        %1186 = vmatprep.subr.mxu0 0.0
        %1187 = vmatpush1.msra.mxu0 0.0
        %1188 = vmatprep.subr.mxu0 0.0
        %1189 = vmatpush1.msra.mxu0 0.0
        %1190 = vmatprep.subr.mxu0 0.0
        %1191 = vmatpush1.msra.mxu0 0.0
        %1192 = vmatprep.subr.mxu0 0.0
        %1193 = vmatpush1.msra.mxu0 0.0
        %1194 = vmatprep.subr.mxu0 0.0
        %1195 = vmatpush1.msra.mxu0 0.0
        %1196 = vmatprep.subr.mxu0 0.0
        %1197 = vmatpush1.msra.mxu0 0.0
        %1198 = vmatprep.subr.mxu0 0.0
        %1199 = vmatpush1.msra.mxu0 0.0
        %1200 = vmatprep.subr.mxu0 0.0
        %1201 = vmatpush1.msra.mxu0 0.0
        %1202 = vmatprep.subr.mxu0 0.0
        %1203 = vmatpush1.msra.mxu0 0.0
        %1204 = vmatprep.subr.mxu0 0.0
        %1205 = vmatpush1.msra.mxu0 0.0
        %1206 = vmatprep.subr.mxu0 0.0
        %1207 = vmatpush1.msra.mxu0 0.0
        %1208 = vmatprep.subr.mxu0 0.0
        %1209 = vmatpush1.msra.mxu0 0.0
        %1210 = vmatprep.subr.mxu0 0.0
        %1211 = vmatpush1.msra.mxu0 0.0
        %1212 = vmatprep.subr.mxu0 0.0
        %1213 = vmatpush1.msra.mxu0 0.0
        %1214 = vmatprep.subr.mxu0 0.0
        %1215 = vmatpush1.msra.mxu0 0.0
        %1216 = vmatprep.mubr.f32.mxu0 0.0
        %v1217 = vand.u32 %v923, 4294901760
        %v1218 = vsub.f32 %v923, %v1217
        %v1219 = vand.u32 %v1218, 4294901760
        %1220 = vmatmul.mubr.f32.gmra.mrb[0].mxu0 %v1219
        %v1221 = vpop.f32.mrb[0].mxu0
        %v1222 = vadd.f32 %v1148, %v1221
        %v1223 = vpop.f32.mrb[0].mxu0
        %1224 = vdwg.mxu0
        %1225 = vmatprep.subr.mxu0 0.0
        %v1226 = vand.u32 %v400, 4294901760
        %v1227 = vsub.f32 %v400, %v1226
        %v1228 = vand.u32 %v1227, 4294901760
        %1229 = vmatpush1.msra.mxu0 %v1228
        %1230 = vmatprep.subr.mxu0 0.0
        %1231 = vmatpush1.msra.mxu0 0.0
        %1232 = vmatprep.subr.mxu0 0.0
        %1233 = vmatpush1.msra.mxu0 0.0
        %1234 = vmatprep.subr.mxu0 0.0
        %1235 = vmatpush1.msra.mxu0 0.0
        %1236 = vmatprep.subr.mxu0 0.0
        %1237 = vmatpush1.msra.mxu0 0.0
        %1238 = vmatprep.subr.mxu0 0.0
        %1239 = vmatpush1.msra.mxu0 0.0
        %1240 = vmatprep.subr.mxu0 0.0
        %1241 = vmatpush1.msra.mxu0 0.0
        %1242 = vmatprep.subr.mxu0 0.0
        %1243 = vmatpush1.msra.mxu0 0.0
        %1244 = vmatprep.subr.mxu0 0.0
        %1245 = vmatpush1.msra.mxu0 0.0
        %1246 = vmatprep.subr.mxu0 0.0
        %1247 = vmatpush1.msra.mxu0 0.0
        %1248 = vmatprep.subr.mxu0 0.0
        %1249 = vmatpush1.msra.mxu0 0.0
        %1250 = vmatprep.subr.mxu0 0.0
        %1251 = vmatpush1.msra.mxu0 0.0
        %1252 = vmatprep.subr.mxu0 0.0
        %1253 = vmatpush1.msra.mxu0 0.0
        %1254 = vmatprep.subr.mxu0 0.0
        %1255 = vmatpush1.msra.mxu0 0.0
        %1256 = vmatprep.subr.mxu0 0.0
        %1257 = vmatpush1.msra.mxu0 0.0
        %1258 = vmatprep.subr.mxu0 0.0
        %1259 = vmatpush1.msra.mxu0 0.0
        %1260 = vmatprep.subr.mxu0 0.0
        %1261 = vmatpush1.msra.mxu0 0.0
        %1262 = vmatprep.subr.mxu0 0.0
        %1263 = vmatpush1.msra.mxu0 0.0
        %1264 = vmatprep.subr.mxu0 0.0
        %1265 = vmatpush1.msra.mxu0 0.0
        %1266 = vmatprep.subr.mxu0 0.0
        %1267 = vmatpush1.msra.mxu0 0.0
        %1268 = vmatprep.subr.mxu0 0.0
        %1269 = vmatpush1.msra.mxu0 0.0
        %1270 = vmatprep.subr.mxu0 0.0
        %1271 = vmatpush1.msra.mxu0 0.0
        %1272 = vmatprep.subr.mxu0 0.0
        %1273 = vmatpush1.msra.mxu0 0.0
        %1274 = vmatprep.subr.mxu0 0.0
        %1275 = vmatpush1.msra.mxu0 0.0
        %1276 = vmatprep.subr.mxu0 0.0
        %1277 = vmatpush1.msra.mxu0 0.0
        %1278 = vmatprep.subr.mxu0 0.0
        %1279 = vmatpush1.msra.mxu0 0.0
        %1280 = vmatprep.subr.mxu0 0.0
        %1281 = vmatpush1.msra.mxu0 0.0
        %1282 = vmatprep.subr.mxu0 0.0
        %1283 = vmatpush1.msra.mxu0 0.0
        %1284 = vmatprep.subr.mxu0 0.0
        %1285 = vmatpush1.msra.mxu0 0.0
        %1286 = vmatprep.subr.mxu0 0.0
        %1287 = vmatpush1.msra.mxu0 0.0
        %1288 = vmatprep.subr.mxu0 0.0
        %1289 = vmatpush1.msra.mxu0 0.0
        %1290 = vmatprep.subr.mxu0 0.0
        %1291 = vmatpush1.msra.mxu0 0.0
        %1292 = vmatprep.mubr.f32.mxu0 0.0
        %v1293 = vand.u32 %v923, 4294901760
        %1294 = vmatmul.mubr.f32.gmra.mrb[0].mxu0 %v1293
        %v1295 = vpop.f32.mrb[0].mxu0
        %v1296 = vadd.f32 %v1222, %v1295
        %v1297 = vpop.f32.mrb[0].mxu0
        %1298 = vdwg.mxu0
        %1299 = vmatprep.subr.mxu0 0.0
        %v1300 = vand.u32 %v400, 4294901760
        %1301 = vmatpush1.msra.mxu0 %v1300
        %1302 = vmatprep.subr.mxu0 0.0
        %1303 = vmatpush1.msra.mxu0 0.0
        %1304 = vmatprep.subr.mxu0 0.0
        %1305 = vmatpush1.msra.mxu0 0.0
        %1306 = vmatprep.subr.mxu0 0.0
        %1307 = vmatpush1.msra.mxu0 0.0
        %1308 = vmatprep.subr.mxu0 0.0
        %1309 = vmatpush1.msra.mxu0 0.0
        %1310 = vmatprep.subr.mxu0 0.0
        %1311 = vmatpush1.msra.mxu0 0.0
        %1312 = vmatprep.subr.mxu0 0.0
        %1313 = vmatpush1.msra.mxu0 0.0
        %1314 = vmatprep.subr.mxu0 0.0
        %1315 = vmatpush1.msra.mxu0 0.0
        %1316 = vmatprep.subr.mxu0 0.0
        %1317 = vmatpush1.msra.mxu0 0.0
        %1318 = vmatprep.subr.mxu0 0.0
        %1319 = vmatpush1.msra.mxu0 0.0
        %1320 = vmatprep.subr.mxu0 0.0
        %1321 = vmatpush1.msra.mxu0 0.0
        %1322 = vmatprep.subr.mxu0 0.0
        %1323 = vmatpush1.msra.mxu0 0.0
        %1324 = vmatprep.subr.mxu0 0.0
        %1325 = vmatpush1.msra.mxu0 0.0
        %1326 = vmatprep.subr.mxu0 0.0
        %1327 = vmatpush1.msra.mxu0 0.0
        %1328 = vmatprep.subr.mxu0 0.0
        %1329 = vmatpush1.msra.mxu0 0.0
        %1330 = vmatprep.subr.mxu0 0.0
        %1331 = vmatpush1.msra.mxu0 0.0
        %1332 = vmatprep.subr.mxu0 0.0
        %1333 = vmatpush1.msra.mxu0 0.0
        %1334 = vmatprep.subr.mxu0 0.0
        %1335 = vmatpush1.msra.mxu0 0.0
        %1336 = vmatprep.subr.mxu0 0.0
        %1337 = vmatpush1.msra.mxu0 0.0
        %1338 = vmatprep.subr.mxu0 0.0
        %1339 = vmatpush1.msra.mxu0 0.0
        %1340 = vmatprep.subr.mxu0 0.0
        %1341 = vmatpush1.msra.mxu0 0.0
        %1342 = vmatprep.subr.mxu0 0.0
        %1343 = vmatpush1.msra.mxu0 0.0
        %1344 = vmatprep.subr.mxu0 0.0
        %1345 = vmatpush1.msra.mxu0 0.0
        %1346 = vmatprep.subr.mxu0 0.0
        %1347 = vmatpush1.msra.mxu0 0.0
        %1348 = vmatprep.subr.mxu0 0.0
        %1349 = vmatpush1.msra.mxu0 0.0
        %1350 = vmatprep.subr.mxu0 0.0
        %1351 = vmatpush1.msra.mxu0 0.0
        %1352 = vmatprep.subr.mxu0 0.0
        %1353 = vmatpush1.msra.mxu0 0.0
        %1354 = vmatprep.subr.mxu0 0.0
        %1355 = vmatpush1.msra.mxu0 0.0
        %1356 = vmatprep.subr.mxu0 0.0
        %1357 = vmatpush1.msra.mxu0 0.0
        %1358 = vmatprep.subr.mxu0 0.0
        %1359 = vmatpush1.msra.mxu0 0.0
        %1360 = vmatprep.subr.mxu0 0.0
        %1361 = vmatpush1.msra.mxu0 0.0
        %1362 = vmatprep.subr.mxu0 0.0
        %1363 = vmatpush1.msra.mxu0 0.0
        %1364 = vmatprep.mubr.f32.mxu0 0.0
        %v1365 = vand.u32 %v923, 4294901760
        %1366 = vmatmul.mubr.f32.gmra.mrb[0].mxu0 %v1365
        %v1367 = vpop.f32.mrb[0].mxu0
        %v1368 = vadd.f32 %v1296, %v1367
        %v1369 = vpop.f32.mrb[0].mxu0
        %1370 = vdwg.mxu0
        %vm1371 = vcmask 261120
        %v1373 = vsel %vm1371, %v1368, 0
        %1375 = vmatprep.subr.mxu0 0.0
        %v1376 = vand.u32 %v405, 4294901760
        %1377 = vmatpush1.msra.mxu0 %v1376
        %1378 = vmatprep.subr.mxu0 0.0
        %v1379 = vand.u32 %v406, 4294901760
        %1380 = vmatpush1.msra.mxu0 %v1379
        %1381 = vmatprep.subr.mxu0 0.0
        %v1382 = vand.u32 %v407, 4294901760
        %1383 = vmatpush1.msra.mxu0 %v1382
        %1384 = vmatprep.subr.mxu0 0.0
        %v1385 = vand.u32 %v408, 4294901760
        %1386 = vmatpush1.msra.mxu0 %v1385
        %1387 = vmatprep.subr.mxu0 0.0
        %1388 = vmatpush1.msra.mxu0 0.0
        %1389 = vmatprep.subr.mxu0 0.0
        %1390 = vmatpush1.msra.mxu0 0.0
        %1391 = vmatprep.subr.mxu0 0.0
        %1392 = vmatpush1.msra.mxu0 0.0
        %1393 = vmatprep.subr.mxu0 0.0
        %1394 = vmatpush1.msra.mxu0 0.0
        %1395 = vmatprep.subr.mxu0 0.0
        %1396 = vmatpush1.msra.mxu0 0.0
        %1397 = vmatprep.subr.mxu0 0.0
        %1398 = vmatpush1.msra.mxu0 0.0
        %1399 = vmatprep.subr.mxu0 0.0
        %1400 = vmatpush1.msra.mxu0 0.0
        %1401 = vmatprep.subr.mxu0 0.0
        %1402 = vmatpush1.msra.mxu0 0.0
        %1403 = vmatprep.subr.mxu0 0.0
        %1404 = vmatpush1.msra.mxu0 0.0
        %1405 = vmatprep.subr.mxu0 0.0
        %1406 = vmatpush1.msra.mxu0 0.0
        %1407 = vmatprep.subr.mxu0 0.0
        %1408 = vmatpush1.msra.mxu0 0.0
        %1409 = vmatprep.subr.mxu0 0.0
        %1410 = vmatpush1.msra.mxu0 0.0
        %1411 = vmatprep.subr.mxu0 0.0
        %1412 = vmatpush1.msra.mxu0 0.0
        %1413 = vmatprep.subr.mxu0 0.0
        %1414 = vmatpush1.msra.mxu0 0.0
        %1415 = vmatprep.subr.mxu0 0.0
        %1416 = vmatpush1.msra.mxu0 0.0
        %1417 = vmatprep.subr.mxu0 0.0
        %1418 = vmatpush1.msra.mxu0 0.0
        %1419 = vmatprep.subr.mxu0 0.0
        %1420 = vmatpush1.msra.mxu0 0.0
        %1421 = vmatprep.subr.mxu0 0.0
        %1422 = vmatpush1.msra.mxu0 0.0
        %1423 = vmatprep.subr.mxu0 0.0
        %1424 = vmatpush1.msra.mxu0 0.0
        %1425 = vmatprep.subr.mxu0 0.0
        %1426 = vmatpush1.msra.mxu0 0.0
        %1427 = vmatprep.subr.mxu0 0.0
        %1428 = vmatpush1.msra.mxu0 0.0
        %1429 = vmatprep.subr.mxu0 0.0
        %1430 = vmatpush1.msra.mxu0 0.0
        %1431 = vmatprep.subr.mxu0 0.0
        %1432 = vmatpush1.msra.mxu0 0.0
        %1433 = vmatprep.subr.mxu0 0.0
        %1434 = vmatpush1.msra.mxu0 0.0
        %1435 = vmatprep.subr.mxu0 0.0
        %1436 = vmatpush1.msra.mxu0 0.0
        %1437 = vmatprep.subr.mxu0 0.0
        %1438 = vmatpush1.msra.mxu0 0.0
        %1439 = vmatprep.subr.mxu0 0.0
        %1440 = vmatpush1.msra.mxu0 0.0
        %1441 = vmatprep.subr.mxu0 0.0
        %1442 = vmatpush1.msra.mxu0 0.0
        %1443 = vmatprep.mubr.f32.mxu0 0.0
        %v1444 = vand.u32 %v1373, 4294901760
        %v1445 = vsub.f32 %v1373, %v1444
        %v1446 = vand.u32 %v1445, 4294901760
        %v1447 = vsub.f32 %v1445, %v1446
        %v1448 = vand.u32 %v1447, 4294901760
        %1449 = vmatmul.mubr.f32.gmra.mrb[0].mxu0 %v1448
        %v1450 = vpop.f32.mrb[0].mxu0
        %v1451 = vadd.f32 0.0, %v1450
        %v1452 = vpop.f32.mrb[0].mxu0
        %1453 = vdwg.mxu0
        %1454 = vmatprep.subr.mxu0 0.0
        %v1455 = vand.u32 %v405, 4294901760
        %v1456 = vsub.f32 %v405, %v1455
        %v1457 = vand.u32 %v1456, 4294901760
        %v1458 = vsub.f32 %v1456, %v1457
        %v1459 = vand.u32 %v1458, 4294901760
        %1460 = vmatpush1.msra.mxu0 %v1459
        %1461 = vmatprep.subr.mxu0 0.0
        %v1462 = vand.u32 %v406, 4294901760
        %v1463 = vsub.f32 %v406, %v1462
        %v1464 = vand.u32 %v1463, 4294901760
        %v1465 = vsub.f32 %v1463, %v1464
        %v1466 = vand.u32 %v1465, 4294901760
        %1467 = vmatpush1.msra.mxu0 %v1466
        %1468 = vmatprep.subr.mxu0 0.0
        %v1469 = vand.u32 %v407, 4294901760
        %v1470 = vsub.f32 %v407, %v1469
        %v1471 = vand.u32 %v1470, 4294901760
        %v1472 = vsub.f32 %v1470, %v1471
        %v1473 = vand.u32 %v1472, 4294901760
        %1474 = vmatpush1.msra.mxu0 %v1473
        %1475 = vmatprep.subr.mxu0 0.0
        %v1476 = vand.u32 %v408, 4294901760
        %v1477 = vsub.f32 %v408, %v1476
        %v1478 = vand.u32 %v1477, 4294901760
        %v1479 = vsub.f32 %v1477, %v1478
        %v1480 = vand.u32 %v1479, 4294901760
        %1481 = vmatpush1.msra.mxu0 %v1480
        %1482 = vmatprep.subr.mxu0 0.0
        %1483 = vmatpush1.msra.mxu0 0.0
        %1484 = vmatprep.subr.mxu0 0.0
        %1485 = vmatpush1.msra.mxu0 0.0
        %1486 = vmatprep.subr.mxu0 0.0
        %1487 = vmatpush1.msra.mxu0 0.0
        %1488 = vmatprep.subr.mxu0 0.0
        %1489 = vmatpush1.msra.mxu0 0.0
        %1490 = vmatprep.subr.mxu0 0.0
        %1491 = vmatpush1.msra.mxu0 0.0
        %1492 = vmatprep.subr.mxu0 0.0
        %1493 = vmatpush1.msra.mxu0 0.0
        %1494 = vmatprep.subr.mxu0 0.0
        %1495 = vmatpush1.msra.mxu0 0.0
        %1496 = vmatprep.subr.mxu0 0.0
        %1497 = vmatpush1.msra.mxu0 0.0
        %1498 = vmatprep.subr.mxu0 0.0
        %1499 = vmatpush1.msra.mxu0 0.0
        %1500 = vmatprep.subr.mxu0 0.0
        %1501 = vmatpush1.msra.mxu0 0.0
        %1502 = vmatprep.subr.mxu0 0.0
        %1503 = vmatpush1.msra.mxu0 0.0
        %1504 = vmatprep.subr.mxu0 0.0
        %1505 = vmatpush1.msra.mxu0 0.0
        %1506 = vmatprep.subr.mxu0 0.0
        %1507 = vmatpush1.msra.mxu0 0.0
        %1508 = vmatprep.subr.mxu0 0.0
        %1509 = vmatpush1.msra.mxu0 0.0
        %1510 = vmatprep.subr.mxu0 0.0
        %1511 = vmatpush1.msra.mxu0 0.0
        %1512 = vmatprep.subr.mxu0 0.0
        %1513 = vmatpush1.msra.mxu0 0.0
        %1514 = vmatprep.subr.mxu0 0.0
        %1515 = vmatpush1.msra.mxu0 0.0
        %1516 = vmatprep.subr.mxu0 0.0
        %1517 = vmatpush1.msra.mxu0 0.0
        %1518 = vmatprep.subr.mxu0 0.0
        %1519 = vmatpush1.msra.mxu0 0.0
        %1520 = vmatprep.subr.mxu0 0.0
        %1521 = vmatpush1.msra.mxu0 0.0
        %1522 = vmatprep.subr.mxu0 0.0
        %1523 = vmatpush1.msra.mxu0 0.0
        %1524 = vmatprep.subr.mxu0 0.0
        %1525 = vmatpush1.msra.mxu0 0.0
        %1526 = vmatprep.subr.mxu0 0.0
        %1527 = vmatpush1.msra.mxu0 0.0
        %1528 = vmatprep.subr.mxu0 0.0
        %1529 = vmatpush1.msra.mxu0 0.0
        %1530 = vmatprep.subr.mxu0 0.0
        %1531 = vmatpush1.msra.mxu0 0.0
        %1532 = vmatprep.subr.mxu0 0.0
        %1533 = vmatpush1.msra.mxu0 0.0
        %1534 = vmatprep.subr.mxu0 0.0
        %1535 = vmatpush1.msra.mxu0 0.0
        %1536 = vmatprep.subr.mxu0 0.0
        %1537 = vmatpush1.msra.mxu0 0.0
        %1538 = vmatprep.mubr.f32.mxu0 0.0
        %v1539 = vand.u32 %v1373, 4294901760
        %1540 = vmatmul.mubr.f32.gmra.mrb[0].mxu0 %v1539
        %v1541 = vpop.f32.mrb[0].mxu0
        %v1542 = vadd.f32 %v1451, %v1541
        %v1543 = vpop.f32.mrb[0].mxu0
        %1544 = vdwg.mxu0
        %1545 = vmatprep.subr.mxu0 0.0
        %v1546 = vand.u32 %v405, 4294901760
        %v1547 = vsub.f32 %v405, %v1546
        %1548 = vmatpush1.msra.mxu0 %v1547
        %1549 = vmatprep.subr.mxu0 0.0
        %v1550 = vand.u32 %v406, 4294901760
        %v1551 = vsub.f32 %v406, %v1550
        %1552 = vmatpush1.msra.mxu0 %v1551
        %1553 = vmatprep.subr.mxu0 0.0
        %v1554 = vand.u32 %v407, 4294901760
        %v1555 = vsub.f32 %v407, %v1554
        %1556 = vmatpush1.msra.mxu0 %v1555
        %1557 = vmatprep.subr.mxu0 0.0
        %v1558 = vand.u32 %v408, 4294901760
        %v1559 = vsub.f32 %v408, %v1558
        %1560 = vmatpush1.msra.mxu0 %v1559
        %1561 = vmatprep.subr.mxu0 0.0
        %1562 = vmatpush1.msra.mxu0 0.0
        %1563 = vmatprep.subr.mxu0 0.0
        %1564 = vmatpush1.msra.mxu0 0.0
        %1565 = vmatprep.subr.mxu0 0.0
        %1566 = vmatpush1.msra.mxu0 0.0
        %1567 = vmatprep.subr.mxu0 0.0
        %1568 = vmatpush1.msra.mxu0 0.0
        %1569 = vmatprep.subr.mxu0 0.0
        %1570 = vmatpush1.msra.mxu0 0.0
        %1571 = vmatprep.subr.mxu0 0.0
        %1572 = vmatpush1.msra.mxu0 0.0
        %1573 = vmatprep.subr.mxu0 0.0
        %1574 = vmatpush1.msra.mxu0 0.0
        %1575 = vmatprep.subr.mxu0 0.0
        %1576 = vmatpush1.msra.mxu0 0.0
        %1577 = vmatprep.subr.mxu0 0.0
        %1578 = vmatpush1.msra.mxu0 0.0
        %1579 = vmatprep.subr.mxu0 0.0
        %1580 = vmatpush1.msra.mxu0 0.0
        %1581 = vmatprep.subr.mxu0 0.0
        %1582 = vmatpush1.msra.mxu0 0.0
        %1583 = vmatprep.subr.mxu0 0.0
        %1584 = vmatpush1.msra.mxu0 0.0
        %1585 = vmatprep.subr.mxu0 0.0
        %1586 = vmatpush1.msra.mxu0 0.0
        %1587 = vmatprep.subr.mxu0 0.0
        %1588 = vmatpush1.msra.mxu0 0.0
        %1589 = vmatprep.subr.mxu0 0.0
        %1590 = vmatpush1.msra.mxu0 0.0
        %1591 = vmatprep.subr.mxu0 0.0
        %1592 = vmatpush1.msra.mxu0 0.0
        %1593 = vmatprep.subr.mxu0 0.0
        %1594 = vmatpush1.msra.mxu0 0.0
        %1595 = vmatprep.subr.mxu0 0.0
        %1596 = vmatpush1.msra.mxu0 0.0
        %1597 = vmatprep.subr.mxu0 0.0
        %1598 = vmatpush1.msra.mxu0 0.0
        %1599 = vmatprep.subr.mxu0 0.0
        %1600 = vmatpush1.msra.mxu0 0.0
        %1601 = vmatprep.subr.mxu0 0.0
        %1602 = vmatpush1.msra.mxu0 0.0
        %1603 = vmatprep.subr.mxu0 0.0
        %1604 = vmatpush1.msra.mxu0 0.0
        %1605 = vmatprep.subr.mxu0 0.0
        %1606 = vmatpush1.msra.mxu0 0.0
        %1607 = vmatprep.subr.mxu0 0.0
        %1608 = vmatpush1.msra.mxu0 0.0
        %1609 = vmatprep.subr.mxu0 0.0
        %1610 = vmatpush1.msra.mxu0 0.0
        %1611 = vmatprep.subr.mxu0 0.0
        %1612 = vmatpush1.msra.mxu0 0.0
        %1613 = vmatprep.subr.mxu0 0.0
        %1614 = vmatpush1.msra.mxu0 0.0
        %1615 = vmatprep.subr.mxu0 0.0
        %1616 = vmatpush1.msra.mxu0 0.0
        %1617 = vmatprep.mubr.f32.mxu0 0.0
        %v1618 = vand.u32 %v1373, 4294901760
        %v1619 = vsub.f32 %v1373, %v1618
        %1620 = vmatmul.mubr.f32.gmra.mrb[0].mxu0 %v1619
        %v1621 = vpop.f32.mrb[0].mxu0
        %v1622 = vadd.f32 %v1542, %v1621
        %v1623 = vpop.f32.mrb[0].mxu0
        %1624 = vdwg.mxu0
        %1625 = vmatprep.subr.mxu0 0.0
        %v1626 = vand.u32 %v405, 4294901760
        %1627 = vmatpush1.msra.mxu0 %v1626
        %1628 = vmatprep.subr.mxu0 0.0
        %v1629 = vand.u32 %v406, 4294901760
        %1630 = vmatpush1.msra.mxu0 %v1629
        %1631 = vmatprep.subr.mxu0 0.0
        %v1632 = vand.u32 %v407, 4294901760
        %1633 = vmatpush1.msra.mxu0 %v1632
        %1634 = vmatprep.subr.mxu0 0.0
        %v1635 = vand.u32 %v408, 4294901760
        %1636 = vmatpush1.msra.mxu0 %v1635
        %1637 = vmatprep.subr.mxu0 0.0
        %1638 = vmatpush1.msra.mxu0 0.0
        %1639 = vmatprep.subr.mxu0 0.0
        %1640 = vmatpush1.msra.mxu0 0.0
        %1641 = vmatprep.subr.mxu0 0.0
        %1642 = vmatpush1.msra.mxu0 0.0
        %1643 = vmatprep.subr.mxu0 0.0
        %1644 = vmatpush1.msra.mxu0 0.0
        %1645 = vmatprep.subr.mxu0 0.0
        %1646 = vmatpush1.msra.mxu0 0.0
        %1647 = vmatprep.subr.mxu0 0.0
        %1648 = vmatpush1.msra.mxu0 0.0
        %1649 = vmatprep.subr.mxu0 0.0
        %1650 = vmatpush1.msra.mxu0 0.0
        %1651 = vmatprep.subr.mxu0 0.0
        %1652 = vmatpush1.msra.mxu0 0.0
        %1653 = vmatprep.subr.mxu0 0.0
        %1654 = vmatpush1.msra.mxu0 0.0
        %1655 = vmatprep.subr.mxu0 0.0
        %1656 = vmatpush1.msra.mxu0 0.0
        %1657 = vmatprep.subr.mxu0 0.0
        %1658 = vmatpush1.msra.mxu0 0.0
        %1659 = vmatprep.subr.mxu0 0.0
        %1660 = vmatpush1.msra.mxu0 0.0
        %1661 = vmatprep.subr.mxu0 0.0
        %1662 = vmatpush1.msra.mxu0 0.0
        %1663 = vmatprep.subr.mxu0 0.0
        %1664 = vmatpush1.msra.mxu0 0.0
        %1665 = vmatprep.subr.mxu0 0.0
        %1666 = vmatpush1.msra.mxu0 0.0
        %1667 = vmatprep.subr.mxu0 0.0
        %1668 = vmatpush1.msra.mxu0 0.0
        %1669 = vmatprep.subr.mxu0 0.0
        %1670 = vmatpush1.msra.mxu0 0.0
        %1671 = vmatprep.subr.mxu0 0.0
        %1672 = vmatpush1.msra.mxu0 0.0
        %1673 = vmatprep.subr.mxu0 0.0
        %1674 = vmatpush1.msra.mxu0 0.0
        %1675 = vmatprep.subr.mxu0 0.0
        %1676 = vmatpush1.msra.mxu0 0.0
        %1677 = vmatprep.subr.mxu0 0.0
        %1678 = vmatpush1.msra.mxu0 0.0
        %1679 = vmatprep.subr.mxu0 0.0
        %1680 = vmatpush1.msra.mxu0 0.0
        %1681 = vmatprep.subr.mxu0 0.0
        %1682 = vmatpush1.msra.mxu0 0.0
        %1683 = vmatprep.subr.mxu0 0.0
        %1684 = vmatpush1.msra.mxu0 0.0
        %1685 = vmatprep.subr.mxu0 0.0
        %1686 = vmatpush1.msra.mxu0 0.0
        %1687 = vmatprep.subr.mxu0 0.0
        %1688 = vmatpush1.msra.mxu0 0.0
        %1689 = vmatprep.subr.mxu0 0.0
        %1690 = vmatpush1.msra.mxu0 0.0
        %1691 = vmatprep.subr.mxu0 0.0
        %1692 = vmatpush1.msra.mxu0 0.0
        %1693 = vmatprep.mubr.f32.mxu0 0.0
        %v1694 = vand.u32 %v1373, 4294901760
        %v1695 = vsub.f32 %v1373, %v1694
        %v1696 = vand.u32 %v1695, 4294901760
        %1697 = vmatmul.mubr.f32.gmra.mrb[0].mxu0 %v1696
        %v1698 = vpop.f32.mrb[0].mxu0
        %v1699 = vadd.f32 %v1622, %v1698
        %v1700 = vpop.f32.mrb[0].mxu0
        %1701 = vdwg.mxu0
        %1702 = vmatprep.subr.mxu0 0.0
        %v1703 = vand.u32 %v405, 4294901760
        %v1704 = vsub.f32 %v405, %v1703
        %v1705 = vand.u32 %v1704, 4294901760
        %1706 = vmatpush1.msra.mxu0 %v1705
        %1707 = vmatprep.subr.mxu0 0.0
        %v1708 = vand.u32 %v406, 4294901760
        %v1709 = vsub.f32 %v406, %v1708
        %v1710 = vand.u32 %v1709, 4294901760
        %1711 = vmatpush1.msra.mxu0 %v1710
        %1712 = vmatprep.subr.mxu0 0.0
        %v1713 = vand.u32 %v407, 4294901760
        %v1714 = vsub.f32 %v407, %v1713
        %v1715 = vand.u32 %v1714, 4294901760
        %1716 = vmatpush1.msra.mxu0 %v1715
        %1717 = vmatprep.subr.mxu0 0.0
        %v1718 = vand.u32 %v408, 4294901760
        %v1719 = vsub.f32 %v408, %v1718
        %v1720 = vand.u32 %v1719, 4294901760
        %1721 = vmatpush1.msra.mxu0 %v1720
        %1722 = vmatprep.subr.mxu0 0.0
        %1723 = vmatpush1.msra.mxu0 0.0
        %1724 = vmatprep.subr.mxu0 0.0
        %1725 = vmatpush1.msra.mxu0 0.0
        %1726 = vmatprep.subr.mxu0 0.0
        %1727 = vmatpush1.msra.mxu0 0.0
        %1728 = vmatprep.subr.mxu0 0.0
        %1729 = vmatpush1.msra.mxu0 0.0
        %1730 = vmatprep.subr.mxu0 0.0
        %1731 = vmatpush1.msra.mxu0 0.0
        %1732 = vmatprep.subr.mxu0 0.0
        %1733 = vmatpush1.msra.mxu0 0.0
        %1734 = vmatprep.subr.mxu0 0.0
        %1735 = vmatpush1.msra.mxu0 0.0
        %1736 = vmatprep.subr.mxu0 0.0
        %1737 = vmatpush1.msra.mxu0 0.0
        %1738 = vmatprep.subr.mxu0 0.0
        %1739 = vmatpush1.msra.mxu0 0.0
        %1740 = vmatprep.subr.mxu0 0.0
        %1741 = vmatpush1.msra.mxu0 0.0
        %1742 = vmatprep.subr.mxu0 0.0
        %1743 = vmatpush1.msra.mxu0 0.0
        %1744 = vmatprep.subr.mxu0 0.0
        %1745 = vmatpush1.msra.mxu0 0.0
        %1746 = vmatprep.subr.mxu0 0.0
        %1747 = vmatpush1.msra.mxu0 0.0
        %1748 = vmatprep.subr.mxu0 0.0
        %1749 = vmatpush1.msra.mxu0 0.0
        %1750 = vmatprep.subr.mxu0 0.0
        %1751 = vmatpush1.msra.mxu0 0.0
        %1752 = vmatprep.subr.mxu0 0.0
        %1753 = vmatpush1.msra.mxu0 0.0
        %1754 = vmatprep.subr.mxu0 0.0
        %1755 = vmatpush1.msra.mxu0 0.0
        %1756 = vmatprep.subr.mxu0 0.0
        %1757 = vmatpush1.msra.mxu0 0.0
        %1758 = vmatprep.subr.mxu0 0.0
        %1759 = vmatpush1.msra.mxu0 0.0
        %1760 = vmatprep.subr.mxu0 0.0
        %1761 = vmatpush1.msra.mxu0 0.0
        %1762 = vmatprep.subr.mxu0 0.0
        %1763 = vmatpush1.msra.mxu0 0.0
        %1764 = vmatprep.subr.mxu0 0.0
        %1765 = vmatpush1.msra.mxu0 0.0
        %1766 = vmatprep.subr.mxu0 0.0
        %1767 = vmatpush1.msra.mxu0 0.0
        %1768 = vmatprep.subr.mxu0 0.0
        %1769 = vmatpush1.msra.mxu0 0.0
        %1770 = vmatprep.subr.mxu0 0.0
        %1771 = vmatpush1.msra.mxu0 0.0
        %1772 = vmatprep.subr.mxu0 0.0
        %1773 = vmatpush1.msra.mxu0 0.0
        %1774 = vmatprep.subr.mxu0 0.0
        %1775 = vmatpush1.msra.mxu0 0.0
        %1776 = vmatprep.subr.mxu0 0.0
        %1777 = vmatpush1.msra.mxu0 0.0
        %1778 = vmatprep.mubr.f32.mxu0 0.0
        %v1779 = vand.u32 %v1373, 4294901760
        %1780 = vmatmul.mubr.f32.gmra.mrb[0].mxu0 %v1779
        %v1781 = vpop.f32.mrb[0].mxu0
        %v1782 = vadd.f32 %v1699, %v1781
        %v1783 = vpop.f32.mrb[0].mxu0
        %1784 = vdwg.mxu0
        %1785 = vmatprep.subr.mxu0 0.0
        %v1786 = vand.u32 %v405, 4294901760
        %1787 = vmatpush1.msra.mxu0 %v1786
        %1788 = vmatprep.subr.mxu0 0.0
        %v1789 = vand.u32 %v406, 4294901760
        %1790 = vmatpush1.msra.mxu0 %v1789
        %1791 = vmatprep.subr.mxu0 0.0
        %v1792 = vand.u32 %v407, 4294901760
        %1793 = vmatpush1.msra.mxu0 %v1792
        %1794 = vmatprep.subr.mxu0 0.0
        %v1795 = vand.u32 %v408, 4294901760
        %1796 = vmatpush1.msra.mxu0 %v1795
        %1797 = vmatprep.subr.mxu0 0.0
        %1798 = vmatpush1.msra.mxu0 0.0
        %1799 = vmatprep.subr.mxu0 0.0
        %1800 = vmatpush1.msra.mxu0 0.0
        %1801 = vmatprep.subr.mxu0 0.0
        %1802 = vmatpush1.msra.mxu0 0.0
        %1803 = vmatprep.subr.mxu0 0.0
        %1804 = vmatpush1.msra.mxu0 0.0
        %1805 = vmatprep.subr.mxu0 0.0
        %1806 = vmatpush1.msra.mxu0 0.0
        %1807 = vmatprep.subr.mxu0 0.0
        %1808 = vmatpush1.msra.mxu0 0.0
        %1809 = vmatprep.subr.mxu0 0.0
        %1810 = vmatpush1.msra.mxu0 0.0
        %1811 = vmatprep.subr.mxu0 0.0
        %1812 = vmatpush1.msra.mxu0 0.0
        %1813 = vmatprep.subr.mxu0 0.0
        %1814 = vmatpush1.msra.mxu0 0.0
        %1815 = vmatprep.subr.mxu0 0.0
        %1816 = vmatpush1.msra.mxu0 0.0
        %1817 = vmatprep.subr.mxu0 0.0
        %1818 = vmatpush1.msra.mxu0 0.0
        %1819 = vmatprep.subr.mxu0 0.0
        %1820 = vmatpush1.msra.mxu0 0.0
        %1821 = vmatprep.subr.mxu0 0.0
        %1822 = vmatpush1.msra.mxu0 0.0
        %1823 = vmatprep.subr.mxu0 0.0
        %1824 = vmatpush1.msra.mxu0 0.0
        %1825 = vmatprep.subr.mxu0 0.0
        %1826 = vmatpush1.msra.mxu0 0.0
        %1827 = vmatprep.subr.mxu0 0.0
        %1828 = vmatpush1.msra.mxu0 0.0
        %1829 = vmatprep.subr.mxu0 0.0
        %1830 = vmatpush1.msra.mxu0 0.0
        %1831 = vmatprep.subr.mxu0 0.0
        %1832 = vmatpush1.msra.mxu0 0.0
        %1833 = vmatprep.subr.mxu0 0.0
        %1834 = vmatpush1.msra.mxu0 0.0
        %1835 = vmatprep.subr.mxu0 0.0
        %1836 = vmatpush1.msra.mxu0 0.0
        %1837 = vmatprep.subr.mxu0 0.0
        %1838 = vmatpush1.msra.mxu0 0.0
        %1839 = vmatprep.subr.mxu0 0.0
        %1840 = vmatpush1.msra.mxu0 0.0
        %1841 = vmatprep.subr.mxu0 0.0
        %1842 = vmatpush1.msra.mxu0 0.0
        %1843 = vmatprep.subr.mxu0 0.0
        %1844 = vmatpush1.msra.mxu0 0.0
        %1845 = vmatprep.subr.mxu0 0.0
        %1846 = vmatpush1.msra.mxu0 0.0
        %1847 = vmatprep.subr.mxu0 0.0
        %1848 = vmatpush1.msra.mxu0 0.0
        %1849 = vmatprep.subr.mxu0 0.0
        %1850 = vmatpush1.msra.mxu0 0.0
        %1851 = vmatprep.subr.mxu0 0.0
        %1852 = vmatpush1.msra.mxu0 0.0
        %1853 = vmatprep.mubr.f32.mxu0 0.0
        %v1854 = vand.u32 %v1373, 4294901760
        %1855 = vmatmul.mubr.f32.gmra.mrb[0].mxu0 %v1854
        %v1856 = vpop.f32.mrb[0].mxu0
        %v1857 = vadd.f32 %v1782, %v1856
        %v1858 = vpop.f32.mrb[0].mxu0
        %1859 = vdwg.mxu0
        %v1861 = vsel %vm1371, %v887, 0
        %1863 = vmatprep.subr.mxu0 0.0
        %v1864 = vand.u32 %v401, 4294901760
        %1865 = vmatpush1.msra.mxu0 %v1864
        %1866 = vmatprep.subr.mxu0 0.0
        %v1867 = vand.u32 %v402, 4294901760
        %1868 = vmatpush1.msra.mxu0 %v1867
        %1869 = vmatprep.subr.mxu0 0.0
        %v1870 = vand.u32 %v403, 4294901760
        %1871 = vmatpush1.msra.mxu0 %v1870
        %1872 = vmatprep.subr.mxu0 0.0
        %v1873 = vand.u32 %v404, 4294901760
        %1874 = vmatpush1.msra.mxu0 %v1873
        %1875 = vmatprep.subr.mxu0 0.0
        %1876 = vmatpush1.msra.mxu0 0.0
        %1877 = vmatprep.subr.mxu0 0.0
        %1878 = vmatpush1.msra.mxu0 0.0
        %1879 = vmatprep.subr.mxu0 0.0
        %1880 = vmatpush1.msra.mxu0 0.0
        %1881 = vmatprep.subr.mxu0 0.0
        %1882 = vmatpush1.msra.mxu0 0.0
        %1883 = vmatprep.subr.mxu0 0.0
        %1884 = vmatpush1.msra.mxu0 0.0
        %1885 = vmatprep.subr.mxu0 0.0
        %1886 = vmatpush1.msra.mxu0 0.0
        %1887 = vmatprep.subr.mxu0 0.0
        %1888 = vmatpush1.msra.mxu0 0.0
        %1889 = vmatprep.subr.mxu0 0.0
        %1890 = vmatpush1.msra.mxu0 0.0
        %1891 = vmatprep.subr.mxu0 0.0
        %1892 = vmatpush1.msra.mxu0 0.0
        %1893 = vmatprep.subr.mxu0 0.0
        %1894 = vmatpush1.msra.mxu0 0.0
        %1895 = vmatprep.subr.mxu0 0.0
        %1896 = vmatpush1.msra.mxu0 0.0
        %1897 = vmatprep.subr.mxu0 0.0
        %1898 = vmatpush1.msra.mxu0 0.0
        %1899 = vmatprep.subr.mxu0 0.0
        %1900 = vmatpush1.msra.mxu0 0.0
        %1901 = vmatprep.subr.mxu0 0.0
        %1902 = vmatpush1.msra.mxu0 0.0
        %1903 = vmatprep.subr.mxu0 0.0
        %1904 = vmatpush1.msra.mxu0 0.0
        %1905 = vmatprep.subr.mxu0 0.0
        %1906 = vmatpush1.msra.mxu0 0.0
        %1907 = vmatprep.subr.mxu0 0.0
        %1908 = vmatpush1.msra.mxu0 0.0
        %1909 = vmatprep.subr.mxu0 0.0
        %1910 = vmatpush1.msra.mxu0 0.0
        %1911 = vmatprep.subr.mxu0 0.0
        %1912 = vmatpush1.msra.mxu0 0.0
        %1913 = vmatprep.subr.mxu0 0.0
        %1914 = vmatpush1.msra.mxu0 0.0
        %1915 = vmatprep.subr.mxu0 0.0
        %1916 = vmatpush1.msra.mxu0 0.0
        %1917 = vmatprep.subr.mxu0 0.0
        %1918 = vmatpush1.msra.mxu0 0.0
        %1919 = vmatprep.subr.mxu0 0.0
        %1920 = vmatpush1.msra.mxu0 0.0
        %1921 = vmatprep.subr.mxu0 0.0
        %1922 = vmatpush1.msra.mxu0 0.0
        %1923 = vmatprep.subr.mxu0 0.0
        %1924 = vmatpush1.msra.mxu0 0.0
        %1925 = vmatprep.subr.mxu0 0.0
        %1926 = vmatpush1.msra.mxu0 0.0
        %1927 = vmatprep.subr.mxu0 0.0
        %1928 = vmatpush1.msra.mxu0 0.0
        %1929 = vmatprep.subr.mxu0 0.0
        %1930 = vmatpush1.msra.mxu0 0.0
        %1931 = vmatprep.mubr.f32.mxu0 0.0
        %v1932 = vand.u32 %v1861, 4294901760
        %v1933 = vsub.f32 %v1861, %v1932
        %v1934 = vand.u32 %v1933, 4294901760
        %v1935 = vsub.f32 %v1933, %v1934
        %v1936 = vand.u32 %v1935, 4294901760
        %1937 = vmatmul.mubr.f32.gmra.mrb[0].mxu0 %v1936
        %v1938 = vpop.f32.mrb[0].mxu0
        %v1939 = vadd.f32 %v1857, %v1938
        %v1940 = vpop.f32.mrb[0].mxu0
        %1941 = vdwg.mxu0
        %1942 = vmatprep.subr.mxu0 0.0
        %v1943 = vand.u32 %v401, 4294901760
        %v1944 = vsub.f32 %v401, %v1943
        %v1945 = vand.u32 %v1944, 4294901760
        %v1946 = vsub.f32 %v1944, %v1945
        %v1947 = vand.u32 %v1946, 4294901760
        %1948 = vmatpush1.msra.mxu0 %v1947
        %1949 = vmatprep.subr.mxu0 0.0
        %v1950 = vand.u32 %v402, 4294901760
        %v1951 = vsub.f32 %v402, %v1950
        %v1952 = vand.u32 %v1951, 4294901760
        %v1953 = vsub.f32 %v1951, %v1952
        %v1954 = vand.u32 %v1953, 4294901760
        %1955 = vmatpush1.msra.mxu0 %v1954
        %1956 = vmatprep.subr.mxu0 0.0
        %v1957 = vand.u32 %v403, 4294901760
        %v1958 = vsub.f32 %v403, %v1957
        %v1959 = vand.u32 %v1958, 4294901760
        %v1960 = vsub.f32 %v1958, %v1959
        %v1961 = vand.u32 %v1960, 4294901760
        %1962 = vmatpush1.msra.mxu0 %v1961
        %1963 = vmatprep.subr.mxu0 0.0
        %v1964 = vand.u32 %v404, 4294901760
        %v1965 = vsub.f32 %v404, %v1964
        %v1966 = vand.u32 %v1965, 4294901760
        %v1967 = vsub.f32 %v1965, %v1966
        %v1968 = vand.u32 %v1967, 4294901760
        %1969 = vmatpush1.msra.mxu0 %v1968
        %1970 = vmatprep.subr.mxu0 0.0
        %1971 = vmatpush1.msra.mxu0 0.0
        %1972 = vmatprep.subr.mxu0 0.0
        %1973 = vmatpush1.msra.mxu0 0.0
        %1974 = vmatprep.subr.mxu0 0.0
        %1975 = vmatpush1.msra.mxu0 0.0
        %1976 = vmatprep.subr.mxu0 0.0
        %1977 = vmatpush1.msra.mxu0 0.0
        %1978 = vmatprep.subr.mxu0 0.0
        %1979 = vmatpush1.msra.mxu0 0.0
        %1980 = vmatprep.subr.mxu0 0.0
        %1981 = vmatpush1.msra.mxu0 0.0
        %1982 = vmatprep.subr.mxu0 0.0
        %1983 = vmatpush1.msra.mxu0 0.0
        %1984 = vmatprep.subr.mxu0 0.0
        %1985 = vmatpush1.msra.mxu0 0.0
        %1986 = vmatprep.subr.mxu0 0.0
        %1987 = vmatpush1.msra.mxu0 0.0
        %1988 = vmatprep.subr.mxu0 0.0
        %1989 = vmatpush1.msra.mxu0 0.0
        %1990 = vmatprep.subr.mxu0 0.0
        %1991 = vmatpush1.msra.mxu0 0.0
        %1992 = vmatprep.subr.mxu0 0.0
        %1993 = vmatpush1.msra.mxu0 0.0
        %1994 = vmatprep.subr.mxu0 0.0
        %1995 = vmatpush1.msra.mxu0 0.0
        %1996 = vmatprep.subr.mxu0 0.0
        %1997 = vmatpush1.msra.mxu0 0.0
        %1998 = vmatprep.subr.mxu0 0.0
        %1999 = vmatpush1.msra.mxu0 0.0
        %2000 = vmatprep.subr.mxu0 0.0
        %2001 = vmatpush1.msra.mxu0 0.0
        %2002 = vmatprep.subr.mxu0 0.0
        %2003 = vmatpush1.msra.mxu0 0.0
        %2004 = vmatprep.subr.mxu0 0.0
        %2005 = vmatpush1.msra.mxu0 0.0
        %2006 = vmatprep.subr.mxu0 0.0
        %2007 = vmatpush1.msra.mxu0 0.0
        %2008 = vmatprep.subr.mxu0 0.0
        %2009 = vmatpush1.msra.mxu0 0.0
        %2010 = vmatprep.subr.mxu0 0.0
        %2011 = vmatpush1.msra.mxu0 0.0
        %2012 = vmatprep.subr.mxu0 0.0
        %2013 = vmatpush1.msra.mxu0 0.0
        %2014 = vmatprep.subr.mxu0 0.0
        %2015 = vmatpush1.msra.mxu0 0.0
        %2016 = vmatprep.subr.mxu0 0.0
        %2017 = vmatpush1.msra.mxu0 0.0
        %2018 = vmatprep.subr.mxu0 0.0
        %2019 = vmatpush1.msra.mxu0 0.0
        %2020 = vmatprep.subr.mxu0 0.0
        %2021 = vmatpush1.msra.mxu0 0.0
        %2022 = vmatprep.subr.mxu0 0.0
        %2023 = vmatpush1.msra.mxu0 0.0
        %2024 = vmatprep.subr.mxu0 0.0
        %2025 = vmatpush1.msra.mxu0 0.0
        %2026 = vmatprep.mubr.f32.mxu0 0.0
        %v2027 = vand.u32 %v1861, 4294901760
        %2028 = vmatmul.mubr.f32.gmra.mrb[0].mxu0 %v2027
        %v2029 = vpop.f32.mrb[0].mxu0
        %v2030 = vadd.f32 %v1939, %v2029
        %v2031 = vpop.f32.mrb[0].mxu0
        %2032 = vdwg.mxu0
        %2033 = vmatprep.subr.mxu0 0.0
        %v2034 = vand.u32 %v401, 4294901760
        %v2035 = vsub.f32 %v401, %v2034
        %2036 = vmatpush1.msra.mxu0 %v2035
        %2037 = vmatprep.subr.mxu0 0.0
        %v2038 = vand.u32 %v402, 4294901760
        %v2039 = vsub.f32 %v402, %v2038
        %2040 = vmatpush1.msra.mxu0 %v2039
        %2041 = vmatprep.subr.mxu0 0.0
        %v2042 = vand.u32 %v403, 4294901760
        %v2043 = vsub.f32 %v403, %v2042
        %2044 = vmatpush1.msra.mxu0 %v2043
        %2045 = vmatprep.subr.mxu0 0.0
        %v2046 = vand.u32 %v404, 4294901760
        %v2047 = vsub.f32 %v404, %v2046
        %2048 = vmatpush1.msra.mxu0 %v2047
        %2049 = vmatprep.subr.mxu0 0.0
        %2050 = vmatpush1.msra.mxu0 0.0
        %2051 = vmatprep.subr.mxu0 0.0
        %2052 = vmatpush1.msra.mxu0 0.0
        %2053 = vmatprep.subr.mxu0 0.0
        %2054 = vmatpush1.msra.mxu0 0.0
        %2055 = vmatprep.subr.mxu0 0.0
        %2056 = vmatpush1.msra.mxu0 0.0
        %2057 = vmatprep.subr.mxu0 0.0
        %2058 = vmatpush1.msra.mxu0 0.0
        %2059 = vmatprep.subr.mxu0 0.0
        %2060 = vmatpush1.msra.mxu0 0.0
        %2061 = vmatprep.subr.mxu0 0.0
        %2062 = vmatpush1.msra.mxu0 0.0
        %2063 = vmatprep.subr.mxu0 0.0
        %2064 = vmatpush1.msra.mxu0 0.0
        %2065 = vmatprep.subr.mxu0 0.0
        %2066 = vmatpush1.msra.mxu0 0.0
        %2067 = vmatprep.subr.mxu0 0.0
        %2068 = vmatpush1.msra.mxu0 0.0
        %2069 = vmatprep.subr.mxu0 0.0
        %2070 = vmatpush1.msra.mxu0 0.0
        %2071 = vmatprep.subr.mxu0 0.0
        %2072 = vmatpush1.msra.mxu0 0.0
        %2073 = vmatprep.subr.mxu0 0.0
        %2074 = vmatpush1.msra.mxu0 0.0
        %2075 = vmatprep.subr.mxu0 0.0
        %2076 = vmatpush1.msra.mxu0 0.0
        %2077 = vmatprep.subr.mxu0 0.0
        %2078 = vmatpush1.msra.mxu0 0.0
        %2079 = vmatprep.subr.mxu0 0.0
        %2080 = vmatpush1.msra.mxu0 0.0
        %2081 = vmatprep.subr.mxu0 0.0
        %2082 = vmatpush1.msra.mxu0 0.0
        %2083 = vmatprep.subr.mxu0 0.0
        %2084 = vmatpush1.msra.mxu0 0.0
        %2085 = vmatprep.subr.mxu0 0.0
        %2086 = vmatpush1.msra.mxu0 0.0
        %2087 = vmatprep.subr.mxu0 0.0
        %2088 = vmatpush1.msra.mxu0 0.0
        %2089 = vmatprep.subr.mxu0 0.0
        %2090 = vmatpush1.msra.mxu0 0.0
        %2091 = vmatprep.subr.mxu0 0.0
        %2092 = vmatpush1.msra.mxu0 0.0
        %2093 = vmatprep.subr.mxu0 0.0
        %2094 = vmatpush1.msra.mxu0 0.0
        %2095 = vmatprep.subr.mxu0 0.0
        %2096 = vmatpush1.msra.mxu0 0.0
        %2097 = vmatprep.subr.mxu0 0.0
        %2098 = vmatpush1.msra.mxu0 0.0
        %2099 = vmatprep.subr.mxu0 0.0
        %2100 = vmatpush1.msra.mxu0 0.0
        %2101 = vmatprep.subr.mxu0 0.0
        %2102 = vmatpush1.msra.mxu0 0.0
        %2103 = vmatprep.subr.mxu0 0.0
        %2104 = vmatpush1.msra.mxu0 0.0
        %2105 = vmatprep.mubr.f32.mxu0 0.0
        %v2106 = vand.u32 %v1861, 4294901760
        %v2107 = vsub.f32 %v1861, %v2106
        %2108 = vmatmul.mubr.f32.gmra.mrb[0].mxu0 %v2107
        %v2109 = vpop.f32.mrb[0].mxu0
        %v2110 = vadd.f32 %v2030, %v2109
        %v2111 = vpop.f32.mrb[0].mxu0
        %2112 = vdwg.mxu0
        %2113 = vmatprep.subr.mxu0 0.0
        %v2114 = vand.u32 %v401, 4294901760
        %2115 = vmatpush1.msra.mxu0 %v2114
        %2116 = vmatprep.subr.mxu0 0.0
        %v2117 = vand.u32 %v402, 4294901760
        %2118 = vmatpush1.msra.mxu0 %v2117
        %2119 = vmatprep.subr.mxu0 0.0
        %v2120 = vand.u32 %v403, 4294901760
        %2121 = vmatpush1.msra.mxu0 %v2120
        %2122 = vmatprep.subr.mxu0 0.0
        %v2123 = vand.u32 %v404, 4294901760
        %2124 = vmatpush1.msra.mxu0 %v2123
        %2125 = vmatprep.subr.mxu0 0.0
        %2126 = vmatpush1.msra.mxu0 0.0
        %2127 = vmatprep.subr.mxu0 0.0
        %2128 = vmatpush1.msra.mxu0 0.0
        %2129 = vmatprep.subr.mxu0 0.0
        %2130 = vmatpush1.msra.mxu0 0.0
        %2131 = vmatprep.subr.mxu0 0.0
        %2132 = vmatpush1.msra.mxu0 0.0
        %2133 = vmatprep.subr.mxu0 0.0
        %2134 = vmatpush1.msra.mxu0 0.0
        %2135 = vmatprep.subr.mxu0 0.0
        %2136 = vmatpush1.msra.mxu0 0.0
        %2137 = vmatprep.subr.mxu0 0.0
        %2138 = vmatpush1.msra.mxu0 0.0
        %2139 = vmatprep.subr.mxu0 0.0
        %2140 = vmatpush1.msra.mxu0 0.0
        %2141 = vmatprep.subr.mxu0 0.0
        %2142 = vmatpush1.msra.mxu0 0.0
        %2143 = vmatprep.subr.mxu0 0.0
        %2144 = vmatpush1.msra.mxu0 0.0
        %2145 = vmatprep.subr.mxu0 0.0
        %2146 = vmatpush1.msra.mxu0 0.0
        %2147 = vmatprep.subr.mxu0 0.0
        %2148 = vmatpush1.msra.mxu0 0.0
        %2149 = vmatprep.subr.mxu0 0.0
        %2150 = vmatpush1.msra.mxu0 0.0
        %2151 = vmatprep.subr.mxu0 0.0
        %2152 = vmatpush1.msra.mxu0 0.0
        %2153 = vmatprep.subr.mxu0 0.0
        %2154 = vmatpush1.msra.mxu0 0.0
        %2155 = vmatprep.subr.mxu0 0.0
        %2156 = vmatpush1.msra.mxu0 0.0
        %2157 = vmatprep.subr.mxu0 0.0
        %2158 = vmatpush1.msra.mxu0 0.0
        %2159 = vmatprep.subr.mxu0 0.0
        %2160 = vmatpush1.msra.mxu0 0.0
        %2161 = vmatprep.subr.mxu0 0.0
        %2162 = vmatpush1.msra.mxu0 0.0
        %2163 = vmatprep.subr.mxu0 0.0
        %2164 = vmatpush1.msra.mxu0 0.0
        %2165 = vmatprep.subr.mxu0 0.0
        %2166 = vmatpush1.msra.mxu0 0.0
        %2167 = vmatprep.subr.mxu0 0.0
        %2168 = vmatpush1.msra.mxu0 0.0
        %2169 = vmatprep.subr.mxu0 0.0
        %2170 = vmatpush1.msra.mxu0 0.0
        %2171 = vmatprep.subr.mxu0 0.0
        %2172 = vmatpush1.msra.mxu0 0.0
        %2173 = vmatprep.subr.mxu0 0.0
        %2174 = vmatpush1.msra.mxu0 0.0
        %2175 = vmatprep.subr.mxu0 0.0
        %2176 = vmatpush1.msra.mxu0 0.0
        %2177 = vmatprep.subr.mxu0 0.0
        %2178 = vmatpush1.msra.mxu0 0.0
        %2179 = vmatprep.subr.mxu0 0.0
        %2180 = vmatpush1.msra.mxu0 0.0
        %2181 = vmatprep.mubr.f32.mxu0 0.0
        %v2182 = vand.u32 %v1861, 4294901760
        %v2183 = vsub.f32 %v1861, %v2182
        %v2184 = vand.u32 %v2183, 4294901760
        %2185 = vmatmul.mubr.f32.gmra.mrb[0].mxu0 %v2184
        %v2186 = vpop.f32.mrb[0].mxu0
        %v2187 = vadd.f32 %v2110, %v2186
        %v2188 = vpop.f32.mrb[0].mxu0
        %2189 = vdwg.mxu0
        %2190 = vmatprep.subr.mxu0 0.0
        %v2191 = vand.u32 %v401, 4294901760
        %v2192 = vsub.f32 %v401, %v2191
        %v2193 = vand.u32 %v2192, 4294901760
        %2194 = vmatpush1.msra.mxu0 %v2193
        %2195 = vmatprep.subr.mxu0 0.0
        %v2196 = vand.u32 %v402, 4294901760
        %v2197 = vsub.f32 %v402, %v2196
        %v2198 = vand.u32 %v2197, 4294901760
        %2199 = vmatpush1.msra.mxu0 %v2198
        %2200 = vmatprep.subr.mxu0 0.0
        %v2201 = vand.u32 %v403, 4294901760
        %v2202 = vsub.f32 %v403, %v2201
        %v2203 = vand.u32 %v2202, 4294901760
        %2204 = vmatpush1.msra.mxu0 %v2203
        %2205 = vmatprep.subr.mxu0 0.0
        %v2206 = vand.u32 %v404, 4294901760
        %v2207 = vsub.f32 %v404, %v2206
        %v2208 = vand.u32 %v2207, 4294901760
        %2209 = vmatpush1.msra.mxu0 %v2208
        %2210 = vmatprep.subr.mxu0 0.0
        %2211 = vmatpush1.msra.mxu0 0.0
        %2212 = vmatprep.subr.mxu0 0.0
        %2213 = vmatpush1.msra.mxu0 0.0
        %2214 = vmatprep.subr.mxu0 0.0
        %2215 = vmatpush1.msra.mxu0 0.0
        %2216 = vmatprep.subr.mxu0 0.0
        %2217 = vmatpush1.msra.mxu0 0.0
        %2218 = vmatprep.subr.mxu0 0.0
        %2219 = vmatpush1.msra.mxu0 0.0
        %2220 = vmatprep.subr.mxu0 0.0
        %2221 = vmatpush1.msra.mxu0 0.0
        %2222 = vmatprep.subr.mxu0 0.0
        %2223 = vmatpush1.msra.mxu0 0.0
        %2224 = vmatprep.subr.mxu0 0.0
        %2225 = vmatpush1.msra.mxu0 0.0
        %2226 = vmatprep.subr.mxu0 0.0
        %2227 = vmatpush1.msra.mxu0 0.0
        %2228 = vmatprep.subr.mxu0 0.0
        %2229 = vmatpush1.msra.mxu0 0.0
        %2230 = vmatprep.subr.mxu0 0.0
        %2231 = vmatpush1.msra.mxu0 0.0
        %2232 = vmatprep.subr.mxu0 0.0
        %2233 = vmatpush1.msra.mxu0 0.0
        %2234 = vmatprep.subr.mxu0 0.0
        %2235 = vmatpush1.msra.mxu0 0.0
        %2236 = vmatprep.subr.mxu0 0.0
        %2237 = vmatpush1.msra.mxu0 0.0
        %2238 = vmatprep.subr.mxu0 0.0
        %2239 = vmatpush1.msra.mxu0 0.0
        %2240 = vmatprep.subr.mxu0 0.0
        %2241 = vmatpush1.msra.mxu0 0.0
        %2242 = vmatprep.subr.mxu0 0.0
        %2243 = vmatpush1.msra.mxu0 0.0
        %2244 = vmatprep.subr.mxu0 0.0
        %2245 = vmatpush1.msra.mxu0 0.0
        %2246 = vmatprep.subr.mxu0 0.0
        %2247 = vmatpush1.msra.mxu0 0.0
        %2248 = vmatprep.subr.mxu0 0.0
        %2249 = vmatpush1.msra.mxu0 0.0
        %2250 = vmatprep.subr.mxu0 0.0
        %2251 = vmatpush1.msra.mxu0 0.0
        %2252 = vmatprep.subr.mxu0 0.0
        %2253 = vmatpush1.msra.mxu0 0.0
        %2254 = vmatprep.subr.mxu0 0.0
        %2255 = vmatpush1.msra.mxu0 0.0
        %2256 = vmatprep.subr.mxu0 0.0
        %2257 = vmatpush1.msra.mxu0 0.0
        %2258 = vmatprep.subr.mxu0 0.0
        %2259 = vmatpush1.msra.mxu0 0.0
        %2260 = vmatprep.subr.mxu0 0.0
        %2261 = vmatpush1.msra.mxu0 0.0
        %2262 = vmatprep.subr.mxu0 0.0
        %2263 = vmatpush1.msra.mxu0 0.0
        %2264 = vmatprep.subr.mxu0 0.0
        %2265 = vmatpush1.msra.mxu0 0.0
        %2266 = vmatprep.mubr.f32.mxu0 0.0
        %v2267 = vand.u32 %v1861, 4294901760
        %2268 = vmatmul.mubr.f32.gmra.mrb[0].mxu0 %v2267
        %v2269 = vpop.f32.mrb[0].mxu0
        %v2270 = vadd.f32 %v2187, %v2269
        %v2271 = vpop.f32.mrb[0].mxu0
        %2272 = vdwg.mxu0
        %2273 = vmatprep.subr.mxu0 0.0
        %v2274 = vand.u32 %v401, 4294901760
        %2275 = vmatpush1.msra.mxu0 %v2274
        %2276 = vmatprep.subr.mxu0 0.0
        %v2277 = vand.u32 %v402, 4294901760
        %2278 = vmatpush1.msra.mxu0 %v2277
        %2279 = vmatprep.subr.mxu0 0.0
        %v2280 = vand.u32 %v403, 4294901760
        %2281 = vmatpush1.msra.mxu0 %v2280
        %2282 = vmatprep.subr.mxu0 0.0
        %v2283 = vand.u32 %v404, 4294901760
        %2284 = vmatpush1.msra.mxu0 %v2283
        %2285 = vmatprep.subr.mxu0 0.0
        %2286 = vmatpush1.msra.mxu0 0.0
        %2287 = vmatprep.subr.mxu0 0.0
        %2288 = vmatpush1.msra.mxu0 0.0
        %2289 = vmatprep.subr.mxu0 0.0
        %2290 = vmatpush1.msra.mxu0 0.0
        %2291 = vmatprep.subr.mxu0 0.0
        %2292 = vmatpush1.msra.mxu0 0.0
        %2293 = vmatprep.subr.mxu0 0.0
        %2294 = vmatpush1.msra.mxu0 0.0
        %2295 = vmatprep.subr.mxu0 0.0
        %2296 = vmatpush1.msra.mxu0 0.0
        %2297 = vmatprep.subr.mxu0 0.0
        %2298 = vmatpush1.msra.mxu0 0.0
        %2299 = vmatprep.subr.mxu0 0.0
        %2300 = vmatpush1.msra.mxu0 0.0
        %2301 = vmatprep.subr.mxu0 0.0
        %2302 = vmatpush1.msra.mxu0 0.0
        %2303 = vmatprep.subr.mxu0 0.0
        %2304 = vmatpush1.msra.mxu0 0.0
        %2305 = vmatprep.subr.mxu0 0.0
        %2306 = vmatpush1.msra.mxu0 0.0
        %2307 = vmatprep.subr.mxu0 0.0
        %2308 = vmatpush1.msra.mxu0 0.0
        %2309 = vmatprep.subr.mxu0 0.0
        %2310 = vmatpush1.msra.mxu0 0.0
        %2311 = vmatprep.subr.mxu0 0.0
        %2312 = vmatpush1.msra.mxu0 0.0
        %2313 = vmatprep.subr.mxu0 0.0
        %2314 = vmatpush1.msra.mxu0 0.0
        %2315 = vmatprep.subr.mxu0 0.0
        %2316 = vmatpush1.msra.mxu0 0.0
        %2317 = vmatprep.subr.mxu0 0.0
        %2318 = vmatpush1.msra.mxu0 0.0
        %2319 = vmatprep.subr.mxu0 0.0
        %2320 = vmatpush1.msra.mxu0 0.0
        %2321 = vmatprep.subr.mxu0 0.0
        %2322 = vmatpush1.msra.mxu0 0.0
        %2323 = vmatprep.subr.mxu0 0.0
        %2324 = vmatpush1.msra.mxu0 0.0
        %2325 = vmatprep.subr.mxu0 0.0
        %2326 = vmatpush1.msra.mxu0 0.0
        %2327 = vmatprep.subr.mxu0 0.0
        %2328 = vmatpush1.msra.mxu0 0.0
        %2329 = vmatprep.subr.mxu0 0.0
        %2330 = vmatpush1.msra.mxu0 0.0
        %2331 = vmatprep.subr.mxu0 0.0
        %2332 = vmatpush1.msra.mxu0 0.0
        %2333 = vmatprep.subr.mxu0 0.0
        %2334 = vmatpush1.msra.mxu0 0.0
        %2335 = vmatprep.subr.mxu0 0.0
        %2336 = vmatpush1.msra.mxu0 0.0
        %2337 = vmatprep.subr.mxu0 0.0
        %2338 = vmatpush1.msra.mxu0 0.0
        %2339 = vmatprep.subr.mxu0 0.0
        %2340 = vmatpush1.msra.mxu0 0.0
        %2341 = vmatprep.mubr.f32.mxu0 0.0
        %v2342 = vand.u32 %v1861, 4294901760
        %2343 = vmatmul.mubr.f32.gmra.mrb[0].mxu0 %v2342
        %v2344 = vpop.f32.mrb[0].mxu0
        %v2345 = vadd.f32 %v2270, %v2344
        %v2346 = vpop.f32.mrb[0].mxu0
        %2347 = vdwg.mxu0
        %v2349 = vsel %vm1371, %v400, 0
        %2351 = vmatprep.subr.mxu0 0.0
        %v2352 = vand.u32 %v409, 4294901760
        %2353 = vmatpush1.msra.mxu0 %v2352
        %2354 = vmatprep.subr.mxu0 0.0
        %v2355 = vand.u32 %v410, 4294901760
        %2356 = vmatpush1.msra.mxu0 %v2355
        %2357 = vmatprep.subr.mxu0 0.0
        %v2358 = vand.u32 %v411, 4294901760
        %2359 = vmatpush1.msra.mxu0 %v2358
        %2360 = vmatprep.subr.mxu0 0.0
        %v2361 = vand.u32 %v412, 4294901760
        %2362 = vmatpush1.msra.mxu0 %v2361
        %2363 = vmatprep.subr.mxu0 0.0
        %2364 = vmatpush1.msra.mxu0 0.0
        %2365 = vmatprep.subr.mxu0 0.0
        %2366 = vmatpush1.msra.mxu0 0.0
        %2367 = vmatprep.subr.mxu0 0.0
        %2368 = vmatpush1.msra.mxu0 0.0
        %2369 = vmatprep.subr.mxu0 0.0
        %2370 = vmatpush1.msra.mxu0 0.0
        %2371 = vmatprep.subr.mxu0 0.0
        %2372 = vmatpush1.msra.mxu0 0.0
        %2373 = vmatprep.subr.mxu0 0.0
        %2374 = vmatpush1.msra.mxu0 0.0
        %2375 = vmatprep.subr.mxu0 0.0
        %2376 = vmatpush1.msra.mxu0 0.0
        %2377 = vmatprep.subr.mxu0 0.0
        %2378 = vmatpush1.msra.mxu0 0.0
        %2379 = vmatprep.subr.mxu0 0.0
        %2380 = vmatpush1.msra.mxu0 0.0
        %2381 = vmatprep.subr.mxu0 0.0
        %2382 = vmatpush1.msra.mxu0 0.0
        %2383 = vmatprep.subr.mxu0 0.0
        %2384 = vmatpush1.msra.mxu0 0.0
        %2385 = vmatprep.subr.mxu0 0.0
        %2386 = vmatpush1.msra.mxu0 0.0
        %2387 = vmatprep.subr.mxu0 0.0
        %2388 = vmatpush1.msra.mxu0 0.0
        %2389 = vmatprep.subr.mxu0 0.0
        %2390 = vmatpush1.msra.mxu0 0.0
        %2391 = vmatprep.subr.mxu0 0.0
        %2392 = vmatpush1.msra.mxu0 0.0
        %2393 = vmatprep.subr.mxu0 0.0
        %2394 = vmatpush1.msra.mxu0 0.0
        %2395 = vmatprep.subr.mxu0 0.0
        %2396 = vmatpush1.msra.mxu0 0.0
        %2397 = vmatprep.subr.mxu0 0.0
        %2398 = vmatpush1.msra.mxu0 0.0
        %2399 = vmatprep.subr.mxu0 0.0
        %2400 = vmatpush1.msra.mxu0 0.0
        %2401 = vmatprep.subr.mxu0 0.0
        %2402 = vmatpush1.msra.mxu0 0.0
        %2403 = vmatprep.subr.mxu0 0.0
        %2404 = vmatpush1.msra.mxu0 0.0
        %2405 = vmatprep.subr.mxu0 0.0
        %2406 = vmatpush1.msra.mxu0 0.0
        %2407 = vmatprep.subr.mxu0 0.0
        %2408 = vmatpush1.msra.mxu0 0.0
        %2409 = vmatprep.subr.mxu0 0.0
        %2410 = vmatpush1.msra.mxu0 0.0
        %2411 = vmatprep.subr.mxu0 0.0
        %2412 = vmatpush1.msra.mxu0 0.0
        %2413 = vmatprep.subr.mxu0 0.0
        %2414 = vmatpush1.msra.mxu0 0.0
        %2415 = vmatprep.subr.mxu0 0.0
        %2416 = vmatpush1.msra.mxu0 0.0
        %2417 = vmatprep.subr.mxu0 0.0
        %2418 = vmatpush1.msra.mxu0 0.0
        %2419 = vmatprep.mubr.f32.mxu0 0.0
        %v2420 = vand.u32 %v2349, 4294901760
        %v2421 = vsub.f32 %v2349, %v2420
        %v2422 = vand.u32 %v2421, 4294901760
        %v2423 = vsub.f32 %v2421, %v2422
        %v2424 = vand.u32 %v2423, 4294901760
        %2425 = vmatmul.mubr.f32.gmra.mrb[0].mxu0 %v2424
        %v2426 = vpop.f32.mrb[0].mxu0
        %v2427 = vadd.f32 0.0, %v2426
        %v2428 = vpop.f32.mrb[0].mxu0
        %2429 = vdwg.mxu0
        %2430 = vmatprep.subr.mxu0 0.0
        %v2431 = vand.u32 %v409, 4294901760
        %v2432 = vsub.f32 %v409, %v2431
        %v2433 = vand.u32 %v2432, 4294901760
        %v2434 = vsub.f32 %v2432, %v2433
        %v2435 = vand.u32 %v2434, 4294901760
        %2436 = vmatpush1.msra.mxu0 %v2435
        %2437 = vmatprep.subr.mxu0 0.0
        %v2438 = vand.u32 %v410, 4294901760
        %v2439 = vsub.f32 %v410, %v2438
        %v2440 = vand.u32 %v2439, 4294901760
        %v2441 = vsub.f32 %v2439, %v2440
        %v2442 = vand.u32 %v2441, 4294901760
        %2443 = vmatpush1.msra.mxu0 %v2442
        %2444 = vmatprep.subr.mxu0 0.0
        %v2445 = vand.u32 %v411, 4294901760
        %v2446 = vsub.f32 %v411, %v2445
        %v2447 = vand.u32 %v2446, 4294901760
        %v2448 = vsub.f32 %v2446, %v2447
        %v2449 = vand.u32 %v2448, 4294901760
        %2450 = vmatpush1.msra.mxu0 %v2449
        %2451 = vmatprep.subr.mxu0 0.0
        %v2452 = vand.u32 %v412, 4294901760
        %v2453 = vsub.f32 %v412, %v2452
        %v2454 = vand.u32 %v2453, 4294901760
        %v2455 = vsub.f32 %v2453, %v2454
        %v2456 = vand.u32 %v2455, 4294901760
        %2457 = vmatpush1.msra.mxu0 %v2456
        %2458 = vmatprep.subr.mxu0 0.0
        %2459 = vmatpush1.msra.mxu0 0.0
        %2460 = vmatprep.subr.mxu0 0.0
        %2461 = vmatpush1.msra.mxu0 0.0
        %2462 = vmatprep.subr.mxu0 0.0
        %2463 = vmatpush1.msra.mxu0 0.0
        %2464 = vmatprep.subr.mxu0 0.0
        %2465 = vmatpush1.msra.mxu0 0.0
        %2466 = vmatprep.subr.mxu0 0.0
        %2467 = vmatpush1.msra.mxu0 0.0
        %2468 = vmatprep.subr.mxu0 0.0
        %2469 = vmatpush1.msra.mxu0 0.0
        %2470 = vmatprep.subr.mxu0 0.0
        %2471 = vmatpush1.msra.mxu0 0.0
        %2472 = vmatprep.subr.mxu0 0.0
        %2473 = vmatpush1.msra.mxu0 0.0
        %2474 = vmatprep.subr.mxu0 0.0
        %2475 = vmatpush1.msra.mxu0 0.0
        %2476 = vmatprep.subr.mxu0 0.0
        %2477 = vmatpush1.msra.mxu0 0.0
        %2478 = vmatprep.subr.mxu0 0.0
        %2479 = vmatpush1.msra.mxu0 0.0
        %2480 = vmatprep.subr.mxu0 0.0
        %2481 = vmatpush1.msra.mxu0 0.0
        %2482 = vmatprep.subr.mxu0 0.0
        %2483 = vmatpush1.msra.mxu0 0.0
        %2484 = vmatprep.subr.mxu0 0.0
        %2485 = vmatpush1.msra.mxu0 0.0
        %2486 = vmatprep.subr.mxu0 0.0
        %2487 = vmatpush1.msra.mxu0 0.0
        %2488 = vmatprep.subr.mxu0 0.0
        %2489 = vmatpush1.msra.mxu0 0.0
        %2490 = vmatprep.subr.mxu0 0.0
        %2491 = vmatpush1.msra.mxu0 0.0
        %2492 = vmatprep.subr.mxu0 0.0
        %2493 = vmatpush1.msra.mxu0 0.0
        %2494 = vmatprep.subr.mxu0 0.0
        %2495 = vmatpush1.msra.mxu0 0.0
        %2496 = vmatprep.subr.mxu0 0.0
        %2497 = vmatpush1.msra.mxu0 0.0
        %2498 = vmatprep.subr.mxu0 0.0
        %2499 = vmatpush1.msra.mxu0 0.0
        %2500 = vmatprep.subr.mxu0 0.0
        %2501 = vmatpush1.msra.mxu0 0.0
        %2502 = vmatprep.subr.mxu0 0.0
        %2503 = vmatpush1.msra.mxu0 0.0
        %2504 = vmatprep.subr.mxu0 0.0
        %2505 = vmatpush1.msra.mxu0 0.0
        %2506 = vmatprep.subr.mxu0 0.0
        %2507 = vmatpush1.msra.mxu0 0.0
        %2508 = vmatprep.subr.mxu0 0.0
        %2509 = vmatpush1.msra.mxu0 0.0
        %2510 = vmatprep.subr.mxu0 0.0
        %2511 = vmatpush1.msra.mxu0 0.0
        %2512 = vmatprep.subr.mxu0 0.0
        %2513 = vmatpush1.msra.mxu0 0.0
        %2514 = vmatprep.mubr.f32.mxu0 0.0
        %v2515 = vand.u32 %v2349, 4294901760
        %2516 = vmatmul.mubr.f32.gmra.mrb[0].mxu0 %v2515
        %v2517 = vpop.f32.mrb[0].mxu0
        %v2518 = vadd.f32 %v2427, %v2517
        %v2519 = vpop.f32.mrb[0].mxu0
        %2520 = vdwg.mxu0
        %2521 = vmatprep.subr.mxu0 0.0
        %v2522 = vand.u32 %v409, 4294901760
        %v2523 = vsub.f32 %v409, %v2522
        %2524 = vmatpush1.msra.mxu0 %v2523
        %2525 = vmatprep.subr.mxu0 0.0
        %v2526 = vand.u32 %v410, 4294901760
        %v2527 = vsub.f32 %v410, %v2526
        %2528 = vmatpush1.msra.mxu0 %v2527
        %2529 = vmatprep.subr.mxu0 0.0
        %v2530 = vand.u32 %v411, 4294901760
        %v2531 = vsub.f32 %v411, %v2530
        %2532 = vmatpush1.msra.mxu0 %v2531
        %2533 = vmatprep.subr.mxu0 0.0
        %v2534 = vand.u32 %v412, 4294901760
        %v2535 = vsub.f32 %v412, %v2534
        %2536 = vmatpush1.msra.mxu0 %v2535
        %2537 = vmatprep.subr.mxu0 0.0
        %2538 = vmatpush1.msra.mxu0 0.0
        %2539 = vmatprep.subr.mxu0 0.0
        %2540 = vmatpush1.msra.mxu0 0.0
        %2541 = vmatprep.subr.mxu0 0.0
        %2542 = vmatpush1.msra.mxu0 0.0
        %2543 = vmatprep.subr.mxu0 0.0
        %2544 = vmatpush1.msra.mxu0 0.0
        %2545 = vmatprep.subr.mxu0 0.0
        %2546 = vmatpush1.msra.mxu0 0.0
        %2547 = vmatprep.subr.mxu0 0.0
        %2548 = vmatpush1.msra.mxu0 0.0
        %2549 = vmatprep.subr.mxu0 0.0
        %2550 = vmatpush1.msra.mxu0 0.0
        %2551 = vmatprep.subr.mxu0 0.0
        %2552 = vmatpush1.msra.mxu0 0.0
        %2553 = vmatprep.subr.mxu0 0.0
        %2554 = vmatpush1.msra.mxu0 0.0
        %2555 = vmatprep.subr.mxu0 0.0
        %2556 = vmatpush1.msra.mxu0 0.0
        %2557 = vmatprep.subr.mxu0 0.0
        %2558 = vmatpush1.msra.mxu0 0.0
        %2559 = vmatprep.subr.mxu0 0.0
        %2560 = vmatpush1.msra.mxu0 0.0
        %2561 = vmatprep.subr.mxu0 0.0
        %2562 = vmatpush1.msra.mxu0 0.0
        %2563 = vmatprep.subr.mxu0 0.0
        %2564 = vmatpush1.msra.mxu0 0.0
        %2565 = vmatprep.subr.mxu0 0.0
        %2566 = vmatpush1.msra.mxu0 0.0
        %2567 = vmatprep.subr.mxu0 0.0
        %2568 = vmatpush1.msra.mxu0 0.0
        %2569 = vmatprep.subr.mxu0 0.0
        %2570 = vmatpush1.msra.mxu0 0.0
        %2571 = vmatprep.subr.mxu0 0.0
        %2572 = vmatpush1.msra.mxu0 0.0
        %2573 = vmatprep.subr.mxu0 0.0
        %2574 = vmatpush1.msra.mxu0 0.0
        %2575 = vmatprep.subr.mxu0 0.0
        %2576 = vmatpush1.msra.mxu0 0.0
        %2577 = vmatprep.subr.mxu0 0.0
        %2578 = vmatpush1.msra.mxu0 0.0
        %2579 = vmatprep.subr.mxu0 0.0
        %2580 = vmatpush1.msra.mxu0 0.0
        %2581 = vmatprep.subr.mxu0 0.0
        %2582 = vmatpush1.msra.mxu0 0.0
        %2583 = vmatprep.subr.mxu0 0.0
        %2584 = vmatpush1.msra.mxu0 0.0
        %2585 = vmatprep.subr.mxu0 0.0
        %2586 = vmatpush1.msra.mxu0 0.0
        %2587 = vmatprep.subr.mxu0 0.0
        %2588 = vmatpush1.msra.mxu0 0.0
        %2589 = vmatprep.subr.mxu0 0.0
        %2590 = vmatpush1.msra.mxu0 0.0
        %2591 = vmatprep.subr.mxu0 0.0
        %2592 = vmatpush1.msra.mxu0 0.0
        %2593 = vmatprep.mubr.f32.mxu0 0.0
        %v2594 = vand.u32 %v2349, 4294901760
        %v2595 = vsub.f32 %v2349, %v2594
        %2596 = vmatmul.mubr.f32.gmra.mrb[0].mxu0 %v2595
        %v2597 = vpop.f32.mrb[0].mxu0
        %v2598 = vadd.f32 %v2518, %v2597
        %v2599 = vpop.f32.mrb[0].mxu0
        %2600 = vdwg.mxu0
        %2601 = vmatprep.subr.mxu0 0.0
        %v2602 = vand.u32 %v409, 4294901760
        %2603 = vmatpush1.msra.mxu0 %v2602
        %2604 = vmatprep.subr.mxu0 0.0
        %v2605 = vand.u32 %v410, 4294901760
        %2606 = vmatpush1.msra.mxu0 %v2605
        %2607 = vmatprep.subr.mxu0 0.0
        %v2608 = vand.u32 %v411, 4294901760
        %2609 = vmatpush1.msra.mxu0 %v2608
        %2610 = vmatprep.subr.mxu0 0.0
        %v2611 = vand.u32 %v412, 4294901760
        %2612 = vmatpush1.msra.mxu0 %v2611
        %2613 = vmatprep.subr.mxu0 0.0
        %2614 = vmatpush1.msra.mxu0 0.0
        %2615 = vmatprep.subr.mxu0 0.0
        %2616 = vmatpush1.msra.mxu0 0.0
        %2617 = vmatprep.subr.mxu0 0.0
        %2618 = vmatpush1.msra.mxu0 0.0
        %2619 = vmatprep.subr.mxu0 0.0
        %2620 = vmatpush1.msra.mxu0 0.0
        %2621 = vmatprep.subr.mxu0 0.0
        %2622 = vmatpush1.msra.mxu0 0.0
        %2623 = vmatprep.subr.mxu0 0.0
        %2624 = vmatpush1.msra.mxu0 0.0
        %2625 = vmatprep.subr.mxu0 0.0
        %2626 = vmatpush1.msra.mxu0 0.0
        %2627 = vmatprep.subr.mxu0 0.0
        %2628 = vmatpush1.msra.mxu0 0.0
        %2629 = vmatprep.subr.mxu0 0.0
        %2630 = vmatpush1.msra.mxu0 0.0
        %2631 = vmatprep.subr.mxu0 0.0
        %2632 = vmatpush1.msra.mxu0 0.0
        %2633 = vmatprep.subr.mxu0 0.0
        %2634 = vmatpush1.msra.mxu0 0.0
        %2635 = vmatprep.subr.mxu0 0.0
        %2636 = vmatpush1.msra.mxu0 0.0
        %2637 = vmatprep.subr.mxu0 0.0
        %2638 = vmatpush1.msra.mxu0 0.0
        %2639 = vmatprep.subr.mxu0 0.0
        %2640 = vmatpush1.msra.mxu0 0.0
        %2641 = vmatprep.subr.mxu0 0.0
        %2642 = vmatpush1.msra.mxu0 0.0
        %2643 = vmatprep.subr.mxu0 0.0
        %2644 = vmatpush1.msra.mxu0 0.0
        %2645 = vmatprep.subr.mxu0 0.0
        %2646 = vmatpush1.msra.mxu0 0.0
        %2647 = vmatprep.subr.mxu0 0.0
        %2648 = vmatpush1.msra.mxu0 0.0
        %2649 = vmatprep.subr.mxu0 0.0
        %2650 = vmatpush1.msra.mxu0 0.0
        %2651 = vmatprep.subr.mxu0 0.0
        %2652 = vmatpush1.msra.mxu0 0.0
        %2653 = vmatprep.subr.mxu0 0.0
        %2654 = vmatpush1.msra.mxu0 0.0
        %2655 = vmatprep.subr.mxu0 0.0
        %2656 = vmatpush1.msra.mxu0 0.0
        %2657 = vmatprep.subr.mxu0 0.0
        %2658 = vmatpush1.msra.mxu0 0.0
        %2659 = vmatprep.subr.mxu0 0.0
        %2660 = vmatpush1.msra.mxu0 0.0
        %2661 = vmatprep.subr.mxu0 0.0
        %2662 = vmatpush1.msra.mxu0 0.0
        %2663 = vmatprep.subr.mxu0 0.0
        %2664 = vmatpush1.msra.mxu0 0.0
        %2665 = vmatprep.subr.mxu0 0.0
        %2666 = vmatpush1.msra.mxu0 0.0
        %2667 = vmatprep.subr.mxu0 0.0
        %2668 = vmatpush1.msra.mxu0 0.0
        %2669 = vmatprep.mubr.f32.mxu0 0.0
        %v2670 = vand.u32 %v2349, 4294901760
        %v2671 = vsub.f32 %v2349, %v2670
        %v2672 = vand.u32 %v2671, 4294901760
        %2673 = vmatmul.mubr.f32.gmra.mrb[0].mxu0 %v2672
        %v2674 = vpop.f32.mrb[0].mxu0
        %v2675 = vadd.f32 %v2598, %v2674
        %v2676 = vpop.f32.mrb[0].mxu0
        %2677 = vdwg.mxu0
        %2678 = vmatprep.subr.mxu0 0.0
        %v2679 = vand.u32 %v409, 4294901760
        %v2680 = vsub.f32 %v409, %v2679
        %v2681 = vand.u32 %v2680, 4294901760
        %2682 = vmatpush1.msra.mxu0 %v2681
        %2683 = vmatprep.subr.mxu0 0.0
        %v2684 = vand.u32 %v410, 4294901760
        %v2685 = vsub.f32 %v410, %v2684
        %v2686 = vand.u32 %v2685, 4294901760
        %2687 = vmatpush1.msra.mxu0 %v2686
        %2688 = vmatprep.subr.mxu0 0.0
        %v2689 = vand.u32 %v411, 4294901760
        %v2690 = vsub.f32 %v411, %v2689
        %v2691 = vand.u32 %v2690, 4294901760
        %2692 = vmatpush1.msra.mxu0 %v2691
        %2693 = vmatprep.subr.mxu0 0.0
        %v2694 = vand.u32 %v412, 4294901760
        %v2695 = vsub.f32 %v412, %v2694
        %v2696 = vand.u32 %v2695, 4294901760
        %2697 = vmatpush1.msra.mxu0 %v2696
        %2698 = vmatprep.subr.mxu0 0.0
        %2699 = vmatpush1.msra.mxu0 0.0
        %2700 = vmatprep.subr.mxu0 0.0
        %2701 = vmatpush1.msra.mxu0 0.0
        %2702 = vmatprep.subr.mxu0 0.0
        %2703 = vmatpush1.msra.mxu0 0.0
        %2704 = vmatprep.subr.mxu0 0.0
        %2705 = vmatpush1.msra.mxu0 0.0
        %2706 = vmatprep.subr.mxu0 0.0
        %2707 = vmatpush1.msra.mxu0 0.0
        %2708 = vmatprep.subr.mxu0 0.0
        %2709 = vmatpush1.msra.mxu0 0.0
        %2710 = vmatprep.subr.mxu0 0.0
        %2711 = vmatpush1.msra.mxu0 0.0
        %2712 = vmatprep.subr.mxu0 0.0
        %2713 = vmatpush1.msra.mxu0 0.0
        %2714 = vmatprep.subr.mxu0 0.0
        %2715 = vmatpush1.msra.mxu0 0.0
        %2716 = vmatprep.subr.mxu0 0.0
        %2717 = vmatpush1.msra.mxu0 0.0
        %2718 = vmatprep.subr.mxu0 0.0
        %2719 = vmatpush1.msra.mxu0 0.0
        %2720 = vmatprep.subr.mxu0 0.0
        %2721 = vmatpush1.msra.mxu0 0.0
        %2722 = vmatprep.subr.mxu0 0.0
        %2723 = vmatpush1.msra.mxu0 0.0
        %2724 = vmatprep.subr.mxu0 0.0
        %2725 = vmatpush1.msra.mxu0 0.0
        %2726 = vmatprep.subr.mxu0 0.0
        %2727 = vmatpush1.msra.mxu0 0.0
        %2728 = vmatprep.subr.mxu0 0.0
        %2729 = vmatpush1.msra.mxu0 0.0
        %2730 = vmatprep.subr.mxu0 0.0
        %2731 = vmatpush1.msra.mxu0 0.0
        %2732 = vmatprep.subr.mxu0 0.0
        %2733 = vmatpush1.msra.mxu0 0.0
        %2734 = vmatprep.subr.mxu0 0.0
        %2735 = vmatpush1.msra.mxu0 0.0
        %2736 = vmatprep.subr.mxu0 0.0
        %2737 = vmatpush1.msra.mxu0 0.0
        %2738 = vmatprep.subr.mxu0 0.0
        %2739 = vmatpush1.msra.mxu0 0.0
        %2740 = vmatprep.subr.mxu0 0.0
        %2741 = vmatpush1.msra.mxu0 0.0
        %2742 = vmatprep.subr.mxu0 0.0
        %2743 = vmatpush1.msra.mxu0 0.0
        %2744 = vmatprep.subr.mxu0 0.0
        %2745 = vmatpush1.msra.mxu0 0.0
        %2746 = vmatprep.subr.mxu0 0.0
        %2747 = vmatpush1.msra.mxu0 0.0
        %2748 = vmatprep.subr.mxu0 0.0
        %2749 = vmatpush1.msra.mxu0 0.0
        %2750 = vmatprep.subr.mxu0 0.0
        %2751 = vmatpush1.msra.mxu0 0.0
        %2752 = vmatprep.subr.mxu0 0.0
        %2753 = vmatpush1.msra.mxu0 0.0
        %2754 = vmatprep.mubr.f32.mxu0 0.0
        %v2755 = vand.u32 %v2349, 4294901760
        %2756 = vmatmul.mubr.f32.gmra.mrb[0].mxu0 %v2755
        %v2757 = vpop.f32.mrb[0].mxu0
        %v2758 = vadd.f32 %v2675, %v2757
        %v2759 = vpop.f32.mrb[0].mxu0
        %2760 = vdwg.mxu0
        %2761 = vmatprep.subr.mxu0 0.0
        %v2762 = vand.u32 %v409, 4294901760
        %2763 = vmatpush1.msra.mxu0 %v2762
        %2764 = vmatprep.subr.mxu0 0.0
        %v2765 = vand.u32 %v410, 4294901760
        %2766 = vmatpush1.msra.mxu0 %v2765
        %2767 = vmatprep.subr.mxu0 0.0
        %v2768 = vand.u32 %v411, 4294901760
        %2769 = vmatpush1.msra.mxu0 %v2768
        %2770 = vmatprep.subr.mxu0 0.0
        %v2771 = vand.u32 %v412, 4294901760
        %2772 = vmatpush1.msra.mxu0 %v2771
        %2773 = vmatprep.subr.mxu0 0.0
        %2774 = vmatpush1.msra.mxu0 0.0
        %2775 = vmatprep.subr.mxu0 0.0
        %2776 = vmatpush1.msra.mxu0 0.0
        %2777 = vmatprep.subr.mxu0 0.0
        %2778 = vmatpush1.msra.mxu0 0.0
        %2779 = vmatprep.subr.mxu0 0.0
        %2780 = vmatpush1.msra.mxu0 0.0
        %2781 = vmatprep.subr.mxu0 0.0
        %2782 = vmatpush1.msra.mxu0 0.0
        %2783 = vmatprep.subr.mxu0 0.0
        %2784 = vmatpush1.msra.mxu0 0.0
        %2785 = vmatprep.subr.mxu0 0.0
        %2786 = vmatpush1.msra.mxu0 0.0
        %2787 = vmatprep.subr.mxu0 0.0
        %2788 = vmatpush1.msra.mxu0 0.0
        %2789 = vmatprep.subr.mxu0 0.0
        %2790 = vmatpush1.msra.mxu0 0.0
        %2791 = vmatprep.subr.mxu0 0.0
        %2792 = vmatpush1.msra.mxu0 0.0
        %2793 = vmatprep.subr.mxu0 0.0
        %2794 = vmatpush1.msra.mxu0 0.0
        %2795 = vmatprep.subr.mxu0 0.0
        %2796 = vmatpush1.msra.mxu0 0.0
        %2797 = vmatprep.subr.mxu0 0.0
        %2798 = vmatpush1.msra.mxu0 0.0
        %2799 = vmatprep.subr.mxu0 0.0
        %2800 = vmatpush1.msra.mxu0 0.0
        %2801 = vmatprep.subr.mxu0 0.0
        %2802 = vmatpush1.msra.mxu0 0.0
        %2803 = vmatprep.subr.mxu0 0.0
        %2804 = vmatpush1.msra.mxu0 0.0
        %2805 = vmatprep.subr.mxu0 0.0
        %2806 = vmatpush1.msra.mxu0 0.0
        %2807 = vmatprep.subr.mxu0 0.0
        %2808 = vmatpush1.msra.mxu0 0.0
        %2809 = vmatprep.subr.mxu0 0.0
        %2810 = vmatpush1.msra.mxu0 0.0
        %2811 = vmatprep.subr.mxu0 0.0
        %2812 = vmatpush1.msra.mxu0 0.0
        %2813 = vmatprep.subr.mxu0 0.0
        %2814 = vmatpush1.msra.mxu0 0.0
        %2815 = vmatprep.subr.mxu0 0.0
        %2816 = vmatpush1.msra.mxu0 0.0
        %2817 = vmatprep.subr.mxu0 0.0
        %2818 = vmatpush1.msra.mxu0 0.0
        %2819 = vmatprep.subr.mxu0 0.0
        %2820 = vmatpush1.msra.mxu0 0.0
        %2821 = vmatprep.subr.mxu0 0.0
        %2822 = vmatpush1.msra.mxu0 0.0
        %2823 = vmatprep.subr.mxu0 0.0
        %2824 = vmatpush1.msra.mxu0 0.0
        %2825 = vmatprep.subr.mxu0 0.0
        %2826 = vmatpush1.msra.mxu0 0.0
        %2827 = vmatprep.subr.mxu0 0.0
        %2828 = vmatpush1.msra.mxu0 0.0
        %2829 = vmatprep.mubr.f32.mxu0 0.0
        %v2830 = vand.u32 %v2349, 4294901760
        %2831 = vmatmul.mubr.f32.gmra.mrb[0].mxu0 %v2830
        %v2832 = vpop.f32.mrb[0].mxu0
        %v2833 = vadd.f32 %v2758, %v2832
        %v2834 = vpop.f32.mrb[0].mxu0
        %2835 = vdwg.mxu0
        %v2836 = vadd.f32 %v2345, %v2833
        %v2838 = vlaneseq
        %v2839 = vshrl.u32 %v2838, 7
        %v2840 = vsub.s32 0, %v2839
        %v2841 = vrot.slane %v413, %v2840
        %v2843 = vadd.f32 %v2836, %v2841
        %v2844 = vsub.f32 0.0, %v2843
        %v2845 = vmul.f32 %v2844, 1.442695
        %v2846 = vpow.pop %v2845
        %v2847 = vadd.f32 %v2846, 1.0
        %v2848 = vrcp.pop %v2847
        %v2849 = vmul.f32 1.0, %v2848
        %2850 = vmatprep.subr.mxu0 0.0
        %v2851 = vand.u32 %v418, 4294901760
        %2852 = vmatpush1.msra.mxu0 %v2851
        %2853 = vmatprep.subr.mxu0 0.0
        %v2854 = vand.u32 %v419, 4294901760
        %2855 = vmatpush1.msra.mxu0 %v2854
        %2856 = vmatprep.subr.mxu0 0.0
        %v2857 = vand.u32 %v420, 4294901760
        %2858 = vmatpush1.msra.mxu0 %v2857
        %2859 = vmatprep.subr.mxu0 0.0
        %v2860 = vand.u32 %v421, 4294901760
        %2861 = vmatpush1.msra.mxu0 %v2860
        %2862 = vmatprep.subr.mxu0 0.0
        %2863 = vmatpush1.msra.mxu0 0.0
        %2864 = vmatprep.subr.mxu0 0.0
        %2865 = vmatpush1.msra.mxu0 0.0
        %2866 = vmatprep.subr.mxu0 0.0
        %2867 = vmatpush1.msra.mxu0 0.0
        %2868 = vmatprep.subr.mxu0 0.0
        %2869 = vmatpush1.msra.mxu0 0.0
        %2870 = vmatprep.subr.mxu0 0.0
        %2871 = vmatpush1.msra.mxu0 0.0
        %2872 = vmatprep.subr.mxu0 0.0
        %2873 = vmatpush1.msra.mxu0 0.0
        %2874 = vmatprep.subr.mxu0 0.0
        %2875 = vmatpush1.msra.mxu0 0.0
        %2876 = vmatprep.subr.mxu0 0.0
        %2877 = vmatpush1.msra.mxu0 0.0
        %2878 = vmatprep.subr.mxu0 0.0
        %2879 = vmatpush1.msra.mxu0 0.0
        %2880 = vmatprep.subr.mxu0 0.0
        %2881 = vmatpush1.msra.mxu0 0.0
        %2882 = vmatprep.subr.mxu0 0.0
        %2883 = vmatpush1.msra.mxu0 0.0
        %2884 = vmatprep.subr.mxu0 0.0
        %2885 = vmatpush1.msra.mxu0 0.0
        %2886 = vmatprep.subr.mxu0 0.0
        %2887 = vmatpush1.msra.mxu0 0.0
        %2888 = vmatprep.subr.mxu0 0.0
        %2889 = vmatpush1.msra.mxu0 0.0
        %2890 = vmatprep.subr.mxu0 0.0
        %2891 = vmatpush1.msra.mxu0 0.0
        %2892 = vmatprep.subr.mxu0 0.0
        %2893 = vmatpush1.msra.mxu0 0.0
        %2894 = vmatprep.subr.mxu0 0.0
        %2895 = vmatpush1.msra.mxu0 0.0
        %2896 = vmatprep.subr.mxu0 0.0
        %2897 = vmatpush1.msra.mxu0 0.0
        %2898 = vmatprep.subr.mxu0 0.0
        %2899 = vmatpush1.msra.mxu0 0.0
        %2900 = vmatprep.subr.mxu0 0.0
        %2901 = vmatpush1.msra.mxu0 0.0
        %2902 = vmatprep.subr.mxu0 0.0
        %2903 = vmatpush1.msra.mxu0 0.0
        %2904 = vmatprep.subr.mxu0 0.0
        %2905 = vmatpush1.msra.mxu0 0.0
        %2906 = vmatprep.subr.mxu0 0.0
        %2907 = vmatpush1.msra.mxu0 0.0
        %2908 = vmatprep.subr.mxu0 0.0
        %2909 = vmatpush1.msra.mxu0 0.0
        %2910 = vmatprep.subr.mxu0 0.0
        %2911 = vmatpush1.msra.mxu0 0.0
        %2912 = vmatprep.subr.mxu0 0.0
        %2913 = vmatpush1.msra.mxu0 0.0
        %2914 = vmatprep.subr.mxu0 0.0
        %2915 = vmatpush1.msra.mxu0 0.0
        %2916 = vmatprep.subr.mxu0 0.0
        %2917 = vmatpush1.msra.mxu0 0.0
        %2918 = vmatprep.mubr.f32.mxu0 0.0
        %v2919 = vand.u32 %v1373, 4294901760
        %v2920 = vsub.f32 %v1373, %v2919
        %v2921 = vand.u32 %v2920, 4294901760
        %v2922 = vsub.f32 %v2920, %v2921
        %v2923 = vand.u32 %v2922, 4294901760
        %2924 = vmatmul.mubr.f32.gmra.mrb[0].mxu0 %v2923
        %v2925 = vpop.f32.mrb[0].mxu0
        %v2926 = vadd.f32 0.0, %v2925
        %v2927 = vpop.f32.mrb[0].mxu0
        %2928 = vdwg.mxu0
        %2929 = vmatprep.subr.mxu0 0.0
        %v2930 = vand.u32 %v418, 4294901760
        %v2931 = vsub.f32 %v418, %v2930
        %v2932 = vand.u32 %v2931, 4294901760
        %v2933 = vsub.f32 %v2931, %v2932
        %v2934 = vand.u32 %v2933, 4294901760
        %2935 = vmatpush1.msra.mxu0 %v2934
        %2936 = vmatprep.subr.mxu0 0.0
        %v2937 = vand.u32 %v419, 4294901760
        %v2938 = vsub.f32 %v419, %v2937
        %v2939 = vand.u32 %v2938, 4294901760
        %v2940 = vsub.f32 %v2938, %v2939
        %v2941 = vand.u32 %v2940, 4294901760
        %2942 = vmatpush1.msra.mxu0 %v2941
        %2943 = vmatprep.subr.mxu0 0.0
        %v2944 = vand.u32 %v420, 4294901760
        %v2945 = vsub.f32 %v420, %v2944
        %v2946 = vand.u32 %v2945, 4294901760
        %v2947 = vsub.f32 %v2945, %v2946
        %v2948 = vand.u32 %v2947, 4294901760
        %2949 = vmatpush1.msra.mxu0 %v2948
        %2950 = vmatprep.subr.mxu0 0.0
        %v2951 = vand.u32 %v421, 4294901760
        %v2952 = vsub.f32 %v421, %v2951
        %v2953 = vand.u32 %v2952, 4294901760
        %v2954 = vsub.f32 %v2952, %v2953
        %v2955 = vand.u32 %v2954, 4294901760
        %2956 = vmatpush1.msra.mxu0 %v2955
        %2957 = vmatprep.subr.mxu0 0.0
        %2958 = vmatpush1.msra.mxu0 0.0
        %2959 = vmatprep.subr.mxu0 0.0
        %2960 = vmatpush1.msra.mxu0 0.0
        %2961 = vmatprep.subr.mxu0 0.0
        %2962 = vmatpush1.msra.mxu0 0.0
        %2963 = vmatprep.subr.mxu0 0.0
        %2964 = vmatpush1.msra.mxu0 0.0
        %2965 = vmatprep.subr.mxu0 0.0
        %2966 = vmatpush1.msra.mxu0 0.0
        %2967 = vmatprep.subr.mxu0 0.0
        %2968 = vmatpush1.msra.mxu0 0.0
        %2969 = vmatprep.subr.mxu0 0.0
        %2970 = vmatpush1.msra.mxu0 0.0
        %2971 = vmatprep.subr.mxu0 0.0
        %2972 = vmatpush1.msra.mxu0 0.0
        %2973 = vmatprep.subr.mxu0 0.0
        %2974 = vmatpush1.msra.mxu0 0.0
        %2975 = vmatprep.subr.mxu0 0.0
        %2976 = vmatpush1.msra.mxu0 0.0
        %2977 = vmatprep.subr.mxu0 0.0
        %2978 = vmatpush1.msra.mxu0 0.0
        %2979 = vmatprep.subr.mxu0 0.0
        %2980 = vmatpush1.msra.mxu0 0.0
        %2981 = vmatprep.subr.mxu0 0.0
        %2982 = vmatpush1.msra.mxu0 0.0
        %2983 = vmatprep.subr.mxu0 0.0
        %2984 = vmatpush1.msra.mxu0 0.0
        %2985 = vmatprep.subr.mxu0 0.0
        %2986 = vmatpush1.msra.mxu0 0.0
        %2987 = vmatprep.subr.mxu0 0.0
        %2988 = vmatpush1.msra.mxu0 0.0
        %2989 = vmatprep.subr.mxu0 0.0
        %2990 = vmatpush1.msra.mxu0 0.0
        %2991 = vmatprep.subr.mxu0 0.0
        %2992 = vmatpush1.msra.mxu0 0.0
        %2993 = vmatprep.subr.mxu0 0.0
        %2994 = vmatpush1.msra.mxu0 0.0
        %2995 = vmatprep.subr.mxu0 0.0
        %2996 = vmatpush1.msra.mxu0 0.0
        %2997 = vmatprep.subr.mxu0 0.0
        %2998 = vmatpush1.msra.mxu0 0.0
        %2999 = vmatprep.subr.mxu0 0.0
        %3000 = vmatpush1.msra.mxu0 0.0
        %3001 = vmatprep.subr.mxu0 0.0
        %3002 = vmatpush1.msra.mxu0 0.0
        %3003 = vmatprep.subr.mxu0 0.0
        %3004 = vmatpush1.msra.mxu0 0.0
        %3005 = vmatprep.subr.mxu0 0.0
        %3006 = vmatpush1.msra.mxu0 0.0
        %3007 = vmatprep.subr.mxu0 0.0
        %3008 = vmatpush1.msra.mxu0 0.0
        %3009 = vmatprep.subr.mxu0 0.0
        %3010 = vmatpush1.msra.mxu0 0.0
        %3011 = vmatprep.subr.mxu0 0.0
        %3012 = vmatpush1.msra.mxu0 0.0
        %3013 = vmatprep.mubr.f32.mxu0 0.0
        %v3014 = vand.u32 %v1373, 4294901760
        %3015 = vmatmul.mubr.f32.gmra.mrb[0].mxu0 %v3014
        %v3016 = vpop.f32.mrb[0].mxu0
        %v3017 = vadd.f32 %v2926, %v3016
        %v3018 = vpop.f32.mrb[0].mxu0
        %3019 = vdwg.mxu0
        %3020 = vmatprep.subr.mxu0 0.0
        %v3021 = vand.u32 %v418, 4294901760
        %v3022 = vsub.f32 %v418, %v3021
        %3023 = vmatpush1.msra.mxu0 %v3022
        %3024 = vmatprep.subr.mxu0 0.0
        %v3025 = vand.u32 %v419, 4294901760
        %v3026 = vsub.f32 %v419, %v3025
        %3027 = vmatpush1.msra.mxu0 %v3026
        %3028 = vmatprep.subr.mxu0 0.0
        %v3029 = vand.u32 %v420, 4294901760
        %v3030 = vsub.f32 %v420, %v3029
        %3031 = vmatpush1.msra.mxu0 %v3030
        %3032 = vmatprep.subr.mxu0 0.0
        %v3033 = vand.u32 %v421, 4294901760
        %v3034 = vsub.f32 %v421, %v3033
        %3035 = vmatpush1.msra.mxu0 %v3034
        %3036 = vmatprep.subr.mxu0 0.0
        %3037 = vmatpush1.msra.mxu0 0.0
        %3038 = vmatprep.subr.mxu0 0.0
        %3039 = vmatpush1.msra.mxu0 0.0
        %3040 = vmatprep.subr.mxu0 0.0
        %3041 = vmatpush1.msra.mxu0 0.0
        %3042 = vmatprep.subr.mxu0 0.0
        %3043 = vmatpush1.msra.mxu0 0.0
        %3044 = vmatprep.subr.mxu0 0.0
        %3045 = vmatpush1.msra.mxu0 0.0
        %3046 = vmatprep.subr.mxu0 0.0
        %3047 = vmatpush1.msra.mxu0 0.0
        %3048 = vmatprep.subr.mxu0 0.0
        %3049 = vmatpush1.msra.mxu0 0.0
        %3050 = vmatprep.subr.mxu0 0.0
        %3051 = vmatpush1.msra.mxu0 0.0
        %3052 = vmatprep.subr.mxu0 0.0
        %3053 = vmatpush1.msra.mxu0 0.0
        %3054 = vmatprep.subr.mxu0 0.0
        %3055 = vmatpush1.msra.mxu0 0.0
        %3056 = vmatprep.subr.mxu0 0.0
        %3057 = vmatpush1.msra.mxu0 0.0
        %3058 = vmatprep.subr.mxu0 0.0
        %3059 = vmatpush1.msra.mxu0 0.0
        %3060 = vmatprep.subr.mxu0 0.0
        %3061 = vmatpush1.msra.mxu0 0.0
        %3062 = vmatprep.subr.mxu0 0.0
        %3063 = vmatpush1.msra.mxu0 0.0
        %3064 = vmatprep.subr.mxu0 0.0
        %3065 = vmatpush1.msra.mxu0 0.0
        %3066 = vmatprep.subr.mxu0 0.0
        %3067 = vmatpush1.msra.mxu0 0.0
        %3068 = vmatprep.subr.mxu0 0.0
        %3069 = vmatpush1.msra.mxu0 0.0
        %3070 = vmatprep.subr.mxu0 0.0
        %3071 = vmatpush1.msra.mxu0 0.0
        %3072 = vmatprep.subr.mxu0 0.0
        %3073 = vmatpush1.msra.mxu0 0.0
        %3074 = vmatprep.subr.mxu0 0.0
        %3075 = vmatpush1.msra.mxu0 0.0
        %3076 = vmatprep.subr.mxu0 0.0
        %3077 = vmatpush1.msra.mxu0 0.0
        %3078 = vmatprep.subr.mxu0 0.0
        %3079 = vmatpush1.msra.mxu0 0.0
        %3080 = vmatprep.subr.mxu0 0.0
        %3081 = vmatpush1.msra.mxu0 0.0
        %3082 = vmatprep.subr.mxu0 0.0
        %3083 = vmatpush1.msra.mxu0 0.0
        %3084 = vmatprep.subr.mxu0 0.0
        %3085 = vmatpush1.msra.mxu0 0.0
        %3086 = vmatprep.subr.mxu0 0.0
        %3087 = vmatpush1.msra.mxu0 0.0
        %3088 = vmatprep.subr.mxu0 0.0
        %3089 = vmatpush1.msra.mxu0 0.0
        %3090 = vmatprep.subr.mxu0 0.0
        %3091 = vmatpush1.msra.mxu0 0.0
        %3092 = vmatprep.mubr.f32.mxu0 0.0
        %v3093 = vand.u32 %v1373, 4294901760
        %v3094 = vsub.f32 %v1373, %v3093
        %3095 = vmatmul.mubr.f32.gmra.mrb[0].mxu0 %v3094
        %v3096 = vpop.f32.mrb[0].mxu0
        %v3097 = vadd.f32 %v3017, %v3096
        %v3098 = vpop.f32.mrb[0].mxu0
        %3099 = vdwg.mxu0
        %3100 = vmatprep.subr.mxu0 0.0
        %v3101 = vand.u32 %v418, 4294901760
        %3102 = vmatpush1.msra.mxu0 %v3101
        %3103 = vmatprep.subr.mxu0 0.0
        %v3104 = vand.u32 %v419, 4294901760
        %3105 = vmatpush1.msra.mxu0 %v3104
        %3106 = vmatprep.subr.mxu0 0.0
        %v3107 = vand.u32 %v420, 4294901760
        %3108 = vmatpush1.msra.mxu0 %v3107
        %3109 = vmatprep.subr.mxu0 0.0
        %v3110 = vand.u32 %v421, 4294901760
        %3111 = vmatpush1.msra.mxu0 %v3110
        %3112 = vmatprep.subr.mxu0 0.0
        %3113 = vmatpush1.msra.mxu0 0.0
        %3114 = vmatprep.subr.mxu0 0.0
        %3115 = vmatpush1.msra.mxu0 0.0
        %3116 = vmatprep.subr.mxu0 0.0
        %3117 = vmatpush1.msra.mxu0 0.0
        %3118 = vmatprep.subr.mxu0 0.0
        %3119 = vmatpush1.msra.mxu0 0.0
        %3120 = vmatprep.subr.mxu0 0.0
        %3121 = vmatpush1.msra.mxu0 0.0
        %3122 = vmatprep.subr.mxu0 0.0
        %3123 = vmatpush1.msra.mxu0 0.0
        %3124 = vmatprep.subr.mxu0 0.0
        %3125 = vmatpush1.msra.mxu0 0.0
        %3126 = vmatprep.subr.mxu0 0.0
        %3127 = vmatpush1.msra.mxu0 0.0
        %3128 = vmatprep.subr.mxu0 0.0
        %3129 = vmatpush1.msra.mxu0 0.0
        %3130 = vmatprep.subr.mxu0 0.0
        %3131 = vmatpush1.msra.mxu0 0.0
        %3132 = vmatprep.subr.mxu0 0.0
        %3133 = vmatpush1.msra.mxu0 0.0
        %3134 = vmatprep.subr.mxu0 0.0
        %3135 = vmatpush1.msra.mxu0 0.0
        %3136 = vmatprep.subr.mxu0 0.0
        %3137 = vmatpush1.msra.mxu0 0.0
        %3138 = vmatprep.subr.mxu0 0.0
        %3139 = vmatpush1.msra.mxu0 0.0
        %3140 = vmatprep.subr.mxu0 0.0
        %3141 = vmatpush1.msra.mxu0 0.0
        %3142 = vmatprep.subr.mxu0 0.0
        %3143 = vmatpush1.msra.mxu0 0.0
        %3144 = vmatprep.subr.mxu0 0.0
        %3145 = vmatpush1.msra.mxu0 0.0
        %3146 = vmatprep.subr.mxu0 0.0
        %3147 = vmatpush1.msra.mxu0 0.0
        %3148 = vmatprep.subr.mxu0 0.0
        %3149 = vmatpush1.msra.mxu0 0.0
        %3150 = vmatprep.subr.mxu0 0.0
        %3151 = vmatpush1.msra.mxu0 0.0
        %3152 = vmatprep.subr.mxu0 0.0
        %3153 = vmatpush1.msra.mxu0 0.0
        %3154 = vmatprep.subr.mxu0 0.0
        %3155 = vmatpush1.msra.mxu0 0.0
        %3156 = vmatprep.subr.mxu0 0.0
        %3157 = vmatpush1.msra.mxu0 0.0
        %3158 = vmatprep.subr.mxu0 0.0
        %3159 = vmatpush1.msra.mxu0 0.0
        %3160 = vmatprep.subr.mxu0 0.0
        %3161 = vmatpush1.msra.mxu0 0.0
        %3162 = vmatprep.subr.mxu0 0.0
        %3163 = vmatpush1.msra.mxu0 0.0
        %3164 = vmatprep.subr.mxu0 0.0
        %3165 = vmatpush1.msra.mxu0 0.0
        %3166 = vmatprep.subr.mxu0 0.0
        %3167 = vmatpush1.msra.mxu0 0.0
        %3168 = vmatprep.mubr.f32.mxu0 0.0
        %v3169 = vand.u32 %v1373, 4294901760
        %v3170 = vsub.f32 %v1373, %v3169
        %v3171 = vand.u32 %v3170, 4294901760
        %3172 = vmatmul.mubr.f32.gmra.mrb[0].mxu0 %v3171
        %v3173 = vpop.f32.mrb[0].mxu0
        %v3174 = vadd.f32 %v3097, %v3173
        %v3175 = vpop.f32.mrb[0].mxu0
        %3176 = vdwg.mxu0
        %3177 = vmatprep.subr.mxu0 0.0
        %v3178 = vand.u32 %v418, 4294901760
        %v3179 = vsub.f32 %v418, %v3178
        %v3180 = vand.u32 %v3179, 4294901760
        %3181 = vmatpush1.msra.mxu0 %v3180
        %3182 = vmatprep.subr.mxu0 0.0
        %v3183 = vand.u32 %v419, 4294901760
        %v3184 = vsub.f32 %v419, %v3183
        %v3185 = vand.u32 %v3184, 4294901760
        %3186 = vmatpush1.msra.mxu0 %v3185
        %3187 = vmatprep.subr.mxu0 0.0
        %v3188 = vand.u32 %v420, 4294901760
        %v3189 = vsub.f32 %v420, %v3188
        %v3190 = vand.u32 %v3189, 4294901760
        %3191 = vmatpush1.msra.mxu0 %v3190
        %3192 = vmatprep.subr.mxu0 0.0
        %v3193 = vand.u32 %v421, 4294901760
        %v3194 = vsub.f32 %v421, %v3193
        %v3195 = vand.u32 %v3194, 4294901760
        %3196 = vmatpush1.msra.mxu0 %v3195
        %3197 = vmatprep.subr.mxu0 0.0
        %3198 = vmatpush1.msra.mxu0 0.0
        %3199 = vmatprep.subr.mxu0 0.0
        %3200 = vmatpush1.msra.mxu0 0.0
        %3201 = vmatprep.subr.mxu0 0.0
        %3202 = vmatpush1.msra.mxu0 0.0
        %3203 = vmatprep.subr.mxu0 0.0
        %3204 = vmatpush1.msra.mxu0 0.0
        %3205 = vmatprep.subr.mxu0 0.0
        %3206 = vmatpush1.msra.mxu0 0.0
        %3207 = vmatprep.subr.mxu0 0.0
        %3208 = vmatpush1.msra.mxu0 0.0
        %3209 = vmatprep.subr.mxu0 0.0
        %3210 = vmatpush1.msra.mxu0 0.0
        %3211 = vmatprep.subr.mxu0 0.0
        %3212 = vmatpush1.msra.mxu0 0.0
        %3213 = vmatprep.subr.mxu0 0.0
        %3214 = vmatpush1.msra.mxu0 0.0
        %3215 = vmatprep.subr.mxu0 0.0
        %3216 = vmatpush1.msra.mxu0 0.0
        %3217 = vmatprep.subr.mxu0 0.0
        %3218 = vmatpush1.msra.mxu0 0.0
        %3219 = vmatprep.subr.mxu0 0.0
        %3220 = vmatpush1.msra.mxu0 0.0
        %3221 = vmatprep.subr.mxu0 0.0
        %3222 = vmatpush1.msra.mxu0 0.0
        %3223 = vmatprep.subr.mxu0 0.0
        %3224 = vmatpush1.msra.mxu0 0.0
        %3225 = vmatprep.subr.mxu0 0.0
        %3226 = vmatpush1.msra.mxu0 0.0
        %3227 = vmatprep.subr.mxu0 0.0
        %3228 = vmatpush1.msra.mxu0 0.0
        %3229 = vmatprep.subr.mxu0 0.0
        %3230 = vmatpush1.msra.mxu0 0.0
        %3231 = vmatprep.subr.mxu0 0.0
        %3232 = vmatpush1.msra.mxu0 0.0
        %3233 = vmatprep.subr.mxu0 0.0
        %3234 = vmatpush1.msra.mxu0 0.0
        %3235 = vmatprep.subr.mxu0 0.0
        %3236 = vmatpush1.msra.mxu0 0.0
        %3237 = vmatprep.subr.mxu0 0.0
        %3238 = vmatpush1.msra.mxu0 0.0
        %3239 = vmatprep.subr.mxu0 0.0
        %3240 = vmatpush1.msra.mxu0 0.0
        %3241 = vmatprep.subr.mxu0 0.0
        %3242 = vmatpush1.msra.mxu0 0.0
        %3243 = vmatprep.subr.mxu0 0.0
        %3244 = vmatpush1.msra.mxu0 0.0
        %3245 = vmatprep.subr.mxu0 0.0
        %3246 = vmatpush1.msra.mxu0 0.0
        %3247 = vmatprep.subr.mxu0 0.0
        %3248 = vmatpush1.msra.mxu0 0.0
        %3249 = vmatprep.subr.mxu0 0.0
        %3250 = vmatpush1.msra.mxu0 0.0
        %3251 = vmatprep.subr.mxu0 0.0
        %3252 = vmatpush1.msra.mxu0 0.0
        %3253 = vmatprep.mubr.f32.mxu0 0.0
        %v3254 = vand.u32 %v1373, 4294901760
        %3255 = vmatmul.mubr.f32.gmra.mrb[0].mxu0 %v3254
        %v3256 = vpop.f32.mrb[0].mxu0
        %v3257 = vadd.f32 %v3174, %v3256
        %v3258 = vpop.f32.mrb[0].mxu0
        %3259 = vdwg.mxu0
        %3260 = vmatprep.subr.mxu0 0.0
        %v3261 = vand.u32 %v418, 4294901760
        %3262 = vmatpush1.msra.mxu0 %v3261
        %3263 = vmatprep.subr.mxu0 0.0
        %v3264 = vand.u32 %v419, 4294901760
        %3265 = vmatpush1.msra.mxu0 %v3264
        %3266 = vmatprep.subr.mxu0 0.0
        %v3267 = vand.u32 %v420, 4294901760
        %3268 = vmatpush1.msra.mxu0 %v3267
        %3269 = vmatprep.subr.mxu0 0.0
        %v3270 = vand.u32 %v421, 4294901760
        %3271 = vmatpush1.msra.mxu0 %v3270
        %3272 = vmatprep.subr.mxu0 0.0
        %3273 = vmatpush1.msra.mxu0 0.0
        %3274 = vmatprep.subr.mxu0 0.0
        %3275 = vmatpush1.msra.mxu0 0.0
        %3276 = vmatprep.subr.mxu0 0.0
        %3277 = vmatpush1.msra.mxu0 0.0
        %3278 = vmatprep.subr.mxu0 0.0
        %3279 = vmatpush1.msra.mxu0 0.0
        %3280 = vmatprep.subr.mxu0 0.0
        %3281 = vmatpush1.msra.mxu0 0.0
        %3282 = vmatprep.subr.mxu0 0.0
        %3283 = vmatpush1.msra.mxu0 0.0
        %3284 = vmatprep.subr.mxu0 0.0
        %3285 = vmatpush1.msra.mxu0 0.0
        %3286 = vmatprep.subr.mxu0 0.0
        %3287 = vmatpush1.msra.mxu0 0.0
        %3288 = vmatprep.subr.mxu0 0.0
        %3289 = vmatpush1.msra.mxu0 0.0
        %3290 = vmatprep.subr.mxu0 0.0
        %3291 = vmatpush1.msra.mxu0 0.0
        %3292 = vmatprep.subr.mxu0 0.0
        %3293 = vmatpush1.msra.mxu0 0.0
        %3294 = vmatprep.subr.mxu0 0.0
        %3295 = vmatpush1.msra.mxu0 0.0
        %3296 = vmatprep.subr.mxu0 0.0
        %3297 = vmatpush1.msra.mxu0 0.0
        %3298 = vmatprep.subr.mxu0 0.0
        %3299 = vmatpush1.msra.mxu0 0.0
        %3300 = vmatprep.subr.mxu0 0.0
        %3301 = vmatpush1.msra.mxu0 0.0
        %3302 = vmatprep.subr.mxu0 0.0
        %3303 = vmatpush1.msra.mxu0 0.0
        %3304 = vmatprep.subr.mxu0 0.0
        %3305 = vmatpush1.msra.mxu0 0.0
        %3306 = vmatprep.subr.mxu0 0.0
        %3307 = vmatpush1.msra.mxu0 0.0
        %3308 = vmatprep.subr.mxu0 0.0
        %3309 = vmatpush1.msra.mxu0 0.0
        %3310 = vmatprep.subr.mxu0 0.0
        %3311 = vmatpush1.msra.mxu0 0.0
        %3312 = vmatprep.subr.mxu0 0.0
        %3313 = vmatpush1.msra.mxu0 0.0
        %3314 = vmatprep.subr.mxu0 0.0
        %3315 = vmatpush1.msra.mxu0 0.0
        %3316 = vmatprep.subr.mxu0 0.0
        %3317 = vmatpush1.msra.mxu0 0.0
        %3318 = vmatprep.subr.mxu0 0.0
        %3319 = vmatpush1.msra.mxu0 0.0
        %3320 = vmatprep.subr.mxu0 0.0
        %3321 = vmatpush1.msra.mxu0 0.0
        %3322 = vmatprep.subr.mxu0 0.0
        %3323 = vmatpush1.msra.mxu0 0.0
        %3324 = vmatprep.subr.mxu0 0.0
        %3325 = vmatpush1.msra.mxu0 0.0
        %3326 = vmatprep.subr.mxu0 0.0
        %3327 = vmatpush1.msra.mxu0 0.0
        %3328 = vmatprep.mubr.f32.mxu0 0.0
        %v3329 = vand.u32 %v1373, 4294901760
        %3330 = vmatmul.mubr.f32.gmra.mrb[0].mxu0 %v3329
        %v3331 = vpop.f32.mrb[0].mxu0
        %v3332 = vadd.f32 %v3257, %v3331
        %v3333 = vpop.f32.mrb[0].mxu0
        %3334 = vdwg.mxu0
        %3335 = vmatprep.subr.mxu0 0.0
        %v3336 = vand.u32 %v414, 4294901760
        %3337 = vmatpush1.msra.mxu0 %v3336
        %3338 = vmatprep.subr.mxu0 0.0
        %v3339 = vand.u32 %v415, 4294901760
        %3340 = vmatpush1.msra.mxu0 %v3339
        %3341 = vmatprep.subr.mxu0 0.0
        %v3342 = vand.u32 %v416, 4294901760
        %3343 = vmatpush1.msra.mxu0 %v3342
        %3344 = vmatprep.subr.mxu0 0.0
        %v3345 = vand.u32 %v417, 4294901760
        %3346 = vmatpush1.msra.mxu0 %v3345
        %3347 = vmatprep.subr.mxu0 0.0
        %3348 = vmatpush1.msra.mxu0 0.0
        %3349 = vmatprep.subr.mxu0 0.0
        %3350 = vmatpush1.msra.mxu0 0.0
        %3351 = vmatprep.subr.mxu0 0.0
        %3352 = vmatpush1.msra.mxu0 0.0
        %3353 = vmatprep.subr.mxu0 0.0
        %3354 = vmatpush1.msra.mxu0 0.0
        %3355 = vmatprep.subr.mxu0 0.0
        %3356 = vmatpush1.msra.mxu0 0.0
        %3357 = vmatprep.subr.mxu0 0.0
        %3358 = vmatpush1.msra.mxu0 0.0
        %3359 = vmatprep.subr.mxu0 0.0
        %3360 = vmatpush1.msra.mxu0 0.0
        %3361 = vmatprep.subr.mxu0 0.0
        %3362 = vmatpush1.msra.mxu0 0.0
        %3363 = vmatprep.subr.mxu0 0.0
        %3364 = vmatpush1.msra.mxu0 0.0
        %3365 = vmatprep.subr.mxu0 0.0
        %3366 = vmatpush1.msra.mxu0 0.0
        %3367 = vmatprep.subr.mxu0 0.0
        %3368 = vmatpush1.msra.mxu0 0.0
        %3369 = vmatprep.subr.mxu0 0.0
        %3370 = vmatpush1.msra.mxu0 0.0
        %3371 = vmatprep.subr.mxu0 0.0
        %3372 = vmatpush1.msra.mxu0 0.0
        %3373 = vmatprep.subr.mxu0 0.0
        %3374 = vmatpush1.msra.mxu0 0.0
        %3375 = vmatprep.subr.mxu0 0.0
        %3376 = vmatpush1.msra.mxu0 0.0
        %3377 = vmatprep.subr.mxu0 0.0
        %3378 = vmatpush1.msra.mxu0 0.0
        %3379 = vmatprep.subr.mxu0 0.0
        %3380 = vmatpush1.msra.mxu0 0.0
        %3381 = vmatprep.subr.mxu0 0.0
        %3382 = vmatpush1.msra.mxu0 0.0
        %3383 = vmatprep.subr.mxu0 0.0
        %3384 = vmatpush1.msra.mxu0 0.0
        %3385 = vmatprep.subr.mxu0 0.0
        %3386 = vmatpush1.msra.mxu0 0.0
        %3387 = vmatprep.subr.mxu0 0.0
        %3388 = vmatpush1.msra.mxu0 0.0
        %3389 = vmatprep.subr.mxu0 0.0
        %3390 = vmatpush1.msra.mxu0 0.0
        %3391 = vmatprep.subr.mxu0 0.0
        %3392 = vmatpush1.msra.mxu0 0.0
        %3393 = vmatprep.subr.mxu0 0.0
        %3394 = vmatpush1.msra.mxu0 0.0
        %3395 = vmatprep.subr.mxu0 0.0
        %3396 = vmatpush1.msra.mxu0 0.0
        %3397 = vmatprep.subr.mxu0 0.0
        %3398 = vmatpush1.msra.mxu0 0.0
        %3399 = vmatprep.subr.mxu0 0.0
        %3400 = vmatpush1.msra.mxu0 0.0
        %3401 = vmatprep.subr.mxu0 0.0
        %3402 = vmatpush1.msra.mxu0 0.0
        %3403 = vmatprep.mubr.f32.mxu0 0.0
        %v3404 = vand.u32 %v1861, 4294901760
        %v3405 = vsub.f32 %v1861, %v3404
        %v3406 = vand.u32 %v3405, 4294901760
        %v3407 = vsub.f32 %v3405, %v3406
        %v3408 = vand.u32 %v3407, 4294901760
        %3409 = vmatmul.mubr.f32.gmra.mrb[0].mxu0 %v3408
        %v3410 = vpop.f32.mrb[0].mxu0
        %v3411 = vadd.f32 %v3332, %v3410
        %v3412 = vpop.f32.mrb[0].mxu0
        %3413 = vdwg.mxu0
        %3414 = vmatprep.subr.mxu0 0.0
        %v3415 = vand.u32 %v414, 4294901760
        %v3416 = vsub.f32 %v414, %v3415
        %v3417 = vand.u32 %v3416, 4294901760
        %v3418 = vsub.f32 %v3416, %v3417
        %v3419 = vand.u32 %v3418, 4294901760
        %3420 = vmatpush1.msra.mxu0 %v3419
        %3421 = vmatprep.subr.mxu0 0.0
        %v3422 = vand.u32 %v415, 4294901760
        %v3423 = vsub.f32 %v415, %v3422
        %v3424 = vand.u32 %v3423, 4294901760
        %v3425 = vsub.f32 %v3423, %v3424
        %v3426 = vand.u32 %v3425, 4294901760
        %3427 = vmatpush1.msra.mxu0 %v3426
        %3428 = vmatprep.subr.mxu0 0.0
        %v3429 = vand.u32 %v416, 4294901760
        %v3430 = vsub.f32 %v416, %v3429
        %v3431 = vand.u32 %v3430, 4294901760
        %v3432 = vsub.f32 %v3430, %v3431
        %v3433 = vand.u32 %v3432, 4294901760
        %3434 = vmatpush1.msra.mxu0 %v3433
        %3435 = vmatprep.subr.mxu0 0.0
        %v3436 = vand.u32 %v417, 4294901760
        %v3437 = vsub.f32 %v417, %v3436
        %v3438 = vand.u32 %v3437, 4294901760
        %v3439 = vsub.f32 %v3437, %v3438
        %v3440 = vand.u32 %v3439, 4294901760
        %3441 = vmatpush1.msra.mxu0 %v3440
        %3442 = vmatprep.subr.mxu0 0.0
        %3443 = vmatpush1.msra.mxu0 0.0
        %3444 = vmatprep.subr.mxu0 0.0
        %3445 = vmatpush1.msra.mxu0 0.0
        %3446 = vmatprep.subr.mxu0 0.0
        %3447 = vmatpush1.msra.mxu0 0.0
        %3448 = vmatprep.subr.mxu0 0.0
        %3449 = vmatpush1.msra.mxu0 0.0
        %3450 = vmatprep.subr.mxu0 0.0
        %3451 = vmatpush1.msra.mxu0 0.0
        %3452 = vmatprep.subr.mxu0 0.0
        %3453 = vmatpush1.msra.mxu0 0.0
        %3454 = vmatprep.subr.mxu0 0.0
        %3455 = vmatpush1.msra.mxu0 0.0
        %3456 = vmatprep.subr.mxu0 0.0
        %3457 = vmatpush1.msra.mxu0 0.0
        %3458 = vmatprep.subr.mxu0 0.0
        %3459 = vmatpush1.msra.mxu0 0.0
        %3460 = vmatprep.subr.mxu0 0.0
        %3461 = vmatpush1.msra.mxu0 0.0
        %3462 = vmatprep.subr.mxu0 0.0
        %3463 = vmatpush1.msra.mxu0 0.0
        %3464 = vmatprep.subr.mxu0 0.0
        %3465 = vmatpush1.msra.mxu0 0.0
        %3466 = vmatprep.subr.mxu0 0.0
        %3467 = vmatpush1.msra.mxu0 0.0
        %3468 = vmatprep.subr.mxu0 0.0
        %3469 = vmatpush1.msra.mxu0 0.0
        %3470 = vmatprep.subr.mxu0 0.0
        %3471 = vmatpush1.msra.mxu0 0.0
        %3472 = vmatprep.subr.mxu0 0.0
        %3473 = vmatpush1.msra.mxu0 0.0
        %3474 = vmatprep.subr.mxu0 0.0
        %3475 = vmatpush1.msra.mxu0 0.0
        %3476 = vmatprep.subr.mxu0 0.0
        %3477 = vmatpush1.msra.mxu0 0.0
        %3478 = vmatprep.subr.mxu0 0.0
        %3479 = vmatpush1.msra.mxu0 0.0
        %3480 = vmatprep.subr.mxu0 0.0
        %3481 = vmatpush1.msra.mxu0 0.0
        %3482 = vmatprep.subr.mxu0 0.0
        %3483 = vmatpush1.msra.mxu0 0.0
        %3484 = vmatprep.subr.mxu0 0.0
        %3485 = vmatpush1.msra.mxu0 0.0
        %3486 = vmatprep.subr.mxu0 0.0
        %3487 = vmatpush1.msra.mxu0 0.0
        %3488 = vmatprep.subr.mxu0 0.0
        %3489 = vmatpush1.msra.mxu0 0.0
        %3490 = vmatprep.subr.mxu0 0.0
        %3491 = vmatpush1.msra.mxu0 0.0
        %3492 = vmatprep.subr.mxu0 0.0
        %3493 = vmatpush1.msra.mxu0 0.0
        %3494 = vmatprep.subr.mxu0 0.0
        %3495 = vmatpush1.msra.mxu0 0.0
        %3496 = vmatprep.subr.mxu0 0.0
        %3497 = vmatpush1.msra.mxu0 0.0
        %3498 = vmatprep.mubr.f32.mxu0 0.0
        %v3499 = vand.u32 %v1861, 4294901760
        %3500 = vmatmul.mubr.f32.gmra.mrb[0].mxu0 %v3499
        %v3501 = vpop.f32.mrb[0].mxu0
        %v3502 = vadd.f32 %v3411, %v3501
        %v3503 = vpop.f32.mrb[0].mxu0
        %3504 = vdwg.mxu0
        %3505 = vmatprep.subr.mxu0 0.0
        %v3506 = vand.u32 %v414, 4294901760
        %v3507 = vsub.f32 %v414, %v3506
        %3508 = vmatpush1.msra.mxu0 %v3507
        %3509 = vmatprep.subr.mxu0 0.0
        %v3510 = vand.u32 %v415, 4294901760
        %v3511 = vsub.f32 %v415, %v3510
        %3512 = vmatpush1.msra.mxu0 %v3511
        %3513 = vmatprep.subr.mxu0 0.0
        %v3514 = vand.u32 %v416, 4294901760
        %v3515 = vsub.f32 %v416, %v3514
        %3516 = vmatpush1.msra.mxu0 %v3515
        %3517 = vmatprep.subr.mxu0 0.0
        %v3518 = vand.u32 %v417, 4294901760
        %v3519 = vsub.f32 %v417, %v3518
        %3520 = vmatpush1.msra.mxu0 %v3519
        %3521 = vmatprep.subr.mxu0 0.0
        %3522 = vmatpush1.msra.mxu0 0.0
        %3523 = vmatprep.subr.mxu0 0.0
        %3524 = vmatpush1.msra.mxu0 0.0
        %3525 = vmatprep.subr.mxu0 0.0
        %3526 = vmatpush1.msra.mxu0 0.0
        %3527 = vmatprep.subr.mxu0 0.0
        %3528 = vmatpush1.msra.mxu0 0.0
        %3529 = vmatprep.subr.mxu0 0.0
        %3530 = vmatpush1.msra.mxu0 0.0
        %3531 = vmatprep.subr.mxu0 0.0
        %3532 = vmatpush1.msra.mxu0 0.0
        %3533 = vmatprep.subr.mxu0 0.0
        %3534 = vmatpush1.msra.mxu0 0.0
        %3535 = vmatprep.subr.mxu0 0.0
        %3536 = vmatpush1.msra.mxu0 0.0
        %3537 = vmatprep.subr.mxu0 0.0
        %3538 = vmatpush1.msra.mxu0 0.0
        %3539 = vmatprep.subr.mxu0 0.0
        %3540 = vmatpush1.msra.mxu0 0.0
        %3541 = vmatprep.subr.mxu0 0.0
        %3542 = vmatpush1.msra.mxu0 0.0
        %3543 = vmatprep.subr.mxu0 0.0
        %3544 = vmatpush1.msra.mxu0 0.0
        %3545 = vmatprep.subr.mxu0 0.0
        %3546 = vmatpush1.msra.mxu0 0.0
        %3547 = vmatprep.subr.mxu0 0.0
        %3548 = vmatpush1.msra.mxu0 0.0
        %3549 = vmatprep.subr.mxu0 0.0
        %3550 = vmatpush1.msra.mxu0 0.0
        %3551 = vmatprep.subr.mxu0 0.0
        %3552 = vmatpush1.msra.mxu0 0.0
        %3553 = vmatprep.subr.mxu0 0.0
        %3554 = vmatpush1.msra.mxu0 0.0
        %3555 = vmatprep.subr.mxu0 0.0
        %3556 = vmatpush1.msra.mxu0 0.0
        %3557 = vmatprep.subr.mxu0 0.0
        %3558 = vmatpush1.msra.mxu0 0.0
        %3559 = vmatprep.subr.mxu0 0.0
        %3560 = vmatpush1.msra.mxu0 0.0
        %3561 = vmatprep.subr.mxu0 0.0
        %3562 = vmatpush1.msra.mxu0 0.0
        %3563 = vmatprep.subr.mxu0 0.0
        %3564 = vmatpush1.msra.mxu0 0.0
        %3565 = vmatprep.subr.mxu0 0.0
        %3566 = vmatpush1.msra.mxu0 0.0
        %3567 = vmatprep.subr.mxu0 0.0
        %3568 = vmatpush1.msra.mxu0 0.0
        %3569 = vmatprep.subr.mxu0 0.0
        %3570 = vmatpush1.msra.mxu0 0.0
        %3571 = vmatprep.subr.mxu0 0.0
        %3572 = vmatpush1.msra.mxu0 0.0
        %3573 = vmatprep.subr.mxu0 0.0
        %3574 = vmatpush1.msra.mxu0 0.0
        %3575 = vmatprep.subr.mxu0 0.0
        %3576 = vmatpush1.msra.mxu0 0.0
        %3577 = vmatprep.mubr.f32.mxu0 0.0
        %v3578 = vand.u32 %v1861, 4294901760
        %v3579 = vsub.f32 %v1861, %v3578
        %3580 = vmatmul.mubr.f32.gmra.mrb[0].mxu0 %v3579
        %v3581 = vpop.f32.mrb[0].mxu0
        %v3582 = vadd.f32 %v3502, %v3581
        %v3583 = vpop.f32.mrb[0].mxu0
        %3584 = vdwg.mxu0
        %3585 = vmatprep.subr.mxu0 0.0
        %v3586 = vand.u32 %v414, 4294901760
        %3587 = vmatpush1.msra.mxu0 %v3586
        %3588 = vmatprep.subr.mxu0 0.0
        %v3589 = vand.u32 %v415, 4294901760
        %3590 = vmatpush1.msra.mxu0 %v3589
        %3591 = vmatprep.subr.mxu0 0.0
        %v3592 = vand.u32 %v416, 4294901760
        %3593 = vmatpush1.msra.mxu0 %v3592
        %3594 = vmatprep.subr.mxu0 0.0
        %v3595 = vand.u32 %v417, 4294901760
        %3596 = vmatpush1.msra.mxu0 %v3595
        %3597 = vmatprep.subr.mxu0 0.0
        %3598 = vmatpush1.msra.mxu0 0.0
        %3599 = vmatprep.subr.mxu0 0.0
        %3600 = vmatpush1.msra.mxu0 0.0
        %3601 = vmatprep.subr.mxu0 0.0
        %3602 = vmatpush1.msra.mxu0 0.0
        %3603 = vmatprep.subr.mxu0 0.0
        %3604 = vmatpush1.msra.mxu0 0.0
        %3605 = vmatprep.subr.mxu0 0.0
        %3606 = vmatpush1.msra.mxu0 0.0
        %3607 = vmatprep.subr.mxu0 0.0
        %3608 = vmatpush1.msra.mxu0 0.0
        %3609 = vmatprep.subr.mxu0 0.0
        %3610 = vmatpush1.msra.mxu0 0.0
        %3611 = vmatprep.subr.mxu0 0.0
        %3612 = vmatpush1.msra.mxu0 0.0
        %3613 = vmatprep.subr.mxu0 0.0
        %3614 = vmatpush1.msra.mxu0 0.0
        %3615 = vmatprep.subr.mxu0 0.0
        %3616 = vmatpush1.msra.mxu0 0.0
        %3617 = vmatprep.subr.mxu0 0.0
        %3618 = vmatpush1.msra.mxu0 0.0
        %3619 = vmatprep.subr.mxu0 0.0
        %3620 = vmatpush1.msra.mxu0 0.0
        %3621 = vmatprep.subr.mxu0 0.0
        %3622 = vmatpush1.msra.mxu0 0.0
        %3623 = vmatprep.subr.mxu0 0.0
        %3624 = vmatpush1.msra.mxu0 0.0
        %3625 = vmatprep.subr.mxu0 0.0
        %3626 = vmatpush1.msra.mxu0 0.0
        %3627 = vmatprep.subr.mxu0 0.0
        %3628 = vmatpush1.msra.mxu0 0.0
        %3629 = vmatprep.subr.mxu0 0.0
        %3630 = vmatpush1.msra.mxu0 0.0
        %3631 = vmatprep.subr.mxu0 0.0
        %3632 = vmatpush1.msra.mxu0 0.0
        %3633 = vmatprep.subr.mxu0 0.0
        %3634 = vmatpush1.msra.mxu0 0.0
        %3635 = vmatprep.subr.mxu0 0.0
        %3636 = vmatpush1.msra.mxu0 0.0
        %3637 = vmatprep.subr.mxu0 0.0
        %3638 = vmatpush1.msra.mxu0 0.0
        %3639 = vmatprep.subr.mxu0 0.0
        %3640 = vmatpush1.msra.mxu0 0.0
        %3641 = vmatprep.subr.mxu0 0.0
        %3642 = vmatpush1.msra.mxu0 0.0
        %3643 = vmatprep.subr.mxu0 0.0
        %3644 = vmatpush1.msra.mxu0 0.0
        %3645 = vmatprep.subr.mxu0 0.0
        %3646 = vmatpush1.msra.mxu0 0.0
        %3647 = vmatprep.subr.mxu0 0.0
        %3648 = vmatpush1.msra.mxu0 0.0
        %3649 = vmatprep.subr.mxu0 0.0
        %3650 = vmatpush1.msra.mxu0 0.0
        %3651 = vmatprep.subr.mxu0 0.0
        %3652 = vmatpush1.msra.mxu0 0.0
        %3653 = vmatprep.mubr.f32.mxu0 0.0
        %v3654 = vand.u32 %v1861, 4294901760
        %v3655 = vsub.f32 %v1861, %v3654
        %v3656 = vand.u32 %v3655, 4294901760
        %3657 = vmatmul.mubr.f32.gmra.mrb[0].mxu0 %v3656
        %v3658 = vpop.f32.mrb[0].mxu0
        %v3659 = vadd.f32 %v3582, %v3658
        %v3660 = vpop.f32.mrb[0].mxu0
        %3661 = vdwg.mxu0
        %3662 = vmatprep.subr.mxu0 0.0
        %v3663 = vand.u32 %v414, 4294901760
        %v3664 = vsub.f32 %v414, %v3663
        %v3665 = vand.u32 %v3664, 4294901760
        %3666 = vmatpush1.msra.mxu0 %v3665
        %3667 = vmatprep.subr.mxu0 0.0
        %v3668 = vand.u32 %v415, 4294901760
        %v3669 = vsub.f32 %v415, %v3668
        %v3670 = vand.u32 %v3669, 4294901760
        %3671 = vmatpush1.msra.mxu0 %v3670
        %3672 = vmatprep.subr.mxu0 0.0
        %v3673 = vand.u32 %v416, 4294901760
        %v3674 = vsub.f32 %v416, %v3673
        %v3675 = vand.u32 %v3674, 4294901760
        %3676 = vmatpush1.msra.mxu0 %v3675
        %3677 = vmatprep.subr.mxu0 0.0
        %v3678 = vand.u32 %v417, 4294901760
        %v3679 = vsub.f32 %v417, %v3678
        %v3680 = vand.u32 %v3679, 4294901760
        %3681 = vmatpush1.msra.mxu0 %v3680
        %3682 = vmatprep.subr.mxu0 0.0
        %3683 = vmatpush1.msra.mxu0 0.0
        %3684 = vmatprep.subr.mxu0 0.0
        %3685 = vmatpush1.msra.mxu0 0.0
        %3686 = vmatprep.subr.mxu0 0.0
        %3687 = vmatpush1.msra.mxu0 0.0
        %3688 = vmatprep.subr.mxu0 0.0
        %3689 = vmatpush1.msra.mxu0 0.0
        %3690 = vmatprep.subr.mxu0 0.0
        %3691 = vmatpush1.msra.mxu0 0.0
        %3692 = vmatprep.subr.mxu0 0.0
        %3693 = vmatpush1.msra.mxu0 0.0
        %3694 = vmatprep.subr.mxu0 0.0
        %3695 = vmatpush1.msra.mxu0 0.0
        %3696 = vmatprep.subr.mxu0 0.0
        %3697 = vmatpush1.msra.mxu0 0.0
        %3698 = vmatprep.subr.mxu0 0.0
        %3699 = vmatpush1.msra.mxu0 0.0
        %3700 = vmatprep.subr.mxu0 0.0
        %3701 = vmatpush1.msra.mxu0 0.0
        %3702 = vmatprep.subr.mxu0 0.0
        %3703 = vmatpush1.msra.mxu0 0.0
        %3704 = vmatprep.subr.mxu0 0.0
        %3705 = vmatpush1.msra.mxu0 0.0
        %3706 = vmatprep.subr.mxu0 0.0
        %3707 = vmatpush1.msra.mxu0 0.0
        %3708 = vmatprep.subr.mxu0 0.0
        %3709 = vmatpush1.msra.mxu0 0.0
        %3710 = vmatprep.subr.mxu0 0.0
        %3711 = vmatpush1.msra.mxu0 0.0
        %3712 = vmatprep.subr.mxu0 0.0
        %3713 = vmatpush1.msra.mxu0 0.0
        %3714 = vmatprep.subr.mxu0 0.0
        %3715 = vmatpush1.msra.mxu0 0.0
        %3716 = vmatprep.subr.mxu0 0.0
        %3717 = vmatpush1.msra.mxu0 0.0
        %3718 = vmatprep.subr.mxu0 0.0
        %3719 = vmatpush1.msra.mxu0 0.0
        %3720 = vmatprep.subr.mxu0 0.0
        %3721 = vmatpush1.msra.mxu0 0.0
        %3722 = vmatprep.subr.mxu0 0.0
        %3723 = vmatpush1.msra.mxu0 0.0
        %3724 = vmatprep.subr.mxu0 0.0
        %3725 = vmatpush1.msra.mxu0 0.0
        %3726 = vmatprep.subr.mxu0 0.0
        %3727 = vmatpush1.msra.mxu0 0.0
        %3728 = vmatprep.subr.mxu0 0.0
        %3729 = vmatpush1.msra.mxu0 0.0
        %3730 = vmatprep.subr.mxu0 0.0
        %3731 = vmatpush1.msra.mxu0 0.0
        %3732 = vmatprep.subr.mxu0 0.0
        %3733 = vmatpush1.msra.mxu0 0.0
        %3734 = vmatprep.subr.mxu0 0.0
        %3735 = vmatpush1.msra.mxu0 0.0
        %3736 = vmatprep.subr.mxu0 0.0
        %3737 = vmatpush1.msra.mxu0 0.0
        %3738 = vmatprep.mubr.f32.mxu0 0.0
        %v3739 = vand.u32 %v1861, 4294901760
        %3740 = vmatmul.mubr.f32.gmra.mrb[0].mxu0 %v3739
        %v3741 = vpop.f32.mrb[0].mxu0
        %v3742 = vadd.f32 %v3659, %v3741
        %v3743 = vpop.f32.mrb[0].mxu0
        %3744 = vdwg.mxu0
        %3745 = vmatprep.subr.mxu0 0.0
        %v3746 = vand.u32 %v414, 4294901760
        %3747 = vmatpush1.msra.mxu0 %v3746
        %3748 = vmatprep.subr.mxu0 0.0
        %v3749 = vand.u32 %v415, 4294901760
        %3750 = vmatpush1.msra.mxu0 %v3749
        %3751 = vmatprep.subr.mxu0 0.0
        %v3752 = vand.u32 %v416, 4294901760
        %3753 = vmatpush1.msra.mxu0 %v3752
        %3754 = vmatprep.subr.mxu0 0.0
        %v3755 = vand.u32 %v417, 4294901760
        %3756 = vmatpush1.msra.mxu0 %v3755
        %3757 = vmatprep.subr.mxu0 0.0
        %3758 = vmatpush1.msra.mxu0 0.0
        %3759 = vmatprep.subr.mxu0 0.0
        %3760 = vmatpush1.msra.mxu0 0.0
        %3761 = vmatprep.subr.mxu0 0.0
        %3762 = vmatpush1.msra.mxu0 0.0
        %3763 = vmatprep.subr.mxu0 0.0
        %3764 = vmatpush1.msra.mxu0 0.0
        %3765 = vmatprep.subr.mxu0 0.0
        %3766 = vmatpush1.msra.mxu0 0.0
        %3767 = vmatprep.subr.mxu0 0.0
        %3768 = vmatpush1.msra.mxu0 0.0
        %3769 = vmatprep.subr.mxu0 0.0
        %3770 = vmatpush1.msra.mxu0 0.0
        %3771 = vmatprep.subr.mxu0 0.0
        %3772 = vmatpush1.msra.mxu0 0.0
        %3773 = vmatprep.subr.mxu0 0.0
        %3774 = vmatpush1.msra.mxu0 0.0
        %3775 = vmatprep.subr.mxu0 0.0
        %3776 = vmatpush1.msra.mxu0 0.0
        %3777 = vmatprep.subr.mxu0 0.0
        %3778 = vmatpush1.msra.mxu0 0.0
        %3779 = vmatprep.subr.mxu0 0.0
        %3780 = vmatpush1.msra.mxu0 0.0
        %3781 = vmatprep.subr.mxu0 0.0
        %3782 = vmatpush1.msra.mxu0 0.0
        %3783 = vmatprep.subr.mxu0 0.0
        %3784 = vmatpush1.msra.mxu0 0.0
        %3785 = vmatprep.subr.mxu0 0.0
        %3786 = vmatpush1.msra.mxu0 0.0
        %3787 = vmatprep.subr.mxu0 0.0
        %3788 = vmatpush1.msra.mxu0 0.0
        %3789 = vmatprep.subr.mxu0 0.0
        %3790 = vmatpush1.msra.mxu0 0.0
        %3791 = vmatprep.subr.mxu0 0.0
        %3792 = vmatpush1.msra.mxu0 0.0
        %3793 = vmatprep.subr.mxu0 0.0
        %3794 = vmatpush1.msra.mxu0 0.0
        %3795 = vmatprep.subr.mxu0 0.0
        %3796 = vmatpush1.msra.mxu0 0.0
        %3797 = vmatprep.subr.mxu0 0.0
        %3798 = vmatpush1.msra.mxu0 0.0
        %3799 = vmatprep.subr.mxu0 0.0
        %3800 = vmatpush1.msra.mxu0 0.0
        %3801 = vmatprep.subr.mxu0 0.0
        %3802 = vmatpush1.msra.mxu0 0.0
        %3803 = vmatprep.subr.mxu0 0.0
        %3804 = vmatpush1.msra.mxu0 0.0
        %3805 = vmatprep.subr.mxu0 0.0
        %3806 = vmatpush1.msra.mxu0 0.0
        %3807 = vmatprep.subr.mxu0 0.0
        %3808 = vmatpush1.msra.mxu0 0.0
        %3809 = vmatprep.subr.mxu0 0.0
        %3810 = vmatpush1.msra.mxu0 0.0
        %3811 = vmatprep.subr.mxu0 0.0
        %3812 = vmatpush1.msra.mxu0 0.0
        %3813 = vmatprep.mubr.f32.mxu0 0.0
        %v3814 = vand.u32 %v1861, 4294901760
        %3815 = vmatmul.mubr.f32.gmra.mrb[0].mxu0 %v3814
        %v3816 = vpop.f32.mrb[0].mxu0
        %v3817 = vadd.f32 %v3742, %v3816
        %v3818 = vpop.f32.mrb[0].mxu0
        %3819 = vdwg.mxu0
        %3820 = vmatprep.subr.mxu0 0.0
        %v3821 = vand.u32 %v422, 4294901760
        %3822 = vmatpush1.msra.mxu0 %v3821
        %3823 = vmatprep.subr.mxu0 0.0
        %v3824 = vand.u32 %v423, 4294901760
        %3825 = vmatpush1.msra.mxu0 %v3824
        %3826 = vmatprep.subr.mxu0 0.0
        %v3827 = vand.u32 %v424, 4294901760
        %3828 = vmatpush1.msra.mxu0 %v3827
        %3829 = vmatprep.subr.mxu0 0.0
        %v3830 = vand.u32 %v425, 4294901760
        %3831 = vmatpush1.msra.mxu0 %v3830
        %3832 = vmatprep.subr.mxu0 0.0
        %3833 = vmatpush1.msra.mxu0 0.0
        %3834 = vmatprep.subr.mxu0 0.0
        %3835 = vmatpush1.msra.mxu0 0.0
        %3836 = vmatprep.subr.mxu0 0.0
        %3837 = vmatpush1.msra.mxu0 0.0
        %3838 = vmatprep.subr.mxu0 0.0
        %3839 = vmatpush1.msra.mxu0 0.0
        %3840 = vmatprep.subr.mxu0 0.0
        %3841 = vmatpush1.msra.mxu0 0.0
        %3842 = vmatprep.subr.mxu0 0.0
        %3843 = vmatpush1.msra.mxu0 0.0
        %3844 = vmatprep.subr.mxu0 0.0
        %3845 = vmatpush1.msra.mxu0 0.0
        %3846 = vmatprep.subr.mxu0 0.0
        %3847 = vmatpush1.msra.mxu0 0.0
        %3848 = vmatprep.subr.mxu0 0.0
        %3849 = vmatpush1.msra.mxu0 0.0
        %3850 = vmatprep.subr.mxu0 0.0
        %3851 = vmatpush1.msra.mxu0 0.0
        %3852 = vmatprep.subr.mxu0 0.0
        %3853 = vmatpush1.msra.mxu0 0.0
        %3854 = vmatprep.subr.mxu0 0.0
        %3855 = vmatpush1.msra.mxu0 0.0
        %3856 = vmatprep.subr.mxu0 0.0
        %3857 = vmatpush1.msra.mxu0 0.0
        %3858 = vmatprep.subr.mxu0 0.0
        %3859 = vmatpush1.msra.mxu0 0.0
        %3860 = vmatprep.subr.mxu0 0.0
        %3861 = vmatpush1.msra.mxu0 0.0
        %3862 = vmatprep.subr.mxu0 0.0
        %3863 = vmatpush1.msra.mxu0 0.0
        %3864 = vmatprep.subr.mxu0 0.0
        %3865 = vmatpush1.msra.mxu0 0.0
        %3866 = vmatprep.subr.mxu0 0.0
        %3867 = vmatpush1.msra.mxu0 0.0
        %3868 = vmatprep.subr.mxu0 0.0
        %3869 = vmatpush1.msra.mxu0 0.0
        %3870 = vmatprep.subr.mxu0 0.0
        %3871 = vmatpush1.msra.mxu0 0.0
        %3872 = vmatprep.subr.mxu0 0.0
        %3873 = vmatpush1.msra.mxu0 0.0
        %3874 = vmatprep.subr.mxu0 0.0
        %3875 = vmatpush1.msra.mxu0 0.0
        %3876 = vmatprep.subr.mxu0 0.0
        %3877 = vmatpush1.msra.mxu0 0.0
        %3878 = vmatprep.subr.mxu0 0.0
        %3879 = vmatpush1.msra.mxu0 0.0
        %3880 = vmatprep.subr.mxu0 0.0
        %3881 = vmatpush1.msra.mxu0 0.0
        %3882 = vmatprep.subr.mxu0 0.0
        %3883 = vmatpush1.msra.mxu0 0.0
        %3884 = vmatprep.subr.mxu0 0.0
        %3885 = vmatpush1.msra.mxu0 0.0
        %3886 = vmatprep.subr.mxu0 0.0
        %3887 = vmatpush1.msra.mxu0 0.0
        %3888 = vmatprep.mubr.f32.mxu0 0.0
        %v3889 = vand.u32 %v2349, 4294901760
        %v3890 = vsub.f32 %v2349, %v3889
        %v3891 = vand.u32 %v3890, 4294901760
        %v3892 = vsub.f32 %v3890, %v3891
        %v3893 = vand.u32 %v3892, 4294901760
        %3894 = vmatmul.mubr.f32.gmra.mrb[0].mxu0 %v3893
        %v3895 = vpop.f32.mrb[0].mxu0
        %v3896 = vadd.f32 0.0, %v3895
        %v3897 = vpop.f32.mrb[0].mxu0
        %3898 = vdwg.mxu0
        %3899 = vmatprep.subr.mxu0 0.0
        %v3900 = vand.u32 %v422, 4294901760
        %v3901 = vsub.f32 %v422, %v3900
        %v3902 = vand.u32 %v3901, 4294901760
        %v3903 = vsub.f32 %v3901, %v3902
        %v3904 = vand.u32 %v3903, 4294901760
        %3905 = vmatpush1.msra.mxu0 %v3904
        %3906 = vmatprep.subr.mxu0 0.0
        %v3907 = vand.u32 %v423, 4294901760
        %v3908 = vsub.f32 %v423, %v3907
        %v3909 = vand.u32 %v3908, 4294901760
        %v3910 = vsub.f32 %v3908, %v3909
        %v3911 = vand.u32 %v3910, 4294901760
        %3912 = vmatpush1.msra.mxu0 %v3911
        %3913 = vmatprep.subr.mxu0 0.0
        %v3914 = vand.u32 %v424, 4294901760
        %v3915 = vsub.f32 %v424, %v3914
        %v3916 = vand.u32 %v3915, 4294901760
        %v3917 = vsub.f32 %v3915, %v3916
        %v3918 = vand.u32 %v3917, 4294901760
        %3919 = vmatpush1.msra.mxu0 %v3918
        %3920 = vmatprep.subr.mxu0 0.0
        %v3921 = vand.u32 %v425, 4294901760
        %v3922 = vsub.f32 %v425, %v3921
        %v3923 = vand.u32 %v3922, 4294901760
        %v3924 = vsub.f32 %v3922, %v3923
        %v3925 = vand.u32 %v3924, 4294901760
        %3926 = vmatpush1.msra.mxu0 %v3925
        %3927 = vmatprep.subr.mxu0 0.0
        %3928 = vmatpush1.msra.mxu0 0.0
        %3929 = vmatprep.subr.mxu0 0.0
        %3930 = vmatpush1.msra.mxu0 0.0
        %3931 = vmatprep.subr.mxu0 0.0
        %3932 = vmatpush1.msra.mxu0 0.0
        %3933 = vmatprep.subr.mxu0 0.0
        %3934 = vmatpush1.msra.mxu0 0.0
        %3935 = vmatprep.subr.mxu0 0.0
        %3936 = vmatpush1.msra.mxu0 0.0
        %3937 = vmatprep.subr.mxu0 0.0
        %3938 = vmatpush1.msra.mxu0 0.0
        %3939 = vmatprep.subr.mxu0 0.0
        %3940 = vmatpush1.msra.mxu0 0.0
        %3941 = vmatprep.subr.mxu0 0.0
        %3942 = vmatpush1.msra.mxu0 0.0
        %3943 = vmatprep.subr.mxu0 0.0
        %3944 = vmatpush1.msra.mxu0 0.0
        %3945 = vmatprep.subr.mxu0 0.0
        %3946 = vmatpush1.msra.mxu0 0.0
        %3947 = vmatprep.subr.mxu0 0.0
        %3948 = vmatpush1.msra.mxu0 0.0
        %3949 = vmatprep.subr.mxu0 0.0
        %3950 = vmatpush1.msra.mxu0 0.0
        %3951 = vmatprep.subr.mxu0 0.0
        %3952 = vmatpush1.msra.mxu0 0.0
        %3953 = vmatprep.subr.mxu0 0.0
        %3954 = vmatpush1.msra.mxu0 0.0
        %3955 = vmatprep.subr.mxu0 0.0
        %3956 = vmatpush1.msra.mxu0 0.0
        %3957 = vmatprep.subr.mxu0 0.0
        %3958 = vmatpush1.msra.mxu0 0.0
        %3959 = vmatprep.subr.mxu0 0.0
        %3960 = vmatpush1.msra.mxu0 0.0
        %3961 = vmatprep.subr.mxu0 0.0
        %3962 = vmatpush1.msra.mxu0 0.0
        %3963 = vmatprep.subr.mxu0 0.0
        %3964 = vmatpush1.msra.mxu0 0.0
        %3965 = vmatprep.subr.mxu0 0.0
        %3966 = vmatpush1.msra.mxu0 0.0
        %3967 = vmatprep.subr.mxu0 0.0
        %3968 = vmatpush1.msra.mxu0 0.0
        %3969 = vmatprep.subr.mxu0 0.0
        %3970 = vmatpush1.msra.mxu0 0.0
        %3971 = vmatprep.subr.mxu0 0.0
        %3972 = vmatpush1.msra.mxu0 0.0
        %3973 = vmatprep.subr.mxu0 0.0
        %3974 = vmatpush1.msra.mxu0 0.0
        %3975 = vmatprep.subr.mxu0 0.0
        %3976 = vmatpush1.msra.mxu0 0.0
        %3977 = vmatprep.subr.mxu0 0.0
        %3978 = vmatpush1.msra.mxu0 0.0
        %3979 = vmatprep.subr.mxu0 0.0
        %3980 = vmatpush1.msra.mxu0 0.0
        %3981 = vmatprep.subr.mxu0 0.0
        %3982 = vmatpush1.msra.mxu0 0.0
        %3983 = vmatprep.mubr.f32.mxu0 0.0
        %v3984 = vand.u32 %v2349, 4294901760
        %3985 = vmatmul.mubr.f32.gmra.mrb[0].mxu0 %v3984
        %v3986 = vpop.f32.mrb[0].mxu0
        %v3987 = vadd.f32 %v3896, %v3986
        %v3988 = vpop.f32.mrb[0].mxu0
        %3989 = vdwg.mxu0
        %3990 = vmatprep.subr.mxu0 0.0
        %v3991 = vand.u32 %v422, 4294901760
        %v3992 = vsub.f32 %v422, %v3991
        %3993 = vmatpush1.msra.mxu0 %v3992
        %3994 = vmatprep.subr.mxu0 0.0
        %v3995 = vand.u32 %v423, 4294901760
        %v3996 = vsub.f32 %v423, %v3995
        %3997 = vmatpush1.msra.mxu0 %v3996
        %3998 = vmatprep.subr.mxu0 0.0
        %v3999 = vand.u32 %v424, 4294901760
        %v4000 = vsub.f32 %v424, %v3999
        %4001 = vmatpush1.msra.mxu0 %v4000
        %4002 = vmatprep.subr.mxu0 0.0
        %v4003 = vand.u32 %v425, 4294901760
        %v4004 = vsub.f32 %v425, %v4003
        %4005 = vmatpush1.msra.mxu0 %v4004
        %4006 = vmatprep.subr.mxu0 0.0
        %4007 = vmatpush1.msra.mxu0 0.0
        %4008 = vmatprep.subr.mxu0 0.0
        %4009 = vmatpush1.msra.mxu0 0.0
        %4010 = vmatprep.subr.mxu0 0.0
        %4011 = vmatpush1.msra.mxu0 0.0
        %4012 = vmatprep.subr.mxu0 0.0
        %4013 = vmatpush1.msra.mxu0 0.0
        %4014 = vmatprep.subr.mxu0 0.0
        %4015 = vmatpush1.msra.mxu0 0.0
        %4016 = vmatprep.subr.mxu0 0.0
        %4017 = vmatpush1.msra.mxu0 0.0
        %4018 = vmatprep.subr.mxu0 0.0
        %4019 = vmatpush1.msra.mxu0 0.0
        %4020 = vmatprep.subr.mxu0 0.0
        %4021 = vmatpush1.msra.mxu0 0.0
        %4022 = vmatprep.subr.mxu0 0.0
        %4023 = vmatpush1.msra.mxu0 0.0
        %4024 = vmatprep.subr.mxu0 0.0
        %4025 = vmatpush1.msra.mxu0 0.0
        %4026 = vmatprep.subr.mxu0 0.0
        %4027 = vmatpush1.msra.mxu0 0.0
        %4028 = vmatprep.subr.mxu0 0.0
        %4029 = vmatpush1.msra.mxu0 0.0
        %4030 = vmatprep.subr.mxu0 0.0
        %4031 = vmatpush1.msra.mxu0 0.0
        %4032 = vmatprep.subr.mxu0 0.0
        %4033 = vmatpush1.msra.mxu0 0.0
        %4034 = vmatprep.subr.mxu0 0.0
        %4035 = vmatpush1.msra.mxu0 0.0
        %4036 = vmatprep.subr.mxu0 0.0
        %4037 = vmatpush1.msra.mxu0 0.0
        %4038 = vmatprep.subr.mxu0 0.0
        %4039 = vmatpush1.msra.mxu0 0.0
        %4040 = vmatprep.subr.mxu0 0.0
        %4041 = vmatpush1.msra.mxu0 0.0
        %4042 = vmatprep.subr.mxu0 0.0
        %4043 = vmatpush1.msra.mxu0 0.0
        %4044 = vmatprep.subr.mxu0 0.0
        %4045 = vmatpush1.msra.mxu0 0.0
        %4046 = vmatprep.subr.mxu0 0.0
        %4047 = vmatpush1.msra.mxu0 0.0
        %4048 = vmatprep.subr.mxu0 0.0
        %4049 = vmatpush1.msra.mxu0 0.0
        %4050 = vmatprep.subr.mxu0 0.0
        %4051 = vmatpush1.msra.mxu0 0.0
        %4052 = vmatprep.subr.mxu0 0.0
        %4053 = vmatpush1.msra.mxu0 0.0
        %4054 = vmatprep.subr.mxu0 0.0
        %4055 = vmatpush1.msra.mxu0 0.0
        %4056 = vmatprep.subr.mxu0 0.0
        %4057 = vmatpush1.msra.mxu0 0.0
        %4058 = vmatprep.subr.mxu0 0.0
        %4059 = vmatpush1.msra.mxu0 0.0
        %4060 = vmatprep.subr.mxu0 0.0
        %4061 = vmatpush1.msra.mxu0 0.0
        %4062 = vmatprep.mubr.f32.mxu0 0.0
        %v4063 = vand.u32 %v2349, 4294901760
        %v4064 = vsub.f32 %v2349, %v4063
        %4065 = vmatmul.mubr.f32.gmra.mrb[0].mxu0 %v4064
        %v4066 = vpop.f32.mrb[0].mxu0
        %v4067 = vadd.f32 %v3987, %v4066
        %v4068 = vpop.f32.mrb[0].mxu0
        %4069 = vdwg.mxu0
        %4070 = vmatprep.subr.mxu0 0.0
        %v4071 = vand.u32 %v422, 4294901760
        %4072 = vmatpush1.msra.mxu0 %v4071
        %4073 = vmatprep.subr.mxu0 0.0
        %v4074 = vand.u32 %v423, 4294901760
        %4075 = vmatpush1.msra.mxu0 %v4074
        %4076 = vmatprep.subr.mxu0 0.0
        %v4077 = vand.u32 %v424, 4294901760
        %4078 = vmatpush1.msra.mxu0 %v4077
        %4079 = vmatprep.subr.mxu0 0.0
        %v4080 = vand.u32 %v425, 4294901760
        %4081 = vmatpush1.msra.mxu0 %v4080
        %4082 = vmatprep.subr.mxu0 0.0
        %4083 = vmatpush1.msra.mxu0 0.0
        %4084 = vmatprep.subr.mxu0 0.0
        %4085 = vmatpush1.msra.mxu0 0.0
        %4086 = vmatprep.subr.mxu0 0.0
        %4087 = vmatpush1.msra.mxu0 0.0
        %4088 = vmatprep.subr.mxu0 0.0
        %4089 = vmatpush1.msra.mxu0 0.0
        %4090 = vmatprep.subr.mxu0 0.0
        %4091 = vmatpush1.msra.mxu0 0.0
        %4092 = vmatprep.subr.mxu0 0.0
        %4093 = vmatpush1.msra.mxu0 0.0
        %4094 = vmatprep.subr.mxu0 0.0
        %4095 = vmatpush1.msra.mxu0 0.0
        %4096 = vmatprep.subr.mxu0 0.0
        %4097 = vmatpush1.msra.mxu0 0.0
        %4098 = vmatprep.subr.mxu0 0.0
        %4099 = vmatpush1.msra.mxu0 0.0
        %4100 = vmatprep.subr.mxu0 0.0
        %4101 = vmatpush1.msra.mxu0 0.0
        %4102 = vmatprep.subr.mxu0 0.0
        %4103 = vmatpush1.msra.mxu0 0.0
        %4104 = vmatprep.subr.mxu0 0.0
        %4105 = vmatpush1.msra.mxu0 0.0
        %4106 = vmatprep.subr.mxu0 0.0
        %4107 = vmatpush1.msra.mxu0 0.0
        %4108 = vmatprep.subr.mxu0 0.0
        %4109 = vmatpush1.msra.mxu0 0.0
        %4110 = vmatprep.subr.mxu0 0.0
        %4111 = vmatpush1.msra.mxu0 0.0
        %4112 = vmatprep.subr.mxu0 0.0
        %4113 = vmatpush1.msra.mxu0 0.0
        %4114 = vmatprep.subr.mxu0 0.0
        %4115 = vmatpush1.msra.mxu0 0.0
        %4116 = vmatprep.subr.mxu0 0.0
        %4117 = vmatpush1.msra.mxu0 0.0
        %4118 = vmatprep.subr.mxu0 0.0
        %4119 = vmatpush1.msra.mxu0 0.0
        %4120 = vmatprep.subr.mxu0 0.0
        %4121 = vmatpush1.msra.mxu0 0.0
        %4122 = vmatprep.subr.mxu0 0.0
        %4123 = vmatpush1.msra.mxu0 0.0
        %4124 = vmatprep.subr.mxu0 0.0
        %4125 = vmatpush1.msra.mxu0 0.0
        %4126 = vmatprep.subr.mxu0 0.0
        %4127 = vmatpush1.msra.mxu0 0.0
        %4128 = vmatprep.subr.mxu0 0.0
        %4129 = vmatpush1.msra.mxu0 0.0
        %4130 = vmatprep.subr.mxu0 0.0
        %4131 = vmatpush1.msra.mxu0 0.0
        %4132 = vmatprep.subr.mxu0 0.0
        %4133 = vmatpush1.msra.mxu0 0.0
        %4134 = vmatprep.subr.mxu0 0.0
        %4135 = vmatpush1.msra.mxu0 0.0
        %4136 = vmatprep.subr.mxu0 0.0
        %4137 = vmatpush1.msra.mxu0 0.0
        %4138 = vmatprep.mubr.f32.mxu0 0.0
        %v4139 = vand.u32 %v2349, 4294901760
        %v4140 = vsub.f32 %v2349, %v4139
        %v4141 = vand.u32 %v4140, 4294901760
        %4142 = vmatmul.mubr.f32.gmra.mrb[0].mxu0 %v4141
        %v4143 = vpop.f32.mrb[0].mxu0
        %v4144 = vadd.f32 %v4067, %v4143
        %v4145 = vpop.f32.mrb[0].mxu0
        %4146 = vdwg.mxu0
        %4147 = vmatprep.subr.mxu0 0.0
        %v4148 = vand.u32 %v422, 4294901760
        %v4149 = vsub.f32 %v422, %v4148
        %v4150 = vand.u32 %v4149, 4294901760
        %4151 = vmatpush1.msra.mxu0 %v4150
        %4152 = vmatprep.subr.mxu0 0.0
        %v4153 = vand.u32 %v423, 4294901760
        %v4154 = vsub.f32 %v423, %v4153
        %v4155 = vand.u32 %v4154, 4294901760
        %4156 = vmatpush1.msra.mxu0 %v4155
        %4157 = vmatprep.subr.mxu0 0.0
        %v4158 = vand.u32 %v424, 4294901760
        %v4159 = vsub.f32 %v424, %v4158
        %v4160 = vand.u32 %v4159, 4294901760
        %4161 = vmatpush1.msra.mxu0 %v4160
        %4162 = vmatprep.subr.mxu0 0.0
        %v4163 = vand.u32 %v425, 4294901760
        %v4164 = vsub.f32 %v425, %v4163
        %v4165 = vand.u32 %v4164, 4294901760
        %4166 = vmatpush1.msra.mxu0 %v4165
        %4167 = vmatprep.subr.mxu0 0.0
        %4168 = vmatpush1.msra.mxu0 0.0
        %4169 = vmatprep.subr.mxu0 0.0
        %4170 = vmatpush1.msra.mxu0 0.0
        %4171 = vmatprep.subr.mxu0 0.0
        %4172 = vmatpush1.msra.mxu0 0.0
        %4173 = vmatprep.subr.mxu0 0.0
        %4174 = vmatpush1.msra.mxu0 0.0
        %4175 = vmatprep.subr.mxu0 0.0
        %4176 = vmatpush1.msra.mxu0 0.0
        %4177 = vmatprep.subr.mxu0 0.0
        %4178 = vmatpush1.msra.mxu0 0.0
        %4179 = vmatprep.subr.mxu0 0.0
        %4180 = vmatpush1.msra.mxu0 0.0
        %4181 = vmatprep.subr.mxu0 0.0
        %4182 = vmatpush1.msra.mxu0 0.0
        %4183 = vmatprep.subr.mxu0 0.0
        %4184 = vmatpush1.msra.mxu0 0.0
        %4185 = vmatprep.subr.mxu0 0.0
        %4186 = vmatpush1.msra.mxu0 0.0
        %4187 = vmatprep.subr.mxu0 0.0
        %4188 = vmatpush1.msra.mxu0 0.0
        %4189 = vmatprep.subr.mxu0 0.0
        %4190 = vmatpush1.msra.mxu0 0.0
        %4191 = vmatprep.subr.mxu0 0.0
        %4192 = vmatpush1.msra.mxu0 0.0
        %4193 = vmatprep.subr.mxu0 0.0
        %4194 = vmatpush1.msra.mxu0 0.0
        %4195 = vmatprep.subr.mxu0 0.0
        %4196 = vmatpush1.msra.mxu0 0.0
        %4197 = vmatprep.subr.mxu0 0.0
        %4198 = vmatpush1.msra.mxu0 0.0
        %4199 = vmatprep.subr.mxu0 0.0
        %4200 = vmatpush1.msra.mxu0 0.0
        %4201 = vmatprep.subr.mxu0 0.0
        %4202 = vmatpush1.msra.mxu0 0.0
        %4203 = vmatprep.subr.mxu0 0.0
        %4204 = vmatpush1.msra.mxu0 0.0
        %4205 = vmatprep.subr.mxu0 0.0
        %4206 = vmatpush1.msra.mxu0 0.0
        %4207 = vmatprep.subr.mxu0 0.0
        %4208 = vmatpush1.msra.mxu0 0.0
        %4209 = vmatprep.subr.mxu0 0.0
        %4210 = vmatpush1.msra.mxu0 0.0
        %4211 = vmatprep.subr.mxu0 0.0
        %4212 = vmatpush1.msra.mxu0 0.0
        %4213 = vmatprep.subr.mxu0 0.0
        %4214 = vmatpush1.msra.mxu0 0.0
        %4215 = vmatprep.subr.mxu0 0.0
        %4216 = vmatpush1.msra.mxu0 0.0
        %4217 = vmatprep.subr.mxu0 0.0
        %4218 = vmatpush1.msra.mxu0 0.0
        %4219 = vmatprep.subr.mxu0 0.0
        %4220 = vmatpush1.msra.mxu0 0.0
        %4221 = vmatprep.subr.mxu0 0.0
        %4222 = vmatpush1.msra.mxu0 0.0
        %4223 = vmatprep.mubr.f32.mxu0 0.0
        %v4224 = vand.u32 %v2349, 4294901760
        %4225 = vmatmul.mubr.f32.gmra.mrb[0].mxu0 %v4224
        %v4226 = vpop.f32.mrb[0].mxu0
        %v4227 = vadd.f32 %v4144, %v4226
        %v4228 = vpop.f32.mrb[0].mxu0
        %4229 = vdwg.mxu0
        %4230 = vmatprep.subr.mxu0 0.0
        %v4231 = vand.u32 %v422, 4294901760
        %4232 = vmatpush1.msra.mxu0 %v4231
        %4233 = vmatprep.subr.mxu0 0.0
        %v4234 = vand.u32 %v423, 4294901760
        %4235 = vmatpush1.msra.mxu0 %v4234
        %4236 = vmatprep.subr.mxu0 0.0
        %v4237 = vand.u32 %v424, 4294901760
        %4238 = vmatpush1.msra.mxu0 %v4237
        %4239 = vmatprep.subr.mxu0 0.0
        %v4240 = vand.u32 %v425, 4294901760
        %4241 = vmatpush1.msra.mxu0 %v4240
        %4242 = vmatprep.subr.mxu0 0.0
        %4243 = vmatpush1.msra.mxu0 0.0
        %4244 = vmatprep.subr.mxu0 0.0
        %4245 = vmatpush1.msra.mxu0 0.0
        %4246 = vmatprep.subr.mxu0 0.0
        %4247 = vmatpush1.msra.mxu0 0.0
        %4248 = vmatprep.subr.mxu0 0.0
        %4249 = vmatpush1.msra.mxu0 0.0
        %4250 = vmatprep.subr.mxu0 0.0
        %4251 = vmatpush1.msra.mxu0 0.0
        %4252 = vmatprep.subr.mxu0 0.0
        %4253 = vmatpush1.msra.mxu0 0.0
        %4254 = vmatprep.subr.mxu0 0.0
        %4255 = vmatpush1.msra.mxu0 0.0
        %4256 = vmatprep.subr.mxu0 0.0
        %4257 = vmatpush1.msra.mxu0 0.0
        %4258 = vmatprep.subr.mxu0 0.0
        %4259 = vmatpush1.msra.mxu0 0.0
        %4260 = vmatprep.subr.mxu0 0.0
        %4261 = vmatpush1.msra.mxu0 0.0
        %4262 = vmatprep.subr.mxu0 0.0
        %4263 = vmatpush1.msra.mxu0 0.0
        %4264 = vmatprep.subr.mxu0 0.0
        %4265 = vmatpush1.msra.mxu0 0.0
        %4266 = vmatprep.subr.mxu0 0.0
        %4267 = vmatpush1.msra.mxu0 0.0
        %4268 = vmatprep.subr.mxu0 0.0
        %4269 = vmatpush1.msra.mxu0 0.0
        %4270 = vmatprep.subr.mxu0 0.0
        %4271 = vmatpush1.msra.mxu0 0.0
        %4272 = vmatprep.subr.mxu0 0.0
        %4273 = vmatpush1.msra.mxu0 0.0
        %4274 = vmatprep.subr.mxu0 0.0
        %4275 = vmatpush1.msra.mxu0 0.0
        %4276 = vmatprep.subr.mxu0 0.0
        %4277 = vmatpush1.msra.mxu0 0.0
        %4278 = vmatprep.subr.mxu0 0.0
        %4279 = vmatpush1.msra.mxu0 0.0
        %4280 = vmatprep.subr.mxu0 0.0
        %4281 = vmatpush1.msra.mxu0 0.0
        %4282 = vmatprep.subr.mxu0 0.0
        %4283 = vmatpush1.msra.mxu0 0.0
        %4284 = vmatprep.subr.mxu0 0.0
        %4285 = vmatpush1.msra.mxu0 0.0
        %4286 = vmatprep.subr.mxu0 0.0
        %4287 = vmatpush1.msra.mxu0 0.0
        %4288 = vmatprep.subr.mxu0 0.0
        %4289 = vmatpush1.msra.mxu0 0.0
        %4290 = vmatprep.subr.mxu0 0.0
        %4291 = vmatpush1.msra.mxu0 0.0
        %4292 = vmatprep.subr.mxu0 0.0
        %4293 = vmatpush1.msra.mxu0 0.0
        %4294 = vmatprep.subr.mxu0 0.0
        %4295 = vmatpush1.msra.mxu0 0.0
        %4296 = vmatprep.subr.mxu0 0.0
        %4297 = vmatpush1.msra.mxu0 0.0
        %4298 = vmatprep.mubr.f32.mxu0 0.0
        %v4299 = vand.u32 %v2349, 4294901760
        %4300 = vmatmul.mubr.f32.gmra.mrb[0].mxu0 %v4299
        %v4301 = vpop.f32.mrb[0].mxu0
        %v4302 = vadd.f32 %v4227, %v4301
        %v4303 = vpop.f32.mrb[0].mxu0
        %4304 = vdwg.mxu0
        %v4305 = vadd.f32 %v3817, %v4302
        %v4307 = vlaneseq
        %v4308 = vshrl.u32 %v4307, 7
        %v4309 = vsub.s32 0, %v4308
        %v4310 = vrot.slane %v426, %v4309
        %v4312 = vadd.f32 %v4305, %v4310
        %v4313 = vsub.f32 0.0, %v4312
        %v4314 = vmul.f32 %v4313, 1.442695
        %v4315 = vpow.pop %v4314
        %v4316 = vadd.f32 %v4315, 1.0
        %v4317 = vrcp.pop %v4316
        %v4318 = vmul.f32 1.0, %v4317
        %4319 = vmatprep.subr.mxu0 0.0
        %v4320 = vand.u32 %v431, 4294901760
        %4321 = vmatpush1.msra.mxu0 %v4320
        %4322 = vmatprep.subr.mxu0 0.0
        %v4323 = vand.u32 %v432, 4294901760
        %4324 = vmatpush1.msra.mxu0 %v4323
        %4325 = vmatprep.subr.mxu0 0.0
        %v4326 = vand.u32 %v433, 4294901760
        %4327 = vmatpush1.msra.mxu0 %v4326
        %4328 = vmatprep.subr.mxu0 0.0
        %v4329 = vand.u32 %v434, 4294901760
        %4330 = vmatpush1.msra.mxu0 %v4329
        %4331 = vmatprep.subr.mxu0 0.0
        %4332 = vmatpush1.msra.mxu0 0.0
        %4333 = vmatprep.subr.mxu0 0.0
        %4334 = vmatpush1.msra.mxu0 0.0
        %4335 = vmatprep.subr.mxu0 0.0
        %4336 = vmatpush1.msra.mxu0 0.0
        %4337 = vmatprep.subr.mxu0 0.0
        %4338 = vmatpush1.msra.mxu0 0.0
        %4339 = vmatprep.subr.mxu0 0.0
        %4340 = vmatpush1.msra.mxu0 0.0
        %4341 = vmatprep.subr.mxu0 0.0
        %4342 = vmatpush1.msra.mxu0 0.0
        %4343 = vmatprep.subr.mxu0 0.0
        %4344 = vmatpush1.msra.mxu0 0.0
        %4345 = vmatprep.subr.mxu0 0.0
        %4346 = vmatpush1.msra.mxu0 0.0
        %4347 = vmatprep.subr.mxu0 0.0
        %4348 = vmatpush1.msra.mxu0 0.0
        %4349 = vmatprep.subr.mxu0 0.0
        %4350 = vmatpush1.msra.mxu0 0.0
        %4351 = vmatprep.subr.mxu0 0.0
        %4352 = vmatpush1.msra.mxu0 0.0
        %4353 = vmatprep.subr.mxu0 0.0
        %4354 = vmatpush1.msra.mxu0 0.0
        %4355 = vmatprep.subr.mxu0 0.0
        %4356 = vmatpush1.msra.mxu0 0.0
        %4357 = vmatprep.subr.mxu0 0.0
        %4358 = vmatpush1.msra.mxu0 0.0
        %4359 = vmatprep.subr.mxu0 0.0
        %4360 = vmatpush1.msra.mxu0 0.0
        %4361 = vmatprep.subr.mxu0 0.0
        %4362 = vmatpush1.msra.mxu0 0.0
        %4363 = vmatprep.subr.mxu0 0.0
        %4364 = vmatpush1.msra.mxu0 0.0
        %4365 = vmatprep.subr.mxu0 0.0
        %4366 = vmatpush1.msra.mxu0 0.0
        %4367 = vmatprep.subr.mxu0 0.0
        %4368 = vmatpush1.msra.mxu0 0.0
        %4369 = vmatprep.subr.mxu0 0.0
        %4370 = vmatpush1.msra.mxu0 0.0
        %4371 = vmatprep.subr.mxu0 0.0
        %4372 = vmatpush1.msra.mxu0 0.0
        %4373 = vmatprep.subr.mxu0 0.0
        %4374 = vmatpush1.msra.mxu0 0.0
        %4375 = vmatprep.subr.mxu0 0.0
        %4376 = vmatpush1.msra.mxu0 0.0
        %4377 = vmatprep.subr.mxu0 0.0
        %4378 = vmatpush1.msra.mxu0 0.0
        %4379 = vmatprep.subr.mxu0 0.0
        %4380 = vmatpush1.msra.mxu0 0.0
        %4381 = vmatprep.subr.mxu0 0.0
        %4382 = vmatpush1.msra.mxu0 0.0
        %4383 = vmatprep.subr.mxu0 0.0
        %4384 = vmatpush1.msra.mxu0 0.0
        %4385 = vmatprep.subr.mxu0 0.0
        %4386 = vmatpush1.msra.mxu0 0.0
        %4387 = vmatprep.mubr.f32.mxu0 0.0
        %v4388 = vand.u32 %v1373, 4294901760
        %v4389 = vsub.f32 %v1373, %v4388
        %v4390 = vand.u32 %v4389, 4294901760
        %v4391 = vsub.f32 %v4389, %v4390
        %v4392 = vand.u32 %v4391, 4294901760
        %4393 = vmatmul.mubr.f32.gmra.mrb[0].mxu0 %v4392
        %v4394 = vpop.f32.mrb[0].mxu0
        %v4395 = vadd.f32 0.0, %v4394
        %v4396 = vpop.f32.mrb[0].mxu0
        %4397 = vdwg.mxu0
        %4398 = vmatprep.subr.mxu0 0.0
        %v4399 = vand.u32 %v431, 4294901760
        %v4400 = vsub.f32 %v431, %v4399
        %v4401 = vand.u32 %v4400, 4294901760
        %v4402 = vsub.f32 %v4400, %v4401
        %v4403 = vand.u32 %v4402, 4294901760
        %4404 = vmatpush1.msra.mxu0 %v4403
        %4405 = vmatprep.subr.mxu0 0.0
        %v4406 = vand.u32 %v432, 4294901760
        %v4407 = vsub.f32 %v432, %v4406
        %v4408 = vand.u32 %v4407, 4294901760
        %v4409 = vsub.f32 %v4407, %v4408
        %v4410 = vand.u32 %v4409, 4294901760
        %4411 = vmatpush1.msra.mxu0 %v4410
        %4412 = vmatprep.subr.mxu0 0.0
        %v4413 = vand.u32 %v433, 4294901760
        %v4414 = vsub.f32 %v433, %v4413
        %v4415 = vand.u32 %v4414, 4294901760
        %v4416 = vsub.f32 %v4414, %v4415
        %v4417 = vand.u32 %v4416, 4294901760
        %4418 = vmatpush1.msra.mxu0 %v4417
        %4419 = vmatprep.subr.mxu0 0.0
        %v4420 = vand.u32 %v434, 4294901760
        %v4421 = vsub.f32 %v434, %v4420
        %v4422 = vand.u32 %v4421, 4294901760
        %v4423 = vsub.f32 %v4421, %v4422
        %v4424 = vand.u32 %v4423, 4294901760
        %4425 = vmatpush1.msra.mxu0 %v4424
        %4426 = vmatprep.subr.mxu0 0.0
        %4427 = vmatpush1.msra.mxu0 0.0
        %4428 = vmatprep.subr.mxu0 0.0
        %4429 = vmatpush1.msra.mxu0 0.0
        %4430 = vmatprep.subr.mxu0 0.0
        %4431 = vmatpush1.msra.mxu0 0.0
        %4432 = vmatprep.subr.mxu0 0.0
        %4433 = vmatpush1.msra.mxu0 0.0
        %4434 = vmatprep.subr.mxu0 0.0
        %4435 = vmatpush1.msra.mxu0 0.0
        %4436 = vmatprep.subr.mxu0 0.0
        %4437 = vmatpush1.msra.mxu0 0.0
        %4438 = vmatprep.subr.mxu0 0.0
        %4439 = vmatpush1.msra.mxu0 0.0
        %4440 = vmatprep.subr.mxu0 0.0
        %4441 = vmatpush1.msra.mxu0 0.0
        %4442 = vmatprep.subr.mxu0 0.0
        %4443 = vmatpush1.msra.mxu0 0.0
        %4444 = vmatprep.subr.mxu0 0.0
        %4445 = vmatpush1.msra.mxu0 0.0
        %4446 = vmatprep.subr.mxu0 0.0
        %4447 = vmatpush1.msra.mxu0 0.0
        %4448 = vmatprep.subr.mxu0 0.0
        %4449 = vmatpush1.msra.mxu0 0.0
        %4450 = vmatprep.subr.mxu0 0.0
        %4451 = vmatpush1.msra.mxu0 0.0
        %4452 = vmatprep.subr.mxu0 0.0
        %4453 = vmatpush1.msra.mxu0 0.0
        %4454 = vmatprep.subr.mxu0 0.0
        %4455 = vmatpush1.msra.mxu0 0.0
        %4456 = vmatprep.subr.mxu0 0.0
        %4457 = vmatpush1.msra.mxu0 0.0
        %4458 = vmatprep.subr.mxu0 0.0
        %4459 = vmatpush1.msra.mxu0 0.0
        %4460 = vmatprep.subr.mxu0 0.0
        %4461 = vmatpush1.msra.mxu0 0.0
        %4462 = vmatprep.subr.mxu0 0.0
        %4463 = vmatpush1.msra.mxu0 0.0
        %4464 = vmatprep.subr.mxu0 0.0
        %4465 = vmatpush1.msra.mxu0 0.0
        %4466 = vmatprep.subr.mxu0 0.0
        %4467 = vmatpush1.msra.mxu0 0.0
        %4468 = vmatprep.subr.mxu0 0.0
        %4469 = vmatpush1.msra.mxu0 0.0
        %4470 = vmatprep.subr.mxu0 0.0
        %4471 = vmatpush1.msra.mxu0 0.0
        %4472 = vmatprep.subr.mxu0 0.0
        %4473 = vmatpush1.msra.mxu0 0.0
        %4474 = vmatprep.subr.mxu0 0.0
        %4475 = vmatpush1.msra.mxu0 0.0
        %4476 = vmatprep.subr.mxu0 0.0
        %4477 = vmatpush1.msra.mxu0 0.0
        %4478 = vmatprep.subr.mxu0 0.0
        %4479 = vmatpush1.msra.mxu0 0.0
        %4480 = vmatprep.subr.mxu0 0.0
        %4481 = vmatpush1.msra.mxu0 0.0
        %4482 = vmatprep.mubr.f32.mxu0 0.0
        %v4483 = vand.u32 %v1373, 4294901760
        %4484 = vmatmul.mubr.f32.gmra.mrb[0].mxu0 %v4483
        %v4485 = vpop.f32.mrb[0].mxu0
        %v4486 = vadd.f32 %v4395, %v4485
        %v4487 = vpop.f32.mrb[0].mxu0
        %4488 = vdwg.mxu0
        %4489 = vmatprep.subr.mxu0 0.0
        %v4490 = vand.u32 %v431, 4294901760
        %v4491 = vsub.f32 %v431, %v4490
        %4492 = vmatpush1.msra.mxu0 %v4491
        %4493 = vmatprep.subr.mxu0 0.0
        %v4494 = vand.u32 %v432, 4294901760
        %v4495 = vsub.f32 %v432, %v4494
        %4496 = vmatpush1.msra.mxu0 %v4495
        %4497 = vmatprep.subr.mxu0 0.0
        %v4498 = vand.u32 %v433, 4294901760
        %v4499 = vsub.f32 %v433, %v4498
        %4500 = vmatpush1.msra.mxu0 %v4499
        %4501 = vmatprep.subr.mxu0 0.0
        %v4502 = vand.u32 %v434, 4294901760
        %v4503 = vsub.f32 %v434, %v4502
        %4504 = vmatpush1.msra.mxu0 %v4503
        %4505 = vmatprep.subr.mxu0 0.0
        %4506 = vmatpush1.msra.mxu0 0.0
        %4507 = vmatprep.subr.mxu0 0.0
        %4508 = vmatpush1.msra.mxu0 0.0
        %4509 = vmatprep.subr.mxu0 0.0
        %4510 = vmatpush1.msra.mxu0 0.0
        %4511 = vmatprep.subr.mxu0 0.0
        %4512 = vmatpush1.msra.mxu0 0.0
        %4513 = vmatprep.subr.mxu0 0.0
        %4514 = vmatpush1.msra.mxu0 0.0
        %4515 = vmatprep.subr.mxu0 0.0
        %4516 = vmatpush1.msra.mxu0 0.0
        %4517 = vmatprep.subr.mxu0 0.0
        %4518 = vmatpush1.msra.mxu0 0.0
        %4519 = vmatprep.subr.mxu0 0.0
        %4520 = vmatpush1.msra.mxu0 0.0
        %4521 = vmatprep.subr.mxu0 0.0
        %4522 = vmatpush1.msra.mxu0 0.0
        %4523 = vmatprep.subr.mxu0 0.0
        %4524 = vmatpush1.msra.mxu0 0.0
        %4525 = vmatprep.subr.mxu0 0.0
        %4526 = vmatpush1.msra.mxu0 0.0
        %4527 = vmatprep.subr.mxu0 0.0
        %4528 = vmatpush1.msra.mxu0 0.0
        %4529 = vmatprep.subr.mxu0 0.0
        %4530 = vmatpush1.msra.mxu0 0.0
        %4531 = vmatprep.subr.mxu0 0.0
        %4532 = vmatpush1.msra.mxu0 0.0
        %4533 = vmatprep.subr.mxu0 0.0
        %4534 = vmatpush1.msra.mxu0 0.0
        %4535 = vmatprep.subr.mxu0 0.0
        %4536 = vmatpush1.msra.mxu0 0.0
        %4537 = vmatprep.subr.mxu0 0.0
        %4538 = vmatpush1.msra.mxu0 0.0
        %4539 = vmatprep.subr.mxu0 0.0
        %4540 = vmatpush1.msra.mxu0 0.0
        %4541 = vmatprep.subr.mxu0 0.0
        %4542 = vmatpush1.msra.mxu0 0.0
        %4543 = vmatprep.subr.mxu0 0.0
        %4544 = vmatpush1.msra.mxu0 0.0
        %4545 = vmatprep.subr.mxu0 0.0
        %4546 = vmatpush1.msra.mxu0 0.0
        %4547 = vmatprep.subr.mxu0 0.0
        %4548 = vmatpush1.msra.mxu0 0.0
        %4549 = vmatprep.subr.mxu0 0.0
        %4550 = vmatpush1.msra.mxu0 0.0
        %4551 = vmatprep.subr.mxu0 0.0
        %4552 = vmatpush1.msra.mxu0 0.0
        %4553 = vmatprep.subr.mxu0 0.0
        %4554 = vmatpush1.msra.mxu0 0.0
        %4555 = vmatprep.subr.mxu0 0.0
        %4556 = vmatpush1.msra.mxu0 0.0
        %4557 = vmatprep.subr.mxu0 0.0
        %4558 = vmatpush1.msra.mxu0 0.0
        %4559 = vmatprep.subr.mxu0 0.0
        %4560 = vmatpush1.msra.mxu0 0.0
        %4561 = vmatprep.mubr.f32.mxu0 0.0
        %v4562 = vand.u32 %v1373, 4294901760
        %v4563 = vsub.f32 %v1373, %v4562
        %4564 = vmatmul.mubr.f32.gmra.mrb[0].mxu0 %v4563
        %v4565 = vpop.f32.mrb[0].mxu0
        %v4566 = vadd.f32 %v4486, %v4565
        %v4567 = vpop.f32.mrb[0].mxu0
        %4568 = vdwg.mxu0
        %4569 = vmatprep.subr.mxu0 0.0
        %v4570 = vand.u32 %v431, 4294901760
        %4571 = vmatpush1.msra.mxu0 %v4570
        %4572 = vmatprep.subr.mxu0 0.0
        %v4573 = vand.u32 %v432, 4294901760
        %4574 = vmatpush1.msra.mxu0 %v4573
        %4575 = vmatprep.subr.mxu0 0.0
        %v4576 = vand.u32 %v433, 4294901760
        %4577 = vmatpush1.msra.mxu0 %v4576
        %4578 = vmatprep.subr.mxu0 0.0
        %v4579 = vand.u32 %v434, 4294901760
        %4580 = vmatpush1.msra.mxu0 %v4579
        %4581 = vmatprep.subr.mxu0 0.0
        %4582 = vmatpush1.msra.mxu0 0.0
        %4583 = vmatprep.subr.mxu0 0.0
        %4584 = vmatpush1.msra.mxu0 0.0
        %4585 = vmatprep.subr.mxu0 0.0
        %4586 = vmatpush1.msra.mxu0 0.0
        %4587 = vmatprep.subr.mxu0 0.0
        %4588 = vmatpush1.msra.mxu0 0.0
        %4589 = vmatprep.subr.mxu0 0.0
        %4590 = vmatpush1.msra.mxu0 0.0
        %4591 = vmatprep.subr.mxu0 0.0
        %4592 = vmatpush1.msra.mxu0 0.0
        %4593 = vmatprep.subr.mxu0 0.0
        %4594 = vmatpush1.msra.mxu0 0.0
        %4595 = vmatprep.subr.mxu0 0.0
        %4596 = vmatpush1.msra.mxu0 0.0
        %4597 = vmatprep.subr.mxu0 0.0
        %4598 = vmatpush1.msra.mxu0 0.0
        %4599 = vmatprep.subr.mxu0 0.0
        %4600 = vmatpush1.msra.mxu0 0.0
        %4601 = vmatprep.subr.mxu0 0.0
        %4602 = vmatpush1.msra.mxu0 0.0
        %4603 = vmatprep.subr.mxu0 0.0
        %4604 = vmatpush1.msra.mxu0 0.0
        %4605 = vmatprep.subr.mxu0 0.0
        %4606 = vmatpush1.msra.mxu0 0.0
        %4607 = vmatprep.subr.mxu0 0.0
        %4608 = vmatpush1.msra.mxu0 0.0
        %4609 = vmatprep.subr.mxu0 0.0
        %4610 = vmatpush1.msra.mxu0 0.0
        %4611 = vmatprep.subr.mxu0 0.0
        %4612 = vmatpush1.msra.mxu0 0.0
        %4613 = vmatprep.subr.mxu0 0.0
        %4614 = vmatpush1.msra.mxu0 0.0
        %4615 = vmatprep.subr.mxu0 0.0
        %4616 = vmatpush1.msra.mxu0 0.0
        %4617 = vmatprep.subr.mxu0 0.0
        %4618 = vmatpush1.msra.mxu0 0.0
        %4619 = vmatprep.subr.mxu0 0.0
        %4620 = vmatpush1.msra.mxu0 0.0
        %4621 = vmatprep.subr.mxu0 0.0
        %4622 = vmatpush1.msra.mxu0 0.0
        %4623 = vmatprep.subr.mxu0 0.0
        %4624 = vmatpush1.msra.mxu0 0.0
        %4625 = vmatprep.subr.mxu0 0.0
        %4626 = vmatpush1.msra.mxu0 0.0
        %4627 = vmatprep.subr.mxu0 0.0
        %4628 = vmatpush1.msra.mxu0 0.0
        %4629 = vmatprep.subr.mxu0 0.0
        %4630 = vmatpush1.msra.mxu0 0.0
        %4631 = vmatprep.subr.mxu0 0.0
        %4632 = vmatpush1.msra.mxu0 0.0
        %4633 = vmatprep.subr.mxu0 0.0
        %4634 = vmatpush1.msra.mxu0 0.0
        %4635 = vmatprep.subr.mxu0 0.0
        %4636 = vmatpush1.msra.mxu0 0.0
        %4637 = vmatprep.mubr.f32.mxu0 0.0
        %v4638 = vand.u32 %v1373, 4294901760
        %v4639 = vsub.f32 %v1373, %v4638
        %v4640 = vand.u32 %v4639, 4294901760
        %4641 = vmatmul.mubr.f32.gmra.mrb[0].mxu0 %v4640
        %v4642 = vpop.f32.mrb[0].mxu0
        %v4643 = vadd.f32 %v4566, %v4642
        %v4644 = vpop.f32.mrb[0].mxu0
        %4645 = vdwg.mxu0
        %4646 = vmatprep.subr.mxu0 0.0
        %v4647 = vand.u32 %v431, 4294901760
        %v4648 = vsub.f32 %v431, %v4647
        %v4649 = vand.u32 %v4648, 4294901760
        %4650 = vmatpush1.msra.mxu0 %v4649
        %4651 = vmatprep.subr.mxu0 0.0
        %v4652 = vand.u32 %v432, 4294901760
        %v4653 = vsub.f32 %v432, %v4652
        %v4654 = vand.u32 %v4653, 4294901760
        %4655 = vmatpush1.msra.mxu0 %v4654
        %4656 = vmatprep.subr.mxu0 0.0
        %v4657 = vand.u32 %v433, 4294901760
        %v4658 = vsub.f32 %v433, %v4657
        %v4659 = vand.u32 %v4658, 4294901760
        %4660 = vmatpush1.msra.mxu0 %v4659
        %4661 = vmatprep.subr.mxu0 0.0
        %v4662 = vand.u32 %v434, 4294901760
        %v4663 = vsub.f32 %v434, %v4662
        %v4664 = vand.u32 %v4663, 4294901760
        %4665 = vmatpush1.msra.mxu0 %v4664
        %4666 = vmatprep.subr.mxu0 0.0
        %4667 = vmatpush1.msra.mxu0 0.0
        %4668 = vmatprep.subr.mxu0 0.0
        %4669 = vmatpush1.msra.mxu0 0.0
        %4670 = vmatprep.subr.mxu0 0.0
        %4671 = vmatpush1.msra.mxu0 0.0
        %4672 = vmatprep.subr.mxu0 0.0
        %4673 = vmatpush1.msra.mxu0 0.0
        %4674 = vmatprep.subr.mxu0 0.0
        %4675 = vmatpush1.msra.mxu0 0.0
        %4676 = vmatprep.subr.mxu0 0.0
        %4677 = vmatpush1.msra.mxu0 0.0
        %4678 = vmatprep.subr.mxu0 0.0
        %4679 = vmatpush1.msra.mxu0 0.0
        %4680 = vmatprep.subr.mxu0 0.0
        %4681 = vmatpush1.msra.mxu0 0.0
        %4682 = vmatprep.subr.mxu0 0.0
        %4683 = vmatpush1.msra.mxu0 0.0
        %4684 = vmatprep.subr.mxu0 0.0
        %4685 = vmatpush1.msra.mxu0 0.0
        %4686 = vmatprep.subr.mxu0 0.0
        %4687 = vmatpush1.msra.mxu0 0.0
        %4688 = vmatprep.subr.mxu0 0.0
        %4689 = vmatpush1.msra.mxu0 0.0
        %4690 = vmatprep.subr.mxu0 0.0
        %4691 = vmatpush1.msra.mxu0 0.0
        %4692 = vmatprep.subr.mxu0 0.0
        %4693 = vmatpush1.msra.mxu0 0.0
        %4694 = vmatprep.subr.mxu0 0.0
        %4695 = vmatpush1.msra.mxu0 0.0
        %4696 = vmatprep.subr.mxu0 0.0
        %4697 = vmatpush1.msra.mxu0 0.0
        %4698 = vmatprep.subr.mxu0 0.0
        %4699 = vmatpush1.msra.mxu0 0.0
        %4700 = vmatprep.subr.mxu0 0.0
        %4701 = vmatpush1.msra.mxu0 0.0
        %4702 = vmatprep.subr.mxu0 0.0
        %4703 = vmatpush1.msra.mxu0 0.0
        %4704 = vmatprep.subr.mxu0 0.0
        %4705 = vmatpush1.msra.mxu0 0.0
        %4706 = vmatprep.subr.mxu0 0.0
        %4707 = vmatpush1.msra.mxu0 0.0
        %4708 = vmatprep.subr.mxu0 0.0
        %4709 = vmatpush1.msra.mxu0 0.0
        %4710 = vmatprep.subr.mxu0 0.0
        %4711 = vmatpush1.msra.mxu0 0.0
        %4712 = vmatprep.subr.mxu0 0.0
        %4713 = vmatpush1.msra.mxu0 0.0
        %4714 = vmatprep.subr.mxu0 0.0
        %4715 = vmatpush1.msra.mxu0 0.0
        %4716 = vmatprep.subr.mxu0 0.0
        %4717 = vmatpush1.msra.mxu0 0.0
        %4718 = vmatprep.subr.mxu0 0.0
        %4719 = vmatpush1.msra.mxu0 0.0
        %4720 = vmatprep.subr.mxu0 0.0
        %4721 = vmatpush1.msra.mxu0 0.0
        %4722 = vmatprep.mubr.f32.mxu0 0.0
        %v4723 = vand.u32 %v1373, 4294901760
        %4724 = vmatmul.mubr.f32.gmra.mrb[0].mxu0 %v4723
        %v4725 = vpop.f32.mrb[0].mxu0
        %v4726 = vadd.f32 %v4643, %v4725
        %v4727 = vpop.f32.mrb[0].mxu0
        %4728 = vdwg.mxu0
        %4729 = vmatprep.subr.mxu0 0.0
        %v4730 = vand.u32 %v431, 4294901760
        %4731 = vmatpush1.msra.mxu0 %v4730
        %4732 = vmatprep.subr.mxu0 0.0
        %v4733 = vand.u32 %v432, 4294901760
        %4734 = vmatpush1.msra.mxu0 %v4733
        %4735 = vmatprep.subr.mxu0 0.0
        %v4736 = vand.u32 %v433, 4294901760
        %4737 = vmatpush1.msra.mxu0 %v4736
        %4738 = vmatprep.subr.mxu0 0.0
        %v4739 = vand.u32 %v434, 4294901760
        %4740 = vmatpush1.msra.mxu0 %v4739
        %4741 = vmatprep.subr.mxu0 0.0
        %4742 = vmatpush1.msra.mxu0 0.0
        %4743 = vmatprep.subr.mxu0 0.0
        %4744 = vmatpush1.msra.mxu0 0.0
        %4745 = vmatprep.subr.mxu0 0.0
        %4746 = vmatpush1.msra.mxu0 0.0
        %4747 = vmatprep.subr.mxu0 0.0
        %4748 = vmatpush1.msra.mxu0 0.0
        %4749 = vmatprep.subr.mxu0 0.0
        %4750 = vmatpush1.msra.mxu0 0.0
        %4751 = vmatprep.subr.mxu0 0.0
        %4752 = vmatpush1.msra.mxu0 0.0
        %4753 = vmatprep.subr.mxu0 0.0
        %4754 = vmatpush1.msra.mxu0 0.0
        %4755 = vmatprep.subr.mxu0 0.0
        %4756 = vmatpush1.msra.mxu0 0.0
        %4757 = vmatprep.subr.mxu0 0.0
        %4758 = vmatpush1.msra.mxu0 0.0
        %4759 = vmatprep.subr.mxu0 0.0
        %4760 = vmatpush1.msra.mxu0 0.0
        %4761 = vmatprep.subr.mxu0 0.0
        %4762 = vmatpush1.msra.mxu0 0.0
        %4763 = vmatprep.subr.mxu0 0.0
        %4764 = vmatpush1.msra.mxu0 0.0
        %4765 = vmatprep.subr.mxu0 0.0
        %4766 = vmatpush1.msra.mxu0 0.0
        %4767 = vmatprep.subr.mxu0 0.0
        %4768 = vmatpush1.msra.mxu0 0.0
        %4769 = vmatprep.subr.mxu0 0.0
        %4770 = vmatpush1.msra.mxu0 0.0
        %4771 = vmatprep.subr.mxu0 0.0
        %4772 = vmatpush1.msra.mxu0 0.0
        %4773 = vmatprep.subr.mxu0 0.0
        %4774 = vmatpush1.msra.mxu0 0.0
        %4775 = vmatprep.subr.mxu0 0.0
        %4776 = vmatpush1.msra.mxu0 0.0
        %4777 = vmatprep.subr.mxu0 0.0
        %4778 = vmatpush1.msra.mxu0 0.0
        %4779 = vmatprep.subr.mxu0 0.0
        %4780 = vmatpush1.msra.mxu0 0.0
        %4781 = vmatprep.subr.mxu0 0.0
        %4782 = vmatpush1.msra.mxu0 0.0
        %4783 = vmatprep.subr.mxu0 0.0
        %4784 = vmatpush1.msra.mxu0 0.0
        %4785 = vmatprep.subr.mxu0 0.0
        %4786 = vmatpush1.msra.mxu0 0.0
        %4787 = vmatprep.subr.mxu0 0.0
        %4788 = vmatpush1.msra.mxu0 0.0
        %4789 = vmatprep.subr.mxu0 0.0
        %4790 = vmatpush1.msra.mxu0 0.0
        %4791 = vmatprep.subr.mxu0 0.0
        %4792 = vmatpush1.msra.mxu0 0.0
        %4793 = vmatprep.subr.mxu0 0.0
        %4794 = vmatpush1.msra.mxu0 0.0
        %4795 = vmatprep.subr.mxu0 0.0
        %4796 = vmatpush1.msra.mxu0 0.0
        %4797 = vmatprep.mubr.f32.mxu0 0.0
        %v4798 = vand.u32 %v1373, 4294901760
        %4799 = vmatmul.mubr.f32.gmra.mrb[0].mxu0 %v4798
        %v4800 = vpop.f32.mrb[0].mxu0
        %v4801 = vadd.f32 %v4726, %v4800
        %v4802 = vpop.f32.mrb[0].mxu0
        %4803 = vdwg.mxu0
        %4804 = vmatprep.subr.mxu0 0.0
        %v4805 = vand.u32 %v427, 4294901760
        %4806 = vmatpush1.msra.mxu0 %v4805
        %4807 = vmatprep.subr.mxu0 0.0
        %v4808 = vand.u32 %v428, 4294901760
        %4809 = vmatpush1.msra.mxu0 %v4808
        %4810 = vmatprep.subr.mxu0 0.0
        %v4811 = vand.u32 %v429, 4294901760
        %4812 = vmatpush1.msra.mxu0 %v4811
        %4813 = vmatprep.subr.mxu0 0.0
        %v4814 = vand.u32 %v430, 4294901760
        %4815 = vmatpush1.msra.mxu0 %v4814
        %4816 = vmatprep.subr.mxu0 0.0
        %4817 = vmatpush1.msra.mxu0 0.0
        %4818 = vmatprep.subr.mxu0 0.0
        %4819 = vmatpush1.msra.mxu0 0.0
        %4820 = vmatprep.subr.mxu0 0.0
        %4821 = vmatpush1.msra.mxu0 0.0
        %4822 = vmatprep.subr.mxu0 0.0
        %4823 = vmatpush1.msra.mxu0 0.0
        %4824 = vmatprep.subr.mxu0 0.0
        %4825 = vmatpush1.msra.mxu0 0.0
        %4826 = vmatprep.subr.mxu0 0.0
        %4827 = vmatpush1.msra.mxu0 0.0
        %4828 = vmatprep.subr.mxu0 0.0
        %4829 = vmatpush1.msra.mxu0 0.0
        %4830 = vmatprep.subr.mxu0 0.0
        %4831 = vmatpush1.msra.mxu0 0.0
        %4832 = vmatprep.subr.mxu0 0.0
        %4833 = vmatpush1.msra.mxu0 0.0
        %4834 = vmatprep.subr.mxu0 0.0
        %4835 = vmatpush1.msra.mxu0 0.0
        %4836 = vmatprep.subr.mxu0 0.0
        %4837 = vmatpush1.msra.mxu0 0.0
        %4838 = vmatprep.subr.mxu0 0.0
        %4839 = vmatpush1.msra.mxu0 0.0
        %4840 = vmatprep.subr.mxu0 0.0
        %4841 = vmatpush1.msra.mxu0 0.0
        %4842 = vmatprep.subr.mxu0 0.0
        %4843 = vmatpush1.msra.mxu0 0.0
        %4844 = vmatprep.subr.mxu0 0.0
        %4845 = vmatpush1.msra.mxu0 0.0
        %4846 = vmatprep.subr.mxu0 0.0
        %4847 = vmatpush1.msra.mxu0 0.0
        %4848 = vmatprep.subr.mxu0 0.0
        %4849 = vmatpush1.msra.mxu0 0.0
        %4850 = vmatprep.subr.mxu0 0.0
        %4851 = vmatpush1.msra.mxu0 0.0
        %4852 = vmatprep.subr.mxu0 0.0
        %4853 = vmatpush1.msra.mxu0 0.0
        %4854 = vmatprep.subr.mxu0 0.0
        %4855 = vmatpush1.msra.mxu0 0.0
        %4856 = vmatprep.subr.mxu0 0.0
        %4857 = vmatpush1.msra.mxu0 0.0
        %4858 = vmatprep.subr.mxu0 0.0
        %4859 = vmatpush1.msra.mxu0 0.0
        %4860 = vmatprep.subr.mxu0 0.0
        %4861 = vmatpush1.msra.mxu0 0.0
        %4862 = vmatprep.subr.mxu0 0.0
        %4863 = vmatpush1.msra.mxu0 0.0
        %4864 = vmatprep.subr.mxu0 0.0
        %4865 = vmatpush1.msra.mxu0 0.0
        %4866 = vmatprep.subr.mxu0 0.0
        %4867 = vmatpush1.msra.mxu0 0.0
        %4868 = vmatprep.subr.mxu0 0.0
        %4869 = vmatpush1.msra.mxu0 0.0
        %4870 = vmatprep.subr.mxu0 0.0
        %4871 = vmatpush1.msra.mxu0 0.0
        %4872 = vmatprep.mubr.f32.mxu0 0.0
        %v4873 = vand.u32 %v1861, 4294901760
        %v4874 = vsub.f32 %v1861, %v4873
        %v4875 = vand.u32 %v4874, 4294901760
        %v4876 = vsub.f32 %v4874, %v4875
        %v4877 = vand.u32 %v4876, 4294901760
        %4878 = vmatmul.mubr.f32.gmra.mrb[0].mxu0 %v4877
        %v4879 = vpop.f32.mrb[0].mxu0
        %v4880 = vadd.f32 %v4801, %v4879
        %v4881 = vpop.f32.mrb[0].mxu0
        %4882 = vdwg.mxu0
        %4883 = vmatprep.subr.mxu0 0.0
        %v4884 = vand.u32 %v427, 4294901760
        %v4885 = vsub.f32 %v427, %v4884
        %v4886 = vand.u32 %v4885, 4294901760
        %v4887 = vsub.f32 %v4885, %v4886
        %v4888 = vand.u32 %v4887, 4294901760
        %4889 = vmatpush1.msra.mxu0 %v4888
        %4890 = vmatprep.subr.mxu0 0.0
        %v4891 = vand.u32 %v428, 4294901760
        %v4892 = vsub.f32 %v428, %v4891
        %v4893 = vand.u32 %v4892, 4294901760
        %v4894 = vsub.f32 %v4892, %v4893
        %v4895 = vand.u32 %v4894, 4294901760
        %4896 = vmatpush1.msra.mxu0 %v4895
        %4897 = vmatprep.subr.mxu0 0.0
        %v4898 = vand.u32 %v429, 4294901760
        %v4899 = vsub.f32 %v429, %v4898
        %v4900 = vand.u32 %v4899, 4294901760
        %v4901 = vsub.f32 %v4899, %v4900
        %v4902 = vand.u32 %v4901, 4294901760
        %4903 = vmatpush1.msra.mxu0 %v4902
        %4904 = vmatprep.subr.mxu0 0.0
        %v4905 = vand.u32 %v430, 4294901760
        %v4906 = vsub.f32 %v430, %v4905
        %v4907 = vand.u32 %v4906, 4294901760
        %v4908 = vsub.f32 %v4906, %v4907
        %v4909 = vand.u32 %v4908, 4294901760
        %4910 = vmatpush1.msra.mxu0 %v4909
        %4911 = vmatprep.subr.mxu0 0.0
        %4912 = vmatpush1.msra.mxu0 0.0
        %4913 = vmatprep.subr.mxu0 0.0
        %4914 = vmatpush1.msra.mxu0 0.0
        %4915 = vmatprep.subr.mxu0 0.0
        %4916 = vmatpush1.msra.mxu0 0.0
        %4917 = vmatprep.subr.mxu0 0.0
        %4918 = vmatpush1.msra.mxu0 0.0
        %4919 = vmatprep.subr.mxu0 0.0
        %4920 = vmatpush1.msra.mxu0 0.0
        %4921 = vmatprep.subr.mxu0 0.0
        %4922 = vmatpush1.msra.mxu0 0.0
        %4923 = vmatprep.subr.mxu0 0.0
        %4924 = vmatpush1.msra.mxu0 0.0
        %4925 = vmatprep.subr.mxu0 0.0
        %4926 = vmatpush1.msra.mxu0 0.0
        %4927 = vmatprep.subr.mxu0 0.0
        %4928 = vmatpush1.msra.mxu0 0.0
        %4929 = vmatprep.subr.mxu0 0.0
        %4930 = vmatpush1.msra.mxu0 0.0
        %4931 = vmatprep.subr.mxu0 0.0
        %4932 = vmatpush1.msra.mxu0 0.0
        %4933 = vmatprep.subr.mxu0 0.0
        %4934 = vmatpush1.msra.mxu0 0.0
        %4935 = vmatprep.subr.mxu0 0.0
        %4936 = vmatpush1.msra.mxu0 0.0
        %4937 = vmatprep.subr.mxu0 0.0
        %4938 = vmatpush1.msra.mxu0 0.0
        %4939 = vmatprep.subr.mxu0 0.0
        %4940 = vmatpush1.msra.mxu0 0.0
        %4941 = vmatprep.subr.mxu0 0.0
        %4942 = vmatpush1.msra.mxu0 0.0
        %4943 = vmatprep.subr.mxu0 0.0
        %4944 = vmatpush1.msra.mxu0 0.0
        %4945 = vmatprep.subr.mxu0 0.0
        %4946 = vmatpush1.msra.mxu0 0.0
        %4947 = vmatprep.subr.mxu0 0.0
        %4948 = vmatpush1.msra.mxu0 0.0
        %4949 = vmatprep.subr.mxu0 0.0
        %4950 = vmatpush1.msra.mxu0 0.0
        %4951 = vmatprep.subr.mxu0 0.0
        %4952 = vmatpush1.msra.mxu0 0.0
        %4953 = vmatprep.subr.mxu0 0.0
        %4954 = vmatpush1.msra.mxu0 0.0
        %4955 = vmatprep.subr.mxu0 0.0
        %4956 = vmatpush1.msra.mxu0 0.0
        %4957 = vmatprep.subr.mxu0 0.0
        %4958 = vmatpush1.msra.mxu0 0.0
        %4959 = vmatprep.subr.mxu0 0.0
        %4960 = vmatpush1.msra.mxu0 0.0
        %4961 = vmatprep.subr.mxu0 0.0
        %4962 = vmatpush1.msra.mxu0 0.0
        %4963 = vmatprep.subr.mxu0 0.0
        %4964 = vmatpush1.msra.mxu0 0.0
        %4965 = vmatprep.subr.mxu0 0.0
        %4966 = vmatpush1.msra.mxu0 0.0
        %4967 = vmatprep.mubr.f32.mxu0 0.0
        %v4968 = vand.u32 %v1861, 4294901760
        %4969 = vmatmul.mubr.f32.gmra.mrb[0].mxu0 %v4968
        %v4970 = vpop.f32.mrb[0].mxu0
        %v4971 = vadd.f32 %v4880, %v4970
        %v4972 = vpop.f32.mrb[0].mxu0
        %4973 = vdwg.mxu0
        %4974 = vmatprep.subr.mxu0 0.0
        %v4975 = vand.u32 %v427, 4294901760
        %v4976 = vsub.f32 %v427, %v4975
        %4977 = vmatpush1.msra.mxu0 %v4976
        %4978 = vmatprep.subr.mxu0 0.0
        %v4979 = vand.u32 %v428, 4294901760
        %v4980 = vsub.f32 %v428, %v4979
        %4981 = vmatpush1.msra.mxu0 %v4980
        %4982 = vmatprep.subr.mxu0 0.0
        %v4983 = vand.u32 %v429, 4294901760
        %v4984 = vsub.f32 %v429, %v4983
        %4985 = vmatpush1.msra.mxu0 %v4984
        %4986 = vmatprep.subr.mxu0 0.0
        %v4987 = vand.u32 %v430, 4294901760
        %v4988 = vsub.f32 %v430, %v4987
        %4989 = vmatpush1.msra.mxu0 %v4988
        %4990 = vmatprep.subr.mxu0 0.0
        %4991 = vmatpush1.msra.mxu0 0.0
        %4992 = vmatprep.subr.mxu0 0.0
        %4993 = vmatpush1.msra.mxu0 0.0
        %4994 = vmatprep.subr.mxu0 0.0
        %4995 = vmatpush1.msra.mxu0 0.0
        %4996 = vmatprep.subr.mxu0 0.0
        %4997 = vmatpush1.msra.mxu0 0.0
        %4998 = vmatprep.subr.mxu0 0.0
        %4999 = vmatpush1.msra.mxu0 0.0
        %5000 = vmatprep.subr.mxu0 0.0
        %5001 = vmatpush1.msra.mxu0 0.0
        %5002 = vmatprep.subr.mxu0 0.0
        %5003 = vmatpush1.msra.mxu0 0.0
        %5004 = vmatprep.subr.mxu0 0.0
        %5005 = vmatpush1.msra.mxu0 0.0
        %5006 = vmatprep.subr.mxu0 0.0
        %5007 = vmatpush1.msra.mxu0 0.0
        %5008 = vmatprep.subr.mxu0 0.0
        %5009 = vmatpush1.msra.mxu0 0.0
        %5010 = vmatprep.subr.mxu0 0.0
        %5011 = vmatpush1.msra.mxu0 0.0
        %5012 = vmatprep.subr.mxu0 0.0
        %5013 = vmatpush1.msra.mxu0 0.0
        %5014 = vmatprep.subr.mxu0 0.0
        %5015 = vmatpush1.msra.mxu0 0.0
        %5016 = vmatprep.subr.mxu0 0.0
        %5017 = vmatpush1.msra.mxu0 0.0
        %5018 = vmatprep.subr.mxu0 0.0
        %5019 = vmatpush1.msra.mxu0 0.0
        %5020 = vmatprep.subr.mxu0 0.0
        %5021 = vmatpush1.msra.mxu0 0.0
        %5022 = vmatprep.subr.mxu0 0.0
        %5023 = vmatpush1.msra.mxu0 0.0
        %5024 = vmatprep.subr.mxu0 0.0
        %5025 = vmatpush1.msra.mxu0 0.0
        %5026 = vmatprep.subr.mxu0 0.0
        %5027 = vmatpush1.msra.mxu0 0.0
        %5028 = vmatprep.subr.mxu0 0.0
        %5029 = vmatpush1.msra.mxu0 0.0
        %5030 = vmatprep.subr.mxu0 0.0
        %5031 = vmatpush1.msra.mxu0 0.0
        %5032 = vmatprep.subr.mxu0 0.0
        %5033 = vmatpush1.msra.mxu0 0.0
        %5034 = vmatprep.subr.mxu0 0.0
        %5035 = vmatpush1.msra.mxu0 0.0
        %5036 = vmatprep.subr.mxu0 0.0
        %5037 = vmatpush1.msra.mxu0 0.0
        %5038 = vmatprep.subr.mxu0 0.0
        %5039 = vmatpush1.msra.mxu0 0.0
        %5040 = vmatprep.subr.mxu0 0.0
        %5041 = vmatpush1.msra.mxu0 0.0
        %5042 = vmatprep.subr.mxu0 0.0
        %5043 = vmatpush1.msra.mxu0 0.0
        %5044 = vmatprep.subr.mxu0 0.0
        %5045 = vmatpush1.msra.mxu0 0.0
        %5046 = vmatprep.mubr.f32.mxu0 0.0
        %v5047 = vand.u32 %v1861, 4294901760
        %v5048 = vsub.f32 %v1861, %v5047
        %5049 = vmatmul.mubr.f32.gmra.mrb[0].mxu0 %v5048
        %v5050 = vpop.f32.mrb[0].mxu0
        %v5051 = vadd.f32 %v4971, %v5050
        %v5052 = vpop.f32.mrb[0].mxu0
        %5053 = vdwg.mxu0
        %5054 = vmatprep.subr.mxu0 0.0
        %v5055 = vand.u32 %v427, 4294901760
        %5056 = vmatpush1.msra.mxu0 %v5055
        %5057 = vmatprep.subr.mxu0 0.0
        %v5058 = vand.u32 %v428, 4294901760
        %5059 = vmatpush1.msra.mxu0 %v5058
        %5060 = vmatprep.subr.mxu0 0.0
        %v5061 = vand.u32 %v429, 4294901760
        %5062 = vmatpush1.msra.mxu0 %v5061
        %5063 = vmatprep.subr.mxu0 0.0
        %v5064 = vand.u32 %v430, 4294901760
        %5065 = vmatpush1.msra.mxu0 %v5064
        %5066 = vmatprep.subr.mxu0 0.0
        %5067 = vmatpush1.msra.mxu0 0.0
        %5068 = vmatprep.subr.mxu0 0.0
        %5069 = vmatpush1.msra.mxu0 0.0
        %5070 = vmatprep.subr.mxu0 0.0
        %5071 = vmatpush1.msra.mxu0 0.0
        %5072 = vmatprep.subr.mxu0 0.0
        %5073 = vmatpush1.msra.mxu0 0.0
        %5074 = vmatprep.subr.mxu0 0.0
        %5075 = vmatpush1.msra.mxu0 0.0
        %5076 = vmatprep.subr.mxu0 0.0
        %5077 = vmatpush1.msra.mxu0 0.0
        %5078 = vmatprep.subr.mxu0 0.0
        %5079 = vmatpush1.msra.mxu0 0.0
        %5080 = vmatprep.subr.mxu0 0.0
        %5081 = vmatpush1.msra.mxu0 0.0
        %5082 = vmatprep.subr.mxu0 0.0
        %5083 = vmatpush1.msra.mxu0 0.0
        %5084 = vmatprep.subr.mxu0 0.0
        %5085 = vmatpush1.msra.mxu0 0.0
        %5086 = vmatprep.subr.mxu0 0.0
        %5087 = vmatpush1.msra.mxu0 0.0
        %5088 = vmatprep.subr.mxu0 0.0
        %5089 = vmatpush1.msra.mxu0 0.0
        %5090 = vmatprep.subr.mxu0 0.0
        %5091 = vmatpush1.msra.mxu0 0.0
        %5092 = vmatprep.subr.mxu0 0.0
        %5093 = vmatpush1.msra.mxu0 0.0
        %5094 = vmatprep.subr.mxu0 0.0
        %5095 = vmatpush1.msra.mxu0 0.0
        %5096 = vmatprep.subr.mxu0 0.0
        %5097 = vmatpush1.msra.mxu0 0.0
        %5098 = vmatprep.subr.mxu0 0.0
        %5099 = vmatpush1.msra.mxu0 0.0
        %5100 = vmatprep.subr.mxu0 0.0
        %5101 = vmatpush1.msra.mxu0 0.0
        %5102 = vmatprep.subr.mxu0 0.0
        %5103 = vmatpush1.msra.mxu0 0.0
        %5104 = vmatprep.subr.mxu0 0.0
        %5105 = vmatpush1.msra.mxu0 0.0
        %5106 = vmatprep.subr.mxu0 0.0
        %5107 = vmatpush1.msra.mxu0 0.0
        %5108 = vmatprep.subr.mxu0 0.0
        %5109 = vmatpush1.msra.mxu0 0.0
        %5110 = vmatprep.subr.mxu0 0.0
        %5111 = vmatpush1.msra.mxu0 0.0
        %5112 = vmatprep.subr.mxu0 0.0
        %5113 = vmatpush1.msra.mxu0 0.0
        %5114 = vmatprep.subr.mxu0 0.0
        %5115 = vmatpush1.msra.mxu0 0.0
        %5116 = vmatprep.subr.mxu0 0.0
        %5117 = vmatpush1.msra.mxu0 0.0
        %5118 = vmatprep.subr.mxu0 0.0
        %5119 = vmatpush1.msra.mxu0 0.0
        %5120 = vmatprep.subr.mxu0 0.0
        %5121 = vmatpush1.msra.mxu0 0.0
        %5122 = vmatprep.mubr.f32.mxu0 0.0
        %v5123 = vand.u32 %v1861, 4294901760
        %v5124 = vsub.f32 %v1861, %v5123
        %v5125 = vand.u32 %v5124, 4294901760
        %5126 = vmatmul.mubr.f32.gmra.mrb[0].mxu0 %v5125
        %v5127 = vpop.f32.mrb[0].mxu0
        %v5128 = vadd.f32 %v5051, %v5127
        %v5129 = vpop.f32.mrb[0].mxu0
        %5130 = vdwg.mxu0
        %5131 = vmatprep.subr.mxu0 0.0
        %v5132 = vand.u32 %v427, 4294901760
        %v5133 = vsub.f32 %v427, %v5132
        %v5134 = vand.u32 %v5133, 4294901760
        %5135 = vmatpush1.msra.mxu0 %v5134
        %5136 = vmatprep.subr.mxu0 0.0
        %v5137 = vand.u32 %v428, 4294901760
        %v5138 = vsub.f32 %v428, %v5137
        %v5139 = vand.u32 %v5138, 4294901760
        %5140 = vmatpush1.msra.mxu0 %v5139
        %5141 = vmatprep.subr.mxu0 0.0
        %v5142 = vand.u32 %v429, 4294901760
        %v5143 = vsub.f32 %v429, %v5142
        %v5144 = vand.u32 %v5143, 4294901760
        %5145 = vmatpush1.msra.mxu0 %v5144
        %5146 = vmatprep.subr.mxu0 0.0
        %v5147 = vand.u32 %v430, 4294901760
        %v5148 = vsub.f32 %v430, %v5147
        %v5149 = vand.u32 %v5148, 4294901760
        %5150 = vmatpush1.msra.mxu0 %v5149
        %5151 = vmatprep.subr.mxu0 0.0
        %5152 = vmatpush1.msra.mxu0 0.0
        %5153 = vmatprep.subr.mxu0 0.0
        %5154 = vmatpush1.msra.mxu0 0.0
        %5155 = vmatprep.subr.mxu0 0.0
        %5156 = vmatpush1.msra.mxu0 0.0
        %5157 = vmatprep.subr.mxu0 0.0
        %5158 = vmatpush1.msra.mxu0 0.0
        %5159 = vmatprep.subr.mxu0 0.0
        %5160 = vmatpush1.msra.mxu0 0.0
        %5161 = vmatprep.subr.mxu0 0.0
        %5162 = vmatpush1.msra.mxu0 0.0
        %5163 = vmatprep.subr.mxu0 0.0
        %5164 = vmatpush1.msra.mxu0 0.0
        %5165 = vmatprep.subr.mxu0 0.0
        %5166 = vmatpush1.msra.mxu0 0.0
        %5167 = vmatprep.subr.mxu0 0.0
        %5168 = vmatpush1.msra.mxu0 0.0
        %5169 = vmatprep.subr.mxu0 0.0
        %5170 = vmatpush1.msra.mxu0 0.0
        %5171 = vmatprep.subr.mxu0 0.0
        %5172 = vmatpush1.msra.mxu0 0.0
        %5173 = vmatprep.subr.mxu0 0.0
        %5174 = vmatpush1.msra.mxu0 0.0
        %5175 = vmatprep.subr.mxu0 0.0
        %5176 = vmatpush1.msra.mxu0 0.0
        %5177 = vmatprep.subr.mxu0 0.0
        %5178 = vmatpush1.msra.mxu0 0.0
        %5179 = vmatprep.subr.mxu0 0.0
        %5180 = vmatpush1.msra.mxu0 0.0
        %5181 = vmatprep.subr.mxu0 0.0
        %5182 = vmatpush1.msra.mxu0 0.0
        %5183 = vmatprep.subr.mxu0 0.0
        %5184 = vmatpush1.msra.mxu0 0.0
        %5185 = vmatprep.subr.mxu0 0.0
        %5186 = vmatpush1.msra.mxu0 0.0
        %5187 = vmatprep.subr.mxu0 0.0
        %5188 = vmatpush1.msra.mxu0 0.0
        %5189 = vmatprep.subr.mxu0 0.0
        %5190 = vmatpush1.msra.mxu0 0.0
        %5191 = vmatprep.subr.mxu0 0.0
        %5192 = vmatpush1.msra.mxu0 0.0
        %5193 = vmatprep.subr.mxu0 0.0
        %5194 = vmatpush1.msra.mxu0 0.0
        %5195 = vmatprep.subr.mxu0 0.0
        %5196 = vmatpush1.msra.mxu0 0.0
        %5197 = vmatprep.subr.mxu0 0.0
        %5198 = vmatpush1.msra.mxu0 0.0
        %5199 = vmatprep.subr.mxu0 0.0
        %5200 = vmatpush1.msra.mxu0 0.0
        %5201 = vmatprep.subr.mxu0 0.0
        %5202 = vmatpush1.msra.mxu0 0.0
        %5203 = vmatprep.subr.mxu0 0.0
        %5204 = vmatpush1.msra.mxu0 0.0
        %5205 = vmatprep.subr.mxu0 0.0
        %5206 = vmatpush1.msra.mxu0 0.0
        %5207 = vmatprep.mubr.f32.mxu0 0.0
        %v5208 = vand.u32 %v1861, 4294901760
        %5209 = vmatmul.mubr.f32.gmra.mrb[0].mxu0 %v5208
        %v5210 = vpop.f32.mrb[0].mxu0
        %v5211 = vadd.f32 %v5128, %v5210
        %v5212 = vpop.f32.mrb[0].mxu0
        %5213 = vdwg.mxu0
        %5214 = vmatprep.subr.mxu0 0.0
        %v5215 = vand.u32 %v427, 4294901760
        %5216 = vmatpush1.msra.mxu0 %v5215
        %5217 = vmatprep.subr.mxu0 0.0
        %v5218 = vand.u32 %v428, 4294901760
        %5219 = vmatpush1.msra.mxu0 %v5218
        %5220 = vmatprep.subr.mxu0 0.0
        %v5221 = vand.u32 %v429, 4294901760
        %5222 = vmatpush1.msra.mxu0 %v5221
        %5223 = vmatprep.subr.mxu0 0.0
        %v5224 = vand.u32 %v430, 4294901760
        %5225 = vmatpush1.msra.mxu0 %v5224
        %5226 = vmatprep.subr.mxu0 0.0
        %5227 = vmatpush1.msra.mxu0 0.0
        %5228 = vmatprep.subr.mxu0 0.0
        %5229 = vmatpush1.msra.mxu0 0.0
        %5230 = vmatprep.subr.mxu0 0.0
        %5231 = vmatpush1.msra.mxu0 0.0
        %5232 = vmatprep.subr.mxu0 0.0
        %5233 = vmatpush1.msra.mxu0 0.0
        %5234 = vmatprep.subr.mxu0 0.0
        %5235 = vmatpush1.msra.mxu0 0.0
        %5236 = vmatprep.subr.mxu0 0.0
        %5237 = vmatpush1.msra.mxu0 0.0
        %5238 = vmatprep.subr.mxu0 0.0
        %5239 = vmatpush1.msra.mxu0 0.0
        %5240 = vmatprep.subr.mxu0 0.0
        %5241 = vmatpush1.msra.mxu0 0.0
        %5242 = vmatprep.subr.mxu0 0.0
        %5243 = vmatpush1.msra.mxu0 0.0
        %5244 = vmatprep.subr.mxu0 0.0
        %5245 = vmatpush1.msra.mxu0 0.0
        %5246 = vmatprep.subr.mxu0 0.0
        %5247 = vmatpush1.msra.mxu0 0.0
        %5248 = vmatprep.subr.mxu0 0.0
        %5249 = vmatpush1.msra.mxu0 0.0
        %5250 = vmatprep.subr.mxu0 0.0
        %5251 = vmatpush1.msra.mxu0 0.0
        %5252 = vmatprep.subr.mxu0 0.0
        %5253 = vmatpush1.msra.mxu0 0.0
        %5254 = vmatprep.subr.mxu0 0.0
        %5255 = vmatpush1.msra.mxu0 0.0
        %5256 = vmatprep.subr.mxu0 0.0
        %5257 = vmatpush1.msra.mxu0 0.0
        %5258 = vmatprep.subr.mxu0 0.0
        %5259 = vmatpush1.msra.mxu0 0.0
        %5260 = vmatprep.subr.mxu0 0.0
        %5261 = vmatpush1.msra.mxu0 0.0
        %5262 = vmatprep.subr.mxu0 0.0
        %5263 = vmatpush1.msra.mxu0 0.0
        %5264 = vmatprep.subr.mxu0 0.0
        %5265 = vmatpush1.msra.mxu0 0.0
        %5266 = vmatprep.subr.mxu0 0.0
        %5267 = vmatpush1.msra.mxu0 0.0
        %5268 = vmatprep.subr.mxu0 0.0
        %5269 = vmatpush1.msra.mxu0 0.0
        %5270 = vmatprep.subr.mxu0 0.0
        %5271 = vmatpush1.msra.mxu0 0.0
        %5272 = vmatprep.subr.mxu0 0.0
        %5273 = vmatpush1.msra.mxu0 0.0
        %5274 = vmatprep.subr.mxu0 0.0
        %5275 = vmatpush1.msra.mxu0 0.0
        %5276 = vmatprep.subr.mxu0 0.0
        %5277 = vmatpush1.msra.mxu0 0.0
        %5278 = vmatprep.subr.mxu0 0.0
        %5279 = vmatpush1.msra.mxu0 0.0
        %5280 = vmatprep.subr.mxu0 0.0
        %5281 = vmatpush1.msra.mxu0 0.0
        %5282 = vmatprep.mubr.f32.mxu0 0.0
        %v5283 = vand.u32 %v1861, 4294901760
        %5284 = vmatmul.mubr.f32.gmra.mrb[0].mxu0 %v5283
        %v5285 = vpop.f32.mrb[0].mxu0
        %v5286 = vadd.f32 %v5211, %v5285
        %v5287 = vpop.f32.mrb[0].mxu0
        %5288 = vdwg.mxu0
        %v5289 = vmul.f32 %v4318, %v400
        %v5291 = vsel %vm1371, %v5289, 0
        %5293 = vmatprep.subr.mxu0 0.0
        %v5294 = vand.u32 %v435, 4294901760
        %5295 = vmatpush1.msra.mxu0 %v5294
        %5296 = vmatprep.subr.mxu0 0.0
        %v5297 = vand.u32 %v436, 4294901760
        %5298 = vmatpush1.msra.mxu0 %v5297
        %5299 = vmatprep.subr.mxu0 0.0
        %v5300 = vand.u32 %v437, 4294901760
        %5301 = vmatpush1.msra.mxu0 %v5300
        %5302 = vmatprep.subr.mxu0 0.0
        %v5303 = vand.u32 %v438, 4294901760
        %5304 = vmatpush1.msra.mxu0 %v5303
        %5305 = vmatprep.subr.mxu0 0.0
        %5306 = vmatpush1.msra.mxu0 0.0
        %5307 = vmatprep.subr.mxu0 0.0
        %5308 = vmatpush1.msra.mxu0 0.0
        %5309 = vmatprep.subr.mxu0 0.0
        %5310 = vmatpush1.msra.mxu0 0.0
        %5311 = vmatprep.subr.mxu0 0.0
        %5312 = vmatpush1.msra.mxu0 0.0
        %5313 = vmatprep.subr.mxu0 0.0
        %5314 = vmatpush1.msra.mxu0 0.0
        %5315 = vmatprep.subr.mxu0 0.0
        %5316 = vmatpush1.msra.mxu0 0.0
        %5317 = vmatprep.subr.mxu0 0.0
        %5318 = vmatpush1.msra.mxu0 0.0
        %5319 = vmatprep.subr.mxu0 0.0
        %5320 = vmatpush1.msra.mxu0 0.0
        %5321 = vmatprep.subr.mxu0 0.0
        %5322 = vmatpush1.msra.mxu0 0.0
        %5323 = vmatprep.subr.mxu0 0.0
        %5324 = vmatpush1.msra.mxu0 0.0
        %5325 = vmatprep.subr.mxu0 0.0
        %5326 = vmatpush1.msra.mxu0 0.0
        %5327 = vmatprep.subr.mxu0 0.0
        %5328 = vmatpush1.msra.mxu0 0.0
        %5329 = vmatprep.subr.mxu0 0.0
        %5330 = vmatpush1.msra.mxu0 0.0
        %5331 = vmatprep.subr.mxu0 0.0
        %5332 = vmatpush1.msra.mxu0 0.0
        %5333 = vmatprep.subr.mxu0 0.0
        %5334 = vmatpush1.msra.mxu0 0.0
        %5335 = vmatprep.subr.mxu0 0.0
        %5336 = vmatpush1.msra.mxu0 0.0
        %5337 = vmatprep.subr.mxu0 0.0
        %5338 = vmatpush1.msra.mxu0 0.0
        %5339 = vmatprep.subr.mxu0 0.0
        %5340 = vmatpush1.msra.mxu0 0.0
        %5341 = vmatprep.subr.mxu0 0.0
        %5342 = vmatpush1.msra.mxu0 0.0
        %5343 = vmatprep.subr.mxu0 0.0
        %5344 = vmatpush1.msra.mxu0 0.0
        %5345 = vmatprep.subr.mxu0 0.0
        %5346 = vmatpush1.msra.mxu0 0.0
        %5347 = vmatprep.subr.mxu0 0.0
        %5348 = vmatpush1.msra.mxu0 0.0
        %5349 = vmatprep.subr.mxu0 0.0
        %5350 = vmatpush1.msra.mxu0 0.0
        %5351 = vmatprep.subr.mxu0 0.0
        %5352 = vmatpush1.msra.mxu0 0.0
        %5353 = vmatprep.subr.mxu0 0.0
        %5354 = vmatpush1.msra.mxu0 0.0
        %5355 = vmatprep.subr.mxu0 0.0
        %5356 = vmatpush1.msra.mxu0 0.0
        %5357 = vmatprep.subr.mxu0 0.0
        %5358 = vmatpush1.msra.mxu0 0.0
        %5359 = vmatprep.subr.mxu0 0.0
        %5360 = vmatpush1.msra.mxu0 0.0
        %5361 = vmatprep.mubr.f32.mxu0 0.0
        %v5362 = vand.u32 %v5291, 4294901760
        %v5363 = vsub.f32 %v5291, %v5362
        %v5364 = vand.u32 %v5363, 4294901760
        %v5365 = vsub.f32 %v5363, %v5364
        %v5366 = vand.u32 %v5365, 4294901760
        %5367 = vmatmul.mubr.f32.gmra.mrb[0].mxu0 %v5366
        %v5368 = vpop.f32.mrb[0].mxu0
        %v5369 = vadd.f32 0.0, %v5368
        %v5370 = vpop.f32.mrb[0].mxu0
        %5371 = vdwg.mxu0
        %5372 = vmatprep.subr.mxu0 0.0
        %v5373 = vand.u32 %v435, 4294901760
        %v5374 = vsub.f32 %v435, %v5373
        %v5375 = vand.u32 %v5374, 4294901760
        %v5376 = vsub.f32 %v5374, %v5375
        %v5377 = vand.u32 %v5376, 4294901760
        %5378 = vmatpush1.msra.mxu0 %v5377
        %5379 = vmatprep.subr.mxu0 0.0
        %v5380 = vand.u32 %v436, 4294901760
        %v5381 = vsub.f32 %v436, %v5380
        %v5382 = vand.u32 %v5381, 4294901760
        %v5383 = vsub.f32 %v5381, %v5382
        %v5384 = vand.u32 %v5383, 4294901760
        %5385 = vmatpush1.msra.mxu0 %v5384
        %5386 = vmatprep.subr.mxu0 0.0
        %v5387 = vand.u32 %v437, 4294901760
        %v5388 = vsub.f32 %v437, %v5387
        %v5389 = vand.u32 %v5388, 4294901760
        %v5390 = vsub.f32 %v5388, %v5389
        %v5391 = vand.u32 %v5390, 4294901760
        %5392 = vmatpush1.msra.mxu0 %v5391
        %5393 = vmatprep.subr.mxu0 0.0
        %v5394 = vand.u32 %v438, 4294901760
        %v5395 = vsub.f32 %v438, %v5394
        %v5396 = vand.u32 %v5395, 4294901760
        %v5397 = vsub.f32 %v5395, %v5396
        %v5398 = vand.u32 %v5397, 4294901760
        %5399 = vmatpush1.msra.mxu0 %v5398
        %5400 = vmatprep.subr.mxu0 0.0
        %5401 = vmatpush1.msra.mxu0 0.0
        %5402 = vmatprep.subr.mxu0 0.0
        %5403 = vmatpush1.msra.mxu0 0.0
        %5404 = vmatprep.subr.mxu0 0.0
        %5405 = vmatpush1.msra.mxu0 0.0
        %5406 = vmatprep.subr.mxu0 0.0
        %5407 = vmatpush1.msra.mxu0 0.0
        %5408 = vmatprep.subr.mxu0 0.0
        %5409 = vmatpush1.msra.mxu0 0.0
        %5410 = vmatprep.subr.mxu0 0.0
        %5411 = vmatpush1.msra.mxu0 0.0
        %5412 = vmatprep.subr.mxu0 0.0
        %5413 = vmatpush1.msra.mxu0 0.0
        %5414 = vmatprep.subr.mxu0 0.0
        %5415 = vmatpush1.msra.mxu0 0.0
        %5416 = vmatprep.subr.mxu0 0.0
        %5417 = vmatpush1.msra.mxu0 0.0
        %5418 = vmatprep.subr.mxu0 0.0
        %5419 = vmatpush1.msra.mxu0 0.0
        %5420 = vmatprep.subr.mxu0 0.0
        %5421 = vmatpush1.msra.mxu0 0.0
        %5422 = vmatprep.subr.mxu0 0.0
        %5423 = vmatpush1.msra.mxu0 0.0
        %5424 = vmatprep.subr.mxu0 0.0
        %5425 = vmatpush1.msra.mxu0 0.0
        %5426 = vmatprep.subr.mxu0 0.0
        %5427 = vmatpush1.msra.mxu0 0.0
        %5428 = vmatprep.subr.mxu0 0.0
        %5429 = vmatpush1.msra.mxu0 0.0
        %5430 = vmatprep.subr.mxu0 0.0
        %5431 = vmatpush1.msra.mxu0 0.0
        %5432 = vmatprep.subr.mxu0 0.0
        %5433 = vmatpush1.msra.mxu0 0.0
        %5434 = vmatprep.subr.mxu0 0.0
        %5435 = vmatpush1.msra.mxu0 0.0
        %5436 = vmatprep.subr.mxu0 0.0
        %5437 = vmatpush1.msra.mxu0 0.0
        %5438 = vmatprep.subr.mxu0 0.0
        %5439 = vmatpush1.msra.mxu0 0.0
        %5440 = vmatprep.subr.mxu0 0.0
        %5441 = vmatpush1.msra.mxu0 0.0
        %5442 = vmatprep.subr.mxu0 0.0
        %5443 = vmatpush1.msra.mxu0 0.0
        %5444 = vmatprep.subr.mxu0 0.0
        %5445 = vmatpush1.msra.mxu0 0.0
        %5446 = vmatprep.subr.mxu0 0.0
        %5447 = vmatpush1.msra.mxu0 0.0
        %5448 = vmatprep.subr.mxu0 0.0
        %5449 = vmatpush1.msra.mxu0 0.0
        %5450 = vmatprep.subr.mxu0 0.0
        %5451 = vmatpush1.msra.mxu0 0.0
        %5452 = vmatprep.subr.mxu0 0.0
        %5453 = vmatpush1.msra.mxu0 0.0
        %5454 = vmatprep.subr.mxu0 0.0
        %5455 = vmatpush1.msra.mxu0 0.0
        %5456 = vmatprep.mubr.f32.mxu0 0.0
        %v5457 = vand.u32 %v5291, 4294901760
        %5458 = vmatmul.mubr.f32.gmra.mrb[0].mxu0 %v5457
        %v5459 = vpop.f32.mrb[0].mxu0
        %v5460 = vadd.f32 %v5369, %v5459
        %v5461 = vpop.f32.mrb[0].mxu0
        %5462 = vdwg.mxu0
        %5463 = vmatprep.subr.mxu0 0.0
        %v5464 = vand.u32 %v435, 4294901760
        %v5465 = vsub.f32 %v435, %v5464
        %5466 = vmatpush1.msra.mxu0 %v5465
        %5467 = vmatprep.subr.mxu0 0.0
        %v5468 = vand.u32 %v436, 4294901760
        %v5469 = vsub.f32 %v436, %v5468
        %5470 = vmatpush1.msra.mxu0 %v5469
        %5471 = vmatprep.subr.mxu0 0.0
        %v5472 = vand.u32 %v437, 4294901760
        %v5473 = vsub.f32 %v437, %v5472
        %5474 = vmatpush1.msra.mxu0 %v5473
        %5475 = vmatprep.subr.mxu0 0.0
        %v5476 = vand.u32 %v438, 4294901760
        %v5477 = vsub.f32 %v438, %v5476
        %5478 = vmatpush1.msra.mxu0 %v5477
        %5479 = vmatprep.subr.mxu0 0.0
        %5480 = vmatpush1.msra.mxu0 0.0
        %5481 = vmatprep.subr.mxu0 0.0
        %5482 = vmatpush1.msra.mxu0 0.0
        %5483 = vmatprep.subr.mxu0 0.0
        %5484 = vmatpush1.msra.mxu0 0.0
        %5485 = vmatprep.subr.mxu0 0.0
        %5486 = vmatpush1.msra.mxu0 0.0
        %5487 = vmatprep.subr.mxu0 0.0
        %5488 = vmatpush1.msra.mxu0 0.0
        %5489 = vmatprep.subr.mxu0 0.0
        %5490 = vmatpush1.msra.mxu0 0.0
        %5491 = vmatprep.subr.mxu0 0.0
        %5492 = vmatpush1.msra.mxu0 0.0
        %5493 = vmatprep.subr.mxu0 0.0
        %5494 = vmatpush1.msra.mxu0 0.0
        %5495 = vmatprep.subr.mxu0 0.0
        %5496 = vmatpush1.msra.mxu0 0.0
        %5497 = vmatprep.subr.mxu0 0.0
        %5498 = vmatpush1.msra.mxu0 0.0
        %5499 = vmatprep.subr.mxu0 0.0
        %5500 = vmatpush1.msra.mxu0 0.0
        %5501 = vmatprep.subr.mxu0 0.0
        %5502 = vmatpush1.msra.mxu0 0.0
        %5503 = vmatprep.subr.mxu0 0.0
        %5504 = vmatpush1.msra.mxu0 0.0
        %5505 = vmatprep.subr.mxu0 0.0
        %5506 = vmatpush1.msra.mxu0 0.0
        %5507 = vmatprep.subr.mxu0 0.0
        %5508 = vmatpush1.msra.mxu0 0.0
        %5509 = vmatprep.subr.mxu0 0.0
        %5510 = vmatpush1.msra.mxu0 0.0
        %5511 = vmatprep.subr.mxu0 0.0
        %5512 = vmatpush1.msra.mxu0 0.0
        %5513 = vmatprep.subr.mxu0 0.0
        %5514 = vmatpush1.msra.mxu0 0.0
        %5515 = vmatprep.subr.mxu0 0.0
        %5516 = vmatpush1.msra.mxu0 0.0
        %5517 = vmatprep.subr.mxu0 0.0
        %5518 = vmatpush1.msra.mxu0 0.0
        %5519 = vmatprep.subr.mxu0 0.0
        %5520 = vmatpush1.msra.mxu0 0.0
        %5521 = vmatprep.subr.mxu0 0.0
        %5522 = vmatpush1.msra.mxu0 0.0
        %5523 = vmatprep.subr.mxu0 0.0
        %5524 = vmatpush1.msra.mxu0 0.0
        %5525 = vmatprep.subr.mxu0 0.0
        %5526 = vmatpush1.msra.mxu0 0.0
        %5527 = vmatprep.subr.mxu0 0.0
        %5528 = vmatpush1.msra.mxu0 0.0
        %5529 = vmatprep.subr.mxu0 0.0
        %5530 = vmatpush1.msra.mxu0 0.0
        %5531 = vmatprep.subr.mxu0 0.0
        %5532 = vmatpush1.msra.mxu0 0.0
        %5533 = vmatprep.subr.mxu0 0.0
        %5534 = vmatpush1.msra.mxu0 0.0
        %5535 = vmatprep.mubr.f32.mxu0 0.0
        %v5536 = vand.u32 %v5291, 4294901760
        %v5537 = vsub.f32 %v5291, %v5536
        %5538 = vmatmul.mubr.f32.gmra.mrb[0].mxu0 %v5537
        %v5539 = vpop.f32.mrb[0].mxu0
        %v5540 = vadd.f32 %v5460, %v5539
        %v5541 = vpop.f32.mrb[0].mxu0
        %5542 = vdwg.mxu0
        %5543 = vmatprep.subr.mxu0 0.0
        %v5544 = vand.u32 %v435, 4294901760
        %5545 = vmatpush1.msra.mxu0 %v5544
        %5546 = vmatprep.subr.mxu0 0.0
        %v5547 = vand.u32 %v436, 4294901760
        %5548 = vmatpush1.msra.mxu0 %v5547
        %5549 = vmatprep.subr.mxu0 0.0
        %v5550 = vand.u32 %v437, 4294901760
        %5551 = vmatpush1.msra.mxu0 %v5550
        %5552 = vmatprep.subr.mxu0 0.0
        %v5553 = vand.u32 %v438, 4294901760
        %5554 = vmatpush1.msra.mxu0 %v5553
        %5555 = vmatprep.subr.mxu0 0.0
        %5556 = vmatpush1.msra.mxu0 0.0
        %5557 = vmatprep.subr.mxu0 0.0
        %5558 = vmatpush1.msra.mxu0 0.0
        %5559 = vmatprep.subr.mxu0 0.0
        %5560 = vmatpush1.msra.mxu0 0.0
        %5561 = vmatprep.subr.mxu0 0.0
        %5562 = vmatpush1.msra.mxu0 0.0
        %5563 = vmatprep.subr.mxu0 0.0
        %5564 = vmatpush1.msra.mxu0 0.0
        %5565 = vmatprep.subr.mxu0 0.0
        %5566 = vmatpush1.msra.mxu0 0.0
        %5567 = vmatprep.subr.mxu0 0.0
        %5568 = vmatpush1.msra.mxu0 0.0
        %5569 = vmatprep.subr.mxu0 0.0
        %5570 = vmatpush1.msra.mxu0 0.0
        %5571 = vmatprep.subr.mxu0 0.0
        %5572 = vmatpush1.msra.mxu0 0.0
        %5573 = vmatprep.subr.mxu0 0.0
        %5574 = vmatpush1.msra.mxu0 0.0
        %5575 = vmatprep.subr.mxu0 0.0
        %5576 = vmatpush1.msra.mxu0 0.0
        %5577 = vmatprep.subr.mxu0 0.0
        %5578 = vmatpush1.msra.mxu0 0.0
        %5579 = vmatprep.subr.mxu0 0.0
        %5580 = vmatpush1.msra.mxu0 0.0
        %5581 = vmatprep.subr.mxu0 0.0
        %5582 = vmatpush1.msra.mxu0 0.0
        %5583 = vmatprep.subr.mxu0 0.0
        %5584 = vmatpush1.msra.mxu0 0.0
        %5585 = vmatprep.subr.mxu0 0.0
        %5586 = vmatpush1.msra.mxu0 0.0
        %5587 = vmatprep.subr.mxu0 0.0
        %5588 = vmatpush1.msra.mxu0 0.0
        %5589 = vmatprep.subr.mxu0 0.0
        %5590 = vmatpush1.msra.mxu0 0.0
        %5591 = vmatprep.subr.mxu0 0.0
        %5592 = vmatpush1.msra.mxu0 0.0
        %5593 = vmatprep.subr.mxu0 0.0
        %5594 = vmatpush1.msra.mxu0 0.0
        %5595 = vmatprep.subr.mxu0 0.0
        %5596 = vmatpush1.msra.mxu0 0.0
        %5597 = vmatprep.subr.mxu0 0.0
        %5598 = vmatpush1.msra.mxu0 0.0
        %5599 = vmatprep.subr.mxu0 0.0
        %5600 = vmatpush1.msra.mxu0 0.0
        %5601 = vmatprep.subr.mxu0 0.0
        %5602 = vmatpush1.msra.mxu0 0.0
        %5603 = vmatprep.subr.mxu0 0.0
        %5604 = vmatpush1.msra.mxu0 0.0
        %5605 = vmatprep.subr.mxu0 0.0
        %5606 = vmatpush1.msra.mxu0 0.0
        %5607 = vmatprep.subr.mxu0 0.0
        %5608 = vmatpush1.msra.mxu0 0.0
        %5609 = vmatprep.subr.mxu0 0.0
        %5610 = vmatpush1.msra.mxu0 0.0
        %5611 = vmatprep.mubr.f32.mxu0 0.0
        %v5612 = vand.u32 %v5291, 4294901760
        %v5613 = vsub.f32 %v5291, %v5612
        %v5614 = vand.u32 %v5613, 4294901760
        %5615 = vmatmul.mubr.f32.gmra.mrb[0].mxu0 %v5614
        %v5616 = vpop.f32.mrb[0].mxu0
        %v5617 = vadd.f32 %v5540, %v5616
        %v5618 = vpop.f32.mrb[0].mxu0
        %5619 = vdwg.mxu0
        %5620 = vmatprep.subr.mxu0 0.0
        %v5621 = vand.u32 %v435, 4294901760
        %v5622 = vsub.f32 %v435, %v5621
        %v5623 = vand.u32 %v5622, 4294901760
        %5624 = vmatpush1.msra.mxu0 %v5623
        %5625 = vmatprep.subr.mxu0 0.0
        %v5626 = vand.u32 %v436, 4294901760
        %v5627 = vsub.f32 %v436, %v5626
        %v5628 = vand.u32 %v5627, 4294901760
        %5629 = vmatpush1.msra.mxu0 %v5628
        %5630 = vmatprep.subr.mxu0 0.0
        %v5631 = vand.u32 %v437, 4294901760
        %v5632 = vsub.f32 %v437, %v5631
        %v5633 = vand.u32 %v5632, 4294901760
        %5634 = vmatpush1.msra.mxu0 %v5633
        %5635 = vmatprep.subr.mxu0 0.0
        %v5636 = vand.u32 %v438, 4294901760
        %v5637 = vsub.f32 %v438, %v5636
        %v5638 = vand.u32 %v5637, 4294901760
        %5639 = vmatpush1.msra.mxu0 %v5638
        %5640 = vmatprep.subr.mxu0 0.0
        %5641 = vmatpush1.msra.mxu0 0.0
        %5642 = vmatprep.subr.mxu0 0.0
        %5643 = vmatpush1.msra.mxu0 0.0
        %5644 = vmatprep.subr.mxu0 0.0
        %5645 = vmatpush1.msra.mxu0 0.0
        %5646 = vmatprep.subr.mxu0 0.0
        %5647 = vmatpush1.msra.mxu0 0.0
        %5648 = vmatprep.subr.mxu0 0.0
        %5649 = vmatpush1.msra.mxu0 0.0
        %5650 = vmatprep.subr.mxu0 0.0
        %5651 = vmatpush1.msra.mxu0 0.0
        %5652 = vmatprep.subr.mxu0 0.0
        %5653 = vmatpush1.msra.mxu0 0.0
        %5654 = vmatprep.subr.mxu0 0.0
        %5655 = vmatpush1.msra.mxu0 0.0
        %5656 = vmatprep.subr.mxu0 0.0
        %5657 = vmatpush1.msra.mxu0 0.0
        %5658 = vmatprep.subr.mxu0 0.0
        %5659 = vmatpush1.msra.mxu0 0.0
        %5660 = vmatprep.subr.mxu0 0.0
        %5661 = vmatpush1.msra.mxu0 0.0
        %5662 = vmatprep.subr.mxu0 0.0
        %5663 = vmatpush1.msra.mxu0 0.0
        %5664 = vmatprep.subr.mxu0 0.0
        %5665 = vmatpush1.msra.mxu0 0.0
        %5666 = vmatprep.subr.mxu0 0.0
        %5667 = vmatpush1.msra.mxu0 0.0
        %5668 = vmatprep.subr.mxu0 0.0
        %5669 = vmatpush1.msra.mxu0 0.0
        %5670 = vmatprep.subr.mxu0 0.0
        %5671 = vmatpush1.msra.mxu0 0.0
        %5672 = vmatprep.subr.mxu0 0.0
        %5673 = vmatpush1.msra.mxu0 0.0
        %5674 = vmatprep.subr.mxu0 0.0
        %5675 = vmatpush1.msra.mxu0 0.0
        %5676 = vmatprep.subr.mxu0 0.0
        %5677 = vmatpush1.msra.mxu0 0.0
        %5678 = vmatprep.subr.mxu0 0.0
        %5679 = vmatpush1.msra.mxu0 0.0
        %5680 = vmatprep.subr.mxu0 0.0
        %5681 = vmatpush1.msra.mxu0 0.0
        %5682 = vmatprep.subr.mxu0 0.0
        %5683 = vmatpush1.msra.mxu0 0.0
        %5684 = vmatprep.subr.mxu0 0.0
        %5685 = vmatpush1.msra.mxu0 0.0
        %5686 = vmatprep.subr.mxu0 0.0
        %5687 = vmatpush1.msra.mxu0 0.0
        %5688 = vmatprep.subr.mxu0 0.0
        %5689 = vmatpush1.msra.mxu0 0.0
        %5690 = vmatprep.subr.mxu0 0.0
        %5691 = vmatpush1.msra.mxu0 0.0
        %5692 = vmatprep.subr.mxu0 0.0
        %5693 = vmatpush1.msra.mxu0 0.0
        %5694 = vmatprep.subr.mxu0 0.0
        %5695 = vmatpush1.msra.mxu0 0.0
        %5696 = vmatprep.mubr.f32.mxu0 0.0
        %v5697 = vand.u32 %v5291, 4294901760
        %5698 = vmatmul.mubr.f32.gmra.mrb[0].mxu0 %v5697
        %v5699 = vpop.f32.mrb[0].mxu0
        %v5700 = vadd.f32 %v5617, %v5699
        %v5701 = vpop.f32.mrb[0].mxu0
        %5702 = vdwg.mxu0
        %5703 = vmatprep.subr.mxu0 0.0
        %v5704 = vand.u32 %v435, 4294901760
        %5705 = vmatpush1.msra.mxu0 %v5704
        %5706 = vmatprep.subr.mxu0 0.0
        %v5707 = vand.u32 %v436, 4294901760
        %5708 = vmatpush1.msra.mxu0 %v5707
        %5709 = vmatprep.subr.mxu0 0.0
        %v5710 = vand.u32 %v437, 4294901760
        %5711 = vmatpush1.msra.mxu0 %v5710
        %5712 = vmatprep.subr.mxu0 0.0
        %v5713 = vand.u32 %v438, 4294901760
        %5714 = vmatpush1.msra.mxu0 %v5713
        %5715 = vmatprep.subr.mxu0 0.0
        %5716 = vmatpush1.msra.mxu0 0.0
        %5717 = vmatprep.subr.mxu0 0.0
        %5718 = vmatpush1.msra.mxu0 0.0
        %5719 = vmatprep.subr.mxu0 0.0
        %5720 = vmatpush1.msra.mxu0 0.0
        %5721 = vmatprep.subr.mxu0 0.0
        %5722 = vmatpush1.msra.mxu0 0.0
        %5723 = vmatprep.subr.mxu0 0.0
        %5724 = vmatpush1.msra.mxu0 0.0
        %5725 = vmatprep.subr.mxu0 0.0
        %5726 = vmatpush1.msra.mxu0 0.0
        %5727 = vmatprep.subr.mxu0 0.0
        %5728 = vmatpush1.msra.mxu0 0.0
        %5729 = vmatprep.subr.mxu0 0.0
        %5730 = vmatpush1.msra.mxu0 0.0
        %5731 = vmatprep.subr.mxu0 0.0
        %5732 = vmatpush1.msra.mxu0 0.0
        %5733 = vmatprep.subr.mxu0 0.0
        %5734 = vmatpush1.msra.mxu0 0.0
        %5735 = vmatprep.subr.mxu0 0.0
        %5736 = vmatpush1.msra.mxu0 0.0
        %5737 = vmatprep.subr.mxu0 0.0
        %5738 = vmatpush1.msra.mxu0 0.0
        %5739 = vmatprep.subr.mxu0 0.0
        %5740 = vmatpush1.msra.mxu0 0.0
        %5741 = vmatprep.subr.mxu0 0.0
        %5742 = vmatpush1.msra.mxu0 0.0
        %5743 = vmatprep.subr.mxu0 0.0
        %5744 = vmatpush1.msra.mxu0 0.0
        %5745 = vmatprep.subr.mxu0 0.0
        %5746 = vmatpush1.msra.mxu0 0.0
        %5747 = vmatprep.subr.mxu0 0.0
        %5748 = vmatpush1.msra.mxu0 0.0
        %5749 = vmatprep.subr.mxu0 0.0
        %5750 = vmatpush1.msra.mxu0 0.0
        %5751 = vmatprep.subr.mxu0 0.0
        %5752 = vmatpush1.msra.mxu0 0.0
        %5753 = vmatprep.subr.mxu0 0.0
        %5754 = vmatpush1.msra.mxu0 0.0
        %5755 = vmatprep.subr.mxu0 0.0
        %5756 = vmatpush1.msra.mxu0 0.0
        %5757 = vmatprep.subr.mxu0 0.0
        %5758 = vmatpush1.msra.mxu0 0.0
        %5759 = vmatprep.subr.mxu0 0.0
        %5760 = vmatpush1.msra.mxu0 0.0
        %5761 = vmatprep.subr.mxu0 0.0
        %5762 = vmatpush1.msra.mxu0 0.0
        %5763 = vmatprep.subr.mxu0 0.0
        %5764 = vmatpush1.msra.mxu0 0.0
        %5765 = vmatprep.subr.mxu0 0.0
        %5766 = vmatpush1.msra.mxu0 0.0
        %5767 = vmatprep.subr.mxu0 0.0
        %5768 = vmatpush1.msra.mxu0 0.0
        %5769 = vmatprep.subr.mxu0 0.0
        %5770 = vmatpush1.msra.mxu0 0.0
        %5771 = vmatprep.mubr.f32.mxu0 0.0
        %v5772 = vand.u32 %v5291, 4294901760
        %5773 = vmatmul.mubr.f32.gmra.mrb[0].mxu0 %v5772
        %v5774 = vpop.f32.mrb[0].mxu0
        %v5775 = vadd.f32 %v5700, %v5774
        %v5776 = vpop.f32.mrb[0].mxu0
        %5777 = vdwg.mxu0
        %v5778 = vadd.f32 %v5286, %v5775
        %v5780 = vlaneseq
        %v5781 = vshrl.u32 %v5780, 7
        %v5782 = vsub.s32 0, %v5781
        %v5783 = vrot.slane %v439, %v5782
        %v5785 = vadd.f32 %v5778, %v5783
        %v5786 = vtanh.pop %v5785
        %v5787 = vsub.f32 1.0, %v2849
        %v5788 = vmul.f32 %v5787, %v400
        %v5789 = vmul.f32 %v2849, %v5786
        %v5790 = vadd.f32 %v5788, %v5789
        %5791 = vmatprep.subr.mxu0 0.0
        %v5792 = vand.u32 %v5790, 4294901760
        %5793 = vmatpush1.msra.mxu0 %v5792
        %5794 = vmatprep.subr.mxu0 0.0
        %5795 = vmatpush1.msra.mxu0 0.0
        %5796 = vmatprep.subr.mxu0 0.0
        %5797 = vmatpush1.msra.mxu0 0.0
        %5798 = vmatprep.subr.mxu0 0.0
        %5799 = vmatpush1.msra.mxu0 0.0
        %5800 = vmatprep.subr.mxu0 0.0
        %5801 = vmatpush1.msra.mxu0 0.0
        %5802 = vmatprep.subr.mxu0 0.0
        %5803 = vmatpush1.msra.mxu0 0.0
        %5804 = vmatprep.subr.mxu0 0.0
        %5805 = vmatpush1.msra.mxu0 0.0
        %5806 = vmatprep.subr.mxu0 0.0
        %5807 = vmatpush1.msra.mxu0 0.0
        %5808 = vmatprep.subr.mxu0 0.0
        %5809 = vmatpush1.msra.mxu0 0.0
        %5810 = vmatprep.subr.mxu0 0.0
        %5811 = vmatpush1.msra.mxu0 0.0
        %5812 = vmatprep.subr.mxu0 0.0
        %5813 = vmatpush1.msra.mxu0 0.0
        %5814 = vmatprep.subr.mxu0 0.0
        %5815 = vmatpush1.msra.mxu0 0.0
        %5816 = vmatprep.subr.mxu0 0.0
        %5817 = vmatpush1.msra.mxu0 0.0
        %5818 = vmatprep.subr.mxu0 0.0
        %5819 = vmatpush1.msra.mxu0 0.0
        %5820 = vmatprep.subr.mxu0 0.0
        %5821 = vmatpush1.msra.mxu0 0.0
        %5822 = vmatprep.subr.mxu0 0.0
        %5823 = vmatpush1.msra.mxu0 0.0
        %5824 = vmatprep.subr.mxu0 0.0
        %5825 = vmatpush1.msra.mxu0 0.0
        %5826 = vmatprep.subr.mxu0 0.0
        %5827 = vmatpush1.msra.mxu0 0.0
        %5828 = vmatprep.subr.mxu0 0.0
        %5829 = vmatpush1.msra.mxu0 0.0
        %5830 = vmatprep.subr.mxu0 0.0
        %5831 = vmatpush1.msra.mxu0 0.0
        %5832 = vmatprep.subr.mxu0 0.0
        %5833 = vmatpush1.msra.mxu0 0.0
        %5834 = vmatprep.subr.mxu0 0.0
        %5835 = vmatpush1.msra.mxu0 0.0
        %5836 = vmatprep.subr.mxu0 0.0
        %5837 = vmatpush1.msra.mxu0 0.0
        %5838 = vmatprep.subr.mxu0 0.0
        %5839 = vmatpush1.msra.mxu0 0.0
        %5840 = vmatprep.subr.mxu0 0.0
        %5841 = vmatpush1.msra.mxu0 0.0
        %5842 = vmatprep.subr.mxu0 0.0
        %5843 = vmatpush1.msra.mxu0 0.0
        %5844 = vmatprep.subr.mxu0 0.0
        %5845 = vmatpush1.msra.mxu0 0.0
        %5846 = vmatprep.subr.mxu0 0.0
        %5847 = vmatpush1.msra.mxu0 0.0
        %5848 = vmatprep.subr.mxu0 0.0
        %5849 = vmatpush1.msra.mxu0 0.0
        %5850 = vmatprep.subr.mxu0 0.0
        %5851 = vmatpush1.msra.mxu0 0.0
        %5852 = vmatprep.subr.mxu0 0.0
        %5853 = vmatpush1.msra.mxu0 0.0
        %5854 = vmatprep.subr.mxu0 0.0
        %5855 = vmatpush1.msra.mxu0 0.0
        %5856 = vmatprep.mubr.f32.mxu0 0.0
        %v5857 = vand.u32 %v442, 4294901760
        %v5858 = vsub.f32 %v442, %v5857
        %v5859 = vand.u32 %v5858, 4294901760
        %v5860 = vsub.f32 %v5858, %v5859
        %v5861 = vand.u32 %v5860, 4294901760
        %5862 = vmatmul.mubr.f32.gmra.mrb[0].mxu0 %v5861
        %v5863 = vpop.f32.mrb[0].mxu0
        %v5864 = vadd.f32 0.0, %v5863
        %v5865 = vpop.f32.mrb[0].mxu0
        %5866 = vdwg.mxu0
        %5867 = vmatprep.subr.mxu0 0.0
        %v5868 = vand.u32 %v5790, 4294901760
        %v5869 = vsub.f32 %v5790, %v5868
        %v5870 = vand.u32 %v5869, 4294901760
        %v5871 = vsub.f32 %v5869, %v5870
        %v5872 = vand.u32 %v5871, 4294901760
        %5873 = vmatpush1.msra.mxu0 %v5872
        %5874 = vmatprep.subr.mxu0 0.0
        %5875 = vmatpush1.msra.mxu0 0.0
        %5876 = vmatprep.subr.mxu0 0.0
        %5877 = vmatpush1.msra.mxu0 0.0
        %5878 = vmatprep.subr.mxu0 0.0
        %5879 = vmatpush1.msra.mxu0 0.0
        %5880 = vmatprep.subr.mxu0 0.0
        %5881 = vmatpush1.msra.mxu0 0.0
        %5882 = vmatprep.subr.mxu0 0.0
        %5883 = vmatpush1.msra.mxu0 0.0
        %5884 = vmatprep.subr.mxu0 0.0
        %5885 = vmatpush1.msra.mxu0 0.0
        %5886 = vmatprep.subr.mxu0 0.0
        %5887 = vmatpush1.msra.mxu0 0.0
        %5888 = vmatprep.subr.mxu0 0.0
        %5889 = vmatpush1.msra.mxu0 0.0
        %5890 = vmatprep.subr.mxu0 0.0
        %5891 = vmatpush1.msra.mxu0 0.0
        %5892 = vmatprep.subr.mxu0 0.0
        %5893 = vmatpush1.msra.mxu0 0.0
        %5894 = vmatprep.subr.mxu0 0.0
        %5895 = vmatpush1.msra.mxu0 0.0
        %5896 = vmatprep.subr.mxu0 0.0
        %5897 = vmatpush1.msra.mxu0 0.0
        %5898 = vmatprep.subr.mxu0 0.0
        %5899 = vmatpush1.msra.mxu0 0.0
        %5900 = vmatprep.subr.mxu0 0.0
        %5901 = vmatpush1.msra.mxu0 0.0
        %5902 = vmatprep.subr.mxu0 0.0
        %5903 = vmatpush1.msra.mxu0 0.0
        %5904 = vmatprep.subr.mxu0 0.0
        %5905 = vmatpush1.msra.mxu0 0.0
        %5906 = vmatprep.subr.mxu0 0.0
        %5907 = vmatpush1.msra.mxu0 0.0
        %5908 = vmatprep.subr.mxu0 0.0
        %5909 = vmatpush1.msra.mxu0 0.0
        %5910 = vmatprep.subr.mxu0 0.0
        %5911 = vmatpush1.msra.mxu0 0.0
        %5912 = vmatprep.subr.mxu0 0.0
        %5913 = vmatpush1.msra.mxu0 0.0
        %5914 = vmatprep.subr.mxu0 0.0
        %5915 = vmatpush1.msra.mxu0 0.0
        %5916 = vmatprep.subr.mxu0 0.0
        %5917 = vmatpush1.msra.mxu0 0.0
        %5918 = vmatprep.subr.mxu0 0.0
        %5919 = vmatpush1.msra.mxu0 0.0
        %5920 = vmatprep.subr.mxu0 0.0
        %5921 = vmatpush1.msra.mxu0 0.0
        %5922 = vmatprep.subr.mxu0 0.0
        %5923 = vmatpush1.msra.mxu0 0.0
        %5924 = vmatprep.subr.mxu0 0.0
        %5925 = vmatpush1.msra.mxu0 0.0
        %5926 = vmatprep.subr.mxu0 0.0
        %5927 = vmatpush1.msra.mxu0 0.0
        %5928 = vmatprep.subr.mxu0 0.0
        %5929 = vmatpush1.msra.mxu0 0.0
        %5930 = vmatprep.subr.mxu0 0.0
        %5931 = vmatpush1.msra.mxu0 0.0
        %5932 = vmatprep.subr.mxu0 0.0
        %5933 = vmatpush1.msra.mxu0 0.0
        %5934 = vmatprep.subr.mxu0 0.0
        %5935 = vmatpush1.msra.mxu0 0.0
        %5936 = vmatprep.mubr.f32.mxu0 0.0
        %v5937 = vand.u32 %v442, 4294901760
        %5938 = vmatmul.mubr.f32.gmra.mrb[0].mxu0 %v5937
        %v5939 = vpop.f32.mrb[0].mxu0
        %v5940 = vadd.f32 %v5864, %v5939
        %v5941 = vpop.f32.mrb[0].mxu0
        %5942 = vdwg.mxu0
        %5943 = vmatprep.subr.mxu0 0.0
        %v5944 = vand.u32 %v5790, 4294901760
        %v5945 = vsub.f32 %v5790, %v5944
        %5946 = vmatpush1.msra.mxu0 %v5945
        %5947 = vmatprep.subr.mxu0 0.0
        %5948 = vmatpush1.msra.mxu0 0.0
        %5949 = vmatprep.subr.mxu0 0.0
        %5950 = vmatpush1.msra.mxu0 0.0
        %5951 = vmatprep.subr.mxu0 0.0
        %5952 = vmatpush1.msra.mxu0 0.0
        %5953 = vmatprep.subr.mxu0 0.0
        %5954 = vmatpush1.msra.mxu0 0.0
        %5955 = vmatprep.subr.mxu0 0.0
        %5956 = vmatpush1.msra.mxu0 0.0
        %5957 = vmatprep.subr.mxu0 0.0
        %5958 = vmatpush1.msra.mxu0 0.0
        %5959 = vmatprep.subr.mxu0 0.0
        %5960 = vmatpush1.msra.mxu0 0.0
        %5961 = vmatprep.subr.mxu0 0.0
        %5962 = vmatpush1.msra.mxu0 0.0
        %5963 = vmatprep.subr.mxu0 0.0
        %5964 = vmatpush1.msra.mxu0 0.0
        %5965 = vmatprep.subr.mxu0 0.0
        %5966 = vmatpush1.msra.mxu0 0.0
        %5967 = vmatprep.subr.mxu0 0.0
        %5968 = vmatpush1.msra.mxu0 0.0
        %5969 = vmatprep.subr.mxu0 0.0
        %5970 = vmatpush1.msra.mxu0 0.0
        %5971 = vmatprep.subr.mxu0 0.0
        %5972 = vmatpush1.msra.mxu0 0.0
        %5973 = vmatprep.subr.mxu0 0.0
        %5974 = vmatpush1.msra.mxu0 0.0
        %5975 = vmatprep.subr.mxu0 0.0
        %5976 = vmatpush1.msra.mxu0 0.0
        %5977 = vmatprep.subr.mxu0 0.0
        %5978 = vmatpush1.msra.mxu0 0.0
        %5979 = vmatprep.subr.mxu0 0.0
        %5980 = vmatpush1.msra.mxu0 0.0
        %5981 = vmatprep.subr.mxu0 0.0
        %5982 = vmatpush1.msra.mxu0 0.0
        %5983 = vmatprep.subr.mxu0 0.0
        %5984 = vmatpush1.msra.mxu0 0.0
        %5985 = vmatprep.subr.mxu0 0.0
        %5986 = vmatpush1.msra.mxu0 0.0
        %5987 = vmatprep.subr.mxu0 0.0
        %5988 = vmatpush1.msra.mxu0 0.0
        %5989 = vmatprep.subr.mxu0 0.0
        %5990 = vmatpush1.msra.mxu0 0.0
        %5991 = vmatprep.subr.mxu0 0.0
        %5992 = vmatpush1.msra.mxu0 0.0
        %5993 = vmatprep.subr.mxu0 0.0
        %5994 = vmatpush1.msra.mxu0 0.0
        %5995 = vmatprep.subr.mxu0 0.0
        %5996 = vmatpush1.msra.mxu0 0.0
        %5997 = vmatprep.subr.mxu0 0.0
        %5998 = vmatpush1.msra.mxu0 0.0
        %5999 = vmatprep.subr.mxu0 0.0
        %6000 = vmatpush1.msra.mxu0 0.0
        %6001 = vmatprep.subr.mxu0 0.0
        %6002 = vmatpush1.msra.mxu0 0.0
        %6003 = vmatprep.subr.mxu0 0.0
        %6004 = vmatpush1.msra.mxu0 0.0
        %6005 = vmatprep.subr.mxu0 0.0
        %6006 = vmatpush1.msra.mxu0 0.0
        %6007 = vmatprep.subr.mxu0 0.0
        %6008 = vmatpush1.msra.mxu0 0.0
        %6009 = vmatprep.mubr.f32.mxu0 0.0
        %v6010 = vand.u32 %v442, 4294901760
        %v6011 = vsub.f32 %v442, %v6010
        %6012 = vmatmul.mubr.f32.gmra.mrb[0].mxu0 %v6011
        %v6013 = vpop.f32.mrb[0].mxu0
        %v6014 = vadd.f32 %v5940, %v6013
        %v6015 = vpop.f32.mrb[0].mxu0
        %6016 = vdwg.mxu0
        %6017 = vmatprep.subr.mxu0 0.0
        %v6018 = vand.u32 %v5790, 4294901760
        %6019 = vmatpush1.msra.mxu0 %v6018
        %6020 = vmatprep.subr.mxu0 0.0
        %6021 = vmatpush1.msra.mxu0 0.0
        %6022 = vmatprep.subr.mxu0 0.0
        %6023 = vmatpush1.msra.mxu0 0.0
        %6024 = vmatprep.subr.mxu0 0.0
        %6025 = vmatpush1.msra.mxu0 0.0
        %6026 = vmatprep.subr.mxu0 0.0
        %6027 = vmatpush1.msra.mxu0 0.0
        %6028 = vmatprep.subr.mxu0 0.0
        %6029 = vmatpush1.msra.mxu0 0.0
        %6030 = vmatprep.subr.mxu0 0.0
        %6031 = vmatpush1.msra.mxu0 0.0
        %6032 = vmatprep.subr.mxu0 0.0
        %6033 = vmatpush1.msra.mxu0 0.0
        %6034 = vmatprep.subr.mxu0 0.0
        %6035 = vmatpush1.msra.mxu0 0.0
        %6036 = vmatprep.subr.mxu0 0.0
        %6037 = vmatpush1.msra.mxu0 0.0
        %6038 = vmatprep.subr.mxu0 0.0
        %6039 = vmatpush1.msra.mxu0 0.0
        %6040 = vmatprep.subr.mxu0 0.0
        %6041 = vmatpush1.msra.mxu0 0.0
        %6042 = vmatprep.subr.mxu0 0.0
        %6043 = vmatpush1.msra.mxu0 0.0
        %6044 = vmatprep.subr.mxu0 0.0
        %6045 = vmatpush1.msra.mxu0 0.0
        %6046 = vmatprep.subr.mxu0 0.0
        %6047 = vmatpush1.msra.mxu0 0.0
        %6048 = vmatprep.subr.mxu0 0.0
        %6049 = vmatpush1.msra.mxu0 0.0
        %6050 = vmatprep.subr.mxu0 0.0
        %6051 = vmatpush1.msra.mxu0 0.0
        %6052 = vmatprep.subr.mxu0 0.0
        %6053 = vmatpush1.msra.mxu0 0.0
        %6054 = vmatprep.subr.mxu0 0.0
        %6055 = vmatpush1.msra.mxu0 0.0
        %6056 = vmatprep.subr.mxu0 0.0
        %6057 = vmatpush1.msra.mxu0 0.0
        %6058 = vmatprep.subr.mxu0 0.0
        %6059 = vmatpush1.msra.mxu0 0.0
        %6060 = vmatprep.subr.mxu0 0.0
        %6061 = vmatpush1.msra.mxu0 0.0
        %6062 = vmatprep.subr.mxu0 0.0
        %6063 = vmatpush1.msra.mxu0 0.0
        %6064 = vmatprep.subr.mxu0 0.0
        %6065 = vmatpush1.msra.mxu0 0.0
        %6066 = vmatprep.subr.mxu0 0.0
        %6067 = vmatpush1.msra.mxu0 0.0
        %6068 = vmatprep.subr.mxu0 0.0
        %6069 = vmatpush1.msra.mxu0 0.0
        %6070 = vmatprep.subr.mxu0 0.0
        %6071 = vmatpush1.msra.mxu0 0.0
        %6072 = vmatprep.subr.mxu0 0.0
        %6073 = vmatpush1.msra.mxu0 0.0
        %6074 = vmatprep.subr.mxu0 0.0
        %6075 = vmatpush1.msra.mxu0 0.0
        %6076 = vmatprep.subr.mxu0 0.0
        %6077 = vmatpush1.msra.mxu0 0.0
        %6078 = vmatprep.subr.mxu0 0.0
        %6079 = vmatpush1.msra.mxu0 0.0
        %6080 = vmatprep.subr.mxu0 0.0
        %6081 = vmatpush1.msra.mxu0 0.0
        %6082 = vmatprep.mubr.f32.mxu0 0.0
        %v6083 = vand.u32 %v442, 4294901760
        %v6084 = vsub.f32 %v442, %v6083
        %v6085 = vand.u32 %v6084, 4294901760
        %6086 = vmatmul.mubr.f32.gmra.mrb[0].mxu0 %v6085
        %v6087 = vpop.f32.mrb[0].mxu0
        %v6088 = vadd.f32 %v6014, %v6087
        %v6089 = vpop.f32.mrb[0].mxu0
        %6090 = vdwg.mxu0
        %6091 = vmatprep.subr.mxu0 0.0
        %v6092 = vand.u32 %v5790, 4294901760
        %v6093 = vsub.f32 %v5790, %v6092
        %v6094 = vand.u32 %v6093, 4294901760
        %6095 = vmatpush1.msra.mxu0 %v6094
        %6096 = vmatprep.subr.mxu0 0.0
        %6097 = vmatpush1.msra.mxu0 0.0
        %6098 = vmatprep.subr.mxu0 0.0
        %6099 = vmatpush1.msra.mxu0 0.0
        %6100 = vmatprep.subr.mxu0 0.0
        %6101 = vmatpush1.msra.mxu0 0.0
        %6102 = vmatprep.subr.mxu0 0.0
        %6103 = vmatpush1.msra.mxu0 0.0
        %6104 = vmatprep.subr.mxu0 0.0
        %6105 = vmatpush1.msra.mxu0 0.0
        %6106 = vmatprep.subr.mxu0 0.0
        %6107 = vmatpush1.msra.mxu0 0.0
        %6108 = vmatprep.subr.mxu0 0.0
        %6109 = vmatpush1.msra.mxu0 0.0
        %6110 = vmatprep.subr.mxu0 0.0
        %6111 = vmatpush1.msra.mxu0 0.0
        %6112 = vmatprep.subr.mxu0 0.0
        %6113 = vmatpush1.msra.mxu0 0.0
        %6114 = vmatprep.subr.mxu0 0.0
        %6115 = vmatpush1.msra.mxu0 0.0
        %6116 = vmatprep.subr.mxu0 0.0
        %6117 = vmatpush1.msra.mxu0 0.0
        %6118 = vmatprep.subr.mxu0 0.0
        %6119 = vmatpush1.msra.mxu0 0.0
        %6120 = vmatprep.subr.mxu0 0.0
        %6121 = vmatpush1.msra.mxu0 0.0
        %6122 = vmatprep.subr.mxu0 0.0
        %6123 = vmatpush1.msra.mxu0 0.0
        %6124 = vmatprep.subr.mxu0 0.0
        %6125 = vmatpush1.msra.mxu0 0.0
        %6126 = vmatprep.subr.mxu0 0.0
        %6127 = vmatpush1.msra.mxu0 0.0
        %6128 = vmatprep.subr.mxu0 0.0
        %6129 = vmatpush1.msra.mxu0 0.0
        %6130 = vmatprep.subr.mxu0 0.0
        %6131 = vmatpush1.msra.mxu0 0.0
        %6132 = vmatprep.subr.mxu0 0.0
        %6133 = vmatpush1.msra.mxu0 0.0
        %6134 = vmatprep.subr.mxu0 0.0
        %6135 = vmatpush1.msra.mxu0 0.0
        %6136 = vmatprep.subr.mxu0 0.0
        %6137 = vmatpush1.msra.mxu0 0.0
        %6138 = vmatprep.subr.mxu0 0.0
        %6139 = vmatpush1.msra.mxu0 0.0
        %6140 = vmatprep.subr.mxu0 0.0
        %6141 = vmatpush1.msra.mxu0 0.0
        %6142 = vmatprep.subr.mxu0 0.0
        %6143 = vmatpush1.msra.mxu0 0.0
        %6144 = vmatprep.subr.mxu0 0.0
        %6145 = vmatpush1.msra.mxu0 0.0
        %6146 = vmatprep.subr.mxu0 0.0
        %6147 = vmatpush1.msra.mxu0 0.0
        %6148 = vmatprep.subr.mxu0 0.0
        %6149 = vmatpush1.msra.mxu0 0.0
        %6150 = vmatprep.subr.mxu0 0.0
        %6151 = vmatpush1.msra.mxu0 0.0
        %6152 = vmatprep.subr.mxu0 0.0
        %6153 = vmatpush1.msra.mxu0 0.0
        %6154 = vmatprep.subr.mxu0 0.0
        %6155 = vmatpush1.msra.mxu0 0.0
        %6156 = vmatprep.subr.mxu0 0.0
        %6157 = vmatpush1.msra.mxu0 0.0
        %6158 = vmatprep.mubr.f32.mxu0 0.0
        %v6159 = vand.u32 %v442, 4294901760
        %6160 = vmatmul.mubr.f32.gmra.mrb[0].mxu0 %v6159
        %v6161 = vpop.f32.mrb[0].mxu0
        %v6162 = vadd.f32 %v6088, %v6161
        %v6163 = vpop.f32.mrb[0].mxu0
        %6164 = vdwg.mxu0
        %6165 = vmatprep.subr.mxu0 0.0
        %v6166 = vand.u32 %v5790, 4294901760
        %6167 = vmatpush1.msra.mxu0 %v6166
        %6168 = vmatprep.subr.mxu0 0.0
        %6169 = vmatpush1.msra.mxu0 0.0
        %6170 = vmatprep.subr.mxu0 0.0
        %6171 = vmatpush1.msra.mxu0 0.0
        %6172 = vmatprep.subr.mxu0 0.0
        %6173 = vmatpush1.msra.mxu0 0.0
        %6174 = vmatprep.subr.mxu0 0.0
        %6175 = vmatpush1.msra.mxu0 0.0
        %6176 = vmatprep.subr.mxu0 0.0
        %6177 = vmatpush1.msra.mxu0 0.0
        %6178 = vmatprep.subr.mxu0 0.0
        %6179 = vmatpush1.msra.mxu0 0.0
        %6180 = vmatprep.subr.mxu0 0.0
        %6181 = vmatpush1.msra.mxu0 0.0
        %6182 = vmatprep.subr.mxu0 0.0
        %6183 = vmatpush1.msra.mxu0 0.0
        %6184 = vmatprep.subr.mxu0 0.0
        %6185 = vmatpush1.msra.mxu0 0.0
        %6186 = vmatprep.subr.mxu0 0.0
        %6187 = vmatpush1.msra.mxu0 0.0
        %6188 = vmatprep.subr.mxu0 0.0
        %6189 = vmatpush1.msra.mxu0 0.0
        %6190 = vmatprep.subr.mxu0 0.0
        %6191 = vmatpush1.msra.mxu0 0.0
        %6192 = vmatprep.subr.mxu0 0.0
        %6193 = vmatpush1.msra.mxu0 0.0
        %6194 = vmatprep.subr.mxu0 0.0
        %6195 = vmatpush1.msra.mxu0 0.0
        %6196 = vmatprep.subr.mxu0 0.0
        %6197 = vmatpush1.msra.mxu0 0.0
        %6198 = vmatprep.subr.mxu0 0.0
        %6199 = vmatpush1.msra.mxu0 0.0
        %6200 = vmatprep.subr.mxu0 0.0
        %6201 = vmatpush1.msra.mxu0 0.0
        %6202 = vmatprep.subr.mxu0 0.0
        %6203 = vmatpush1.msra.mxu0 0.0
        %6204 = vmatprep.subr.mxu0 0.0
        %6205 = vmatpush1.msra.mxu0 0.0
        %6206 = vmatprep.subr.mxu0 0.0
        %6207 = vmatpush1.msra.mxu0 0.0
        %6208 = vmatprep.subr.mxu0 0.0
        %6209 = vmatpush1.msra.mxu0 0.0
        %6210 = vmatprep.subr.mxu0 0.0
        %6211 = vmatpush1.msra.mxu0 0.0
        %6212 = vmatprep.subr.mxu0 0.0
        %6213 = vmatpush1.msra.mxu0 0.0
        %6214 = vmatprep.subr.mxu0 0.0
        %6215 = vmatpush1.msra.mxu0 0.0
        %6216 = vmatprep.subr.mxu0 0.0
        %6217 = vmatpush1.msra.mxu0 0.0
        %6218 = vmatprep.subr.mxu0 0.0
        %6219 = vmatpush1.msra.mxu0 0.0
        %6220 = vmatprep.subr.mxu0 0.0
        %6221 = vmatpush1.msra.mxu0 0.0
        %6222 = vmatprep.subr.mxu0 0.0
        %6223 = vmatpush1.msra.mxu0 0.0
        %6224 = vmatprep.subr.mxu0 0.0
        %6225 = vmatpush1.msra.mxu0 0.0
        %6226 = vmatprep.subr.mxu0 0.0
        %6227 = vmatpush1.msra.mxu0 0.0
        %6228 = vmatprep.subr.mxu0 0.0
        %6229 = vmatpush1.msra.mxu0 0.0
        %6230 = vmatprep.mubr.f32.mxu0 0.0
        %v6231 = vand.u32 %v442, 4294901760
        %6232 = vmatmul.mubr.f32.gmra.mrb[0].mxu0 %v6231
        %v6233 = vpop.f32.mrb[0].mxu0
        %v6234 = vadd.f32 %v6162, %v6233
        %v6235 = vpop.f32.mrb[0].mxu0
        %6236 = vdwg.mxu0
        %6237 = vmatprep.subr.mxu0 0.0
        %v6238 = vand.u32 %v5790, 4294901760
        %6239 = vmatpush1.msra.mxu0 %v6238
        %6240 = vmatprep.subr.mxu0 0.0
        %6241 = vmatpush1.msra.mxu0 0.0
        %6242 = vmatprep.subr.mxu0 0.0
        %6243 = vmatpush1.msra.mxu0 0.0
        %6244 = vmatprep.subr.mxu0 0.0
        %6245 = vmatpush1.msra.mxu0 0.0
        %6246 = vmatprep.subr.mxu0 0.0
        %6247 = vmatpush1.msra.mxu0 0.0
        %6248 = vmatprep.subr.mxu0 0.0
        %6249 = vmatpush1.msra.mxu0 0.0
        %6250 = vmatprep.subr.mxu0 0.0
        %6251 = vmatpush1.msra.mxu0 0.0
        %6252 = vmatprep.subr.mxu0 0.0
        %6253 = vmatpush1.msra.mxu0 0.0
        %6254 = vmatprep.subr.mxu0 0.0
        %6255 = vmatpush1.msra.mxu0 0.0
        %6256 = vmatprep.subr.mxu0 0.0
        %6257 = vmatpush1.msra.mxu0 0.0
        %6258 = vmatprep.subr.mxu0 0.0
        %6259 = vmatpush1.msra.mxu0 0.0
        %6260 = vmatprep.subr.mxu0 0.0
        %6261 = vmatpush1.msra.mxu0 0.0
        %6262 = vmatprep.subr.mxu0 0.0
        %6263 = vmatpush1.msra.mxu0 0.0
        %6264 = vmatprep.subr.mxu0 0.0
        %6265 = vmatpush1.msra.mxu0 0.0
        %6266 = vmatprep.subr.mxu0 0.0
        %6267 = vmatpush1.msra.mxu0 0.0
        %6268 = vmatprep.subr.mxu0 0.0
        %6269 = vmatpush1.msra.mxu0 0.0
        %6270 = vmatprep.subr.mxu0 0.0
        %6271 = vmatpush1.msra.mxu0 0.0
        %6272 = vmatprep.subr.mxu0 0.0
        %6273 = vmatpush1.msra.mxu0 0.0
        %6274 = vmatprep.subr.mxu0 0.0
        %6275 = vmatpush1.msra.mxu0 0.0
        %6276 = vmatprep.subr.mxu0 0.0
        %6277 = vmatpush1.msra.mxu0 0.0
        %6278 = vmatprep.subr.mxu0 0.0
        %6279 = vmatpush1.msra.mxu0 0.0
        %6280 = vmatprep.subr.mxu0 0.0
        %6281 = vmatpush1.msra.mxu0 0.0
        %6282 = vmatprep.subr.mxu0 0.0
        %6283 = vmatpush1.msra.mxu0 0.0
        %6284 = vmatprep.subr.mxu0 0.0
        %6285 = vmatpush1.msra.mxu0 0.0
        %6286 = vmatprep.subr.mxu0 0.0
        %6287 = vmatpush1.msra.mxu0 0.0
        %6288 = vmatprep.subr.mxu0 0.0
        %6289 = vmatpush1.msra.mxu0 0.0
        %6290 = vmatprep.subr.mxu0 0.0
        %6291 = vmatpush1.msra.mxu0 0.0
        %6292 = vmatprep.subr.mxu0 0.0
        %6293 = vmatpush1.msra.mxu0 0.0
        %6294 = vmatprep.subr.mxu0 0.0
        %6295 = vmatpush1.msra.mxu0 0.0
        %6296 = vmatprep.subr.mxu0 0.0
        %6297 = vmatpush1.msra.mxu0 0.0
        %6298 = vmatprep.subr.mxu0 0.0
        %6299 = vmatpush1.msra.mxu0 0.0
        %6300 = vmatprep.subr.mxu0 0.0
        %6301 = vmatpush1.msra.mxu0 0.0
        %6302 = vmatprep.mubr.f32.mxu0 0.0
        %v6303 = vand.u32 %v923, 4294901760
        %v6304 = vsub.f32 %v923, %v6303
        %v6305 = vand.u32 %v6304, 4294901760
        %v6306 = vsub.f32 %v6304, %v6305
        %v6307 = vand.u32 %v6306, 4294901760
        %6308 = vmatmul.mubr.f32.gmra.mrb[0].mxu0 %v6307
        %v6309 = vpop.f32.mrb[0].mxu0
        %v6310 = vadd.f32 0.0, %v6309
        %v6311 = vpop.f32.mrb[0].mxu0
        %6312 = vdwg.mxu0
        %6313 = vmatprep.subr.mxu0 0.0
        %v6314 = vand.u32 %v5790, 4294901760
        %v6315 = vsub.f32 %v5790, %v6314
        %v6316 = vand.u32 %v6315, 4294901760
        %v6317 = vsub.f32 %v6315, %v6316
        %v6318 = vand.u32 %v6317, 4294901760
        %6319 = vmatpush1.msra.mxu0 %v6318
        %6320 = vmatprep.subr.mxu0 0.0
        %6321 = vmatpush1.msra.mxu0 0.0
        %6322 = vmatprep.subr.mxu0 0.0
        %6323 = vmatpush1.msra.mxu0 0.0
        %6324 = vmatprep.subr.mxu0 0.0
        %6325 = vmatpush1.msra.mxu0 0.0
        %6326 = vmatprep.subr.mxu0 0.0
        %6327 = vmatpush1.msra.mxu0 0.0
        %6328 = vmatprep.subr.mxu0 0.0
        %6329 = vmatpush1.msra.mxu0 0.0
        %6330 = vmatprep.subr.mxu0 0.0
        %6331 = vmatpush1.msra.mxu0 0.0
        %6332 = vmatprep.subr.mxu0 0.0
        %6333 = vmatpush1.msra.mxu0 0.0
        %6334 = vmatprep.subr.mxu0 0.0
        %6335 = vmatpush1.msra.mxu0 0.0
        %6336 = vmatprep.subr.mxu0 0.0
        %6337 = vmatpush1.msra.mxu0 0.0
        %6338 = vmatprep.subr.mxu0 0.0
        %6339 = vmatpush1.msra.mxu0 0.0
        %6340 = vmatprep.subr.mxu0 0.0
        %6341 = vmatpush1.msra.mxu0 0.0
        %6342 = vmatprep.subr.mxu0 0.0
        %6343 = vmatpush1.msra.mxu0 0.0
        %6344 = vmatprep.subr.mxu0 0.0
        %6345 = vmatpush1.msra.mxu0 0.0
        %6346 = vmatprep.subr.mxu0 0.0
        %6347 = vmatpush1.msra.mxu0 0.0
        %6348 = vmatprep.subr.mxu0 0.0
        %6349 = vmatpush1.msra.mxu0 0.0
        %6350 = vmatprep.subr.mxu0 0.0
        %6351 = vmatpush1.msra.mxu0 0.0
        %6352 = vmatprep.subr.mxu0 0.0
        %6353 = vmatpush1.msra.mxu0 0.0
        %6354 = vmatprep.subr.mxu0 0.0
        %6355 = vmatpush1.msra.mxu0 0.0
        %6356 = vmatprep.subr.mxu0 0.0
        %6357 = vmatpush1.msra.mxu0 0.0
        %6358 = vmatprep.subr.mxu0 0.0
        %6359 = vmatpush1.msra.mxu0 0.0
        %6360 = vmatprep.subr.mxu0 0.0
        %6361 = vmatpush1.msra.mxu0 0.0
        %6362 = vmatprep.subr.mxu0 0.0
        %6363 = vmatpush1.msra.mxu0 0.0
        %6364 = vmatprep.subr.mxu0 0.0
        %6365 = vmatpush1.msra.mxu0 0.0
        %6366 = vmatprep.subr.mxu0 0.0
        %6367 = vmatpush1.msra.mxu0 0.0
        %6368 = vmatprep.subr.mxu0 0.0
        %6369 = vmatpush1.msra.mxu0 0.0
        %6370 = vmatprep.subr.mxu0 0.0
        %6371 = vmatpush1.msra.mxu0 0.0
        %6372 = vmatprep.subr.mxu0 0.0
        %6373 = vmatpush1.msra.mxu0 0.0
        %6374 = vmatprep.subr.mxu0 0.0
        %6375 = vmatpush1.msra.mxu0 0.0
        %6376 = vmatprep.subr.mxu0 0.0
        %6377 = vmatpush1.msra.mxu0 0.0
        %6378 = vmatprep.subr.mxu0 0.0
        %6379 = vmatpush1.msra.mxu0 0.0
        %6380 = vmatprep.subr.mxu0 0.0
        %6381 = vmatpush1.msra.mxu0 0.0
        %6382 = vmatprep.mubr.f32.mxu0 0.0
        %v6383 = vand.u32 %v923, 4294901760
        %6384 = vmatmul.mubr.f32.gmra.mrb[0].mxu0 %v6383
        %v6385 = vpop.f32.mrb[0].mxu0
        %v6386 = vadd.f32 %v6310, %v6385
        %v6387 = vpop.f32.mrb[0].mxu0
        %6388 = vdwg.mxu0
        %6389 = vmatprep.subr.mxu0 0.0
        %v6390 = vand.u32 %v5790, 4294901760
        %v6391 = vsub.f32 %v5790, %v6390
        %6392 = vmatpush1.msra.mxu0 %v6391
        %6393 = vmatprep.subr.mxu0 0.0
        %6394 = vmatpush1.msra.mxu0 0.0
        %6395 = vmatprep.subr.mxu0 0.0
        %6396 = vmatpush1.msra.mxu0 0.0
        %6397 = vmatprep.subr.mxu0 0.0
        %6398 = vmatpush1.msra.mxu0 0.0
        %6399 = vmatprep.subr.mxu0 0.0
        %6400 = vmatpush1.msra.mxu0 0.0
        %6401 = vmatprep.subr.mxu0 0.0
        %6402 = vmatpush1.msra.mxu0 0.0
        %6403 = vmatprep.subr.mxu0 0.0
        %6404 = vmatpush1.msra.mxu0 0.0
        %6405 = vmatprep.subr.mxu0 0.0
        %6406 = vmatpush1.msra.mxu0 0.0
        %6407 = vmatprep.subr.mxu0 0.0
        %6408 = vmatpush1.msra.mxu0 0.0
        %6409 = vmatprep.subr.mxu0 0.0
        %6410 = vmatpush1.msra.mxu0 0.0
        %6411 = vmatprep.subr.mxu0 0.0
        %6412 = vmatpush1.msra.mxu0 0.0
        %6413 = vmatprep.subr.mxu0 0.0
        %6414 = vmatpush1.msra.mxu0 0.0
        %6415 = vmatprep.subr.mxu0 0.0
        %6416 = vmatpush1.msra.mxu0 0.0
        %6417 = vmatprep.subr.mxu0 0.0
        %6418 = vmatpush1.msra.mxu0 0.0
        %6419 = vmatprep.subr.mxu0 0.0
        %6420 = vmatpush1.msra.mxu0 0.0
        %6421 = vmatprep.subr.mxu0 0.0
        %6422 = vmatpush1.msra.mxu0 0.0
        %6423 = vmatprep.subr.mxu0 0.0
        %6424 = vmatpush1.msra.mxu0 0.0
        %6425 = vmatprep.subr.mxu0 0.0
        %6426 = vmatpush1.msra.mxu0 0.0
        %6427 = vmatprep.subr.mxu0 0.0
        %6428 = vmatpush1.msra.mxu0 0.0
        %6429 = vmatprep.subr.mxu0 0.0
        %6430 = vmatpush1.msra.mxu0 0.0
        %6431 = vmatprep.subr.mxu0 0.0
        %6432 = vmatpush1.msra.mxu0 0.0
        %6433 = vmatprep.subr.mxu0 0.0
        %6434 = vmatpush1.msra.mxu0 0.0
        %6435 = vmatprep.subr.mxu0 0.0
        %6436 = vmatpush1.msra.mxu0 0.0
        %6437 = vmatprep.subr.mxu0 0.0
        %6438 = vmatpush1.msra.mxu0 0.0
        %6439 = vmatprep.subr.mxu0 0.0
        %6440 = vmatpush1.msra.mxu0 0.0
        %6441 = vmatprep.subr.mxu0 0.0
        %6442 = vmatpush1.msra.mxu0 0.0
        %6443 = vmatprep.subr.mxu0 0.0
        %6444 = vmatpush1.msra.mxu0 0.0
        %6445 = vmatprep.subr.mxu0 0.0
        %6446 = vmatpush1.msra.mxu0 0.0
        %6447 = vmatprep.subr.mxu0 0.0
        %6448 = vmatpush1.msra.mxu0 0.0
        %6449 = vmatprep.subr.mxu0 0.0
        %6450 = vmatpush1.msra.mxu0 0.0
        %6451 = vmatprep.subr.mxu0 0.0
        %6452 = vmatpush1.msra.mxu0 0.0
        %6453 = vmatprep.subr.mxu0 0.0
        %6454 = vmatpush1.msra.mxu0 0.0
        %6455 = vmatprep.mubr.f32.mxu0 0.0
        %v6456 = vand.u32 %v923, 4294901760
        %v6457 = vsub.f32 %v923, %v6456
        %6458 = vmatmul.mubr.f32.gmra.mrb[0].mxu0 %v6457
        %v6459 = vpop.f32.mrb[0].mxu0
        %v6460 = vadd.f32 %v6386, %v6459
        %v6461 = vpop.f32.mrb[0].mxu0
        %6462 = vdwg.mxu0
        %6463 = vmatprep.subr.mxu0 0.0
        %v6464 = vand.u32 %v5790, 4294901760
        %6465 = vmatpush1.msra.mxu0 %v6464
        %6466 = vmatprep.subr.mxu0 0.0
        %6467 = vmatpush1.msra.mxu0 0.0
        %6468 = vmatprep.subr.mxu0 0.0
        %6469 = vmatpush1.msra.mxu0 0.0
        %6470 = vmatprep.subr.mxu0 0.0
        %6471 = vmatpush1.msra.mxu0 0.0
        %6472 = vmatprep.subr.mxu0 0.0
        %6473 = vmatpush1.msra.mxu0 0.0
        %6474 = vmatprep.subr.mxu0 0.0
        %6475 = vmatpush1.msra.mxu0 0.0
        %6476 = vmatprep.subr.mxu0 0.0
        %6477 = vmatpush1.msra.mxu0 0.0
        %6478 = vmatprep.subr.mxu0 0.0
        %6479 = vmatpush1.msra.mxu0 0.0
        %6480 = vmatprep.subr.mxu0 0.0
        %6481 = vmatpush1.msra.mxu0 0.0
        %6482 = vmatprep.subr.mxu0 0.0
        %6483 = vmatpush1.msra.mxu0 0.0
        %6484 = vmatprep.subr.mxu0 0.0
        %6485 = vmatpush1.msra.mxu0 0.0
        %6486 = vmatprep.subr.mxu0 0.0
        %6487 = vmatpush1.msra.mxu0 0.0
        %6488 = vmatprep.subr.mxu0 0.0
        %6489 = vmatpush1.msra.mxu0 0.0
        %6490 = vmatprep.subr.mxu0 0.0
        %6491 = vmatpush1.msra.mxu0 0.0
        %6492 = vmatprep.subr.mxu0 0.0
        %6493 = vmatpush1.msra.mxu0 0.0
        %6494 = vmatprep.subr.mxu0 0.0
        %6495 = vmatpush1.msra.mxu0 0.0
        %6496 = vmatprep.subr.mxu0 0.0
        %6497 = vmatpush1.msra.mxu0 0.0
        %6498 = vmatprep.subr.mxu0 0.0
        %6499 = vmatpush1.msra.mxu0 0.0
        %6500 = vmatprep.subr.mxu0 0.0
        %6501 = vmatpush1.msra.mxu0 0.0
        %6502 = vmatprep.subr.mxu0 0.0
        %6503 = vmatpush1.msra.mxu0 0.0
        %6504 = vmatprep.subr.mxu0 0.0
        %6505 = vmatpush1.msra.mxu0 0.0
        %6506 = vmatprep.subr.mxu0 0.0
        %6507 = vmatpush1.msra.mxu0 0.0
        %6508 = vmatprep.subr.mxu0 0.0
        %6509 = vmatpush1.msra.mxu0 0.0
        %6510 = vmatprep.subr.mxu0 0.0
        %6511 = vmatpush1.msra.mxu0 0.0
        %6512 = vmatprep.subr.mxu0 0.0
        %6513 = vmatpush1.msra.mxu0 0.0
        %6514 = vmatprep.subr.mxu0 0.0
        %6515 = vmatpush1.msra.mxu0 0.0
        %6516 = vmatprep.subr.mxu0 0.0
        %6517 = vmatpush1.msra.mxu0 0.0
        %6518 = vmatprep.subr.mxu0 0.0
        %6519 = vmatpush1.msra.mxu0 0.0
        %6520 = vmatprep.subr.mxu0 0.0
        %6521 = vmatpush1.msra.mxu0 0.0
        %6522 = vmatprep.subr.mxu0 0.0
        %6523 = vmatpush1.msra.mxu0 0.0
        %6524 = vmatprep.subr.mxu0 0.0
        %6525 = vmatpush1.msra.mxu0 0.0
        %6526 = vmatprep.subr.mxu0 0.0
        %6527 = vmatpush1.msra.mxu0 0.0
        %6528 = vmatprep.mubr.f32.mxu0 0.0
        %v6529 = vand.u32 %v923, 4294901760
        %v6530 = vsub.f32 %v923, %v6529
        %v6531 = vand.u32 %v6530, 4294901760
        %6532 = vmatmul.mubr.f32.gmra.mrb[0].mxu0 %v6531
        %v6533 = vpop.f32.mrb[0].mxu0
        %v6534 = vadd.f32 %v6460, %v6533
        %v6535 = vpop.f32.mrb[0].mxu0
        %6536 = vdwg.mxu0
        %6537 = vmatprep.subr.mxu0 0.0
        %v6538 = vand.u32 %v5790, 4294901760
        %v6539 = vsub.f32 %v5790, %v6538
        %v6540 = vand.u32 %v6539, 4294901760
        %6541 = vmatpush1.msra.mxu0 %v6540
        %6542 = vmatprep.subr.mxu0 0.0
        %6543 = vmatpush1.msra.mxu0 0.0
        %6544 = vmatprep.subr.mxu0 0.0
        %6545 = vmatpush1.msra.mxu0 0.0
        %6546 = vmatprep.subr.mxu0 0.0
        %6547 = vmatpush1.msra.mxu0 0.0
        %6548 = vmatprep.subr.mxu0 0.0
        %6549 = vmatpush1.msra.mxu0 0.0
        %6550 = vmatprep.subr.mxu0 0.0
        %6551 = vmatpush1.msra.mxu0 0.0
        %6552 = vmatprep.subr.mxu0 0.0
        %6553 = vmatpush1.msra.mxu0 0.0
        %6554 = vmatprep.subr.mxu0 0.0
        %6555 = vmatpush1.msra.mxu0 0.0
        %6556 = vmatprep.subr.mxu0 0.0
        %6557 = vmatpush1.msra.mxu0 0.0
        %6558 = vmatprep.subr.mxu0 0.0
        %6559 = vmatpush1.msra.mxu0 0.0
        %6560 = vmatprep.subr.mxu0 0.0
        %6561 = vmatpush1.msra.mxu0 0.0
        %6562 = vmatprep.subr.mxu0 0.0
        %6563 = vmatpush1.msra.mxu0 0.0
        %6564 = vmatprep.subr.mxu0 0.0
        %6565 = vmatpush1.msra.mxu0 0.0
        %6566 = vmatprep.subr.mxu0 0.0
        %6567 = vmatpush1.msra.mxu0 0.0
        %6568 = vmatprep.subr.mxu0 0.0
        %6569 = vmatpush1.msra.mxu0 0.0
        %6570 = vmatprep.subr.mxu0 0.0
        %6571 = vmatpush1.msra.mxu0 0.0
        %6572 = vmatprep.subr.mxu0 0.0
        %6573 = vmatpush1.msra.mxu0 0.0
        %6574 = vmatprep.subr.mxu0 0.0
        %6575 = vmatpush1.msra.mxu0 0.0
        %6576 = vmatprep.subr.mxu0 0.0
        %6577 = vmatpush1.msra.mxu0 0.0
        %6578 = vmatprep.subr.mxu0 0.0
        %6579 = vmatpush1.msra.mxu0 0.0
        %6580 = vmatprep.subr.mxu0 0.0
        %6581 = vmatpush1.msra.mxu0 0.0
        %6582 = vmatprep.subr.mxu0 0.0
        %6583 = vmatpush1.msra.mxu0 0.0
        %6584 = vmatprep.subr.mxu0 0.0
        %6585 = vmatpush1.msra.mxu0 0.0
        %6586 = vmatprep.subr.mxu0 0.0
        %6587 = vmatpush1.msra.mxu0 0.0
        %6588 = vmatprep.subr.mxu0 0.0
        %6589 = vmatpush1.msra.mxu0 0.0
        %6590 = vmatprep.subr.mxu0 0.0
        %6591 = vmatpush1.msra.mxu0 0.0
        %6592 = vmatprep.subr.mxu0 0.0
        %6593 = vmatpush1.msra.mxu0 0.0
        %6594 = vmatprep.subr.mxu0 0.0
        %6595 = vmatpush1.msra.mxu0 0.0
        %6596 = vmatprep.subr.mxu0 0.0
        %6597 = vmatpush1.msra.mxu0 0.0
        %6598 = vmatprep.subr.mxu0 0.0
        %6599 = vmatpush1.msra.mxu0 0.0
        %6600 = vmatprep.subr.mxu0 0.0
        %6601 = vmatpush1.msra.mxu0 0.0
        %6602 = vmatprep.subr.mxu0 0.0
        %6603 = vmatpush1.msra.mxu0 0.0
        %6604 = vmatprep.mubr.f32.mxu0 0.0
        %v6605 = vand.u32 %v923, 4294901760
        %6606 = vmatmul.mubr.f32.gmra.mrb[0].mxu0 %v6605
        %v6607 = vpop.f32.mrb[0].mxu0
        %v6608 = vadd.f32 %v6534, %v6607
        %v6609 = vpop.f32.mrb[0].mxu0
        %6610 = vdwg.mxu0
        %6611 = vmatprep.subr.mxu0 0.0
        %v6612 = vand.u32 %v5790, 4294901760
        %6613 = vmatpush1.msra.mxu0 %v6612
        %6614 = vmatprep.subr.mxu0 0.0
        %6615 = vmatpush1.msra.mxu0 0.0
        %6616 = vmatprep.subr.mxu0 0.0
        %6617 = vmatpush1.msra.mxu0 0.0
        %6618 = vmatprep.subr.mxu0 0.0
        %6619 = vmatpush1.msra.mxu0 0.0
        %6620 = vmatprep.subr.mxu0 0.0
        %6621 = vmatpush1.msra.mxu0 0.0
        %6622 = vmatprep.subr.mxu0 0.0
        %6623 = vmatpush1.msra.mxu0 0.0
        %6624 = vmatprep.subr.mxu0 0.0
        %6625 = vmatpush1.msra.mxu0 0.0
        %6626 = vmatprep.subr.mxu0 0.0
        %6627 = vmatpush1.msra.mxu0 0.0
        %6628 = vmatprep.subr.mxu0 0.0
        %6629 = vmatpush1.msra.mxu0 0.0
        %6630 = vmatprep.subr.mxu0 0.0
        %6631 = vmatpush1.msra.mxu0 0.0
        %6632 = vmatprep.subr.mxu0 0.0
        %6633 = vmatpush1.msra.mxu0 0.0
        %6634 = vmatprep.subr.mxu0 0.0
        %6635 = vmatpush1.msra.mxu0 0.0
        %6636 = vmatprep.subr.mxu0 0.0
        %6637 = vmatpush1.msra.mxu0 0.0
        %6638 = vmatprep.subr.mxu0 0.0
        %6639 = vmatpush1.msra.mxu0 0.0
        %6640 = vmatprep.subr.mxu0 0.0
        %6641 = vmatpush1.msra.mxu0 0.0
        %6642 = vmatprep.subr.mxu0 0.0
        %6643 = vmatpush1.msra.mxu0 0.0
        %6644 = vmatprep.subr.mxu0 0.0
        %6645 = vmatpush1.msra.mxu0 0.0
        %6646 = vmatprep.subr.mxu0 0.0
        %6647 = vmatpush1.msra.mxu0 0.0
        %6648 = vmatprep.subr.mxu0 0.0
        %6649 = vmatpush1.msra.mxu0 0.0
        %6650 = vmatprep.subr.mxu0 0.0
        %6651 = vmatpush1.msra.mxu0 0.0
        %6652 = vmatprep.subr.mxu0 0.0
        %6653 = vmatpush1.msra.mxu0 0.0
        %6654 = vmatprep.subr.mxu0 0.0
        %6655 = vmatpush1.msra.mxu0 0.0
        %6656 = vmatprep.subr.mxu0 0.0
        %6657 = vmatpush1.msra.mxu0 0.0
        %6658 = vmatprep.subr.mxu0 0.0
        %6659 = vmatpush1.msra.mxu0 0.0
        %6660 = vmatprep.subr.mxu0 0.0
        %6661 = vmatpush1.msra.mxu0 0.0
        %6662 = vmatprep.subr.mxu0 0.0
        %6663 = vmatpush1.msra.mxu0 0.0
        %6664 = vmatprep.subr.mxu0 0.0
        %6665 = vmatpush1.msra.mxu0 0.0
        %6666 = vmatprep.subr.mxu0 0.0
        %6667 = vmatpush1.msra.mxu0 0.0
        %6668 = vmatprep.subr.mxu0 0.0
        %6669 = vmatpush1.msra.mxu0 0.0
        %6670 = vmatprep.subr.mxu0 0.0
        %6671 = vmatpush1.msra.mxu0 0.0
        %6672 = vmatprep.subr.mxu0 0.0
        %6673 = vmatpush1.msra.mxu0 0.0
        %6674 = vmatprep.subr.mxu0 0.0
        %6675 = vmatpush1.msra.mxu0 0.0
        %6676 = vmatprep.mubr.f32.mxu0 0.0
        %v6677 = vand.u32 %v923, 4294901760
        %6678 = vmatmul.mubr.f32.gmra.mrb[0].mxu0 %v6677
        %v6679 = vpop.f32.mrb[0].mxu0
        %v6680 = vadd.f32 %v6608, %v6679
        %v6681 = vpop.f32.mrb[0].mxu0
        %6682 = vdwg.mxu0
        %v6684 = vsel %vm1371, %v6680, 0
        %6686 = vmatprep.subr.mxu0 0.0
        %v6687 = vand.u32 %v405, 4294901760
        %6688 = vmatpush1.msra.mxu0 %v6687
        %6689 = vmatprep.subr.mxu0 0.0
        %v6690 = vand.u32 %v406, 4294901760
        %6691 = vmatpush1.msra.mxu0 %v6690
        %6692 = vmatprep.subr.mxu0 0.0
        %v6693 = vand.u32 %v407, 4294901760
        %6694 = vmatpush1.msra.mxu0 %v6693
        %6695 = vmatprep.subr.mxu0 0.0
        %v6696 = vand.u32 %v408, 4294901760
        %6697 = vmatpush1.msra.mxu0 %v6696
        %6698 = vmatprep.subr.mxu0 0.0
        %6699 = vmatpush1.msra.mxu0 0.0
        %6700 = vmatprep.subr.mxu0 0.0
        %6701 = vmatpush1.msra.mxu0 0.0
        %6702 = vmatprep.subr.mxu0 0.0
        %6703 = vmatpush1.msra.mxu0 0.0
        %6704 = vmatprep.subr.mxu0 0.0
        %6705 = vmatpush1.msra.mxu0 0.0
        %6706 = vmatprep.subr.mxu0 0.0
        %6707 = vmatpush1.msra.mxu0 0.0
        %6708 = vmatprep.subr.mxu0 0.0
        %6709 = vmatpush1.msra.mxu0 0.0
        %6710 = vmatprep.subr.mxu0 0.0
        %6711 = vmatpush1.msra.mxu0 0.0
        %6712 = vmatprep.subr.mxu0 0.0
        %6713 = vmatpush1.msra.mxu0 0.0
        %6714 = vmatprep.subr.mxu0 0.0
        %6715 = vmatpush1.msra.mxu0 0.0
        %6716 = vmatprep.subr.mxu0 0.0
        %6717 = vmatpush1.msra.mxu0 0.0
        %6718 = vmatprep.subr.mxu0 0.0
        %6719 = vmatpush1.msra.mxu0 0.0
        %6720 = vmatprep.subr.mxu0 0.0
        %6721 = vmatpush1.msra.mxu0 0.0
        %6722 = vmatprep.subr.mxu0 0.0
        %6723 = vmatpush1.msra.mxu0 0.0
        %6724 = vmatprep.subr.mxu0 0.0
        %6725 = vmatpush1.msra.mxu0 0.0
        %6726 = vmatprep.subr.mxu0 0.0
        %6727 = vmatpush1.msra.mxu0 0.0
        %6728 = vmatprep.subr.mxu0 0.0
        %6729 = vmatpush1.msra.mxu0 0.0
        %6730 = vmatprep.subr.mxu0 0.0
        %6731 = vmatpush1.msra.mxu0 0.0
        %6732 = vmatprep.subr.mxu0 0.0
        %6733 = vmatpush1.msra.mxu0 0.0
        %6734 = vmatprep.subr.mxu0 0.0
        %6735 = vmatpush1.msra.mxu0 0.0
        %6736 = vmatprep.subr.mxu0 0.0
        %6737 = vmatpush1.msra.mxu0 0.0
        %6738 = vmatprep.subr.mxu0 0.0
        %6739 = vmatpush1.msra.mxu0 0.0
        %6740 = vmatprep.subr.mxu0 0.0
        %6741 = vmatpush1.msra.mxu0 0.0
        %6742 = vmatprep.subr.mxu0 0.0
        %6743 = vmatpush1.msra.mxu0 0.0
        %6744 = vmatprep.subr.mxu0 0.0
        %6745 = vmatpush1.msra.mxu0 0.0
        %6746 = vmatprep.subr.mxu0 0.0
        %6747 = vmatpush1.msra.mxu0 0.0
        %6748 = vmatprep.subr.mxu0 0.0
        %6749 = vmatpush1.msra.mxu0 0.0
        %6750 = vmatprep.subr.mxu0 0.0
        %6751 = vmatpush1.msra.mxu0 0.0
        %6752 = vmatprep.subr.mxu0 0.0
        %6753 = vmatpush1.msra.mxu0 0.0
        %6754 = vmatprep.mubr.f32.mxu0 0.0
        %v6755 = vand.u32 %v6684, 4294901760
        %v6756 = vsub.f32 %v6684, %v6755
        %v6757 = vand.u32 %v6756, 4294901760
        %v6758 = vsub.f32 %v6756, %v6757
        %v6759 = vand.u32 %v6758, 4294901760
        %6760 = vmatmul.mubr.f32.gmra.mrb[0].mxu0 %v6759
        %v6761 = vpop.f32.mrb[0].mxu0
        %v6762 = vadd.f32 0.0, %v6761
        %v6763 = vpop.f32.mrb[0].mxu0
        %6764 = vdwg.mxu0
        %6765 = vmatprep.subr.mxu0 0.0
        %v6766 = vand.u32 %v405, 4294901760
        %v6767 = vsub.f32 %v405, %v6766
        %v6768 = vand.u32 %v6767, 4294901760
        %v6769 = vsub.f32 %v6767, %v6768
        %v6770 = vand.u32 %v6769, 4294901760
        %6771 = vmatpush1.msra.mxu0 %v6770
        %6772 = vmatprep.subr.mxu0 0.0
        %v6773 = vand.u32 %v406, 4294901760
        %v6774 = vsub.f32 %v406, %v6773
        %v6775 = vand.u32 %v6774, 4294901760
        %v6776 = vsub.f32 %v6774, %v6775
        %v6777 = vand.u32 %v6776, 4294901760
        %6778 = vmatpush1.msra.mxu0 %v6777
        %6779 = vmatprep.subr.mxu0 0.0
        %v6780 = vand.u32 %v407, 4294901760
        %v6781 = vsub.f32 %v407, %v6780
        %v6782 = vand.u32 %v6781, 4294901760
        %v6783 = vsub.f32 %v6781, %v6782
        %v6784 = vand.u32 %v6783, 4294901760
        %6785 = vmatpush1.msra.mxu0 %v6784
        %6786 = vmatprep.subr.mxu0 0.0
        %v6787 = vand.u32 %v408, 4294901760
        %v6788 = vsub.f32 %v408, %v6787
        %v6789 = vand.u32 %v6788, 4294901760
        %v6790 = vsub.f32 %v6788, %v6789
        %v6791 = vand.u32 %v6790, 4294901760
        %6792 = vmatpush1.msra.mxu0 %v6791
        %6793 = vmatprep.subr.mxu0 0.0
        %6794 = vmatpush1.msra.mxu0 0.0
        %6795 = vmatprep.subr.mxu0 0.0
        %6796 = vmatpush1.msra.mxu0 0.0
        %6797 = vmatprep.subr.mxu0 0.0
        %6798 = vmatpush1.msra.mxu0 0.0
        %6799 = vmatprep.subr.mxu0 0.0
        %6800 = vmatpush1.msra.mxu0 0.0
        %6801 = vmatprep.subr.mxu0 0.0
        %6802 = vmatpush1.msra.mxu0 0.0
        %6803 = vmatprep.subr.mxu0 0.0
        %6804 = vmatpush1.msra.mxu0 0.0
        %6805 = vmatprep.subr.mxu0 0.0
        %6806 = vmatpush1.msra.mxu0 0.0
        %6807 = vmatprep.subr.mxu0 0.0
        %6808 = vmatpush1.msra.mxu0 0.0
        %6809 = vmatprep.subr.mxu0 0.0
        %6810 = vmatpush1.msra.mxu0 0.0
        %6811 = vmatprep.subr.mxu0 0.0
        %6812 = vmatpush1.msra.mxu0 0.0
        %6813 = vmatprep.subr.mxu0 0.0
        %6814 = vmatpush1.msra.mxu0 0.0
        %6815 = vmatprep.subr.mxu0 0.0
        %6816 = vmatpush1.msra.mxu0 0.0
        %6817 = vmatprep.subr.mxu0 0.0
        %6818 = vmatpush1.msra.mxu0 0.0
        %6819 = vmatprep.subr.mxu0 0.0
        %6820 = vmatpush1.msra.mxu0 0.0
        %6821 = vmatprep.subr.mxu0 0.0
        %6822 = vmatpush1.msra.mxu0 0.0
        %6823 = vmatprep.subr.mxu0 0.0
        %6824 = vmatpush1.msra.mxu0 0.0
        %6825 = vmatprep.subr.mxu0 0.0
        %6826 = vmatpush1.msra.mxu0 0.0
        %6827 = vmatprep.subr.mxu0 0.0
        %6828 = vmatpush1.msra.mxu0 0.0
        %6829 = vmatprep.subr.mxu0 0.0
        %6830 = vmatpush1.msra.mxu0 0.0
        %6831 = vmatprep.subr.mxu0 0.0
        %6832 = vmatpush1.msra.mxu0 0.0
        %6833 = vmatprep.subr.mxu0 0.0
        %6834 = vmatpush1.msra.mxu0 0.0
        %6835 = vmatprep.subr.mxu0 0.0
        %6836 = vmatpush1.msra.mxu0 0.0
        %6837 = vmatprep.subr.mxu0 0.0
        %6838 = vmatpush1.msra.mxu0 0.0
        %6839 = vmatprep.subr.mxu0 0.0
        %6840 = vmatpush1.msra.mxu0 0.0
        %6841 = vmatprep.subr.mxu0 0.0
        %6842 = vmatpush1.msra.mxu0 0.0
        %6843 = vmatprep.subr.mxu0 0.0
        %6844 = vmatpush1.msra.mxu0 0.0
        %6845 = vmatprep.subr.mxu0 0.0
        %6846 = vmatpush1.msra.mxu0 0.0
        %6847 = vmatprep.subr.mxu0 0.0
        %6848 = vmatpush1.msra.mxu0 0.0
        %6849 = vmatprep.mubr.f32.mxu0 0.0
        %v6850 = vand.u32 %v6684, 4294901760
        %6851 = vmatmul.mubr.f32.gmra.mrb[0].mxu0 %v6850
        %v6852 = vpop.f32.mrb[0].mxu0
        %v6853 = vadd.f32 %v6762, %v6852
        %v6854 = vpop.f32.mrb[0].mxu0
        %6855 = vdwg.mxu0
        %6856 = vmatprep.subr.mxu0 0.0
        %v6857 = vand.u32 %v405, 4294901760
        %v6858 = vsub.f32 %v405, %v6857
        %6859 = vmatpush1.msra.mxu0 %v6858
        %6860 = vmatprep.subr.mxu0 0.0
        %v6861 = vand.u32 %v406, 4294901760
        %v6862 = vsub.f32 %v406, %v6861
        %6863 = vmatpush1.msra.mxu0 %v6862
        %6864 = vmatprep.subr.mxu0 0.0
        %v6865 = vand.u32 %v407, 4294901760
        %v6866 = vsub.f32 %v407, %v6865
        %6867 = vmatpush1.msra.mxu0 %v6866
        %6868 = vmatprep.subr.mxu0 0.0
        %v6869 = vand.u32 %v408, 4294901760
        %v6870 = vsub.f32 %v408, %v6869
        %6871 = vmatpush1.msra.mxu0 %v6870
        %6872 = vmatprep.subr.mxu0 0.0
        %6873 = vmatpush1.msra.mxu0 0.0
        %6874 = vmatprep.subr.mxu0 0.0
        %6875 = vmatpush1.msra.mxu0 0.0
        %6876 = vmatprep.subr.mxu0 0.0
        %6877 = vmatpush1.msra.mxu0 0.0
        %6878 = vmatprep.subr.mxu0 0.0
        %6879 = vmatpush1.msra.mxu0 0.0
        %6880 = vmatprep.subr.mxu0 0.0
        %6881 = vmatpush1.msra.mxu0 0.0
        %6882 = vmatprep.subr.mxu0 0.0
        %6883 = vmatpush1.msra.mxu0 0.0
        %6884 = vmatprep.subr.mxu0 0.0
        %6885 = vmatpush1.msra.mxu0 0.0
        %6886 = vmatprep.subr.mxu0 0.0
        %6887 = vmatpush1.msra.mxu0 0.0
        %6888 = vmatprep.subr.mxu0 0.0
        %6889 = vmatpush1.msra.mxu0 0.0
        %6890 = vmatprep.subr.mxu0 0.0
        %6891 = vmatpush1.msra.mxu0 0.0
        %6892 = vmatprep.subr.mxu0 0.0
        %6893 = vmatpush1.msra.mxu0 0.0
        %6894 = vmatprep.subr.mxu0 0.0
        %6895 = vmatpush1.msra.mxu0 0.0
        %6896 = vmatprep.subr.mxu0 0.0
        %6897 = vmatpush1.msra.mxu0 0.0
        %6898 = vmatprep.subr.mxu0 0.0
        %6899 = vmatpush1.msra.mxu0 0.0
        %6900 = vmatprep.subr.mxu0 0.0
        %6901 = vmatpush1.msra.mxu0 0.0
        %6902 = vmatprep.subr.mxu0 0.0
        %6903 = vmatpush1.msra.mxu0 0.0
        %6904 = vmatprep.subr.mxu0 0.0
        %6905 = vmatpush1.msra.mxu0 0.0
        %6906 = vmatprep.subr.mxu0 0.0
        %6907 = vmatpush1.msra.mxu0 0.0
        %6908 = vmatprep.subr.mxu0 0.0
        %6909 = vmatpush1.msra.mxu0 0.0
        %6910 = vmatprep.subr.mxu0 0.0
        %6911 = vmatpush1.msra.mxu0 0.0
        %6912 = vmatprep.subr.mxu0 0.0
        %6913 = vmatpush1.msra.mxu0 0.0
        %6914 = vmatprep.subr.mxu0 0.0
        %6915 = vmatpush1.msra.mxu0 0.0
        %6916 = vmatprep.subr.mxu0 0.0
        %6917 = vmatpush1.msra.mxu0 0.0
        %6918 = vmatprep.subr.mxu0 0.0
        %6919 = vmatpush1.msra.mxu0 0.0
        %6920 = vmatprep.subr.mxu0 0.0
        %6921 = vmatpush1.msra.mxu0 0.0
        %6922 = vmatprep.subr.mxu0 0.0
        %6923 = vmatpush1.msra.mxu0 0.0
        %6924 = vmatprep.subr.mxu0 0.0
        %6925 = vmatpush1.msra.mxu0 0.0
        %6926 = vmatprep.subr.mxu0 0.0
        %6927 = vmatpush1.msra.mxu0 0.0
        %6928 = vmatprep.mubr.f32.mxu0 0.0
        %v6929 = vand.u32 %v6684, 4294901760
        %v6930 = vsub.f32 %v6684, %v6929
        %6931 = vmatmul.mubr.f32.gmra.mrb[0].mxu0 %v6930
        %v6932 = vpop.f32.mrb[0].mxu0
        %v6933 = vadd.f32 %v6853, %v6932
        %v6934 = vpop.f32.mrb[0].mxu0
        %6935 = vdwg.mxu0
        %6936 = vmatprep.subr.mxu0 0.0
        %v6937 = vand.u32 %v405, 4294901760
        %6938 = vmatpush1.msra.mxu0 %v6937
        %6939 = vmatprep.subr.mxu0 0.0
        %v6940 = vand.u32 %v406, 4294901760
        %6941 = vmatpush1.msra.mxu0 %v6940
        %6942 = vmatprep.subr.mxu0 0.0
        %v6943 = vand.u32 %v407, 4294901760
        %6944 = vmatpush1.msra.mxu0 %v6943
        %6945 = vmatprep.subr.mxu0 0.0
        %v6946 = vand.u32 %v408, 4294901760
        %6947 = vmatpush1.msra.mxu0 %v6946
        %6948 = vmatprep.subr.mxu0 0.0
        %6949 = vmatpush1.msra.mxu0 0.0
        %6950 = vmatprep.subr.mxu0 0.0
        %6951 = vmatpush1.msra.mxu0 0.0
        %6952 = vmatprep.subr.mxu0 0.0
        %6953 = vmatpush1.msra.mxu0 0.0
        %6954 = vmatprep.subr.mxu0 0.0
        %6955 = vmatpush1.msra.mxu0 0.0
        %6956 = vmatprep.subr.mxu0 0.0
        %6957 = vmatpush1.msra.mxu0 0.0
        %6958 = vmatprep.subr.mxu0 0.0
        %6959 = vmatpush1.msra.mxu0 0.0
        %6960 = vmatprep.subr.mxu0 0.0
        %6961 = vmatpush1.msra.mxu0 0.0
        %6962 = vmatprep.subr.mxu0 0.0
        %6963 = vmatpush1.msra.mxu0 0.0
        %6964 = vmatprep.subr.mxu0 0.0
        %6965 = vmatpush1.msra.mxu0 0.0
        %6966 = vmatprep.subr.mxu0 0.0
        %6967 = vmatpush1.msra.mxu0 0.0
        %6968 = vmatprep.subr.mxu0 0.0
        %6969 = vmatpush1.msra.mxu0 0.0
        %6970 = vmatprep.subr.mxu0 0.0
        %6971 = vmatpush1.msra.mxu0 0.0
        %6972 = vmatprep.subr.mxu0 0.0
        %6973 = vmatpush1.msra.mxu0 0.0
        %6974 = vmatprep.subr.mxu0 0.0
        %6975 = vmatpush1.msra.mxu0 0.0
        %6976 = vmatprep.subr.mxu0 0.0
        %6977 = vmatpush1.msra.mxu0 0.0
        %6978 = vmatprep.subr.mxu0 0.0
        %6979 = vmatpush1.msra.mxu0 0.0
        %6980 = vmatprep.subr.mxu0 0.0
        %6981 = vmatpush1.msra.mxu0 0.0
        %6982 = vmatprep.subr.mxu0 0.0
        %6983 = vmatpush1.msra.mxu0 0.0
        %6984 = vmatprep.subr.mxu0 0.0
        %6985 = vmatpush1.msra.mxu0 0.0
        %6986 = vmatprep.subr.mxu0 0.0
        %6987 = vmatpush1.msra.mxu0 0.0
        %6988 = vmatprep.subr.mxu0 0.0
        %6989 = vmatpush1.msra.mxu0 0.0
        %6990 = vmatprep.subr.mxu0 0.0
        %6991 = vmatpush1.msra.mxu0 0.0
        %6992 = vmatprep.subr.mxu0 0.0
        %6993 = vmatpush1.msra.mxu0 0.0
        %6994 = vmatprep.subr.mxu0 0.0
        %6995 = vmatpush1.msra.mxu0 0.0
        %6996 = vmatprep.subr.mxu0 0.0
        %6997 = vmatpush1.msra.mxu0 0.0
        %6998 = vmatprep.subr.mxu0 0.0
        %6999 = vmatpush1.msra.mxu0 0.0
        %7000 = vmatprep.subr.mxu0 0.0
        %7001 = vmatpush1.msra.mxu0 0.0
        %7002 = vmatprep.subr.mxu0 0.0
        %7003 = vmatpush1.msra.mxu0 0.0
        %7004 = vmatprep.mubr.f32.mxu0 0.0
        %v7005 = vand.u32 %v6684, 4294901760
        %v7006 = vsub.f32 %v6684, %v7005
        %v7007 = vand.u32 %v7006, 4294901760
        %7008 = vmatmul.mubr.f32.gmra.mrb[0].mxu0 %v7007
        %v7009 = vpop.f32.mrb[0].mxu0
        %v7010 = vadd.f32 %v6933, %v7009
        %v7011 = vpop.f32.mrb[0].mxu0
        %7012 = vdwg.mxu0
        %7013 = vmatprep.subr.mxu0 0.0
        %v7014 = vand.u32 %v405, 4294901760
        %v7015 = vsub.f32 %v405, %v7014
        %v7016 = vand.u32 %v7015, 4294901760
        %7017 = vmatpush1.msra.mxu0 %v7016
        %7018 = vmatprep.subr.mxu0 0.0
        %v7019 = vand.u32 %v406, 4294901760
        %v7020 = vsub.f32 %v406, %v7019
        %v7021 = vand.u32 %v7020, 4294901760
        %7022 = vmatpush1.msra.mxu0 %v7021
        %7023 = vmatprep.subr.mxu0 0.0
        %v7024 = vand.u32 %v407, 4294901760
        %v7025 = vsub.f32 %v407, %v7024
        %v7026 = vand.u32 %v7025, 4294901760
        %7027 = vmatpush1.msra.mxu0 %v7026
        %7028 = vmatprep.subr.mxu0 0.0
        %v7029 = vand.u32 %v408, 4294901760
        %v7030 = vsub.f32 %v408, %v7029
        %v7031 = vand.u32 %v7030, 4294901760
        %7032 = vmatpush1.msra.mxu0 %v7031
        %7033 = vmatprep.subr.mxu0 0.0
        %7034 = vmatpush1.msra.mxu0 0.0
        %7035 = vmatprep.subr.mxu0 0.0
        %7036 = vmatpush1.msra.mxu0 0.0
        %7037 = vmatprep.subr.mxu0 0.0
        %7038 = vmatpush1.msra.mxu0 0.0
        %7039 = vmatprep.subr.mxu0 0.0
        %7040 = vmatpush1.msra.mxu0 0.0
        %7041 = vmatprep.subr.mxu0 0.0
        %7042 = vmatpush1.msra.mxu0 0.0
        %7043 = vmatprep.subr.mxu0 0.0
        %7044 = vmatpush1.msra.mxu0 0.0
        %7045 = vmatprep.subr.mxu0 0.0
        %7046 = vmatpush1.msra.mxu0 0.0
        %7047 = vmatprep.subr.mxu0 0.0
        %7048 = vmatpush1.msra.mxu0 0.0
        %7049 = vmatprep.subr.mxu0 0.0
        %7050 = vmatpush1.msra.mxu0 0.0
        %7051 = vmatprep.subr.mxu0 0.0
        %7052 = vmatpush1.msra.mxu0 0.0
        %7053 = vmatprep.subr.mxu0 0.0
        %7054 = vmatpush1.msra.mxu0 0.0
        %7055 = vmatprep.subr.mxu0 0.0
        %7056 = vmatpush1.msra.mxu0 0.0
        %7057 = vmatprep.subr.mxu0 0.0
        %7058 = vmatpush1.msra.mxu0 0.0
        %7059 = vmatprep.subr.mxu0 0.0
        %7060 = vmatpush1.msra.mxu0 0.0
        %7061 = vmatprep.subr.mxu0 0.0
        %7062 = vmatpush1.msra.mxu0 0.0
        %7063 = vmatprep.subr.mxu0 0.0
        %7064 = vmatpush1.msra.mxu0 0.0
        %7065 = vmatprep.subr.mxu0 0.0
        %7066 = vmatpush1.msra.mxu0 0.0
        %7067 = vmatprep.subr.mxu0 0.0
        %7068 = vmatpush1.msra.mxu0 0.0
        %7069 = vmatprep.subr.mxu0 0.0
        %7070 = vmatpush1.msra.mxu0 0.0
        %7071 = vmatprep.subr.mxu0 0.0
        %7072 = vmatpush1.msra.mxu0 0.0
        %7073 = vmatprep.subr.mxu0 0.0
        %7074 = vmatpush1.msra.mxu0 0.0
        %7075 = vmatprep.subr.mxu0 0.0
        %7076 = vmatpush1.msra.mxu0 0.0
        %7077 = vmatprep.subr.mxu0 0.0
        %7078 = vmatpush1.msra.mxu0 0.0
        %7079 = vmatprep.subr.mxu0 0.0
        %7080 = vmatpush1.msra.mxu0 0.0
        %7081 = vmatprep.subr.mxu0 0.0
        %7082 = vmatpush1.msra.mxu0 0.0
        %7083 = vmatprep.subr.mxu0 0.0
        %7084 = vmatpush1.msra.mxu0 0.0
        %7085 = vmatprep.subr.mxu0 0.0
        %7086 = vmatpush1.msra.mxu0 0.0
        %7087 = vmatprep.subr.mxu0 0.0
        %7088 = vmatpush1.msra.mxu0 0.0
        %7089 = vmatprep.mubr.f32.mxu0 0.0
        %v7090 = vand.u32 %v6684, 4294901760
        %7091 = vmatmul.mubr.f32.gmra.mrb[0].mxu0 %v7090
        %v7092 = vpop.f32.mrb[0].mxu0
        %v7093 = vadd.f32 %v7010, %v7092
        %v7094 = vpop.f32.mrb[0].mxu0
        %7095 = vdwg.mxu0
        %7096 = vmatprep.subr.mxu0 0.0
        %v7097 = vand.u32 %v405, 4294901760
        %7098 = vmatpush1.msra.mxu0 %v7097
        %7099 = vmatprep.subr.mxu0 0.0
        %v7100 = vand.u32 %v406, 4294901760
        %7101 = vmatpush1.msra.mxu0 %v7100
        %7102 = vmatprep.subr.mxu0 0.0
        %v7103 = vand.u32 %v407, 4294901760
        %7104 = vmatpush1.msra.mxu0 %v7103
        %7105 = vmatprep.subr.mxu0 0.0
        %v7106 = vand.u32 %v408, 4294901760
        %7107 = vmatpush1.msra.mxu0 %v7106
        %7108 = vmatprep.subr.mxu0 0.0
        %7109 = vmatpush1.msra.mxu0 0.0
        %7110 = vmatprep.subr.mxu0 0.0
        %7111 = vmatpush1.msra.mxu0 0.0
        %7112 = vmatprep.subr.mxu0 0.0
        %7113 = vmatpush1.msra.mxu0 0.0
        %7114 = vmatprep.subr.mxu0 0.0
        %7115 = vmatpush1.msra.mxu0 0.0
        %7116 = vmatprep.subr.mxu0 0.0
        %7117 = vmatpush1.msra.mxu0 0.0
        %7118 = vmatprep.subr.mxu0 0.0
        %7119 = vmatpush1.msra.mxu0 0.0
        %7120 = vmatprep.subr.mxu0 0.0
        %7121 = vmatpush1.msra.mxu0 0.0
        %7122 = vmatprep.subr.mxu0 0.0
        %7123 = vmatpush1.msra.mxu0 0.0
        %7124 = vmatprep.subr.mxu0 0.0
        %7125 = vmatpush1.msra.mxu0 0.0
        %7126 = vmatprep.subr.mxu0 0.0
        %7127 = vmatpush1.msra.mxu0 0.0
        %7128 = vmatprep.subr.mxu0 0.0
        %7129 = vmatpush1.msra.mxu0 0.0
        %7130 = vmatprep.subr.mxu0 0.0
        %7131 = vmatpush1.msra.mxu0 0.0
        %7132 = vmatprep.subr.mxu0 0.0
        %7133 = vmatpush1.msra.mxu0 0.0
        %7134 = vmatprep.subr.mxu0 0.0
        %7135 = vmatpush1.msra.mxu0 0.0
        %7136 = vmatprep.subr.mxu0 0.0
        %7137 = vmatpush1.msra.mxu0 0.0
        %7138 = vmatprep.subr.mxu0 0.0
        %7139 = vmatpush1.msra.mxu0 0.0
        %7140 = vmatprep.subr.mxu0 0.0
        %7141 = vmatpush1.msra.mxu0 0.0
        %7142 = vmatprep.subr.mxu0 0.0
        %7143 = vmatpush1.msra.mxu0 0.0
        %7144 = vmatprep.subr.mxu0 0.0
        %7145 = vmatpush1.msra.mxu0 0.0
        %7146 = vmatprep.subr.mxu0 0.0
        %7147 = vmatpush1.msra.mxu0 0.0
        %7148 = vmatprep.subr.mxu0 0.0
        %7149 = vmatpush1.msra.mxu0 0.0
        %7150 = vmatprep.subr.mxu0 0.0
        %7151 = vmatpush1.msra.mxu0 0.0
        %7152 = vmatprep.subr.mxu0 0.0
        %7153 = vmatpush1.msra.mxu0 0.0
        %7154 = vmatprep.subr.mxu0 0.0
        %7155 = vmatpush1.msra.mxu0 0.0
        %7156 = vmatprep.subr.mxu0 0.0
        %7157 = vmatpush1.msra.mxu0 0.0
        %7158 = vmatprep.subr.mxu0 0.0
        %7159 = vmatpush1.msra.mxu0 0.0
        %7160 = vmatprep.subr.mxu0 0.0
        %7161 = vmatpush1.msra.mxu0 0.0
        %7162 = vmatprep.subr.mxu0 0.0
        %7163 = vmatpush1.msra.mxu0 0.0
        %7164 = vmatprep.mubr.f32.mxu0 0.0
        %v7165 = vand.u32 %v6684, 4294901760
        %7166 = vmatmul.mubr.f32.gmra.mrb[0].mxu0 %v7165
        %v7167 = vpop.f32.mrb[0].mxu0
        %v7168 = vadd.f32 %v7093, %v7167
        %v7169 = vpop.f32.mrb[0].mxu0
        %7170 = vdwg.mxu0
        %v7172 = vsel %vm1371, %v6234, 0
        %7174 = vmatprep.subr.mxu0 0.0
        %v7175 = vand.u32 %v401, 4294901760
        %7176 = vmatpush1.msra.mxu0 %v7175
        %7177 = vmatprep.subr.mxu0 0.0
        %v7178 = vand.u32 %v402, 4294901760
        %7179 = vmatpush1.msra.mxu0 %v7178
        %7180 = vmatprep.subr.mxu0 0.0
        %v7181 = vand.u32 %v403, 4294901760
        %7182 = vmatpush1.msra.mxu0 %v7181
        %7183 = vmatprep.subr.mxu0 0.0
        %v7184 = vand.u32 %v404, 4294901760
        %7185 = vmatpush1.msra.mxu0 %v7184
        %7186 = vmatprep.subr.mxu0 0.0
        %7187 = vmatpush1.msra.mxu0 0.0
        %7188 = vmatprep.subr.mxu0 0.0
        %7189 = vmatpush1.msra.mxu0 0.0
        %7190 = vmatprep.subr.mxu0 0.0
        %7191 = vmatpush1.msra.mxu0 0.0
        %7192 = vmatprep.subr.mxu0 0.0
        %7193 = vmatpush1.msra.mxu0 0.0
        %7194 = vmatprep.subr.mxu0 0.0
        %7195 = vmatpush1.msra.mxu0 0.0
        %7196 = vmatprep.subr.mxu0 0.0
        %7197 = vmatpush1.msra.mxu0 0.0
        %7198 = vmatprep.subr.mxu0 0.0
        %7199 = vmatpush1.msra.mxu0 0.0
        %7200 = vmatprep.subr.mxu0 0.0
        %7201 = vmatpush1.msra.mxu0 0.0
        %7202 = vmatprep.subr.mxu0 0.0
        %7203 = vmatpush1.msra.mxu0 0.0
        %7204 = vmatprep.subr.mxu0 0.0
        %7205 = vmatpush1.msra.mxu0 0.0
        %7206 = vmatprep.subr.mxu0 0.0
        %7207 = vmatpush1.msra.mxu0 0.0
        %7208 = vmatprep.subr.mxu0 0.0
        %7209 = vmatpush1.msra.mxu0 0.0
        %7210 = vmatprep.subr.mxu0 0.0
        %7211 = vmatpush1.msra.mxu0 0.0
        %7212 = vmatprep.subr.mxu0 0.0
        %7213 = vmatpush1.msra.mxu0 0.0
        %7214 = vmatprep.subr.mxu0 0.0
        %7215 = vmatpush1.msra.mxu0 0.0
        %7216 = vmatprep.subr.mxu0 0.0
        %7217 = vmatpush1.msra.mxu0 0.0
        %7218 = vmatprep.subr.mxu0 0.0
        %7219 = vmatpush1.msra.mxu0 0.0
        %7220 = vmatprep.subr.mxu0 0.0
        %7221 = vmatpush1.msra.mxu0 0.0
        %7222 = vmatprep.subr.mxu0 0.0
        %7223 = vmatpush1.msra.mxu0 0.0
        %7224 = vmatprep.subr.mxu0 0.0
        %7225 = vmatpush1.msra.mxu0 0.0
        %7226 = vmatprep.subr.mxu0 0.0
        %7227 = vmatpush1.msra.mxu0 0.0
        %7228 = vmatprep.subr.mxu0 0.0
        %7229 = vmatpush1.msra.mxu0 0.0
        %7230 = vmatprep.subr.mxu0 0.0
        %7231 = vmatpush1.msra.mxu0 0.0
        %7232 = vmatprep.subr.mxu0 0.0
        %7233 = vmatpush1.msra.mxu0 0.0
        %7234 = vmatprep.subr.mxu0 0.0
        %7235 = vmatpush1.msra.mxu0 0.0
        %7236 = vmatprep.subr.mxu0 0.0
        %7237 = vmatpush1.msra.mxu0 0.0
        %7238 = vmatprep.subr.mxu0 0.0
        %7239 = vmatpush1.msra.mxu0 0.0
        %7240 = vmatprep.subr.mxu0 0.0
        %7241 = vmatpush1.msra.mxu0 0.0
        %7242 = vmatprep.mubr.f32.mxu0 0.0
        %v7243 = vand.u32 %v7172, 4294901760
        %v7244 = vsub.f32 %v7172, %v7243
        %v7245 = vand.u32 %v7244, 4294901760
        %v7246 = vsub.f32 %v7244, %v7245
        %v7247 = vand.u32 %v7246, 4294901760
        %7248 = vmatmul.mubr.f32.gmra.mrb[0].mxu0 %v7247
        %v7249 = vpop.f32.mrb[0].mxu0
        %v7250 = vadd.f32 %v7168, %v7249
        %v7251 = vpop.f32.mrb[0].mxu0
        %7252 = vdwg.mxu0
        %7253 = vmatprep.subr.mxu0 0.0
        %v7254 = vand.u32 %v401, 4294901760
        %v7255 = vsub.f32 %v401, %v7254
        %v7256 = vand.u32 %v7255, 4294901760
        %v7257 = vsub.f32 %v7255, %v7256
        %v7258 = vand.u32 %v7257, 4294901760
        %7259 = vmatpush1.msra.mxu0 %v7258
        %7260 = vmatprep.subr.mxu0 0.0
        %v7261 = vand.u32 %v402, 4294901760
        %v7262 = vsub.f32 %v402, %v7261
        %v7263 = vand.u32 %v7262, 4294901760
        %v7264 = vsub.f32 %v7262, %v7263
        %v7265 = vand.u32 %v7264, 4294901760
        %7266 = vmatpush1.msra.mxu0 %v7265
        %7267 = vmatprep.subr.mxu0 0.0
        %v7268 = vand.u32 %v403, 4294901760
        %v7269 = vsub.f32 %v403, %v7268
        %v7270 = vand.u32 %v7269, 4294901760
        %v7271 = vsub.f32 %v7269, %v7270
        %v7272 = vand.u32 %v7271, 4294901760
        %7273 = vmatpush1.msra.mxu0 %v7272
        %7274 = vmatprep.subr.mxu0 0.0
        %v7275 = vand.u32 %v404, 4294901760
        %v7276 = vsub.f32 %v404, %v7275
        %v7277 = vand.u32 %v7276, 4294901760
        %v7278 = vsub.f32 %v7276, %v7277
        %v7279 = vand.u32 %v7278, 4294901760
        %7280 = vmatpush1.msra.mxu0 %v7279
        %7281 = vmatprep.subr.mxu0 0.0
        %7282 = vmatpush1.msra.mxu0 0.0
        %7283 = vmatprep.subr.mxu0 0.0
        %7284 = vmatpush1.msra.mxu0 0.0
        %7285 = vmatprep.subr.mxu0 0.0
        %7286 = vmatpush1.msra.mxu0 0.0
        %7287 = vmatprep.subr.mxu0 0.0
        %7288 = vmatpush1.msra.mxu0 0.0
        %7289 = vmatprep.subr.mxu0 0.0
        %7290 = vmatpush1.msra.mxu0 0.0
        %7291 = vmatprep.subr.mxu0 0.0
        %7292 = vmatpush1.msra.mxu0 0.0
        %7293 = vmatprep.subr.mxu0 0.0
        %7294 = vmatpush1.msra.mxu0 0.0
        %7295 = vmatprep.subr.mxu0 0.0
        %7296 = vmatpush1.msra.mxu0 0.0
        %7297 = vmatprep.subr.mxu0 0.0
        %7298 = vmatpush1.msra.mxu0 0.0
        %7299 = vmatprep.subr.mxu0 0.0
        %7300 = vmatpush1.msra.mxu0 0.0
        %7301 = vmatprep.subr.mxu0 0.0
        %7302 = vmatpush1.msra.mxu0 0.0
        %7303 = vmatprep.subr.mxu0 0.0
        %7304 = vmatpush1.msra.mxu0 0.0
        %7305 = vmatprep.subr.mxu0 0.0
        %7306 = vmatpush1.msra.mxu0 0.0
        %7307 = vmatprep.subr.mxu0 0.0
        %7308 = vmatpush1.msra.mxu0 0.0
        %7309 = vmatprep.subr.mxu0 0.0
        %7310 = vmatpush1.msra.mxu0 0.0
        %7311 = vmatprep.subr.mxu0 0.0
        %7312 = vmatpush1.msra.mxu0 0.0
        %7313 = vmatprep.subr.mxu0 0.0
        %7314 = vmatpush1.msra.mxu0 0.0
        %7315 = vmatprep.subr.mxu0 0.0
        %7316 = vmatpush1.msra.mxu0 0.0
        %7317 = vmatprep.subr.mxu0 0.0
        %7318 = vmatpush1.msra.mxu0 0.0
        %7319 = vmatprep.subr.mxu0 0.0
        %7320 = vmatpush1.msra.mxu0 0.0
        %7321 = vmatprep.subr.mxu0 0.0
        %7322 = vmatpush1.msra.mxu0 0.0
        %7323 = vmatprep.subr.mxu0 0.0
        %7324 = vmatpush1.msra.mxu0 0.0
        %7325 = vmatprep.subr.mxu0 0.0
        %7326 = vmatpush1.msra.mxu0 0.0
        %7327 = vmatprep.subr.mxu0 0.0
        %7328 = vmatpush1.msra.mxu0 0.0
        %7329 = vmatprep.subr.mxu0 0.0
        %7330 = vmatpush1.msra.mxu0 0.0
        %7331 = vmatprep.subr.mxu0 0.0
        %7332 = vmatpush1.msra.mxu0 0.0
        %7333 = vmatprep.subr.mxu0 0.0
        %7334 = vmatpush1.msra.mxu0 0.0
        %7335 = vmatprep.subr.mxu0 0.0
        %7336 = vmatpush1.msra.mxu0 0.0
        %7337 = vmatprep.mubr.f32.mxu0 0.0
        %v7338 = vand.u32 %v7172, 4294901760
        %7339 = vmatmul.mubr.f32.gmra.mrb[0].mxu0 %v7338
        %v7340 = vpop.f32.mrb[0].mxu0
        %v7341 = vadd.f32 %v7250, %v7340
        %v7342 = vpop.f32.mrb[0].mxu0
        %7343 = vdwg.mxu0
        %7344 = vmatprep.subr.mxu0 0.0
        %v7345 = vand.u32 %v401, 4294901760
        %v7346 = vsub.f32 %v401, %v7345
        %7347 = vmatpush1.msra.mxu0 %v7346
        %7348 = vmatprep.subr.mxu0 0.0
        %v7349 = vand.u32 %v402, 4294901760
        %v7350 = vsub.f32 %v402, %v7349
        %7351 = vmatpush1.msra.mxu0 %v7350
        %7352 = vmatprep.subr.mxu0 0.0
        %v7353 = vand.u32 %v403, 4294901760
        %v7354 = vsub.f32 %v403, %v7353
        %7355 = vmatpush1.msra.mxu0 %v7354
        %7356 = vmatprep.subr.mxu0 0.0
        %v7357 = vand.u32 %v404, 4294901760
        %v7358 = vsub.f32 %v404, %v7357
        %7359 = vmatpush1.msra.mxu0 %v7358
        %7360 = vmatprep.subr.mxu0 0.0
        %7361 = vmatpush1.msra.mxu0 0.0
        %7362 = vmatprep.subr.mxu0 0.0
        %7363 = vmatpush1.msra.mxu0 0.0
        %7364 = vmatprep.subr.mxu0 0.0
        %7365 = vmatpush1.msra.mxu0 0.0
        %7366 = vmatprep.subr.mxu0 0.0
        %7367 = vmatpush1.msra.mxu0 0.0
        %7368 = vmatprep.subr.mxu0 0.0
        %7369 = vmatpush1.msra.mxu0 0.0
        %7370 = vmatprep.subr.mxu0 0.0
        %7371 = vmatpush1.msra.mxu0 0.0
        %7372 = vmatprep.subr.mxu0 0.0
        %7373 = vmatpush1.msra.mxu0 0.0
        %7374 = vmatprep.subr.mxu0 0.0
        %7375 = vmatpush1.msra.mxu0 0.0
        %7376 = vmatprep.subr.mxu0 0.0
        %7377 = vmatpush1.msra.mxu0 0.0
        %7378 = vmatprep.subr.mxu0 0.0
        %7379 = vmatpush1.msra.mxu0 0.0
        %7380 = vmatprep.subr.mxu0 0.0
        %7381 = vmatpush1.msra.mxu0 0.0
        %7382 = vmatprep.subr.mxu0 0.0
        %7383 = vmatpush1.msra.mxu0 0.0
        %7384 = vmatprep.subr.mxu0 0.0
        %7385 = vmatpush1.msra.mxu0 0.0
        %7386 = vmatprep.subr.mxu0 0.0
        %7387 = vmatpush1.msra.mxu0 0.0
        %7388 = vmatprep.subr.mxu0 0.0
        %7389 = vmatpush1.msra.mxu0 0.0
        %7390 = vmatprep.subr.mxu0 0.0
        %7391 = vmatpush1.msra.mxu0 0.0
        %7392 = vmatprep.subr.mxu0 0.0
        %7393 = vmatpush1.msra.mxu0 0.0
        %7394 = vmatprep.subr.mxu0 0.0
        %7395 = vmatpush1.msra.mxu0 0.0
        %7396 = vmatprep.subr.mxu0 0.0
        %7397 = vmatpush1.msra.mxu0 0.0
        %7398 = vmatprep.subr.mxu0 0.0
        %7399 = vmatpush1.msra.mxu0 0.0
        %7400 = vmatprep.subr.mxu0 0.0
        %7401 = vmatpush1.msra.mxu0 0.0
        %7402 = vmatprep.subr.mxu0 0.0
        %7403 = vmatpush1.msra.mxu0 0.0
        %7404 = vmatprep.subr.mxu0 0.0
        %7405 = vmatpush1.msra.mxu0 0.0
        %7406 = vmatprep.subr.mxu0 0.0
        %7407 = vmatpush1.msra.mxu0 0.0
        %7408 = vmatprep.subr.mxu0 0.0
        %7409 = vmatpush1.msra.mxu0 0.0
        %7410 = vmatprep.subr.mxu0 0.0
        %7411 = vmatpush1.msra.mxu0 0.0
        %7412 = vmatprep.subr.mxu0 0.0
        %7413 = vmatpush1.msra.mxu0 0.0
        %7414 = vmatprep.subr.mxu0 0.0
        %7415 = vmatpush1.msra.mxu0 0.0
        %7416 = vmatprep.mubr.f32.mxu0 0.0
        %v7417 = vand.u32 %v7172, 4294901760
        %v7418 = vsub.f32 %v7172, %v7417
        %7419 = vmatmul.mubr.f32.gmra.mrb[0].mxu0 %v7418
        %v7420 = vpop.f32.mrb[0].mxu0
        %v7421 = vadd.f32 %v7341, %v7420
        %v7422 = vpop.f32.mrb[0].mxu0
        %7423 = vdwg.mxu0
        %7424 = vmatprep.subr.mxu0 0.0
        %v7425 = vand.u32 %v401, 4294901760
        %7426 = vmatpush1.msra.mxu0 %v7425
        %7427 = vmatprep.subr.mxu0 0.0
        %v7428 = vand.u32 %v402, 4294901760
        %7429 = vmatpush1.msra.mxu0 %v7428
        %7430 = vmatprep.subr.mxu0 0.0
        %v7431 = vand.u32 %v403, 4294901760
        %7432 = vmatpush1.msra.mxu0 %v7431
        %7433 = vmatprep.subr.mxu0 0.0
        %v7434 = vand.u32 %v404, 4294901760
        %7435 = vmatpush1.msra.mxu0 %v7434
        %7436 = vmatprep.subr.mxu0 0.0
        %7437 = vmatpush1.msra.mxu0 0.0
        %7438 = vmatprep.subr.mxu0 0.0
        %7439 = vmatpush1.msra.mxu0 0.0
        %7440 = vmatprep.subr.mxu0 0.0
        %7441 = vmatpush1.msra.mxu0 0.0
        %7442 = vmatprep.subr.mxu0 0.0
        %7443 = vmatpush1.msra.mxu0 0.0
        %7444 = vmatprep.subr.mxu0 0.0
        %7445 = vmatpush1.msra.mxu0 0.0
        %7446 = vmatprep.subr.mxu0 0.0
        %7447 = vmatpush1.msra.mxu0 0.0
        %7448 = vmatprep.subr.mxu0 0.0
        %7449 = vmatpush1.msra.mxu0 0.0
        %7450 = vmatprep.subr.mxu0 0.0
        %7451 = vmatpush1.msra.mxu0 0.0
        %7452 = vmatprep.subr.mxu0 0.0
        %7453 = vmatpush1.msra.mxu0 0.0
        %7454 = vmatprep.subr.mxu0 0.0
        %7455 = vmatpush1.msra.mxu0 0.0
        %7456 = vmatprep.subr.mxu0 0.0
        %7457 = vmatpush1.msra.mxu0 0.0
        %7458 = vmatprep.subr.mxu0 0.0
        %7459 = vmatpush1.msra.mxu0 0.0
        %7460 = vmatprep.subr.mxu0 0.0
        %7461 = vmatpush1.msra.mxu0 0.0
        %7462 = vmatprep.subr.mxu0 0.0
        %7463 = vmatpush1.msra.mxu0 0.0
        %7464 = vmatprep.subr.mxu0 0.0
        %7465 = vmatpush1.msra.mxu0 0.0
        %7466 = vmatprep.subr.mxu0 0.0
        %7467 = vmatpush1.msra.mxu0 0.0
        %7468 = vmatprep.subr.mxu0 0.0
        %7469 = vmatpush1.msra.mxu0 0.0
        %7470 = vmatprep.subr.mxu0 0.0
        %7471 = vmatpush1.msra.mxu0 0.0
        %7472 = vmatprep.subr.mxu0 0.0
        %7473 = vmatpush1.msra.mxu0 0.0
        %7474 = vmatprep.subr.mxu0 0.0
        %7475 = vmatpush1.msra.mxu0 0.0
        %7476 = vmatprep.subr.mxu0 0.0
        %7477 = vmatpush1.msra.mxu0 0.0
        %7478 = vmatprep.subr.mxu0 0.0
        %7479 = vmatpush1.msra.mxu0 0.0
        %7480 = vmatprep.subr.mxu0 0.0
        %7481 = vmatpush1.msra.mxu0 0.0
        %7482 = vmatprep.subr.mxu0 0.0
        %7483 = vmatpush1.msra.mxu0 0.0
        %7484 = vmatprep.subr.mxu0 0.0
        %7485 = vmatpush1.msra.mxu0 0.0
        %7486 = vmatprep.subr.mxu0 0.0
        %7487 = vmatpush1.msra.mxu0 0.0
        %7488 = vmatprep.subr.mxu0 0.0
        %7489 = vmatpush1.msra.mxu0 0.0
        %7490 = vmatprep.subr.mxu0 0.0
        %7491 = vmatpush1.msra.mxu0 0.0
        %7492 = vmatprep.mubr.f32.mxu0 0.0
        %v7493 = vand.u32 %v7172, 4294901760
        %v7494 = vsub.f32 %v7172, %v7493
        %v7495 = vand.u32 %v7494, 4294901760
        %7496 = vmatmul.mubr.f32.gmra.mrb[0].mxu0 %v7495
        %v7497 = vpop.f32.mrb[0].mxu0
        %v7498 = vadd.f32 %v7421, %v7497
        %v7499 = vpop.f32.mrb[0].mxu0
        %7500 = vdwg.mxu0
        %7501 = vmatprep.subr.mxu0 0.0
        %v7502 = vand.u32 %v401, 4294901760
        %v7503 = vsub.f32 %v401, %v7502
        %v7504 = vand.u32 %v7503, 4294901760
        %7505 = vmatpush1.msra.mxu0 %v7504
        %7506 = vmatprep.subr.mxu0 0.0
        %v7507 = vand.u32 %v402, 4294901760
        %v7508 = vsub.f32 %v402, %v7507
        %v7509 = vand.u32 %v7508, 4294901760
        %7510 = vmatpush1.msra.mxu0 %v7509
        %7511 = vmatprep.subr.mxu0 0.0
        %v7512 = vand.u32 %v403, 4294901760
        %v7513 = vsub.f32 %v403, %v7512
        %v7514 = vand.u32 %v7513, 4294901760
        %7515 = vmatpush1.msra.mxu0 %v7514
        %7516 = vmatprep.subr.mxu0 0.0
        %v7517 = vand.u32 %v404, 4294901760
        %v7518 = vsub.f32 %v404, %v7517
        %v7519 = vand.u32 %v7518, 4294901760
        %7520 = vmatpush1.msra.mxu0 %v7519
        %7521 = vmatprep.subr.mxu0 0.0
        %7522 = vmatpush1.msra.mxu0 0.0
        %7523 = vmatprep.subr.mxu0 0.0
        %7524 = vmatpush1.msra.mxu0 0.0
        %7525 = vmatprep.subr.mxu0 0.0
        %7526 = vmatpush1.msra.mxu0 0.0
        %7527 = vmatprep.subr.mxu0 0.0
        %7528 = vmatpush1.msra.mxu0 0.0
        %7529 = vmatprep.subr.mxu0 0.0
        %7530 = vmatpush1.msra.mxu0 0.0
        %7531 = vmatprep.subr.mxu0 0.0
        %7532 = vmatpush1.msra.mxu0 0.0
        %7533 = vmatprep.subr.mxu0 0.0
        %7534 = vmatpush1.msra.mxu0 0.0
        %7535 = vmatprep.subr.mxu0 0.0
        %7536 = vmatpush1.msra.mxu0 0.0
        %7537 = vmatprep.subr.mxu0 0.0
        %7538 = vmatpush1.msra.mxu0 0.0
        %7539 = vmatprep.subr.mxu0 0.0
        %7540 = vmatpush1.msra.mxu0 0.0
        %7541 = vmatprep.subr.mxu0 0.0
        %7542 = vmatpush1.msra.mxu0 0.0
        %7543 = vmatprep.subr.mxu0 0.0
        %7544 = vmatpush1.msra.mxu0 0.0
        %7545 = vmatprep.subr.mxu0 0.0
        %7546 = vmatpush1.msra.mxu0 0.0
        %7547 = vmatprep.subr.mxu0 0.0
        %7548 = vmatpush1.msra.mxu0 0.0
        %7549 = vmatprep.subr.mxu0 0.0
        %7550 = vmatpush1.msra.mxu0 0.0
        %7551 = vmatprep.subr.mxu0 0.0
        %7552 = vmatpush1.msra.mxu0 0.0
        %7553 = vmatprep.subr.mxu0 0.0
        %7554 = vmatpush1.msra.mxu0 0.0
        %7555 = vmatprep.subr.mxu0 0.0
        %7556 = vmatpush1.msra.mxu0 0.0
        %7557 = vmatprep.subr.mxu0 0.0
        %7558 = vmatpush1.msra.mxu0 0.0
        %7559 = vmatprep.subr.mxu0 0.0
        %7560 = vmatpush1.msra.mxu0 0.0
        %7561 = vmatprep.subr.mxu0 0.0
        %7562 = vmatpush1.msra.mxu0 0.0
        %7563 = vmatprep.subr.mxu0 0.0
        %7564 = vmatpush1.msra.mxu0 0.0
        %7565 = vmatprep.subr.mxu0 0.0
        %7566 = vmatpush1.msra.mxu0 0.0
        %7567 = vmatprep.subr.mxu0 0.0
        %7568 = vmatpush1.msra.mxu0 0.0
        %7569 = vmatprep.subr.mxu0 0.0
        %7570 = vmatpush1.msra.mxu0 0.0
        %7571 = vmatprep.subr.mxu0 0.0
        %7572 = vmatpush1.msra.mxu0 0.0
        %7573 = vmatprep.subr.mxu0 0.0
        %7574 = vmatpush1.msra.mxu0 0.0
        %7575 = vmatprep.subr.mxu0 0.0
        %7576 = vmatpush1.msra.mxu0 0.0
        %7577 = vmatprep.mubr.f32.mxu0 0.0
        %v7578 = vand.u32 %v7172, 4294901760
        %7579 = vmatmul.mubr.f32.gmra.mrb[0].mxu0 %v7578
        %v7580 = vpop.f32.mrb[0].mxu0
        %v7581 = vadd.f32 %v7498, %v7580
        %v7582 = vpop.f32.mrb[0].mxu0
        %7583 = vdwg.mxu0
        %7584 = vmatprep.subr.mxu0 0.0
        %v7585 = vand.u32 %v401, 4294901760
        %7586 = vmatpush1.msra.mxu0 %v7585
        %7587 = vmatprep.subr.mxu0 0.0
        %v7588 = vand.u32 %v402, 4294901760
        %7589 = vmatpush1.msra.mxu0 %v7588
        %7590 = vmatprep.subr.mxu0 0.0
        %v7591 = vand.u32 %v403, 4294901760
        %7592 = vmatpush1.msra.mxu0 %v7591
        %7593 = vmatprep.subr.mxu0 0.0
        %v7594 = vand.u32 %v404, 4294901760
        %7595 = vmatpush1.msra.mxu0 %v7594
        %7596 = vmatprep.subr.mxu0 0.0
        %7597 = vmatpush1.msra.mxu0 0.0
        %7598 = vmatprep.subr.mxu0 0.0
        %7599 = vmatpush1.msra.mxu0 0.0
        %7600 = vmatprep.subr.mxu0 0.0
        %7601 = vmatpush1.msra.mxu0 0.0
        %7602 = vmatprep.subr.mxu0 0.0
        %7603 = vmatpush1.msra.mxu0 0.0
        %7604 = vmatprep.subr.mxu0 0.0
        %7605 = vmatpush1.msra.mxu0 0.0
        %7606 = vmatprep.subr.mxu0 0.0
        %7607 = vmatpush1.msra.mxu0 0.0
        %7608 = vmatprep.subr.mxu0 0.0
        %7609 = vmatpush1.msra.mxu0 0.0
        %7610 = vmatprep.subr.mxu0 0.0
        %7611 = vmatpush1.msra.mxu0 0.0
        %7612 = vmatprep.subr.mxu0 0.0
        %7613 = vmatpush1.msra.mxu0 0.0
        %7614 = vmatprep.subr.mxu0 0.0
        %7615 = vmatpush1.msra.mxu0 0.0
        %7616 = vmatprep.subr.mxu0 0.0
        %7617 = vmatpush1.msra.mxu0 0.0
        %7618 = vmatprep.subr.mxu0 0.0
        %7619 = vmatpush1.msra.mxu0 0.0
        %7620 = vmatprep.subr.mxu0 0.0
        %7621 = vmatpush1.msra.mxu0 0.0
        %7622 = vmatprep.subr.mxu0 0.0
        %7623 = vmatpush1.msra.mxu0 0.0
        %7624 = vmatprep.subr.mxu0 0.0
        %7625 = vmatpush1.msra.mxu0 0.0
        %7626 = vmatprep.subr.mxu0 0.0
        %7627 = vmatpush1.msra.mxu0 0.0
        %7628 = vmatprep.subr.mxu0 0.0
        %7629 = vmatpush1.msra.mxu0 0.0
        %7630 = vmatprep.subr.mxu0 0.0
        %7631 = vmatpush1.msra.mxu0 0.0
        %7632 = vmatprep.subr.mxu0 0.0
        %7633 = vmatpush1.msra.mxu0 0.0
        %7634 = vmatprep.subr.mxu0 0.0
        %7635 = vmatpush1.msra.mxu0 0.0
        %7636 = vmatprep.subr.mxu0 0.0
        %7637 = vmatpush1.msra.mxu0 0.0
        %7638 = vmatprep.subr.mxu0 0.0
        %7639 = vmatpush1.msra.mxu0 0.0
        %7640 = vmatprep.subr.mxu0 0.0
        %7641 = vmatpush1.msra.mxu0 0.0
        %7642 = vmatprep.subr.mxu0 0.0
        %7643 = vmatpush1.msra.mxu0 0.0
        %7644 = vmatprep.subr.mxu0 0.0
        %7645 = vmatpush1.msra.mxu0 0.0
        %7646 = vmatprep.subr.mxu0 0.0
        %7647 = vmatpush1.msra.mxu0 0.0
        %7648 = vmatprep.subr.mxu0 0.0
        %7649 = vmatpush1.msra.mxu0 0.0
        %7650 = vmatprep.subr.mxu0 0.0
        %7651 = vmatpush1.msra.mxu0 0.0
        %7652 = vmatprep.mubr.f32.mxu0 0.0
        %v7653 = vand.u32 %v7172, 4294901760
        %7654 = vmatmul.mubr.f32.gmra.mrb[0].mxu0 %v7653
        %v7655 = vpop.f32.mrb[0].mxu0
        %v7656 = vadd.f32 %v7581, %v7655
        %v7657 = vpop.f32.mrb[0].mxu0
        %7658 = vdwg.mxu0
        %v7660 = vsel %vm1371, %v5790, 0
        %7662 = vmatprep.subr.mxu0 0.0
        %v7663 = vand.u32 %v409, 4294901760
        %7664 = vmatpush1.msra.mxu0 %v7663
        %7665 = vmatprep.subr.mxu0 0.0
        %v7666 = vand.u32 %v410, 4294901760
        %7667 = vmatpush1.msra.mxu0 %v7666
        %7668 = vmatprep.subr.mxu0 0.0
        %v7669 = vand.u32 %v411, 4294901760
        %7670 = vmatpush1.msra.mxu0 %v7669
        %7671 = vmatprep.subr.mxu0 0.0
        %v7672 = vand.u32 %v412, 4294901760
        %7673 = vmatpush1.msra.mxu0 %v7672
        %7674 = vmatprep.subr.mxu0 0.0
        %7675 = vmatpush1.msra.mxu0 0.0
        %7676 = vmatprep.subr.mxu0 0.0
        %7677 = vmatpush1.msra.mxu0 0.0
        %7678 = vmatprep.subr.mxu0 0.0
        %7679 = vmatpush1.msra.mxu0 0.0
        %7680 = vmatprep.subr.mxu0 0.0
        %7681 = vmatpush1.msra.mxu0 0.0
        %7682 = vmatprep.subr.mxu0 0.0
        %7683 = vmatpush1.msra.mxu0 0.0
        %7684 = vmatprep.subr.mxu0 0.0
        %7685 = vmatpush1.msra.mxu0 0.0
        %7686 = vmatprep.subr.mxu0 0.0
        %7687 = vmatpush1.msra.mxu0 0.0
        %7688 = vmatprep.subr.mxu0 0.0
        %7689 = vmatpush1.msra.mxu0 0.0
        %7690 = vmatprep.subr.mxu0 0.0
        %7691 = vmatpush1.msra.mxu0 0.0
        %7692 = vmatprep.subr.mxu0 0.0
        %7693 = vmatpush1.msra.mxu0 0.0
        %7694 = vmatprep.subr.mxu0 0.0
        %7695 = vmatpush1.msra.mxu0 0.0
        %7696 = vmatprep.subr.mxu0 0.0
        %7697 = vmatpush1.msra.mxu0 0.0
        %7698 = vmatprep.subr.mxu0 0.0
        %7699 = vmatpush1.msra.mxu0 0.0
        %7700 = vmatprep.subr.mxu0 0.0
        %7701 = vmatpush1.msra.mxu0 0.0
        %7702 = vmatprep.subr.mxu0 0.0
        %7703 = vmatpush1.msra.mxu0 0.0
        %7704 = vmatprep.subr.mxu0 0.0
        %7705 = vmatpush1.msra.mxu0 0.0
        %7706 = vmatprep.subr.mxu0 0.0
        %7707 = vmatpush1.msra.mxu0 0.0
        %7708 = vmatprep.subr.mxu0 0.0
        %7709 = vmatpush1.msra.mxu0 0.0
        %7710 = vmatprep.subr.mxu0 0.0
        %7711 = vmatpush1.msra.mxu0 0.0
        %7712 = vmatprep.subr.mxu0 0.0
        %7713 = vmatpush1.msra.mxu0 0.0
        %7714 = vmatprep.subr.mxu0 0.0
        %7715 = vmatpush1.msra.mxu0 0.0
        %7716 = vmatprep.subr.mxu0 0.0
        %7717 = vmatpush1.msra.mxu0 0.0
        %7718 = vmatprep.subr.mxu0 0.0
        %7719 = vmatpush1.msra.mxu0 0.0
        %7720 = vmatprep.subr.mxu0 0.0
        %7721 = vmatpush1.msra.mxu0 0.0
        %7722 = vmatprep.subr.mxu0 0.0
        %7723 = vmatpush1.msra.mxu0 0.0
        %7724 = vmatprep.subr.mxu0 0.0
        %7725 = vmatpush1.msra.mxu0 0.0
        %7726 = vmatprep.subr.mxu0 0.0
        %7727 = vmatpush1.msra.mxu0 0.0
        %7728 = vmatprep.subr.mxu0 0.0
        %7729 = vmatpush1.msra.mxu0 0.0
        %7730 = vmatprep.mubr.f32.mxu0 0.0
        %v7731 = vand.u32 %v7660, 4294901760
        %v7732 = vsub.f32 %v7660, %v7731
        %v7733 = vand.u32 %v7732, 4294901760
        %v7734 = vsub.f32 %v7732, %v7733
        %v7735 = vand.u32 %v7734, 4294901760
        %7736 = vmatmul.mubr.f32.gmra.mrb[0].mxu0 %v7735
        %v7737 = vpop.f32.mrb[0].mxu0
        %v7738 = vadd.f32 0.0, %v7737
        %v7739 = vpop.f32.mrb[0].mxu0
        %7740 = vdwg.mxu0
        %7741 = vmatprep.subr.mxu0 0.0
        %v7742 = vand.u32 %v409, 4294901760
        %v7743 = vsub.f32 %v409, %v7742
        %v7744 = vand.u32 %v7743, 4294901760
        %v7745 = vsub.f32 %v7743, %v7744
        %v7746 = vand.u32 %v7745, 4294901760
        %7747 = vmatpush1.msra.mxu0 %v7746
        %7748 = vmatprep.subr.mxu0 0.0
        %v7749 = vand.u32 %v410, 4294901760
        %v7750 = vsub.f32 %v410, %v7749
        %v7751 = vand.u32 %v7750, 4294901760
        %v7752 = vsub.f32 %v7750, %v7751
        %v7753 = vand.u32 %v7752, 4294901760
        %7754 = vmatpush1.msra.mxu0 %v7753
        %7755 = vmatprep.subr.mxu0 0.0
        %v7756 = vand.u32 %v411, 4294901760
        %v7757 = vsub.f32 %v411, %v7756
        %v7758 = vand.u32 %v7757, 4294901760
        %v7759 = vsub.f32 %v7757, %v7758
        %v7760 = vand.u32 %v7759, 4294901760
        %7761 = vmatpush1.msra.mxu0 %v7760
        %7762 = vmatprep.subr.mxu0 0.0
        %v7763 = vand.u32 %v412, 4294901760
        %v7764 = vsub.f32 %v412, %v7763
        %v7765 = vand.u32 %v7764, 4294901760
        %v7766 = vsub.f32 %v7764, %v7765
        %v7767 = vand.u32 %v7766, 4294901760
        %7768 = vmatpush1.msra.mxu0 %v7767
        %7769 = vmatprep.subr.mxu0 0.0
        %7770 = vmatpush1.msra.mxu0 0.0
        %7771 = vmatprep.subr.mxu0 0.0
        %7772 = vmatpush1.msra.mxu0 0.0
        %7773 = vmatprep.subr.mxu0 0.0
        %7774 = vmatpush1.msra.mxu0 0.0
        %7775 = vmatprep.subr.mxu0 0.0
        %7776 = vmatpush1.msra.mxu0 0.0
        %7777 = vmatprep.subr.mxu0 0.0
        %7778 = vmatpush1.msra.mxu0 0.0
        %7779 = vmatprep.subr.mxu0 0.0
        %7780 = vmatpush1.msra.mxu0 0.0
        %7781 = vmatprep.subr.mxu0 0.0
        %7782 = vmatpush1.msra.mxu0 0.0
        %7783 = vmatprep.subr.mxu0 0.0
        %7784 = vmatpush1.msra.mxu0 0.0
        %7785 = vmatprep.subr.mxu0 0.0
        %7786 = vmatpush1.msra.mxu0 0.0
        %7787 = vmatprep.subr.mxu0 0.0
        %7788 = vmatpush1.msra.mxu0 0.0
        %7789 = vmatprep.subr.mxu0 0.0
        %7790 = vmatpush1.msra.mxu0 0.0
        %7791 = vmatprep.subr.mxu0 0.0
        %7792 = vmatpush1.msra.mxu0 0.0
        %7793 = vmatprep.subr.mxu0 0.0
        %7794 = vmatpush1.msra.mxu0 0.0
        %7795 = vmatprep.subr.mxu0 0.0
        %7796 = vmatpush1.msra.mxu0 0.0
        %7797 = vmatprep.subr.mxu0 0.0
        %7798 = vmatpush1.msra.mxu0 0.0
        %7799 = vmatprep.subr.mxu0 0.0
        %7800 = vmatpush1.msra.mxu0 0.0
        %7801 = vmatprep.subr.mxu0 0.0
        %7802 = vmatpush1.msra.mxu0 0.0
        %7803 = vmatprep.subr.mxu0 0.0
        %7804 = vmatpush1.msra.mxu0 0.0
        %7805 = vmatprep.subr.mxu0 0.0
        %7806 = vmatpush1.msra.mxu0 0.0
        %7807 = vmatprep.subr.mxu0 0.0
        %7808 = vmatpush1.msra.mxu0 0.0
        %7809 = vmatprep.subr.mxu0 0.0
        %7810 = vmatpush1.msra.mxu0 0.0
        %7811 = vmatprep.subr.mxu0 0.0
        %7812 = vmatpush1.msra.mxu0 0.0
        %7813 = vmatprep.subr.mxu0 0.0
        %7814 = vmatpush1.msra.mxu0 0.0
        %7815 = vmatprep.subr.mxu0 0.0
        %7816 = vmatpush1.msra.mxu0 0.0
        %7817 = vmatprep.subr.mxu0 0.0
        %7818 = vmatpush1.msra.mxu0 0.0
        %7819 = vmatprep.subr.mxu0 0.0
        %7820 = vmatpush1.msra.mxu0 0.0
        %7821 = vmatprep.subr.mxu0 0.0
        %7822 = vmatpush1.msra.mxu0 0.0
        %7823 = vmatprep.subr.mxu0 0.0
        %7824 = vmatpush1.msra.mxu0 0.0
        %7825 = vmatprep.mubr.f32.mxu0 0.0
        %v7826 = vand.u32 %v7660, 4294901760
        %7827 = vmatmul.mubr.f32.gmra.mrb[0].mxu0 %v7826
        %v7828 = vpop.f32.mrb[0].mxu0
        %v7829 = vadd.f32 %v7738, %v7828
        %v7830 = vpop.f32.mrb[0].mxu0
        %7831 = vdwg.mxu0
        %7832 = vmatprep.subr.mxu0 0.0
        %v7833 = vand.u32 %v409, 4294901760
        %v7834 = vsub.f32 %v409, %v7833
        %7835 = vmatpush1.msra.mxu0 %v7834
        %7836 = vmatprep.subr.mxu0 0.0
        %v7837 = vand.u32 %v410, 4294901760
        %v7838 = vsub.f32 %v410, %v7837
        %7839 = vmatpush1.msra.mxu0 %v7838
        %7840 = vmatprep.subr.mxu0 0.0
        %v7841 = vand.u32 %v411, 4294901760
        %v7842 = vsub.f32 %v411, %v7841
        %7843 = vmatpush1.msra.mxu0 %v7842
        %7844 = vmatprep.subr.mxu0 0.0
        %v7845 = vand.u32 %v412, 4294901760
        %v7846 = vsub.f32 %v412, %v7845
        %7847 = vmatpush1.msra.mxu0 %v7846
        %7848 = vmatprep.subr.mxu0 0.0
        %7849 = vmatpush1.msra.mxu0 0.0
        %7850 = vmatprep.subr.mxu0 0.0
        %7851 = vmatpush1.msra.mxu0 0.0
        %7852 = vmatprep.subr.mxu0 0.0
        %7853 = vmatpush1.msra.mxu0 0.0
        %7854 = vmatprep.subr.mxu0 0.0
        %7855 = vmatpush1.msra.mxu0 0.0
        %7856 = vmatprep.subr.mxu0 0.0
        %7857 = vmatpush1.msra.mxu0 0.0
        %7858 = vmatprep.subr.mxu0 0.0
        %7859 = vmatpush1.msra.mxu0 0.0
        %7860 = vmatprep.subr.mxu0 0.0
        %7861 = vmatpush1.msra.mxu0 0.0
        %7862 = vmatprep.subr.mxu0 0.0
        %7863 = vmatpush1.msra.mxu0 0.0
        %7864 = vmatprep.subr.mxu0 0.0
        %7865 = vmatpush1.msra.mxu0 0.0
        %7866 = vmatprep.subr.mxu0 0.0
        %7867 = vmatpush1.msra.mxu0 0.0
        %7868 = vmatprep.subr.mxu0 0.0
        %7869 = vmatpush1.msra.mxu0 0.0
        %7870 = vmatprep.subr.mxu0 0.0
        %7871 = vmatpush1.msra.mxu0 0.0
        %7872 = vmatprep.subr.mxu0 0.0
        %7873 = vmatpush1.msra.mxu0 0.0
        %7874 = vmatprep.subr.mxu0 0.0
        %7875 = vmatpush1.msra.mxu0 0.0
        %7876 = vmatprep.subr.mxu0 0.0
        %7877 = vmatpush1.msra.mxu0 0.0
        %7878 = vmatprep.subr.mxu0 0.0
        %7879 = vmatpush1.msra.mxu0 0.0
        %7880 = vmatprep.subr.mxu0 0.0
        %7881 = vmatpush1.msra.mxu0 0.0
        %7882 = vmatprep.subr.mxu0 0.0
        %7883 = vmatpush1.msra.mxu0 0.0
        %7884 = vmatprep.subr.mxu0 0.0
        %7885 = vmatpush1.msra.mxu0 0.0
        %7886 = vmatprep.subr.mxu0 0.0
        %7887 = vmatpush1.msra.mxu0 0.0
        %7888 = vmatprep.subr.mxu0 0.0
        %7889 = vmatpush1.msra.mxu0 0.0
        %7890 = vmatprep.subr.mxu0 0.0
        %7891 = vmatpush1.msra.mxu0 0.0
        %7892 = vmatprep.subr.mxu0 0.0
        %7893 = vmatpush1.msra.mxu0 0.0
        %7894 = vmatprep.subr.mxu0 0.0
        %7895 = vmatpush1.msra.mxu0 0.0
        %7896 = vmatprep.subr.mxu0 0.0
        %7897 = vmatpush1.msra.mxu0 0.0
        %7898 = vmatprep.subr.mxu0 0.0
        %7899 = vmatpush1.msra.mxu0 0.0
        %7900 = vmatprep.subr.mxu0 0.0
        %7901 = vmatpush1.msra.mxu0 0.0
        %7902 = vmatprep.subr.mxu0 0.0
        %7903 = vmatpush1.msra.mxu0 0.0
        %7904 = vmatprep.mubr.f32.mxu0 0.0
        %v7905 = vand.u32 %v7660, 4294901760
        %v7906 = vsub.f32 %v7660, %v7905
        %7907 = vmatmul.mubr.f32.gmra.mrb[0].mxu0 %v7906
        %v7908 = vpop.f32.mrb[0].mxu0
        %v7909 = vadd.f32 %v7829, %v7908
        %v7910 = vpop.f32.mrb[0].mxu0
        %7911 = vdwg.mxu0
        %7912 = vmatprep.subr.mxu0 0.0
        %v7913 = vand.u32 %v409, 4294901760
        %7914 = vmatpush1.msra.mxu0 %v7913
        %7915 = vmatprep.subr.mxu0 0.0
        %v7916 = vand.u32 %v410, 4294901760
        %7917 = vmatpush1.msra.mxu0 %v7916
        %7918 = vmatprep.subr.mxu0 0.0
        %v7919 = vand.u32 %v411, 4294901760
        %7920 = vmatpush1.msra.mxu0 %v7919
        %7921 = vmatprep.subr.mxu0 0.0
        %v7922 = vand.u32 %v412, 4294901760
        %7923 = vmatpush1.msra.mxu0 %v7922
        %7924 = vmatprep.subr.mxu0 0.0
        %7925 = vmatpush1.msra.mxu0 0.0
        %7926 = vmatprep.subr.mxu0 0.0
        %7927 = vmatpush1.msra.mxu0 0.0
        %7928 = vmatprep.subr.mxu0 0.0
        %7929 = vmatpush1.msra.mxu0 0.0
        %7930 = vmatprep.subr.mxu0 0.0
        %7931 = vmatpush1.msra.mxu0 0.0
        %7932 = vmatprep.subr.mxu0 0.0
        %7933 = vmatpush1.msra.mxu0 0.0
        %7934 = vmatprep.subr.mxu0 0.0
        %7935 = vmatpush1.msra.mxu0 0.0
        %7936 = vmatprep.subr.mxu0 0.0
        %7937 = vmatpush1.msra.mxu0 0.0
        %7938 = vmatprep.subr.mxu0 0.0
        %7939 = vmatpush1.msra.mxu0 0.0
        %7940 = vmatprep.subr.mxu0 0.0
        %7941 = vmatpush1.msra.mxu0 0.0
        %7942 = vmatprep.subr.mxu0 0.0
        %7943 = vmatpush1.msra.mxu0 0.0
        %7944 = vmatprep.subr.mxu0 0.0
        %7945 = vmatpush1.msra.mxu0 0.0
        %7946 = vmatprep.subr.mxu0 0.0
        %7947 = vmatpush1.msra.mxu0 0.0
        %7948 = vmatprep.subr.mxu0 0.0
        %7949 = vmatpush1.msra.mxu0 0.0
        %7950 = vmatprep.subr.mxu0 0.0
        %7951 = vmatpush1.msra.mxu0 0.0
        %7952 = vmatprep.subr.mxu0 0.0
        %7953 = vmatpush1.msra.mxu0 0.0
        %7954 = vmatprep.subr.mxu0 0.0
        %7955 = vmatpush1.msra.mxu0 0.0
        %7956 = vmatprep.subr.mxu0 0.0
        %7957 = vmatpush1.msra.mxu0 0.0
        %7958 = vmatprep.subr.mxu0 0.0
        %7959 = vmatpush1.msra.mxu0 0.0
        %7960 = vmatprep.subr.mxu0 0.0
        %7961 = vmatpush1.msra.mxu0 0.0
        %7962 = vmatprep.subr.mxu0 0.0
        %7963 = vmatpush1.msra.mxu0 0.0
        %7964 = vmatprep.subr.mxu0 0.0
        %7965 = vmatpush1.msra.mxu0 0.0
        %7966 = vmatprep.subr.mxu0 0.0
        %7967 = vmatpush1.msra.mxu0 0.0
        %7968 = vmatprep.subr.mxu0 0.0
        %7969 = vmatpush1.msra.mxu0 0.0
        %7970 = vmatprep.subr.mxu0 0.0
        %7971 = vmatpush1.msra.mxu0 0.0
        %7972 = vmatprep.subr.mxu0 0.0
        %7973 = vmatpush1.msra.mxu0 0.0
        %7974 = vmatprep.subr.mxu0 0.0
        %7975 = vmatpush1.msra.mxu0 0.0
        %7976 = vmatprep.subr.mxu0 0.0
        %7977 = vmatpush1.msra.mxu0 0.0
        %7978 = vmatprep.subr.mxu0 0.0
        %7979 = vmatpush1.msra.mxu0 0.0
        %7980 = vmatprep.mubr.f32.mxu0 0.0
        %v7981 = vand.u32 %v7660, 4294901760
        %v7982 = vsub.f32 %v7660, %v7981
        %v7983 = vand.u32 %v7982, 4294901760
        %7984 = vmatmul.mubr.f32.gmra.mrb[0].mxu0 %v7983
        %v7985 = vpop.f32.mrb[0].mxu0
        %v7986 = vadd.f32 %v7909, %v7985
        %v7987 = vpop.f32.mrb[0].mxu0
        %7988 = vdwg.mxu0
        %7989 = vmatprep.subr.mxu0 0.0
        %v7990 = vand.u32 %v409, 4294901760
        %v7991 = vsub.f32 %v409, %v7990
        %v7992 = vand.u32 %v7991, 4294901760
        %7993 = vmatpush1.msra.mxu0 %v7992
        %7994 = vmatprep.subr.mxu0 0.0
        %v7995 = vand.u32 %v410, 4294901760
        %v7996 = vsub.f32 %v410, %v7995
        %v7997 = vand.u32 %v7996, 4294901760
        %7998 = vmatpush1.msra.mxu0 %v7997
        %7999 = vmatprep.subr.mxu0 0.0
        %v8000 = vand.u32 %v411, 4294901760
        %v8001 = vsub.f32 %v411, %v8000
        %v8002 = vand.u32 %v8001, 4294901760
        %8003 = vmatpush1.msra.mxu0 %v8002
        %8004 = vmatprep.subr.mxu0 0.0
        %v8005 = vand.u32 %v412, 4294901760
        %v8006 = vsub.f32 %v412, %v8005
        %v8007 = vand.u32 %v8006, 4294901760
        %8008 = vmatpush1.msra.mxu0 %v8007
        %8009 = vmatprep.subr.mxu0 0.0
        %8010 = vmatpush1.msra.mxu0 0.0
        %8011 = vmatprep.subr.mxu0 0.0
        %8012 = vmatpush1.msra.mxu0 0.0
        %8013 = vmatprep.subr.mxu0 0.0
        %8014 = vmatpush1.msra.mxu0 0.0
        %8015 = vmatprep.subr.mxu0 0.0
        %8016 = vmatpush1.msra.mxu0 0.0
        %8017 = vmatprep.subr.mxu0 0.0
        %8018 = vmatpush1.msra.mxu0 0.0
        %8019 = vmatprep.subr.mxu0 0.0
        %8020 = vmatpush1.msra.mxu0 0.0
        %8021 = vmatprep.subr.mxu0 0.0
        %8022 = vmatpush1.msra.mxu0 0.0
        %8023 = vmatprep.subr.mxu0 0.0
        %8024 = vmatpush1.msra.mxu0 0.0
        %8025 = vmatprep.subr.mxu0 0.0
        %8026 = vmatpush1.msra.mxu0 0.0
        %8027 = vmatprep.subr.mxu0 0.0
        %8028 = vmatpush1.msra.mxu0 0.0
        %8029 = vmatprep.subr.mxu0 0.0
        %8030 = vmatpush1.msra.mxu0 0.0
        %8031 = vmatprep.subr.mxu0 0.0
        %8032 = vmatpush1.msra.mxu0 0.0
        %8033 = vmatprep.subr.mxu0 0.0
        %8034 = vmatpush1.msra.mxu0 0.0
        %8035 = vmatprep.subr.mxu0 0.0
        %8036 = vmatpush1.msra.mxu0 0.0
        %8037 = vmatprep.subr.mxu0 0.0
        %8038 = vmatpush1.msra.mxu0 0.0
        %8039 = vmatprep.subr.mxu0 0.0
        %8040 = vmatpush1.msra.mxu0 0.0
        %8041 = vmatprep.subr.mxu0 0.0
        %8042 = vmatpush1.msra.mxu0 0.0
        %8043 = vmatprep.subr.mxu0 0.0
        %8044 = vmatpush1.msra.mxu0 0.0
        %8045 = vmatprep.subr.mxu0 0.0
        %8046 = vmatpush1.msra.mxu0 0.0
        %8047 = vmatprep.subr.mxu0 0.0
        %8048 = vmatpush1.msra.mxu0 0.0
        %8049 = vmatprep.subr.mxu0 0.0
        %8050 = vmatpush1.msra.mxu0 0.0
        %8051 = vmatprep.subr.mxu0 0.0
        %8052 = vmatpush1.msra.mxu0 0.0
        %8053 = vmatprep.subr.mxu0 0.0
        %8054 = vmatpush1.msra.mxu0 0.0
        %8055 = vmatprep.subr.mxu0 0.0
        %8056 = vmatpush1.msra.mxu0 0.0
        %8057 = vmatprep.subr.mxu0 0.0
        %8058 = vmatpush1.msra.mxu0 0.0
        %8059 = vmatprep.subr.mxu0 0.0
        %8060 = vmatpush1.msra.mxu0 0.0
        %8061 = vmatprep.subr.mxu0 0.0
        %8062 = vmatpush1.msra.mxu0 0.0
        %8063 = vmatprep.subr.mxu0 0.0
        %8064 = vmatpush1.msra.mxu0 0.0
        %8065 = vmatprep.mubr.f32.mxu0 0.0
        %v8066 = vand.u32 %v7660, 4294901760
        %8067 = vmatmul.mubr.f32.gmra.mrb[0].mxu0 %v8066
        %v8068 = vpop.f32.mrb[0].mxu0
        %v8069 = vadd.f32 %v7986, %v8068
        %v8070 = vpop.f32.mrb[0].mxu0
        %8071 = vdwg.mxu0
        %8072 = vmatprep.subr.mxu0 0.0
        %v8073 = vand.u32 %v409, 4294901760
        %8074 = vmatpush1.msra.mxu0 %v8073
        %8075 = vmatprep.subr.mxu0 0.0
        %v8076 = vand.u32 %v410, 4294901760
        %8077 = vmatpush1.msra.mxu0 %v8076
        %8078 = vmatprep.subr.mxu0 0.0
        %v8079 = vand.u32 %v411, 4294901760
        %8080 = vmatpush1.msra.mxu0 %v8079
        %8081 = vmatprep.subr.mxu0 0.0
        %v8082 = vand.u32 %v412, 4294901760
        %8083 = vmatpush1.msra.mxu0 %v8082
        %8084 = vmatprep.subr.mxu0 0.0
        %8085 = vmatpush1.msra.mxu0 0.0
        %8086 = vmatprep.subr.mxu0 0.0
        %8087 = vmatpush1.msra.mxu0 0.0
        %8088 = vmatprep.subr.mxu0 0.0
        %8089 = vmatpush1.msra.mxu0 0.0
        %8090 = vmatprep.subr.mxu0 0.0
        %8091 = vmatpush1.msra.mxu0 0.0
        %8092 = vmatprep.subr.mxu0 0.0
        %8093 = vmatpush1.msra.mxu0 0.0
        %8094 = vmatprep.subr.mxu0 0.0
        %8095 = vmatpush1.msra.mxu0 0.0
        %8096 = vmatprep.subr.mxu0 0.0
        %8097 = vmatpush1.msra.mxu0 0.0
        %8098 = vmatprep.subr.mxu0 0.0
        %8099 = vmatpush1.msra.mxu0 0.0
        %8100 = vmatprep.subr.mxu0 0.0
        %8101 = vmatpush1.msra.mxu0 0.0
        %8102 = vmatprep.subr.mxu0 0.0
        %8103 = vmatpush1.msra.mxu0 0.0
        %8104 = vmatprep.subr.mxu0 0.0
        %8105 = vmatpush1.msra.mxu0 0.0
        %8106 = vmatprep.subr.mxu0 0.0
        %8107 = vmatpush1.msra.mxu0 0.0
        %8108 = vmatprep.subr.mxu0 0.0
        %8109 = vmatpush1.msra.mxu0 0.0
        %8110 = vmatprep.subr.mxu0 0.0
        %8111 = vmatpush1.msra.mxu0 0.0
        %8112 = vmatprep.subr.mxu0 0.0
        %8113 = vmatpush1.msra.mxu0 0.0
        %8114 = vmatprep.subr.mxu0 0.0
        %8115 = vmatpush1.msra.mxu0 0.0
        %8116 = vmatprep.subr.mxu0 0.0
        %8117 = vmatpush1.msra.mxu0 0.0
        %8118 = vmatprep.subr.mxu0 0.0
        %8119 = vmatpush1.msra.mxu0 0.0
        %8120 = vmatprep.subr.mxu0 0.0
        %8121 = vmatpush1.msra.mxu0 0.0
        %8122 = vmatprep.subr.mxu0 0.0
        %8123 = vmatpush1.msra.mxu0 0.0
        %8124 = vmatprep.subr.mxu0 0.0
        %8125 = vmatpush1.msra.mxu0 0.0
        %8126 = vmatprep.subr.mxu0 0.0
        %8127 = vmatpush1.msra.mxu0 0.0
        %8128 = vmatprep.subr.mxu0 0.0
        %8129 = vmatpush1.msra.mxu0 0.0
        %8130 = vmatprep.subr.mxu0 0.0
        %8131 = vmatpush1.msra.mxu0 0.0
        %8132 = vmatprep.subr.mxu0 0.0
        %8133 = vmatpush1.msra.mxu0 0.0
        %8134 = vmatprep.subr.mxu0 0.0
        %8135 = vmatpush1.msra.mxu0 0.0
        %8136 = vmatprep.subr.mxu0 0.0
        %8137 = vmatpush1.msra.mxu0 0.0
        %8138 = vmatprep.subr.mxu0 0.0
        %8139 = vmatpush1.msra.mxu0 0.0
        %8140 = vmatprep.mubr.f32.mxu0 0.0
        %v8141 = vand.u32 %v7660, 4294901760
        %8142 = vmatmul.mubr.f32.gmra.mrb[0].mxu0 %v8141
        %v8143 = vpop.f32.mrb[0].mxu0
        %v8144 = vadd.f32 %v8069, %v8143
        %v8145 = vpop.f32.mrb[0].mxu0
        %8146 = vdwg.mxu0
        %v8147 = vadd.f32 %v7656, %v8144
        %v8148 = vadd.f32 %v8147, %v2841
        %v8149 = vsub.f32 0.0, %v8148
        %v8150 = vmul.f32 %v8149, 1.442695
        %v8151 = vpow.pop %v8150
        %v8152 = vadd.f32 %v8151, 1.0
        %v8153 = vrcp.pop %v8152
        %v8154 = vmul.f32 1.0, %v8153
        %8155 = vmatprep.subr.mxu0 0.0
        %v8156 = vand.u32 %v418, 4294901760
        %8157 = vmatpush1.msra.mxu0 %v8156
        %8158 = vmatprep.subr.mxu0 0.0
        %v8159 = vand.u32 %v419, 4294901760
        %8160 = vmatpush1.msra.mxu0 %v8159
        %8161 = vmatprep.subr.mxu0 0.0
        %v8162 = vand.u32 %v420, 4294901760
        %8163 = vmatpush1.msra.mxu0 %v8162
        %8164 = vmatprep.subr.mxu0 0.0
        %v8165 = vand.u32 %v421, 4294901760
        %8166 = vmatpush1.msra.mxu0 %v8165
        %8167 = vmatprep.subr.mxu0 0.0
        %8168 = vmatpush1.msra.mxu0 0.0
        %8169 = vmatprep.subr.mxu0 0.0
        %8170 = vmatpush1.msra.mxu0 0.0
        %8171 = vmatprep.subr.mxu0 0.0
        %8172 = vmatpush1.msra.mxu0 0.0
        %8173 = vmatprep.subr.mxu0 0.0
        %8174 = vmatpush1.msra.mxu0 0.0
        %8175 = vmatprep.subr.mxu0 0.0
        %8176 = vmatpush1.msra.mxu0 0.0
        %8177 = vmatprep.subr.mxu0 0.0
        %8178 = vmatpush1.msra.mxu0 0.0
        %8179 = vmatprep.subr.mxu0 0.0
        %8180 = vmatpush1.msra.mxu0 0.0
        %8181 = vmatprep.subr.mxu0 0.0
        %8182 = vmatpush1.msra.mxu0 0.0
        %8183 = vmatprep.subr.mxu0 0.0
        %8184 = vmatpush1.msra.mxu0 0.0
        %8185 = vmatprep.subr.mxu0 0.0
        %8186 = vmatpush1.msra.mxu0 0.0
        %8187 = vmatprep.subr.mxu0 0.0
        %8188 = vmatpush1.msra.mxu0 0.0
        %8189 = vmatprep.subr.mxu0 0.0
        %8190 = vmatpush1.msra.mxu0 0.0
        %8191 = vmatprep.subr.mxu0 0.0
        %8192 = vmatpush1.msra.mxu0 0.0
        %8193 = vmatprep.subr.mxu0 0.0
        %8194 = vmatpush1.msra.mxu0 0.0
        %8195 = vmatprep.subr.mxu0 0.0
        %8196 = vmatpush1.msra.mxu0 0.0
        %8197 = vmatprep.subr.mxu0 0.0
        %8198 = vmatpush1.msra.mxu0 0.0
        %8199 = vmatprep.subr.mxu0 0.0
        %8200 = vmatpush1.msra.mxu0 0.0
        %8201 = vmatprep.subr.mxu0 0.0
        %8202 = vmatpush1.msra.mxu0 0.0
        %8203 = vmatprep.subr.mxu0 0.0
        %8204 = vmatpush1.msra.mxu0 0.0
        %8205 = vmatprep.subr.mxu0 0.0
        %8206 = vmatpush1.msra.mxu0 0.0
        %8207 = vmatprep.subr.mxu0 0.0
        %8208 = vmatpush1.msra.mxu0 0.0
        %8209 = vmatprep.subr.mxu0 0.0
        %8210 = vmatpush1.msra.mxu0 0.0
        %8211 = vmatprep.subr.mxu0 0.0
        %8212 = vmatpush1.msra.mxu0 0.0
        %8213 = vmatprep.subr.mxu0 0.0
        %8214 = vmatpush1.msra.mxu0 0.0
        %8215 = vmatprep.subr.mxu0 0.0
        %8216 = vmatpush1.msra.mxu0 0.0
        %8217 = vmatprep.subr.mxu0 0.0
        %8218 = vmatpush1.msra.mxu0 0.0
        %8219 = vmatprep.subr.mxu0 0.0
        %8220 = vmatpush1.msra.mxu0 0.0
        %8221 = vmatprep.subr.mxu0 0.0
        %8222 = vmatpush1.msra.mxu0 0.0
        %8223 = vmatprep.mubr.f32.mxu0 0.0
        %v8224 = vand.u32 %v6684, 4294901760
        %v8225 = vsub.f32 %v6684, %v8224
        %v8226 = vand.u32 %v8225, 4294901760
        %v8227 = vsub.f32 %v8225, %v8226
        %v8228 = vand.u32 %v8227, 4294901760
        %8229 = vmatmul.mubr.f32.gmra.mrb[0].mxu0 %v8228
        %v8230 = vpop.f32.mrb[0].mxu0
        %v8231 = vadd.f32 0.0, %v8230
        %v8232 = vpop.f32.mrb[0].mxu0
        %8233 = vdwg.mxu0
        %8234 = vmatprep.subr.mxu0 0.0
        %v8235 = vand.u32 %v418, 4294901760
        %v8236 = vsub.f32 %v418, %v8235
        %v8237 = vand.u32 %v8236, 4294901760
        %v8238 = vsub.f32 %v8236, %v8237
        %v8239 = vand.u32 %v8238, 4294901760
        %8240 = vmatpush1.msra.mxu0 %v8239
        %8241 = vmatprep.subr.mxu0 0.0
        %v8242 = vand.u32 %v419, 4294901760
        %v8243 = vsub.f32 %v419, %v8242
        %v8244 = vand.u32 %v8243, 4294901760
        %v8245 = vsub.f32 %v8243, %v8244
        %v8246 = vand.u32 %v8245, 4294901760
        %8247 = vmatpush1.msra.mxu0 %v8246
        %8248 = vmatprep.subr.mxu0 0.0
        %v8249 = vand.u32 %v420, 4294901760
        %v8250 = vsub.f32 %v420, %v8249
        %v8251 = vand.u32 %v8250, 4294901760
        %v8252 = vsub.f32 %v8250, %v8251
        %v8253 = vand.u32 %v8252, 4294901760
        %8254 = vmatpush1.msra.mxu0 %v8253
        %8255 = vmatprep.subr.mxu0 0.0
        %v8256 = vand.u32 %v421, 4294901760
        %v8257 = vsub.f32 %v421, %v8256
        %v8258 = vand.u32 %v8257, 4294901760
        %v8259 = vsub.f32 %v8257, %v8258
        %v8260 = vand.u32 %v8259, 4294901760
        %8261 = vmatpush1.msra.mxu0 %v8260
        %8262 = vmatprep.subr.mxu0 0.0
        %8263 = vmatpush1.msra.mxu0 0.0
        %8264 = vmatprep.subr.mxu0 0.0
        %8265 = vmatpush1.msra.mxu0 0.0
        %8266 = vmatprep.subr.mxu0 0.0
        %8267 = vmatpush1.msra.mxu0 0.0
        %8268 = vmatprep.subr.mxu0 0.0
        %8269 = vmatpush1.msra.mxu0 0.0
        %8270 = vmatprep.subr.mxu0 0.0
        %8271 = vmatpush1.msra.mxu0 0.0
        %8272 = vmatprep.subr.mxu0 0.0
        %8273 = vmatpush1.msra.mxu0 0.0
        %8274 = vmatprep.subr.mxu0 0.0
        %8275 = vmatpush1.msra.mxu0 0.0
        %8276 = vmatprep.subr.mxu0 0.0
        %8277 = vmatpush1.msra.mxu0 0.0
        %8278 = vmatprep.subr.mxu0 0.0
        %8279 = vmatpush1.msra.mxu0 0.0
        %8280 = vmatprep.subr.mxu0 0.0
        %8281 = vmatpush1.msra.mxu0 0.0
        %8282 = vmatprep.subr.mxu0 0.0
        %8283 = vmatpush1.msra.mxu0 0.0
        %8284 = vmatprep.subr.mxu0 0.0
        %8285 = vmatpush1.msra.mxu0 0.0
        %8286 = vmatprep.subr.mxu0 0.0
        %8287 = vmatpush1.msra.mxu0 0.0
        %8288 = vmatprep.subr.mxu0 0.0
        %8289 = vmatpush1.msra.mxu0 0.0
        %8290 = vmatprep.subr.mxu0 0.0
        %8291 = vmatpush1.msra.mxu0 0.0
        %8292 = vmatprep.subr.mxu0 0.0
        %8293 = vmatpush1.msra.mxu0 0.0
        %8294 = vmatprep.subr.mxu0 0.0
        %8295 = vmatpush1.msra.mxu0 0.0
        %8296 = vmatprep.subr.mxu0 0.0
        %8297 = vmatpush1.msra.mxu0 0.0
        %8298 = vmatprep.subr.mxu0 0.0
        %8299 = vmatpush1.msra.mxu0 0.0
        %8300 = vmatprep.subr.mxu0 0.0
        %8301 = vmatpush1.msra.mxu0 0.0
        %8302 = vmatprep.subr.mxu0 0.0
        %8303 = vmatpush1.msra.mxu0 0.0
        %8304 = vmatprep.subr.mxu0 0.0
        %8305 = vmatpush1.msra.mxu0 0.0
        %8306 = vmatprep.subr.mxu0 0.0
        %8307 = vmatpush1.msra.mxu0 0.0
        %8308 = vmatprep.subr.mxu0 0.0
        %8309 = vmatpush1.msra.mxu0 0.0
        %8310 = vmatprep.subr.mxu0 0.0
        %8311 = vmatpush1.msra.mxu0 0.0
        %8312 = vmatprep.subr.mxu0 0.0
        %8313 = vmatpush1.msra.mxu0 0.0
        %8314 = vmatprep.subr.mxu0 0.0
        %8315 = vmatpush1.msra.mxu0 0.0
        %8316 = vmatprep.subr.mxu0 0.0
        %8317 = vmatpush1.msra.mxu0 0.0
        %8318 = vmatprep.mubr.f32.mxu0 0.0
        %v8319 = vand.u32 %v6684, 4294901760
        %8320 = vmatmul.mubr.f32.gmra.mrb[0].mxu0 %v8319
        %v8321 = vpop.f32.mrb[0].mxu0
        %v8322 = vadd.f32 %v8231, %v8321
        %v8323 = vpop.f32.mrb[0].mxu0
        %8324 = vdwg.mxu0
        %8325 = vmatprep.subr.mxu0 0.0
        %v8326 = vand.u32 %v418, 4294901760
        %v8327 = vsub.f32 %v418, %v8326
        %8328 = vmatpush1.msra.mxu0 %v8327
        %8329 = vmatprep.subr.mxu0 0.0
        %v8330 = vand.u32 %v419, 4294901760
        %v8331 = vsub.f32 %v419, %v8330
        %8332 = vmatpush1.msra.mxu0 %v8331
        %8333 = vmatprep.subr.mxu0 0.0
        %v8334 = vand.u32 %v420, 4294901760
        %v8335 = vsub.f32 %v420, %v8334
        %8336 = vmatpush1.msra.mxu0 %v8335
        %8337 = vmatprep.subr.mxu0 0.0
        %v8338 = vand.u32 %v421, 4294901760
        %v8339 = vsub.f32 %v421, %v8338
        %8340 = vmatpush1.msra.mxu0 %v8339
        %8341 = vmatprep.subr.mxu0 0.0
        %8342 = vmatpush1.msra.mxu0 0.0
        %8343 = vmatprep.subr.mxu0 0.0
        %8344 = vmatpush1.msra.mxu0 0.0
        %8345 = vmatprep.subr.mxu0 0.0
        %8346 = vmatpush1.msra.mxu0 0.0
        %8347 = vmatprep.subr.mxu0 0.0
        %8348 = vmatpush1.msra.mxu0 0.0
        %8349 = vmatprep.subr.mxu0 0.0
        %8350 = vmatpush1.msra.mxu0 0.0
        %8351 = vmatprep.subr.mxu0 0.0
        %8352 = vmatpush1.msra.mxu0 0.0
        %8353 = vmatprep.subr.mxu0 0.0
        %8354 = vmatpush1.msra.mxu0 0.0
        %8355 = vmatprep.subr.mxu0 0.0
        %8356 = vmatpush1.msra.mxu0 0.0
        %8357 = vmatprep.subr.mxu0 0.0
        %8358 = vmatpush1.msra.mxu0 0.0
        %8359 = vmatprep.subr.mxu0 0.0
        %8360 = vmatpush1.msra.mxu0 0.0
        %8361 = vmatprep.subr.mxu0 0.0
        %8362 = vmatpush1.msra.mxu0 0.0
        %8363 = vmatprep.subr.mxu0 0.0
        %8364 = vmatpush1.msra.mxu0 0.0
        %8365 = vmatprep.subr.mxu0 0.0
        %8366 = vmatpush1.msra.mxu0 0.0
        %8367 = vmatprep.subr.mxu0 0.0
        %8368 = vmatpush1.msra.mxu0 0.0
        %8369 = vmatprep.subr.mxu0 0.0
        %8370 = vmatpush1.msra.mxu0 0.0
        %8371 = vmatprep.subr.mxu0 0.0
        %8372 = vmatpush1.msra.mxu0 0.0
        %8373 = vmatprep.subr.mxu0 0.0
        %8374 = vmatpush1.msra.mxu0 0.0
        %8375 = vmatprep.subr.mxu0 0.0
        %8376 = vmatpush1.msra.mxu0 0.0
        %8377 = vmatprep.subr.mxu0 0.0
        %8378 = vmatpush1.msra.mxu0 0.0
        %8379 = vmatprep.subr.mxu0 0.0
        %8380 = vmatpush1.msra.mxu0 0.0
        %8381 = vmatprep.subr.mxu0 0.0
        %8382 = vmatpush1.msra.mxu0 0.0
        %8383 = vmatprep.subr.mxu0 0.0
        %8384 = vmatpush1.msra.mxu0 0.0
        %8385 = vmatprep.subr.mxu0 0.0
        %8386 = vmatpush1.msra.mxu0 0.0
        %8387 = vmatprep.subr.mxu0 0.0
        %8388 = vmatpush1.msra.mxu0 0.0
        %8389 = vmatprep.subr.mxu0 0.0
        %8390 = vmatpush1.msra.mxu0 0.0
        %8391 = vmatprep.subr.mxu0 0.0
        %8392 = vmatpush1.msra.mxu0 0.0
        %8393 = vmatprep.subr.mxu0 0.0
        %8394 = vmatpush1.msra.mxu0 0.0
        %8395 = vmatprep.subr.mxu0 0.0
        %8396 = vmatpush1.msra.mxu0 0.0
        %8397 = vmatprep.mubr.f32.mxu0 0.0
        %v8398 = vand.u32 %v6684, 4294901760
        %v8399 = vsub.f32 %v6684, %v8398
        %8400 = vmatmul.mubr.f32.gmra.mrb[0].mxu0 %v8399
        %v8401 = vpop.f32.mrb[0].mxu0
        %v8402 = vadd.f32 %v8322, %v8401
        %v8403 = vpop.f32.mrb[0].mxu0
        %8404 = vdwg.mxu0
        %8405 = vmatprep.subr.mxu0 0.0
        %v8406 = vand.u32 %v418, 4294901760
        %8407 = vmatpush1.msra.mxu0 %v8406
        %8408 = vmatprep.subr.mxu0 0.0
        %v8409 = vand.u32 %v419, 4294901760
        %8410 = vmatpush1.msra.mxu0 %v8409
        %8411 = vmatprep.subr.mxu0 0.0
        %v8412 = vand.u32 %v420, 4294901760
        %8413 = vmatpush1.msra.mxu0 %v8412
        %8414 = vmatprep.subr.mxu0 0.0
        %v8415 = vand.u32 %v421, 4294901760
        %8416 = vmatpush1.msra.mxu0 %v8415
        %8417 = vmatprep.subr.mxu0 0.0
        %8418 = vmatpush1.msra.mxu0 0.0
        %8419 = vmatprep.subr.mxu0 0.0
        %8420 = vmatpush1.msra.mxu0 0.0
        %8421 = vmatprep.subr.mxu0 0.0
        %8422 = vmatpush1.msra.mxu0 0.0
        %8423 = vmatprep.subr.mxu0 0.0
        %8424 = vmatpush1.msra.mxu0 0.0
        %8425 = vmatprep.subr.mxu0 0.0
        %8426 = vmatpush1.msra.mxu0 0.0
        %8427 = vmatprep.subr.mxu0 0.0
        %8428 = vmatpush1.msra.mxu0 0.0
        %8429 = vmatprep.subr.mxu0 0.0
        %8430 = vmatpush1.msra.mxu0 0.0
        %8431 = vmatprep.subr.mxu0 0.0
        %8432 = vmatpush1.msra.mxu0 0.0
        %8433 = vmatprep.subr.mxu0 0.0
        %8434 = vmatpush1.msra.mxu0 0.0
        %8435 = vmatprep.subr.mxu0 0.0
        %8436 = vmatpush1.msra.mxu0 0.0
        %8437 = vmatprep.subr.mxu0 0.0
        %8438 = vmatpush1.msra.mxu0 0.0
        %8439 = vmatprep.subr.mxu0 0.0
        %8440 = vmatpush1.msra.mxu0 0.0
        %8441 = vmatprep.subr.mxu0 0.0
        %8442 = vmatpush1.msra.mxu0 0.0
        %8443 = vmatprep.subr.mxu0 0.0
        %8444 = vmatpush1.msra.mxu0 0.0
        %8445 = vmatprep.subr.mxu0 0.0
        %8446 = vmatpush1.msra.mxu0 0.0
        %8447 = vmatprep.subr.mxu0 0.0
        %8448 = vmatpush1.msra.mxu0 0.0
        %8449 = vmatprep.subr.mxu0 0.0
        %8450 = vmatpush1.msra.mxu0 0.0
        %8451 = vmatprep.subr.mxu0 0.0
        %8452 = vmatpush1.msra.mxu0 0.0
        %8453 = vmatprep.subr.mxu0 0.0
        %8454 = vmatpush1.msra.mxu0 0.0
        %8455 = vmatprep.subr.mxu0 0.0
        %8456 = vmatpush1.msra.mxu0 0.0
        %8457 = vmatprep.subr.mxu0 0.0
        %8458 = vmatpush1.msra.mxu0 0.0
        %8459 = vmatprep.subr.mxu0 0.0
        %8460 = vmatpush1.msra.mxu0 0.0
        %8461 = vmatprep.subr.mxu0 0.0
        %8462 = vmatpush1.msra.mxu0 0.0
        %8463 = vmatprep.subr.mxu0 0.0
        %8464 = vmatpush1.msra.mxu0 0.0
        %8465 = vmatprep.subr.mxu0 0.0
        %8466 = vmatpush1.msra.mxu0 0.0
        %8467 = vmatprep.subr.mxu0 0.0
        %8468 = vmatpush1.msra.mxu0 0.0
        %8469 = vmatprep.subr.mxu0 0.0
        %8470 = vmatpush1.msra.mxu0 0.0
        %8471 = vmatprep.subr.mxu0 0.0
        %8472 = vmatpush1.msra.mxu0 0.0
        %8473 = vmatprep.mubr.f32.mxu0 0.0
        %v8474 = vand.u32 %v6684, 4294901760
        %v8475 = vsub.f32 %v6684, %v8474
        %v8476 = vand.u32 %v8475, 4294901760
        %8477 = vmatmul.mubr.f32.gmra.mrb[0].mxu0 %v8476
        %v8478 = vpop.f32.mrb[0].mxu0
        %v8479 = vadd.f32 %v8402, %v8478
        %v8480 = vpop.f32.mrb[0].mxu0
        %8481 = vdwg.mxu0
        %8482 = vmatprep.subr.mxu0 0.0
        %v8483 = vand.u32 %v418, 4294901760
        %v8484 = vsub.f32 %v418, %v8483
        %v8485 = vand.u32 %v8484, 4294901760
        %8486 = vmatpush1.msra.mxu0 %v8485
        %8487 = vmatprep.subr.mxu0 0.0
        %v8488 = vand.u32 %v419, 4294901760
        %v8489 = vsub.f32 %v419, %v8488
        %v8490 = vand.u32 %v8489, 4294901760
        %8491 = vmatpush1.msra.mxu0 %v8490
        %8492 = vmatprep.subr.mxu0 0.0
        %v8493 = vand.u32 %v420, 4294901760
        %v8494 = vsub.f32 %v420, %v8493
        %v8495 = vand.u32 %v8494, 4294901760
        %8496 = vmatpush1.msra.mxu0 %v8495
        %8497 = vmatprep.subr.mxu0 0.0
        %v8498 = vand.u32 %v421, 4294901760
        %v8499 = vsub.f32 %v421, %v8498
        %v8500 = vand.u32 %v8499, 4294901760
        %8501 = vmatpush1.msra.mxu0 %v8500
        %8502 = vmatprep.subr.mxu0 0.0
        %8503 = vmatpush1.msra.mxu0 0.0
        %8504 = vmatprep.subr.mxu0 0.0
        %8505 = vmatpush1.msra.mxu0 0.0
        %8506 = vmatprep.subr.mxu0 0.0
        %8507 = vmatpush1.msra.mxu0 0.0
        %8508 = vmatprep.subr.mxu0 0.0
        %8509 = vmatpush1.msra.mxu0 0.0
        %8510 = vmatprep.subr.mxu0 0.0
        %8511 = vmatpush1.msra.mxu0 0.0
        %8512 = vmatprep.subr.mxu0 0.0
        %8513 = vmatpush1.msra.mxu0 0.0
        %8514 = vmatprep.subr.mxu0 0.0
        %8515 = vmatpush1.msra.mxu0 0.0
        %8516 = vmatprep.subr.mxu0 0.0
        %8517 = vmatpush1.msra.mxu0 0.0
        %8518 = vmatprep.subr.mxu0 0.0
        %8519 = vmatpush1.msra.mxu0 0.0
        %8520 = vmatprep.subr.mxu0 0.0
        %8521 = vmatpush1.msra.mxu0 0.0
        %8522 = vmatprep.subr.mxu0 0.0
        %8523 = vmatpush1.msra.mxu0 0.0
        %8524 = vmatprep.subr.mxu0 0.0
        %8525 = vmatpush1.msra.mxu0 0.0
        %8526 = vmatprep.subr.mxu0 0.0
        %8527 = vmatpush1.msra.mxu0 0.0
        %8528 = vmatprep.subr.mxu0 0.0
        %8529 = vmatpush1.msra.mxu0 0.0
        %8530 = vmatprep.subr.mxu0 0.0
        %8531 = vmatpush1.msra.mxu0 0.0
        %8532 = vmatprep.subr.mxu0 0.0
        %8533 = vmatpush1.msra.mxu0 0.0
        %8534 = vmatprep.subr.mxu0 0.0
        %8535 = vmatpush1.msra.mxu0 0.0
        %8536 = vmatprep.subr.mxu0 0.0
        %8537 = vmatpush1.msra.mxu0 0.0
        %8538 = vmatprep.subr.mxu0 0.0
        %8539 = vmatpush1.msra.mxu0 0.0
        %8540 = vmatprep.subr.mxu0 0.0
        %8541 = vmatpush1.msra.mxu0 0.0
        %8542 = vmatprep.subr.mxu0 0.0
        %8543 = vmatpush1.msra.mxu0 0.0
        %8544 = vmatprep.subr.mxu0 0.0
        %8545 = vmatpush1.msra.mxu0 0.0
        %8546 = vmatprep.subr.mxu0 0.0
        %8547 = vmatpush1.msra.mxu0 0.0
        %8548 = vmatprep.subr.mxu0 0.0
        %8549 = vmatpush1.msra.mxu0 0.0
        %8550 = vmatprep.subr.mxu0 0.0
        %8551 = vmatpush1.msra.mxu0 0.0
        %8552 = vmatprep.subr.mxu0 0.0
        %8553 = vmatpush1.msra.mxu0 0.0
        %8554 = vmatprep.subr.mxu0 0.0
        %8555 = vmatpush1.msra.mxu0 0.0
        %8556 = vmatprep.subr.mxu0 0.0
        %8557 = vmatpush1.msra.mxu0 0.0
        %8558 = vmatprep.mubr.f32.mxu0 0.0
        %v8559 = vand.u32 %v6684, 4294901760
        %8560 = vmatmul.mubr.f32.gmra.mrb[0].mxu0 %v8559
        %v8561 = vpop.f32.mrb[0].mxu0
        %v8562 = vadd.f32 %v8479, %v8561
        %v8563 = vpop.f32.mrb[0].mxu0
        %8564 = vdwg.mxu0
        %8565 = vmatprep.subr.mxu0 0.0
        %v8566 = vand.u32 %v418, 4294901760
        %8567 = vmatpush1.msra.mxu0 %v8566
        %8568 = vmatprep.subr.mxu0 0.0
        %v8569 = vand.u32 %v419, 4294901760
        %8570 = vmatpush1.msra.mxu0 %v8569
        %8571 = vmatprep.subr.mxu0 0.0
        %v8572 = vand.u32 %v420, 4294901760
        %8573 = vmatpush1.msra.mxu0 %v8572
        %8574 = vmatprep.subr.mxu0 0.0
        %v8575 = vand.u32 %v421, 4294901760
        %8576 = vmatpush1.msra.mxu0 %v8575
        %8577 = vmatprep.subr.mxu0 0.0
        %8578 = vmatpush1.msra.mxu0 0.0
        %8579 = vmatprep.subr.mxu0 0.0
        %8580 = vmatpush1.msra.mxu0 0.0
        %8581 = vmatprep.subr.mxu0 0.0
        %8582 = vmatpush1.msra.mxu0 0.0
        %8583 = vmatprep.subr.mxu0 0.0
        %8584 = vmatpush1.msra.mxu0 0.0
        %8585 = vmatprep.subr.mxu0 0.0
        %8586 = vmatpush1.msra.mxu0 0.0
        %8587 = vmatprep.subr.mxu0 0.0
        %8588 = vmatpush1.msra.mxu0 0.0
        %8589 = vmatprep.subr.mxu0 0.0
        %8590 = vmatpush1.msra.mxu0 0.0
        %8591 = vmatprep.subr.mxu0 0.0
        %8592 = vmatpush1.msra.mxu0 0.0
        %8593 = vmatprep.subr.mxu0 0.0
        %8594 = vmatpush1.msra.mxu0 0.0
        %8595 = vmatprep.subr.mxu0 0.0
        %8596 = vmatpush1.msra.mxu0 0.0
        %8597 = vmatprep.subr.mxu0 0.0
        %8598 = vmatpush1.msra.mxu0 0.0
        %8599 = vmatprep.subr.mxu0 0.0
        %8600 = vmatpush1.msra.mxu0 0.0
        %8601 = vmatprep.subr.mxu0 0.0
        %8602 = vmatpush1.msra.mxu0 0.0
        %8603 = vmatprep.subr.mxu0 0.0
        %8604 = vmatpush1.msra.mxu0 0.0
        %8605 = vmatprep.subr.mxu0 0.0
        %8606 = vmatpush1.msra.mxu0 0.0
        %8607 = vmatprep.subr.mxu0 0.0
        %8608 = vmatpush1.msra.mxu0 0.0
        %8609 = vmatprep.subr.mxu0 0.0
        %8610 = vmatpush1.msra.mxu0 0.0
        %8611 = vmatprep.subr.mxu0 0.0
        %8612 = vmatpush1.msra.mxu0 0.0
        %8613 = vmatprep.subr.mxu0 0.0
        %8614 = vmatpush1.msra.mxu0 0.0
        %8615 = vmatprep.subr.mxu0 0.0
        %8616 = vmatpush1.msra.mxu0 0.0
        %8617 = vmatprep.subr.mxu0 0.0
        %8618 = vmatpush1.msra.mxu0 0.0
        %8619 = vmatprep.subr.mxu0 0.0
        %8620 = vmatpush1.msra.mxu0 0.0
        %8621 = vmatprep.subr.mxu0 0.0
        %8622 = vmatpush1.msra.mxu0 0.0
        %8623 = vmatprep.subr.mxu0 0.0
        %8624 = vmatpush1.msra.mxu0 0.0
        %8625 = vmatprep.subr.mxu0 0.0
        %8626 = vmatpush1.msra.mxu0 0.0
        %8627 = vmatprep.subr.mxu0 0.0
        %8628 = vmatpush1.msra.mxu0 0.0
        %8629 = vmatprep.subr.mxu0 0.0
        %8630 = vmatpush1.msra.mxu0 0.0
        %8631 = vmatprep.subr.mxu0 0.0
        %8632 = vmatpush1.msra.mxu0 0.0
        %8633 = vmatprep.mubr.f32.mxu0 0.0
        %v8634 = vand.u32 %v6684, 4294901760
        %8635 = vmatmul.mubr.f32.gmra.mrb[0].mxu0 %v8634
        %v8636 = vpop.f32.mrb[0].mxu0
        %v8637 = vadd.f32 %v8562, %v8636
        %v8638 = vpop.f32.mrb[0].mxu0
        %8639 = vdwg.mxu0
        %8640 = vmatprep.subr.mxu0 0.0
        %v8641 = vand.u32 %v414, 4294901760
        %8642 = vmatpush1.msra.mxu0 %v8641
        %8643 = vmatprep.subr.mxu0 0.0
        %v8644 = vand.u32 %v415, 4294901760
        %8645 = vmatpush1.msra.mxu0 %v8644
        %8646 = vmatprep.subr.mxu0 0.0
        %v8647 = vand.u32 %v416, 4294901760
        %8648 = vmatpush1.msra.mxu0 %v8647
        %8649 = vmatprep.subr.mxu0 0.0
        %v8650 = vand.u32 %v417, 4294901760
        %8651 = vmatpush1.msra.mxu0 %v8650
        %8652 = vmatprep.subr.mxu0 0.0
        %8653 = vmatpush1.msra.mxu0 0.0
        %8654 = vmatprep.subr.mxu0 0.0
        %8655 = vmatpush1.msra.mxu0 0.0
        %8656 = vmatprep.subr.mxu0 0.0
        %8657 = vmatpush1.msra.mxu0 0.0
        %8658 = vmatprep.subr.mxu0 0.0
        %8659 = vmatpush1.msra.mxu0 0.0
        %8660 = vmatprep.subr.mxu0 0.0
        %8661 = vmatpush1.msra.mxu0 0.0
        %8662 = vmatprep.subr.mxu0 0.0
        %8663 = vmatpush1.msra.mxu0 0.0
        %8664 = vmatprep.subr.mxu0 0.0
        %8665 = vmatpush1.msra.mxu0 0.0
        %8666 = vmatprep.subr.mxu0 0.0
        %8667 = vmatpush1.msra.mxu0 0.0
        %8668 = vmatprep.subr.mxu0 0.0
        %8669 = vmatpush1.msra.mxu0 0.0
        %8670 = vmatprep.subr.mxu0 0.0
        %8671 = vmatpush1.msra.mxu0 0.0
        %8672 = vmatprep.subr.mxu0 0.0
        %8673 = vmatpush1.msra.mxu0 0.0
        %8674 = vmatprep.subr.mxu0 0.0
        %8675 = vmatpush1.msra.mxu0 0.0
        %8676 = vmatprep.subr.mxu0 0.0
        %8677 = vmatpush1.msra.mxu0 0.0
        %8678 = vmatprep.subr.mxu0 0.0
        %8679 = vmatpush1.msra.mxu0 0.0
        %8680 = vmatprep.subr.mxu0 0.0
        %8681 = vmatpush1.msra.mxu0 0.0
        %8682 = vmatprep.subr.mxu0 0.0
        %8683 = vmatpush1.msra.mxu0 0.0
        %8684 = vmatprep.subr.mxu0 0.0
        %8685 = vmatpush1.msra.mxu0 0.0
        %8686 = vmatprep.subr.mxu0 0.0
        %8687 = vmatpush1.msra.mxu0 0.0
        %8688 = vmatprep.subr.mxu0 0.0
        %8689 = vmatpush1.msra.mxu0 0.0
        %8690 = vmatprep.subr.mxu0 0.0
        %8691 = vmatpush1.msra.mxu0 0.0
        %8692 = vmatprep.subr.mxu0 0.0
        %8693 = vmatpush1.msra.mxu0 0.0
        %8694 = vmatprep.subr.mxu0 0.0
        %8695 = vmatpush1.msra.mxu0 0.0
        %8696 = vmatprep.subr.mxu0 0.0
        %8697 = vmatpush1.msra.mxu0 0.0
        %8698 = vmatprep.subr.mxu0 0.0
        %8699 = vmatpush1.msra.mxu0 0.0
        %8700 = vmatprep.subr.mxu0 0.0
        %8701 = vmatpush1.msra.mxu0 0.0
        %8702 = vmatprep.subr.mxu0 0.0
        %8703 = vmatpush1.msra.mxu0 0.0
        %8704 = vmatprep.subr.mxu0 0.0
        %8705 = vmatpush1.msra.mxu0 0.0
        %8706 = vmatprep.subr.mxu0 0.0
        %8707 = vmatpush1.msra.mxu0 0.0
        %8708 = vmatprep.mubr.f32.mxu0 0.0
        %v8709 = vand.u32 %v7172, 4294901760
        %v8710 = vsub.f32 %v7172, %v8709
        %v8711 = vand.u32 %v8710, 4294901760
        %v8712 = vsub.f32 %v8710, %v8711
        %v8713 = vand.u32 %v8712, 4294901760
        %8714 = vmatmul.mubr.f32.gmra.mrb[0].mxu0 %v8713
        %v8715 = vpop.f32.mrb[0].mxu0
        %v8716 = vadd.f32 %v8637, %v8715
        %v8717 = vpop.f32.mrb[0].mxu0
        %8718 = vdwg.mxu0
        %8719 = vmatprep.subr.mxu0 0.0
        %v8720 = vand.u32 %v414, 4294901760
        %v8721 = vsub.f32 %v414, %v8720
        %v8722 = vand.u32 %v8721, 4294901760
        %v8723 = vsub.f32 %v8721, %v8722
        %v8724 = vand.u32 %v8723, 4294901760
        %8725 = vmatpush1.msra.mxu0 %v8724
        %8726 = vmatprep.subr.mxu0 0.0
        %v8727 = vand.u32 %v415, 4294901760
        %v8728 = vsub.f32 %v415, %v8727
        %v8729 = vand.u32 %v8728, 4294901760
        %v8730 = vsub.f32 %v8728, %v8729
        %v8731 = vand.u32 %v8730, 4294901760
        %8732 = vmatpush1.msra.mxu0 %v8731
        %8733 = vmatprep.subr.mxu0 0.0
        %v8734 = vand.u32 %v416, 4294901760
        %v8735 = vsub.f32 %v416, %v8734
        %v8736 = vand.u32 %v8735, 4294901760
        %v8737 = vsub.f32 %v8735, %v8736
        %v8738 = vand.u32 %v8737, 4294901760
        %8739 = vmatpush1.msra.mxu0 %v8738
        %8740 = vmatprep.subr.mxu0 0.0
        %v8741 = vand.u32 %v417, 4294901760
        %v8742 = vsub.f32 %v417, %v8741
        %v8743 = vand.u32 %v8742, 4294901760
        %v8744 = vsub.f32 %v8742, %v8743
        %v8745 = vand.u32 %v8744, 4294901760
        %8746 = vmatpush1.msra.mxu0 %v8745
        %8747 = vmatprep.subr.mxu0 0.0
        %8748 = vmatpush1.msra.mxu0 0.0
        %8749 = vmatprep.subr.mxu0 0.0
        %8750 = vmatpush1.msra.mxu0 0.0
        %8751 = vmatprep.subr.mxu0 0.0
        %8752 = vmatpush1.msra.mxu0 0.0
        %8753 = vmatprep.subr.mxu0 0.0
        %8754 = vmatpush1.msra.mxu0 0.0
        %8755 = vmatprep.subr.mxu0 0.0
        %8756 = vmatpush1.msra.mxu0 0.0
        %8757 = vmatprep.subr.mxu0 0.0
        %8758 = vmatpush1.msra.mxu0 0.0
        %8759 = vmatprep.subr.mxu0 0.0
        %8760 = vmatpush1.msra.mxu0 0.0
        %8761 = vmatprep.subr.mxu0 0.0
        %8762 = vmatpush1.msra.mxu0 0.0
        %8763 = vmatprep.subr.mxu0 0.0
        %8764 = vmatpush1.msra.mxu0 0.0
        %8765 = vmatprep.subr.mxu0 0.0
        %8766 = vmatpush1.msra.mxu0 0.0
        %8767 = vmatprep.subr.mxu0 0.0
        %8768 = vmatpush1.msra.mxu0 0.0
        %8769 = vmatprep.subr.mxu0 0.0
        %8770 = vmatpush1.msra.mxu0 0.0
        %8771 = vmatprep.subr.mxu0 0.0
        %8772 = vmatpush1.msra.mxu0 0.0
        %8773 = vmatprep.subr.mxu0 0.0
        %8774 = vmatpush1.msra.mxu0 0.0
        %8775 = vmatprep.subr.mxu0 0.0
        %8776 = vmatpush1.msra.mxu0 0.0
        %8777 = vmatprep.subr.mxu0 0.0
        %8778 = vmatpush1.msra.mxu0 0.0
        %8779 = vmatprep.subr.mxu0 0.0
        %8780 = vmatpush1.msra.mxu0 0.0
        %8781 = vmatprep.subr.mxu0 0.0
        %8782 = vmatpush1.msra.mxu0 0.0
        %8783 = vmatprep.subr.mxu0 0.0
        %8784 = vmatpush1.msra.mxu0 0.0
        %8785 = vmatprep.subr.mxu0 0.0
        %8786 = vmatpush1.msra.mxu0 0.0
        %8787 = vmatprep.subr.mxu0 0.0
        %8788 = vmatpush1.msra.mxu0 0.0
        %8789 = vmatprep.subr.mxu0 0.0
        %8790 = vmatpush1.msra.mxu0 0.0
        %8791 = vmatprep.subr.mxu0 0.0
        %8792 = vmatpush1.msra.mxu0 0.0
        %8793 = vmatprep.subr.mxu0 0.0
        %8794 = vmatpush1.msra.mxu0 0.0
        %8795 = vmatprep.subr.mxu0 0.0
        %8796 = vmatpush1.msra.mxu0 0.0
        %8797 = vmatprep.subr.mxu0 0.0
        %8798 = vmatpush1.msra.mxu0 0.0
        %8799 = vmatprep.subr.mxu0 0.0
        %8800 = vmatpush1.msra.mxu0 0.0
        %8801 = vmatprep.subr.mxu0 0.0
        %8802 = vmatpush1.msra.mxu0 0.0
        %8803 = vmatprep.mubr.f32.mxu0 0.0
        %v8804 = vand.u32 %v7172, 4294901760
        %8805 = vmatmul.mubr.f32.gmra.mrb[0].mxu0 %v8804
        %v8806 = vpop.f32.mrb[0].mxu0
        %v8807 = vadd.f32 %v8716, %v8806
        %v8808 = vpop.f32.mrb[0].mxu0
        %8809 = vdwg.mxu0
        %8810 = vmatprep.subr.mxu0 0.0
        %v8811 = vand.u32 %v414, 4294901760
        %v8812 = vsub.f32 %v414, %v8811
        %8813 = vmatpush1.msra.mxu0 %v8812
        %8814 = vmatprep.subr.mxu0 0.0
        %v8815 = vand.u32 %v415, 4294901760
        %v8816 = vsub.f32 %v415, %v8815
        %8817 = vmatpush1.msra.mxu0 %v8816
        %8818 = vmatprep.subr.mxu0 0.0
        %v8819 = vand.u32 %v416, 4294901760
        %v8820 = vsub.f32 %v416, %v8819
        %8821 = vmatpush1.msra.mxu0 %v8820
        %8822 = vmatprep.subr.mxu0 0.0
        %v8823 = vand.u32 %v417, 4294901760
        %v8824 = vsub.f32 %v417, %v8823
        %8825 = vmatpush1.msra.mxu0 %v8824
        %8826 = vmatprep.subr.mxu0 0.0
        %8827 = vmatpush1.msra.mxu0 0.0
        %8828 = vmatprep.subr.mxu0 0.0
        %8829 = vmatpush1.msra.mxu0 0.0
        %8830 = vmatprep.subr.mxu0 0.0
        %8831 = vmatpush1.msra.mxu0 0.0
        %8832 = vmatprep.subr.mxu0 0.0
        %8833 = vmatpush1.msra.mxu0 0.0
        %8834 = vmatprep.subr.mxu0 0.0
        %8835 = vmatpush1.msra.mxu0 0.0
        %8836 = vmatprep.subr.mxu0 0.0
        %8837 = vmatpush1.msra.mxu0 0.0
        %8838 = vmatprep.subr.mxu0 0.0
        %8839 = vmatpush1.msra.mxu0 0.0
        %8840 = vmatprep.subr.mxu0 0.0
        %8841 = vmatpush1.msra.mxu0 0.0
        %8842 = vmatprep.subr.mxu0 0.0
        %8843 = vmatpush1.msra.mxu0 0.0
        %8844 = vmatprep.subr.mxu0 0.0
        %8845 = vmatpush1.msra.mxu0 0.0
        %8846 = vmatprep.subr.mxu0 0.0
        %8847 = vmatpush1.msra.mxu0 0.0
        %8848 = vmatprep.subr.mxu0 0.0
        %8849 = vmatpush1.msra.mxu0 0.0
        %8850 = vmatprep.subr.mxu0 0.0
        %8851 = vmatpush1.msra.mxu0 0.0
        %8852 = vmatprep.subr.mxu0 0.0
        %8853 = vmatpush1.msra.mxu0 0.0
        %8854 = vmatprep.subr.mxu0 0.0
        %8855 = vmatpush1.msra.mxu0 0.0
        %8856 = vmatprep.subr.mxu0 0.0
        %8857 = vmatpush1.msra.mxu0 0.0
        %8858 = vmatprep.subr.mxu0 0.0
        %8859 = vmatpush1.msra.mxu0 0.0
        %8860 = vmatprep.subr.mxu0 0.0
        %8861 = vmatpush1.msra.mxu0 0.0
        %8862 = vmatprep.subr.mxu0 0.0
        %8863 = vmatpush1.msra.mxu0 0.0
        %8864 = vmatprep.subr.mxu0 0.0
        %8865 = vmatpush1.msra.mxu0 0.0
        %8866 = vmatprep.subr.mxu0 0.0
        %8867 = vmatpush1.msra.mxu0 0.0
        %8868 = vmatprep.subr.mxu0 0.0
        %8869 = vmatpush1.msra.mxu0 0.0
        %8870 = vmatprep.subr.mxu0 0.0
        %8871 = vmatpush1.msra.mxu0 0.0
        %8872 = vmatprep.subr.mxu0 0.0
        %8873 = vmatpush1.msra.mxu0 0.0
        %8874 = vmatprep.subr.mxu0 0.0
        %8875 = vmatpush1.msra.mxu0 0.0
        %8876 = vmatprep.subr.mxu0 0.0
        %8877 = vmatpush1.msra.mxu0 0.0
        %8878 = vmatprep.subr.mxu0 0.0
        %8879 = vmatpush1.msra.mxu0 0.0
        %8880 = vmatprep.subr.mxu0 0.0
        %8881 = vmatpush1.msra.mxu0 0.0
        %8882 = vmatprep.mubr.f32.mxu0 0.0
        %v8883 = vand.u32 %v7172, 4294901760
        %v8884 = vsub.f32 %v7172, %v8883
        %8885 = vmatmul.mubr.f32.gmra.mrb[0].mxu0 %v8884
        %v8886 = vpop.f32.mrb[0].mxu0
        %v8887 = vadd.f32 %v8807, %v8886
        %v8888 = vpop.f32.mrb[0].mxu0
        %8889 = vdwg.mxu0
        %8890 = vmatprep.subr.mxu0 0.0
        %v8891 = vand.u32 %v414, 4294901760
        %8892 = vmatpush1.msra.mxu0 %v8891
        %8893 = vmatprep.subr.mxu0 0.0
        %v8894 = vand.u32 %v415, 4294901760
        %8895 = vmatpush1.msra.mxu0 %v8894
        %8896 = vmatprep.subr.mxu0 0.0
        %v8897 = vand.u32 %v416, 4294901760
        %8898 = vmatpush1.msra.mxu0 %v8897
        %8899 = vmatprep.subr.mxu0 0.0
        %v8900 = vand.u32 %v417, 4294901760
        %8901 = vmatpush1.msra.mxu0 %v8900
        %8902 = vmatprep.subr.mxu0 0.0
        %8903 = vmatpush1.msra.mxu0 0.0
        %8904 = vmatprep.subr.mxu0 0.0
        %8905 = vmatpush1.msra.mxu0 0.0
        %8906 = vmatprep.subr.mxu0 0.0
        %8907 = vmatpush1.msra.mxu0 0.0
        %8908 = vmatprep.subr.mxu0 0.0
        %8909 = vmatpush1.msra.mxu0 0.0
        %8910 = vmatprep.subr.mxu0 0.0
        %8911 = vmatpush1.msra.mxu0 0.0
        %8912 = vmatprep.subr.mxu0 0.0
        %8913 = vmatpush1.msra.mxu0 0.0
        %8914 = vmatprep.subr.mxu0 0.0
        %8915 = vmatpush1.msra.mxu0 0.0
        %8916 = vmatprep.subr.mxu0 0.0
        %8917 = vmatpush1.msra.mxu0 0.0
        %8918 = vmatprep.subr.mxu0 0.0
        %8919 = vmatpush1.msra.mxu0 0.0
        %8920 = vmatprep.subr.mxu0 0.0
        %8921 = vmatpush1.msra.mxu0 0.0
        %8922 = vmatprep.subr.mxu0 0.0
        %8923 = vmatpush1.msra.mxu0 0.0
        %8924 = vmatprep.subr.mxu0 0.0
        %8925 = vmatpush1.msra.mxu0 0.0
        %8926 = vmatprep.subr.mxu0 0.0
        %8927 = vmatpush1.msra.mxu0 0.0
        %8928 = vmatprep.subr.mxu0 0.0
        %8929 = vmatpush1.msra.mxu0 0.0
        %8930 = vmatprep.subr.mxu0 0.0
        %8931 = vmatpush1.msra.mxu0 0.0
        %8932 = vmatprep.subr.mxu0 0.0
        %8933 = vmatpush1.msra.mxu0 0.0
        %8934 = vmatprep.subr.mxu0 0.0
        %8935 = vmatpush1.msra.mxu0 0.0
        %8936 = vmatprep.subr.mxu0 0.0
        %8937 = vmatpush1.msra.mxu0 0.0
        %8938 = vmatprep.subr.mxu0 0.0
        %8939 = vmatpush1.msra.mxu0 0.0
        %8940 = vmatprep.subr.mxu0 0.0
        %8941 = vmatpush1.msra.mxu0 0.0
        %8942 = vmatprep.subr.mxu0 0.0
        %8943 = vmatpush1.msra.mxu0 0.0
        %8944 = vmatprep.subr.mxu0 0.0
        %8945 = vmatpush1.msra.mxu0 0.0
        %8946 = vmatprep.subr.mxu0 0.0
        %8947 = vmatpush1.msra.mxu0 0.0
        %8948 = vmatprep.subr.mxu0 0.0
        %8949 = vmatpush1.msra.mxu0 0.0
        %8950 = vmatprep.subr.mxu0 0.0
        %8951 = vmatpush1.msra.mxu0 0.0
        %8952 = vmatprep.subr.mxu0 0.0
        %8953 = vmatpush1.msra.mxu0 0.0
        %8954 = vmatprep.subr.mxu0 0.0
        %8955 = vmatpush1.msra.mxu0 0.0
        %8956 = vmatprep.subr.mxu0 0.0
        %8957 = vmatpush1.msra.mxu0 0.0
        %8958 = vmatprep.mubr.f32.mxu0 0.0
        %v8959 = vand.u32 %v7172, 4294901760
        %v8960 = vsub.f32 %v7172, %v8959
        %v8961 = vand.u32 %v8960, 4294901760
        %8962 = vmatmul.mubr.f32.gmra.mrb[0].mxu0 %v8961
        %v8963 = vpop.f32.mrb[0].mxu0
        %v8964 = vadd.f32 %v8887, %v8963
        %v8965 = vpop.f32.mrb[0].mxu0
        %8966 = vdwg.mxu0
        %8967 = vmatprep.subr.mxu0 0.0
        %v8968 = vand.u32 %v414, 4294901760
        %v8969 = vsub.f32 %v414, %v8968
        %v8970 = vand.u32 %v8969, 4294901760
        %8971 = vmatpush1.msra.mxu0 %v8970
        %8972 = vmatprep.subr.mxu0 0.0
        %v8973 = vand.u32 %v415, 4294901760
        %v8974 = vsub.f32 %v415, %v8973
        %v8975 = vand.u32 %v8974, 4294901760
        %8976 = vmatpush1.msra.mxu0 %v8975
        %8977 = vmatprep.subr.mxu0 0.0
        %v8978 = vand.u32 %v416, 4294901760
        %v8979 = vsub.f32 %v416, %v8978
        %v8980 = vand.u32 %v8979, 4294901760
        %8981 = vmatpush1.msra.mxu0 %v8980
        %8982 = vmatprep.subr.mxu0 0.0
        %v8983 = vand.u32 %v417, 4294901760
        %v8984 = vsub.f32 %v417, %v8983
        %v8985 = vand.u32 %v8984, 4294901760
        %8986 = vmatpush1.msra.mxu0 %v8985
        %8987 = vmatprep.subr.mxu0 0.0
        %8988 = vmatpush1.msra.mxu0 0.0
        %8989 = vmatprep.subr.mxu0 0.0
        %8990 = vmatpush1.msra.mxu0 0.0
        %8991 = vmatprep.subr.mxu0 0.0
        %8992 = vmatpush1.msra.mxu0 0.0
        %8993 = vmatprep.subr.mxu0 0.0
        %8994 = vmatpush1.msra.mxu0 0.0
        %8995 = vmatprep.subr.mxu0 0.0
        %8996 = vmatpush1.msra.mxu0 0.0
        %8997 = vmatprep.subr.mxu0 0.0
        %8998 = vmatpush1.msra.mxu0 0.0
        %8999 = vmatprep.subr.mxu0 0.0
        %9000 = vmatpush1.msra.mxu0 0.0
        %9001 = vmatprep.subr.mxu0 0.0
        %9002 = vmatpush1.msra.mxu0 0.0
        %9003 = vmatprep.subr.mxu0 0.0
        %9004 = vmatpush1.msra.mxu0 0.0
        %9005 = vmatprep.subr.mxu0 0.0
        %9006 = vmatpush1.msra.mxu0 0.0
        %9007 = vmatprep.subr.mxu0 0.0
        %9008 = vmatpush1.msra.mxu0 0.0
        %9009 = vmatprep.subr.mxu0 0.0
        %9010 = vmatpush1.msra.mxu0 0.0
        %9011 = vmatprep.subr.mxu0 0.0
        %9012 = vmatpush1.msra.mxu0 0.0
        %9013 = vmatprep.subr.mxu0 0.0
        %9014 = vmatpush1.msra.mxu0 0.0
        %9015 = vmatprep.subr.mxu0 0.0
        %9016 = vmatpush1.msra.mxu0 0.0
        %9017 = vmatprep.subr.mxu0 0.0
        %9018 = vmatpush1.msra.mxu0 0.0
        %9019 = vmatprep.subr.mxu0 0.0
        %9020 = vmatpush1.msra.mxu0 0.0
        %9021 = vmatprep.subr.mxu0 0.0
        %9022 = vmatpush1.msra.mxu0 0.0
        %9023 = vmatprep.subr.mxu0 0.0
        %9024 = vmatpush1.msra.mxu0 0.0
        %9025 = vmatprep.subr.mxu0 0.0
        %9026 = vmatpush1.msra.mxu0 0.0
        %9027 = vmatprep.subr.mxu0 0.0
        %9028 = vmatpush1.msra.mxu0 0.0
        %9029 = vmatprep.subr.mxu0 0.0
        %9030 = vmatpush1.msra.mxu0 0.0
        %9031 = vmatprep.subr.mxu0 0.0
        %9032 = vmatpush1.msra.mxu0 0.0
        %9033 = vmatprep.subr.mxu0 0.0
        %9034 = vmatpush1.msra.mxu0 0.0
        %9035 = vmatprep.subr.mxu0 0.0
        %9036 = vmatpush1.msra.mxu0 0.0
        %9037 = vmatprep.subr.mxu0 0.0
        %9038 = vmatpush1.msra.mxu0 0.0
        %9039 = vmatprep.subr.mxu0 0.0
        %9040 = vmatpush1.msra.mxu0 0.0
        %9041 = vmatprep.subr.mxu0 0.0
        %9042 = vmatpush1.msra.mxu0 0.0
        %9043 = vmatprep.mubr.f32.mxu0 0.0
        %v9044 = vand.u32 %v7172, 4294901760
        %9045 = vmatmul.mubr.f32.gmra.mrb[0].mxu0 %v9044
        %v9046 = vpop.f32.mrb[0].mxu0
        %v9047 = vadd.f32 %v8964, %v9046
        %v9048 = vpop.f32.mrb[0].mxu0
        %9049 = vdwg.mxu0
        %9050 = vmatprep.subr.mxu0 0.0
        %v9051 = vand.u32 %v414, 4294901760
        %9052 = vmatpush1.msra.mxu0 %v9051
        %9053 = vmatprep.subr.mxu0 0.0
        %v9054 = vand.u32 %v415, 4294901760
        %9055 = vmatpush1.msra.mxu0 %v9054
        %9056 = vmatprep.subr.mxu0 0.0
        %v9057 = vand.u32 %v416, 4294901760
        %9058 = vmatpush1.msra.mxu0 %v9057
        %9059 = vmatprep.subr.mxu0 0.0
        %v9060 = vand.u32 %v417, 4294901760
        %9061 = vmatpush1.msra.mxu0 %v9060
        %9062 = vmatprep.subr.mxu0 0.0
        %9063 = vmatpush1.msra.mxu0 0.0
        %9064 = vmatprep.subr.mxu0 0.0
        %9065 = vmatpush1.msra.mxu0 0.0
        %9066 = vmatprep.subr.mxu0 0.0
        %9067 = vmatpush1.msra.mxu0 0.0
        %9068 = vmatprep.subr.mxu0 0.0
        %9069 = vmatpush1.msra.mxu0 0.0
        %9070 = vmatprep.subr.mxu0 0.0
        %9071 = vmatpush1.msra.mxu0 0.0
        %9072 = vmatprep.subr.mxu0 0.0
        %9073 = vmatpush1.msra.mxu0 0.0
        %9074 = vmatprep.subr.mxu0 0.0
        %9075 = vmatpush1.msra.mxu0 0.0
        %9076 = vmatprep.subr.mxu0 0.0
        %9077 = vmatpush1.msra.mxu0 0.0
        %9078 = vmatprep.subr.mxu0 0.0
        %9079 = vmatpush1.msra.mxu0 0.0
        %9080 = vmatprep.subr.mxu0 0.0
        %9081 = vmatpush1.msra.mxu0 0.0
        %9082 = vmatprep.subr.mxu0 0.0
        %9083 = vmatpush1.msra.mxu0 0.0
        %9084 = vmatprep.subr.mxu0 0.0
        %9085 = vmatpush1.msra.mxu0 0.0
        %9086 = vmatprep.subr.mxu0 0.0
        %9087 = vmatpush1.msra.mxu0 0.0
        %9088 = vmatprep.subr.mxu0 0.0
        %9089 = vmatpush1.msra.mxu0 0.0
        %9090 = vmatprep.subr.mxu0 0.0
        %9091 = vmatpush1.msra.mxu0 0.0
        %9092 = vmatprep.subr.mxu0 0.0
        %9093 = vmatpush1.msra.mxu0 0.0
        %9094 = vmatprep.subr.mxu0 0.0
        %9095 = vmatpush1.msra.mxu0 0.0
        %9096 = vmatprep.subr.mxu0 0.0
        %9097 = vmatpush1.msra.mxu0 0.0
        %9098 = vmatprep.subr.mxu0 0.0
        %9099 = vmatpush1.msra.mxu0 0.0
        %9100 = vmatprep.subr.mxu0 0.0
        %9101 = vmatpush1.msra.mxu0 0.0
        %9102 = vmatprep.subr.mxu0 0.0
        %9103 = vmatpush1.msra.mxu0 0.0
        %9104 = vmatprep.subr.mxu0 0.0
        %9105 = vmatpush1.msra.mxu0 0.0
        %9106 = vmatprep.subr.mxu0 0.0
        %9107 = vmatpush1.msra.mxu0 0.0
        %9108 = vmatprep.subr.mxu0 0.0
        %9109 = vmatpush1.msra.mxu0 0.0
        %9110 = vmatprep.subr.mxu0 0.0
        %9111 = vmatpush1.msra.mxu0 0.0
        %9112 = vmatprep.subr.mxu0 0.0
        %9113 = vmatpush1.msra.mxu0 0.0
        %9114 = vmatprep.subr.mxu0 0.0
        %9115 = vmatpush1.msra.mxu0 0.0
        %9116 = vmatprep.subr.mxu0 0.0
        %9117 = vmatpush1.msra.mxu0 0.0
        %9118 = vmatprep.mubr.f32.mxu0 0.0
        %v9119 = vand.u32 %v7172, 4294901760
        %9120 = vmatmul.mubr.f32.gmra.mrb[0].mxu0 %v9119
        %v9121 = vpop.f32.mrb[0].mxu0
        %v9122 = vadd.f32 %v9047, %v9121
        %v9123 = vpop.f32.mrb[0].mxu0
        %9124 = vdwg.mxu0
        %9125 = vmatprep.subr.mxu0 0.0
        %v9126 = vand.u32 %v422, 4294901760
        %9127 = vmatpush1.msra.mxu0 %v9126
        %9128 = vmatprep.subr.mxu0 0.0
        %v9129 = vand.u32 %v423, 4294901760
        %9130 = vmatpush1.msra.mxu0 %v9129
        %9131 = vmatprep.subr.mxu0 0.0
        %v9132 = vand.u32 %v424, 4294901760
        %9133 = vmatpush1.msra.mxu0 %v9132
        %9134 = vmatprep.subr.mxu0 0.0
        %v9135 = vand.u32 %v425, 4294901760
        %9136 = vmatpush1.msra.mxu0 %v9135
        %9137 = vmatprep.subr.mxu0 0.0
        %9138 = vmatpush1.msra.mxu0 0.0
        %9139 = vmatprep.subr.mxu0 0.0
        %9140 = vmatpush1.msra.mxu0 0.0
        %9141 = vmatprep.subr.mxu0 0.0
        %9142 = vmatpush1.msra.mxu0 0.0
        %9143 = vmatprep.subr.mxu0 0.0
        %9144 = vmatpush1.msra.mxu0 0.0
        %9145 = vmatprep.subr.mxu0 0.0
        %9146 = vmatpush1.msra.mxu0 0.0
        %9147 = vmatprep.subr.mxu0 0.0
        %9148 = vmatpush1.msra.mxu0 0.0
        %9149 = vmatprep.subr.mxu0 0.0
        %9150 = vmatpush1.msra.mxu0 0.0
        %9151 = vmatprep.subr.mxu0 0.0
        %9152 = vmatpush1.msra.mxu0 0.0
        %9153 = vmatprep.subr.mxu0 0.0
        %9154 = vmatpush1.msra.mxu0 0.0
        %9155 = vmatprep.subr.mxu0 0.0
        %9156 = vmatpush1.msra.mxu0 0.0
        %9157 = vmatprep.subr.mxu0 0.0
        %9158 = vmatpush1.msra.mxu0 0.0
        %9159 = vmatprep.subr.mxu0 0.0
        %9160 = vmatpush1.msra.mxu0 0.0
        %9161 = vmatprep.subr.mxu0 0.0
        %9162 = vmatpush1.msra.mxu0 0.0
        %9163 = vmatprep.subr.mxu0 0.0
        %9164 = vmatpush1.msra.mxu0 0.0
        %9165 = vmatprep.subr.mxu0 0.0
        %9166 = vmatpush1.msra.mxu0 0.0
        %9167 = vmatprep.subr.mxu0 0.0
        %9168 = vmatpush1.msra.mxu0 0.0
        %9169 = vmatprep.subr.mxu0 0.0
        %9170 = vmatpush1.msra.mxu0 0.0
        %9171 = vmatprep.subr.mxu0 0.0
        %9172 = vmatpush1.msra.mxu0 0.0
        %9173 = vmatprep.subr.mxu0 0.0
        %9174 = vmatpush1.msra.mxu0 0.0
        %9175 = vmatprep.subr.mxu0 0.0
        %9176 = vmatpush1.msra.mxu0 0.0
        %9177 = vmatprep.subr.mxu0 0.0
        %9178 = vmatpush1.msra.mxu0 0.0
        %9179 = vmatprep.subr.mxu0 0.0
        %9180 = vmatpush1.msra.mxu0 0.0
        %9181 = vmatprep.subr.mxu0 0.0
        %9182 = vmatpush1.msra.mxu0 0.0
        %9183 = vmatprep.subr.mxu0 0.0
        %9184 = vmatpush1.msra.mxu0 0.0
        %9185 = vmatprep.subr.mxu0 0.0
        %9186 = vmatpush1.msra.mxu0 0.0
        %9187 = vmatprep.subr.mxu0 0.0
        %9188 = vmatpush1.msra.mxu0 0.0
        %9189 = vmatprep.subr.mxu0 0.0
        %9190 = vmatpush1.msra.mxu0 0.0
        %9191 = vmatprep.subr.mxu0 0.0
        %9192 = vmatpush1.msra.mxu0 0.0
        %9193 = vmatprep.mubr.f32.mxu0 0.0
        %v9194 = vand.u32 %v7660, 4294901760
        %v9195 = vsub.f32 %v7660, %v9194
        %v9196 = vand.u32 %v9195, 4294901760
        %v9197 = vsub.f32 %v9195, %v9196
        %v9198 = vand.u32 %v9197, 4294901760
        %9199 = vmatmul.mubr.f32.gmra.mrb[0].mxu0 %v9198
        %v9200 = vpop.f32.mrb[0].mxu0
        %v9201 = vadd.f32 0.0, %v9200
        %v9202 = vpop.f32.mrb[0].mxu0
        %9203 = vdwg.mxu0
        %9204 = vmatprep.subr.mxu0 0.0
        %v9205 = vand.u32 %v422, 4294901760
        %v9206 = vsub.f32 %v422, %v9205
        %v9207 = vand.u32 %v9206, 4294901760
        %v9208 = vsub.f32 %v9206, %v9207
        %v9209 = vand.u32 %v9208, 4294901760
        %9210 = vmatpush1.msra.mxu0 %v9209
        %9211 = vmatprep.subr.mxu0 0.0
        %v9212 = vand.u32 %v423, 4294901760
        %v9213 = vsub.f32 %v423, %v9212
        %v9214 = vand.u32 %v9213, 4294901760
        %v9215 = vsub.f32 %v9213, %v9214
        %v9216 = vand.u32 %v9215, 4294901760
        %9217 = vmatpush1.msra.mxu0 %v9216
        %9218 = vmatprep.subr.mxu0 0.0
        %v9219 = vand.u32 %v424, 4294901760
        %v9220 = vsub.f32 %v424, %v9219
        %v9221 = vand.u32 %v9220, 4294901760
        %v9222 = vsub.f32 %v9220, %v9221
        %v9223 = vand.u32 %v9222, 4294901760
        %9224 = vmatpush1.msra.mxu0 %v9223
        %9225 = vmatprep.subr.mxu0 0.0
        %v9226 = vand.u32 %v425, 4294901760
        %v9227 = vsub.f32 %v425, %v9226
        %v9228 = vand.u32 %v9227, 4294901760
        %v9229 = vsub.f32 %v9227, %v9228
        %v9230 = vand.u32 %v9229, 4294901760
        %9231 = vmatpush1.msra.mxu0 %v9230
        %9232 = vmatprep.subr.mxu0 0.0
        %9233 = vmatpush1.msra.mxu0 0.0
        %9234 = vmatprep.subr.mxu0 0.0
        %9235 = vmatpush1.msra.mxu0 0.0
        %9236 = vmatprep.subr.mxu0 0.0
        %9237 = vmatpush1.msra.mxu0 0.0
        %9238 = vmatprep.subr.mxu0 0.0
        %9239 = vmatpush1.msra.mxu0 0.0
        %9240 = vmatprep.subr.mxu0 0.0
        %9241 = vmatpush1.msra.mxu0 0.0
        %9242 = vmatprep.subr.mxu0 0.0
        %9243 = vmatpush1.msra.mxu0 0.0
        %9244 = vmatprep.subr.mxu0 0.0
        %9245 = vmatpush1.msra.mxu0 0.0
        %9246 = vmatprep.subr.mxu0 0.0
        %9247 = vmatpush1.msra.mxu0 0.0
        %9248 = vmatprep.subr.mxu0 0.0
        %9249 = vmatpush1.msra.mxu0 0.0
        %9250 = vmatprep.subr.mxu0 0.0
        %9251 = vmatpush1.msra.mxu0 0.0
        %9252 = vmatprep.subr.mxu0 0.0
        %9253 = vmatpush1.msra.mxu0 0.0
        %9254 = vmatprep.subr.mxu0 0.0
        %9255 = vmatpush1.msra.mxu0 0.0
        %9256 = vmatprep.subr.mxu0 0.0
        %9257 = vmatpush1.msra.mxu0 0.0
        %9258 = vmatprep.subr.mxu0 0.0
        %9259 = vmatpush1.msra.mxu0 0.0
        %9260 = vmatprep.subr.mxu0 0.0
        %9261 = vmatpush1.msra.mxu0 0.0
        %9262 = vmatprep.subr.mxu0 0.0
        %9263 = vmatpush1.msra.mxu0 0.0
        %9264 = vmatprep.subr.mxu0 0.0
        %9265 = vmatpush1.msra.mxu0 0.0
        %9266 = vmatprep.subr.mxu0 0.0
        %9267 = vmatpush1.msra.mxu0 0.0
        %9268 = vmatprep.subr.mxu0 0.0
        %9269 = vmatpush1.msra.mxu0 0.0
        %9270 = vmatprep.subr.mxu0 0.0
        %9271 = vmatpush1.msra.mxu0 0.0
        %9272 = vmatprep.subr.mxu0 0.0
        %9273 = vmatpush1.msra.mxu0 0.0
        %9274 = vmatprep.subr.mxu0 0.0
        %9275 = vmatpush1.msra.mxu0 0.0
        %9276 = vmatprep.subr.mxu0 0.0
        %9277 = vmatpush1.msra.mxu0 0.0
        %9278 = vmatprep.subr.mxu0 0.0
        %9279 = vmatpush1.msra.mxu0 0.0
        %9280 = vmatprep.subr.mxu0 0.0
        %9281 = vmatpush1.msra.mxu0 0.0
        %9282 = vmatprep.subr.mxu0 0.0
        %9283 = vmatpush1.msra.mxu0 0.0
        %9284 = vmatprep.subr.mxu0 0.0
        %9285 = vmatpush1.msra.mxu0 0.0
        %9286 = vmatprep.subr.mxu0 0.0
        %9287 = vmatpush1.msra.mxu0 0.0
        %9288 = vmatprep.mubr.f32.mxu0 0.0
        %v9289 = vand.u32 %v7660, 4294901760
        %9290 = vmatmul.mubr.f32.gmra.mrb[0].mxu0 %v9289
        %v9291 = vpop.f32.mrb[0].mxu0
        %v9292 = vadd.f32 %v9201, %v9291
        %v9293 = vpop.f32.mrb[0].mxu0
        %9294 = vdwg.mxu0
        %9295 = vmatprep.subr.mxu0 0.0
        %v9296 = vand.u32 %v422, 4294901760
        %v9297 = vsub.f32 %v422, %v9296
        %9298 = vmatpush1.msra.mxu0 %v9297
        %9299 = vmatprep.subr.mxu0 0.0
        %v9300 = vand.u32 %v423, 4294901760
        %v9301 = vsub.f32 %v423, %v9300
        %9302 = vmatpush1.msra.mxu0 %v9301
        %9303 = vmatprep.subr.mxu0 0.0
        %v9304 = vand.u32 %v424, 4294901760
        %v9305 = vsub.f32 %v424, %v9304
        %9306 = vmatpush1.msra.mxu0 %v9305
        %9307 = vmatprep.subr.mxu0 0.0
        %v9308 = vand.u32 %v425, 4294901760
        %v9309 = vsub.f32 %v425, %v9308
        %9310 = vmatpush1.msra.mxu0 %v9309
        %9311 = vmatprep.subr.mxu0 0.0
        %9312 = vmatpush1.msra.mxu0 0.0
        %9313 = vmatprep.subr.mxu0 0.0
        %9314 = vmatpush1.msra.mxu0 0.0
        %9315 = vmatprep.subr.mxu0 0.0
        %9316 = vmatpush1.msra.mxu0 0.0
        %9317 = vmatprep.subr.mxu0 0.0
        %9318 = vmatpush1.msra.mxu0 0.0
        %9319 = vmatprep.subr.mxu0 0.0
        %9320 = vmatpush1.msra.mxu0 0.0
        %9321 = vmatprep.subr.mxu0 0.0
        %9322 = vmatpush1.msra.mxu0 0.0
        %9323 = vmatprep.subr.mxu0 0.0
        %9324 = vmatpush1.msra.mxu0 0.0
        %9325 = vmatprep.subr.mxu0 0.0
        %9326 = vmatpush1.msra.mxu0 0.0
        %9327 = vmatprep.subr.mxu0 0.0
        %9328 = vmatpush1.msra.mxu0 0.0
        %9329 = vmatprep.subr.mxu0 0.0
        %9330 = vmatpush1.msra.mxu0 0.0
        %9331 = vmatprep.subr.mxu0 0.0
        %9332 = vmatpush1.msra.mxu0 0.0
        %9333 = vmatprep.subr.mxu0 0.0
        %9334 = vmatpush1.msra.mxu0 0.0
        %9335 = vmatprep.subr.mxu0 0.0
        %9336 = vmatpush1.msra.mxu0 0.0
        %9337 = vmatprep.subr.mxu0 0.0
        %9338 = vmatpush1.msra.mxu0 0.0
        %9339 = vmatprep.subr.mxu0 0.0
        %9340 = vmatpush1.msra.mxu0 0.0
        %9341 = vmatprep.subr.mxu0 0.0
        %9342 = vmatpush1.msra.mxu0 0.0
        %9343 = vmatprep.subr.mxu0 0.0
        %9344 = vmatpush1.msra.mxu0 0.0
        %9345 = vmatprep.subr.mxu0 0.0
        %9346 = vmatpush1.msra.mxu0 0.0
        %9347 = vmatprep.subr.mxu0 0.0
        %9348 = vmatpush1.msra.mxu0 0.0
        %9349 = vmatprep.subr.mxu0 0.0
        %9350 = vmatpush1.msra.mxu0 0.0
        %9351 = vmatprep.subr.mxu0 0.0
        %9352 = vmatpush1.msra.mxu0 0.0
        %9353 = vmatprep.subr.mxu0 0.0
        %9354 = vmatpush1.msra.mxu0 0.0
        %9355 = vmatprep.subr.mxu0 0.0
        %9356 = vmatpush1.msra.mxu0 0.0
        %9357 = vmatprep.subr.mxu0 0.0
        %9358 = vmatpush1.msra.mxu0 0.0
        %9359 = vmatprep.subr.mxu0 0.0
        %9360 = vmatpush1.msra.mxu0 0.0
        %9361 = vmatprep.subr.mxu0 0.0
        %9362 = vmatpush1.msra.mxu0 0.0
        %9363 = vmatprep.subr.mxu0 0.0
        %9364 = vmatpush1.msra.mxu0 0.0
        %9365 = vmatprep.subr.mxu0 0.0
        %9366 = vmatpush1.msra.mxu0 0.0
        %9367 = vmatprep.mubr.f32.mxu0 0.0
        %v9368 = vand.u32 %v7660, 4294901760
        %v9369 = vsub.f32 %v7660, %v9368
        %9370 = vmatmul.mubr.f32.gmra.mrb[0].mxu0 %v9369
        %v9371 = vpop.f32.mrb[0].mxu0
        %v9372 = vadd.f32 %v9292, %v9371
        %v9373 = vpop.f32.mrb[0].mxu0
        %9374 = vdwg.mxu0
        %9375 = vmatprep.subr.mxu0 0.0
        %v9376 = vand.u32 %v422, 4294901760
        %9377 = vmatpush1.msra.mxu0 %v9376
        %9378 = vmatprep.subr.mxu0 0.0
        %v9379 = vand.u32 %v423, 4294901760
        %9380 = vmatpush1.msra.mxu0 %v9379
        %9381 = vmatprep.subr.mxu0 0.0
        %v9382 = vand.u32 %v424, 4294901760
        %9383 = vmatpush1.msra.mxu0 %v9382
        %9384 = vmatprep.subr.mxu0 0.0
        %v9385 = vand.u32 %v425, 4294901760
        %9386 = vmatpush1.msra.mxu0 %v9385
        %9387 = vmatprep.subr.mxu0 0.0
        %9388 = vmatpush1.msra.mxu0 0.0
        %9389 = vmatprep.subr.mxu0 0.0
        %9390 = vmatpush1.msra.mxu0 0.0
        %9391 = vmatprep.subr.mxu0 0.0
        %9392 = vmatpush1.msra.mxu0 0.0
        %9393 = vmatprep.subr.mxu0 0.0
        %9394 = vmatpush1.msra.mxu0 0.0
        %9395 = vmatprep.subr.mxu0 0.0
        %9396 = vmatpush1.msra.mxu0 0.0
        %9397 = vmatprep.subr.mxu0 0.0
        %9398 = vmatpush1.msra.mxu0 0.0
        %9399 = vmatprep.subr.mxu0 0.0
        %9400 = vmatpush1.msra.mxu0 0.0
        %9401 = vmatprep.subr.mxu0 0.0
        %9402 = vmatpush1.msra.mxu0 0.0
        %9403 = vmatprep.subr.mxu0 0.0
        %9404 = vmatpush1.msra.mxu0 0.0
        %9405 = vmatprep.subr.mxu0 0.0
        %9406 = vmatpush1.msra.mxu0 0.0
        %9407 = vmatprep.subr.mxu0 0.0
        %9408 = vmatpush1.msra.mxu0 0.0
        %9409 = vmatprep.subr.mxu0 0.0
        %9410 = vmatpush1.msra.mxu0 0.0
        %9411 = vmatprep.subr.mxu0 0.0
        %9412 = vmatpush1.msra.mxu0 0.0
        %9413 = vmatprep.subr.mxu0 0.0
        %9414 = vmatpush1.msra.mxu0 0.0
        %9415 = vmatprep.subr.mxu0 0.0
        %9416 = vmatpush1.msra.mxu0 0.0
        %9417 = vmatprep.subr.mxu0 0.0
        %9418 = vmatpush1.msra.mxu0 0.0
        %9419 = vmatprep.subr.mxu0 0.0
        %9420 = vmatpush1.msra.mxu0 0.0
        %9421 = vmatprep.subr.mxu0 0.0
        %9422 = vmatpush1.msra.mxu0 0.0
        %9423 = vmatprep.subr.mxu0 0.0
        %9424 = vmatpush1.msra.mxu0 0.0
        %9425 = vmatprep.subr.mxu0 0.0
        %9426 = vmatpush1.msra.mxu0 0.0
        %9427 = vmatprep.subr.mxu0 0.0
        %9428 = vmatpush1.msra.mxu0 0.0
        %9429 = vmatprep.subr.mxu0 0.0
        %9430 = vmatpush1.msra.mxu0 0.0
        %9431 = vmatprep.subr.mxu0 0.0
        %9432 = vmatpush1.msra.mxu0 0.0
        %9433 = vmatprep.subr.mxu0 0.0
        %9434 = vmatpush1.msra.mxu0 0.0
        %9435 = vmatprep.subr.mxu0 0.0
        %9436 = vmatpush1.msra.mxu0 0.0
        %9437 = vmatprep.subr.mxu0 0.0
        %9438 = vmatpush1.msra.mxu0 0.0
        %9439 = vmatprep.subr.mxu0 0.0
        %9440 = vmatpush1.msra.mxu0 0.0
        %9441 = vmatprep.subr.mxu0 0.0
        %9442 = vmatpush1.msra.mxu0 0.0
        %9443 = vmatprep.mubr.f32.mxu0 0.0
        %v9444 = vand.u32 %v7660, 4294901760
        %v9445 = vsub.f32 %v7660, %v9444
        %v9446 = vand.u32 %v9445, 4294901760
        %9447 = vmatmul.mubr.f32.gmra.mrb[0].mxu0 %v9446
        %v9448 = vpop.f32.mrb[0].mxu0
        %v9449 = vadd.f32 %v9372, %v9448
        %v9450 = vpop.f32.mrb[0].mxu0
        %9451 = vdwg.mxu0
        %9452 = vmatprep.subr.mxu0 0.0
        %v9453 = vand.u32 %v422, 4294901760
        %v9454 = vsub.f32 %v422, %v9453
        %v9455 = vand.u32 %v9454, 4294901760
        %9456 = vmatpush1.msra.mxu0 %v9455
        %9457 = vmatprep.subr.mxu0 0.0
        %v9458 = vand.u32 %v423, 4294901760
        %v9459 = vsub.f32 %v423, %v9458
        %v9460 = vand.u32 %v9459, 4294901760
        %9461 = vmatpush1.msra.mxu0 %v9460
        %9462 = vmatprep.subr.mxu0 0.0
        %v9463 = vand.u32 %v424, 4294901760
        %v9464 = vsub.f32 %v424, %v9463
        %v9465 = vand.u32 %v9464, 4294901760
        %9466 = vmatpush1.msra.mxu0 %v9465
        %9467 = vmatprep.subr.mxu0 0.0
        %v9468 = vand.u32 %v425, 4294901760
        %v9469 = vsub.f32 %v425, %v9468
        %v9470 = vand.u32 %v9469, 4294901760
        %9471 = vmatpush1.msra.mxu0 %v9470
        %9472 = vmatprep.subr.mxu0 0.0
        %9473 = vmatpush1.msra.mxu0 0.0
        %9474 = vmatprep.subr.mxu0 0.0
        %9475 = vmatpush1.msra.mxu0 0.0
        %9476 = vmatprep.subr.mxu0 0.0
        %9477 = vmatpush1.msra.mxu0 0.0
        %9478 = vmatprep.subr.mxu0 0.0
        %9479 = vmatpush1.msra.mxu0 0.0
        %9480 = vmatprep.subr.mxu0 0.0
        %9481 = vmatpush1.msra.mxu0 0.0
        %9482 = vmatprep.subr.mxu0 0.0
        %9483 = vmatpush1.msra.mxu0 0.0
        %9484 = vmatprep.subr.mxu0 0.0
        %9485 = vmatpush1.msra.mxu0 0.0
        %9486 = vmatprep.subr.mxu0 0.0
        %9487 = vmatpush1.msra.mxu0 0.0
        %9488 = vmatprep.subr.mxu0 0.0
        %9489 = vmatpush1.msra.mxu0 0.0
        %9490 = vmatprep.subr.mxu0 0.0
        %9491 = vmatpush1.msra.mxu0 0.0
        %9492 = vmatprep.subr.mxu0 0.0
        %9493 = vmatpush1.msra.mxu0 0.0
        %9494 = vmatprep.subr.mxu0 0.0
        %9495 = vmatpush1.msra.mxu0 0.0
        %9496 = vmatprep.subr.mxu0 0.0
        %9497 = vmatpush1.msra.mxu0 0.0
        %9498 = vmatprep.subr.mxu0 0.0
        %9499 = vmatpush1.msra.mxu0 0.0
        %9500 = vmatprep.subr.mxu0 0.0
        %9501 = vmatpush1.msra.mxu0 0.0
        %9502 = vmatprep.subr.mxu0 0.0
        %9503 = vmatpush1.msra.mxu0 0.0
        %9504 = vmatprep.subr.mxu0 0.0
        %9505 = vmatpush1.msra.mxu0 0.0
        %9506 = vmatprep.subr.mxu0 0.0
        %9507 = vmatpush1.msra.mxu0 0.0
        %9508 = vmatprep.subr.mxu0 0.0
        %9509 = vmatpush1.msra.mxu0 0.0
        %9510 = vmatprep.subr.mxu0 0.0
        %9511 = vmatpush1.msra.mxu0 0.0
        %9512 = vmatprep.subr.mxu0 0.0
        %9513 = vmatpush1.msra.mxu0 0.0
        %9514 = vmatprep.subr.mxu0 0.0
        %9515 = vmatpush1.msra.mxu0 0.0
        %9516 = vmatprep.subr.mxu0 0.0
        %9517 = vmatpush1.msra.mxu0 0.0
        %9518 = vmatprep.subr.mxu0 0.0
        %9519 = vmatpush1.msra.mxu0 0.0
        %9520 = vmatprep.subr.mxu0 0.0
        %9521 = vmatpush1.msra.mxu0 0.0
        %9522 = vmatprep.subr.mxu0 0.0
        %9523 = vmatpush1.msra.mxu0 0.0
        %9524 = vmatprep.subr.mxu0 0.0
        %9525 = vmatpush1.msra.mxu0 0.0
        %9526 = vmatprep.subr.mxu0 0.0
        %9527 = vmatpush1.msra.mxu0 0.0
        %9528 = vmatprep.mubr.f32.mxu0 0.0
        %v9529 = vand.u32 %v7660, 4294901760
        %9530 = vmatmul.mubr.f32.gmra.mrb[0].mxu0 %v9529
        %v9531 = vpop.f32.mrb[0].mxu0
        %v9532 = vadd.f32 %v9449, %v9531
        %v9533 = vpop.f32.mrb[0].mxu0
        %9534 = vdwg.mxu0
        %9535 = vmatprep.subr.mxu0 0.0
        %v9536 = vand.u32 %v422, 4294901760
        %9537 = vmatpush1.msra.mxu0 %v9536
        %9538 = vmatprep.subr.mxu0 0.0
        %v9539 = vand.u32 %v423, 4294901760
        %9540 = vmatpush1.msra.mxu0 %v9539
        %9541 = vmatprep.subr.mxu0 0.0
        %v9542 = vand.u32 %v424, 4294901760
        %9543 = vmatpush1.msra.mxu0 %v9542
        %9544 = vmatprep.subr.mxu0 0.0
        %v9545 = vand.u32 %v425, 4294901760
        %9546 = vmatpush1.msra.mxu0 %v9545
        %9547 = vmatprep.subr.mxu0 0.0
        %9548 = vmatpush1.msra.mxu0 0.0
        %9549 = vmatprep.subr.mxu0 0.0
        %9550 = vmatpush1.msra.mxu0 0.0
        %9551 = vmatprep.subr.mxu0 0.0
        %9552 = vmatpush1.msra.mxu0 0.0
        %9553 = vmatprep.subr.mxu0 0.0
        %9554 = vmatpush1.msra.mxu0 0.0
        %9555 = vmatprep.subr.mxu0 0.0
        %9556 = vmatpush1.msra.mxu0 0.0
        %9557 = vmatprep.subr.mxu0 0.0
        %9558 = vmatpush1.msra.mxu0 0.0
        %9559 = vmatprep.subr.mxu0 0.0
        %9560 = vmatpush1.msra.mxu0 0.0
        %9561 = vmatprep.subr.mxu0 0.0
        %9562 = vmatpush1.msra.mxu0 0.0
        %9563 = vmatprep.subr.mxu0 0.0
        %9564 = vmatpush1.msra.mxu0 0.0
        %9565 = vmatprep.subr.mxu0 0.0
        %9566 = vmatpush1.msra.mxu0 0.0
        %9567 = vmatprep.subr.mxu0 0.0
        %9568 = vmatpush1.msra.mxu0 0.0
        %9569 = vmatprep.subr.mxu0 0.0
        %9570 = vmatpush1.msra.mxu0 0.0
        %9571 = vmatprep.subr.mxu0 0.0
        %9572 = vmatpush1.msra.mxu0 0.0
        %9573 = vmatprep.subr.mxu0 0.0
        %9574 = vmatpush1.msra.mxu0 0.0
        %9575 = vmatprep.subr.mxu0 0.0
        %9576 = vmatpush1.msra.mxu0 0.0
        %9577 = vmatprep.subr.mxu0 0.0
        %9578 = vmatpush1.msra.mxu0 0.0
        %9579 = vmatprep.subr.mxu0 0.0
        %9580 = vmatpush1.msra.mxu0 0.0
        %9581 = vmatprep.subr.mxu0 0.0
        %9582 = vmatpush1.msra.mxu0 0.0
        %9583 = vmatprep.subr.mxu0 0.0
        %9584 = vmatpush1.msra.mxu0 0.0
        %9585 = vmatprep.subr.mxu0 0.0
        %9586 = vmatpush1.msra.mxu0 0.0
        %9587 = vmatprep.subr.mxu0 0.0
        %9588 = vmatpush1.msra.mxu0 0.0
        %9589 = vmatprep.subr.mxu0 0.0
        %9590 = vmatpush1.msra.mxu0 0.0
        %9591 = vmatprep.subr.mxu0 0.0
        %9592 = vmatpush1.msra.mxu0 0.0
        %9593 = vmatprep.subr.mxu0 0.0
        %9594 = vmatpush1.msra.mxu0 0.0
        %9595 = vmatprep.subr.mxu0 0.0
        %9596 = vmatpush1.msra.mxu0 0.0
        %9597 = vmatprep.subr.mxu0 0.0
        %9598 = vmatpush1.msra.mxu0 0.0
        %9599 = vmatprep.subr.mxu0 0.0
        %9600 = vmatpush1.msra.mxu0 0.0
        %9601 = vmatprep.subr.mxu0 0.0
        %9602 = vmatpush1.msra.mxu0 0.0
        %9603 = vmatprep.mubr.f32.mxu0 0.0
        %v9604 = vand.u32 %v7660, 4294901760
        %9605 = vmatmul.mubr.f32.gmra.mrb[0].mxu0 %v9604
        %v9606 = vpop.f32.mrb[0].mxu0
        %v9607 = vadd.f32 %v9532, %v9606
        %v9608 = vpop.f32.mrb[0].mxu0
        %9609 = vdwg.mxu0
        %v9610 = vadd.f32 %v9122, %v9607
        %v9611 = vadd.f32 %v9610, %v4310
        %v9612 = vsub.f32 0.0, %v9611
        %v9613 = vmul.f32 %v9612, 1.442695
        %v9614 = vpow.pop %v9613
        %v9615 = vadd.f32 %v9614, 1.0
        %v9616 = vrcp.pop %v9615
        %v9617 = vmul.f32 1.0, %v9616
        %9618 = vmatprep.subr.mxu0 0.0
        %v9619 = vand.u32 %v431, 4294901760
        %9620 = vmatpush1.msra.mxu0 %v9619
        %9621 = vmatprep.subr.mxu0 0.0
        %v9622 = vand.u32 %v432, 4294901760
        %9623 = vmatpush1.msra.mxu0 %v9622
        %9624 = vmatprep.subr.mxu0 0.0
        %v9625 = vand.u32 %v433, 4294901760
        %9626 = vmatpush1.msra.mxu0 %v9625
        %9627 = vmatprep.subr.mxu0 0.0
        %v9628 = vand.u32 %v434, 4294901760
        %9629 = vmatpush1.msra.mxu0 %v9628
        %9630 = vmatprep.subr.mxu0 0.0
        %9631 = vmatpush1.msra.mxu0 0.0
        %9632 = vmatprep.subr.mxu0 0.0
        %9633 = vmatpush1.msra.mxu0 0.0
        %9634 = vmatprep.subr.mxu0 0.0
        %9635 = vmatpush1.msra.mxu0 0.0
        %9636 = vmatprep.subr.mxu0 0.0
        %9637 = vmatpush1.msra.mxu0 0.0
        %9638 = vmatprep.subr.mxu0 0.0
        %9639 = vmatpush1.msra.mxu0 0.0
        %9640 = vmatprep.subr.mxu0 0.0
        %9641 = vmatpush1.msra.mxu0 0.0
        %9642 = vmatprep.subr.mxu0 0.0
        %9643 = vmatpush1.msra.mxu0 0.0
        %9644 = vmatprep.subr.mxu0 0.0
        %9645 = vmatpush1.msra.mxu0 0.0
        %9646 = vmatprep.subr.mxu0 0.0
        %9647 = vmatpush1.msra.mxu0 0.0
        %9648 = vmatprep.subr.mxu0 0.0
        %9649 = vmatpush1.msra.mxu0 0.0
        %9650 = vmatprep.subr.mxu0 0.0
        %9651 = vmatpush1.msra.mxu0 0.0
        %9652 = vmatprep.subr.mxu0 0.0
        %9653 = vmatpush1.msra.mxu0 0.0
        %9654 = vmatprep.subr.mxu0 0.0
        %9655 = vmatpush1.msra.mxu0 0.0
        %9656 = vmatprep.subr.mxu0 0.0
        %9657 = vmatpush1.msra.mxu0 0.0
        %9658 = vmatprep.subr.mxu0 0.0
        %9659 = vmatpush1.msra.mxu0 0.0
        %9660 = vmatprep.subr.mxu0 0.0
        %9661 = vmatpush1.msra.mxu0 0.0
        %9662 = vmatprep.subr.mxu0 0.0
        %9663 = vmatpush1.msra.mxu0 0.0
        %9664 = vmatprep.subr.mxu0 0.0
        %9665 = vmatpush1.msra.mxu0 0.0
        %9666 = vmatprep.subr.mxu0 0.0
        %9667 = vmatpush1.msra.mxu0 0.0
        %9668 = vmatprep.subr.mxu0 0.0
        %9669 = vmatpush1.msra.mxu0 0.0
        %9670 = vmatprep.subr.mxu0 0.0
        %9671 = vmatpush1.msra.mxu0 0.0
        %9672 = vmatprep.subr.mxu0 0.0
        %9673 = vmatpush1.msra.mxu0 0.0
        %9674 = vmatprep.subr.mxu0 0.0
        %9675 = vmatpush1.msra.mxu0 0.0
        %9676 = vmatprep.subr.mxu0 0.0
        %9677 = vmatpush1.msra.mxu0 0.0
        %9678 = vmatprep.subr.mxu0 0.0
        %9679 = vmatpush1.msra.mxu0 0.0
        %9680 = vmatprep.subr.mxu0 0.0
        %9681 = vmatpush1.msra.mxu0 0.0
        %9682 = vmatprep.subr.mxu0 0.0
        %9683 = vmatpush1.msra.mxu0 0.0
        %9684 = vmatprep.subr.mxu0 0.0
        %9685 = vmatpush1.msra.mxu0 0.0
        %9686 = vmatprep.mubr.f32.mxu0 0.0
        %v9687 = vand.u32 %v6684, 4294901760
        %v9688 = vsub.f32 %v6684, %v9687
        %v9689 = vand.u32 %v9688, 4294901760
        %v9690 = vsub.f32 %v9688, %v9689
        %v9691 = vand.u32 %v9690, 4294901760
        %9692 = vmatmul.mubr.f32.gmra.mrb[0].mxu0 %v9691
        %v9693 = vpop.f32.mrb[0].mxu0
        %v9694 = vadd.f32 0.0, %v9693
        %v9695 = vpop.f32.mrb[0].mxu0
        %9696 = vdwg.mxu0
        %9697 = vmatprep.subr.mxu0 0.0
        %v9698 = vand.u32 %v431, 4294901760
        %v9699 = vsub.f32 %v431, %v9698
        %v9700 = vand.u32 %v9699, 4294901760
        %v9701 = vsub.f32 %v9699, %v9700
        %v9702 = vand.u32 %v9701, 4294901760
        %9703 = vmatpush1.msra.mxu0 %v9702
        %9704 = vmatprep.subr.mxu0 0.0
        %v9705 = vand.u32 %v432, 4294901760
        %v9706 = vsub.f32 %v432, %v9705
        %v9707 = vand.u32 %v9706, 4294901760
        %v9708 = vsub.f32 %v9706, %v9707
        %v9709 = vand.u32 %v9708, 4294901760
        %9710 = vmatpush1.msra.mxu0 %v9709
        %9711 = vmatprep.subr.mxu0 0.0
        %v9712 = vand.u32 %v433, 4294901760
        %v9713 = vsub.f32 %v433, %v9712
        %v9714 = vand.u32 %v9713, 4294901760
        %v9715 = vsub.f32 %v9713, %v9714
        %v9716 = vand.u32 %v9715, 4294901760
        %9717 = vmatpush1.msra.mxu0 %v9716
        %9718 = vmatprep.subr.mxu0 0.0
        %v9719 = vand.u32 %v434, 4294901760
        %v9720 = vsub.f32 %v434, %v9719
        %v9721 = vand.u32 %v9720, 4294901760
        %v9722 = vsub.f32 %v9720, %v9721
        %v9723 = vand.u32 %v9722, 4294901760
        %9724 = vmatpush1.msra.mxu0 %v9723
        %9725 = vmatprep.subr.mxu0 0.0
        %9726 = vmatpush1.msra.mxu0 0.0
        %9727 = vmatprep.subr.mxu0 0.0
        %9728 = vmatpush1.msra.mxu0 0.0
        %9729 = vmatprep.subr.mxu0 0.0
        %9730 = vmatpush1.msra.mxu0 0.0
        %9731 = vmatprep.subr.mxu0 0.0
        %9732 = vmatpush1.msra.mxu0 0.0
        %9733 = vmatprep.subr.mxu0 0.0
        %9734 = vmatpush1.msra.mxu0 0.0
        %9735 = vmatprep.subr.mxu0 0.0
        %9736 = vmatpush1.msra.mxu0 0.0
        %9737 = vmatprep.subr.mxu0 0.0
        %9738 = vmatpush1.msra.mxu0 0.0
        %9739 = vmatprep.subr.mxu0 0.0
        %9740 = vmatpush1.msra.mxu0 0.0
        %9741 = vmatprep.subr.mxu0 0.0
        %9742 = vmatpush1.msra.mxu0 0.0
        %9743 = vmatprep.subr.mxu0 0.0
        %9744 = vmatpush1.msra.mxu0 0.0
        %9745 = vmatprep.subr.mxu0 0.0
        %9746 = vmatpush1.msra.mxu0 0.0
        %9747 = vmatprep.subr.mxu0 0.0
        %9748 = vmatpush1.msra.mxu0 0.0
        %9749 = vmatprep.subr.mxu0 0.0
        %9750 = vmatpush1.msra.mxu0 0.0
        %9751 = vmatprep.subr.mxu0 0.0
        %9752 = vmatpush1.msra.mxu0 0.0
        %9753 = vmatprep.subr.mxu0 0.0
        %9754 = vmatpush1.msra.mxu0 0.0
        %9755 = vmatprep.subr.mxu0 0.0
        %9756 = vmatpush1.msra.mxu0 0.0
        %9757 = vmatprep.subr.mxu0 0.0
        %9758 = vmatpush1.msra.mxu0 0.0
        %9759 = vmatprep.subr.mxu0 0.0
        %9760 = vmatpush1.msra.mxu0 0.0
        %9761 = vmatprep.subr.mxu0 0.0
        %9762 = vmatpush1.msra.mxu0 0.0
        %9763 = vmatprep.subr.mxu0 0.0
        %9764 = vmatpush1.msra.mxu0 0.0
        %9765 = vmatprep.subr.mxu0 0.0
        %9766 = vmatpush1.msra.mxu0 0.0
        %9767 = vmatprep.subr.mxu0 0.0
        %9768 = vmatpush1.msra.mxu0 0.0
        %9769 = vmatprep.subr.mxu0 0.0
        %9770 = vmatpush1.msra.mxu0 0.0
        %9771 = vmatprep.subr.mxu0 0.0
        %9772 = vmatpush1.msra.mxu0 0.0
        %9773 = vmatprep.subr.mxu0 0.0
        %9774 = vmatpush1.msra.mxu0 0.0
        %9775 = vmatprep.subr.mxu0 0.0
        %9776 = vmatpush1.msra.mxu0 0.0
        %9777 = vmatprep.subr.mxu0 0.0
        %9778 = vmatpush1.msra.mxu0 0.0
        %9779 = vmatprep.subr.mxu0 0.0
        %9780 = vmatpush1.msra.mxu0 0.0
        %9781 = vmatprep.mubr.f32.mxu0 0.0
        %v9782 = vand.u32 %v6684, 4294901760
        %9783 = vmatmul.mubr.f32.gmra.mrb[0].mxu0 %v9782
        %v9784 = vpop.f32.mrb[0].mxu0
        %v9785 = vadd.f32 %v9694, %v9784
        %v9786 = vpop.f32.mrb[0].mxu0
        %9787 = vdwg.mxu0
        %9788 = vmatprep.subr.mxu0 0.0
        %v9789 = vand.u32 %v431, 4294901760
        %v9790 = vsub.f32 %v431, %v9789
        %9791 = vmatpush1.msra.mxu0 %v9790
        %9792 = vmatprep.subr.mxu0 0.0
        %v9793 = vand.u32 %v432, 4294901760
        %v9794 = vsub.f32 %v432, %v9793
        %9795 = vmatpush1.msra.mxu0 %v9794
        %9796 = vmatprep.subr.mxu0 0.0
        %v9797 = vand.u32 %v433, 4294901760
        %v9798 = vsub.f32 %v433, %v9797
        %9799 = vmatpush1.msra.mxu0 %v9798
        %9800 = vmatprep.subr.mxu0 0.0
        %v9801 = vand.u32 %v434, 4294901760
        %v9802 = vsub.f32 %v434, %v9801
        %9803 = vmatpush1.msra.mxu0 %v9802
        %9804 = vmatprep.subr.mxu0 0.0
        %9805 = vmatpush1.msra.mxu0 0.0
        %9806 = vmatprep.subr.mxu0 0.0
        %9807 = vmatpush1.msra.mxu0 0.0
        %9808 = vmatprep.subr.mxu0 0.0
        %9809 = vmatpush1.msra.mxu0 0.0
        %9810 = vmatprep.subr.mxu0 0.0
        %9811 = vmatpush1.msra.mxu0 0.0
        %9812 = vmatprep.subr.mxu0 0.0
        %9813 = vmatpush1.msra.mxu0 0.0
        %9814 = vmatprep.subr.mxu0 0.0
        %9815 = vmatpush1.msra.mxu0 0.0
        %9816 = vmatprep.subr.mxu0 0.0
        %9817 = vmatpush1.msra.mxu0 0.0
        %9818 = vmatprep.subr.mxu0 0.0
        %9819 = vmatpush1.msra.mxu0 0.0
        %9820 = vmatprep.subr.mxu0 0.0
        %9821 = vmatpush1.msra.mxu0 0.0
        %9822 = vmatprep.subr.mxu0 0.0
        %9823 = vmatpush1.msra.mxu0 0.0
        %9824 = vmatprep.subr.mxu0 0.0
        %9825 = vmatpush1.msra.mxu0 0.0
        %9826 = vmatprep.subr.mxu0 0.0
        %9827 = vmatpush1.msra.mxu0 0.0
        %9828 = vmatprep.subr.mxu0 0.0
        %9829 = vmatpush1.msra.mxu0 0.0
        %9830 = vmatprep.subr.mxu0 0.0
        %9831 = vmatpush1.msra.mxu0 0.0
        %9832 = vmatprep.subr.mxu0 0.0
        %9833 = vmatpush1.msra.mxu0 0.0
        %9834 = vmatprep.subr.mxu0 0.0
        %9835 = vmatpush1.msra.mxu0 0.0
        %9836 = vmatprep.subr.mxu0 0.0
        %9837 = vmatpush1.msra.mxu0 0.0
        %9838 = vmatprep.subr.mxu0 0.0
        %9839 = vmatpush1.msra.mxu0 0.0
        %9840 = vmatprep.subr.mxu0 0.0
        %9841 = vmatpush1.msra.mxu0 0.0
        %9842 = vmatprep.subr.mxu0 0.0
        %9843 = vmatpush1.msra.mxu0 0.0
        %9844 = vmatprep.subr.mxu0 0.0
        %9845 = vmatpush1.msra.mxu0 0.0
        %9846 = vmatprep.subr.mxu0 0.0
        %9847 = vmatpush1.msra.mxu0 0.0
        %9848 = vmatprep.subr.mxu0 0.0
        %9849 = vmatpush1.msra.mxu0 0.0
        %9850 = vmatprep.subr.mxu0 0.0
        %9851 = vmatpush1.msra.mxu0 0.0
        %9852 = vmatprep.subr.mxu0 0.0
        %9853 = vmatpush1.msra.mxu0 0.0
        %9854 = vmatprep.subr.mxu0 0.0
        %9855 = vmatpush1.msra.mxu0 0.0
        %9856 = vmatprep.subr.mxu0 0.0
        %9857 = vmatpush1.msra.mxu0 0.0
        %9858 = vmatprep.subr.mxu0 0.0
        %9859 = vmatpush1.msra.mxu0 0.0
        %9860 = vmatprep.mubr.f32.mxu0 0.0
        %v9861 = vand.u32 %v6684, 4294901760
        %v9862 = vsub.f32 %v6684, %v9861
        %9863 = vmatmul.mubr.f32.gmra.mrb[0].mxu0 %v9862
        %v9864 = vpop.f32.mrb[0].mxu0
        %v9865 = vadd.f32 %v9785, %v9864
        %v9866 = vpop.f32.mrb[0].mxu0
        %9867 = vdwg.mxu0
        %9868 = vmatprep.subr.mxu0 0.0
        %v9869 = vand.u32 %v431, 4294901760
        %9870 = vmatpush1.msra.mxu0 %v9869
        %9871 = vmatprep.subr.mxu0 0.0
        %v9872 = vand.u32 %v432, 4294901760
        %9873 = vmatpush1.msra.mxu0 %v9872
        %9874 = vmatprep.subr.mxu0 0.0
        %v9875 = vand.u32 %v433, 4294901760
        %9876 = vmatpush1.msra.mxu0 %v9875
        %9877 = vmatprep.subr.mxu0 0.0
        %v9878 = vand.u32 %v434, 4294901760
        %9879 = vmatpush1.msra.mxu0 %v9878
        %9880 = vmatprep.subr.mxu0 0.0
        %9881 = vmatpush1.msra.mxu0 0.0
        %9882 = vmatprep.subr.mxu0 0.0
        %9883 = vmatpush1.msra.mxu0 0.0
        %9884 = vmatprep.subr.mxu0 0.0
        %9885 = vmatpush1.msra.mxu0 0.0
        %9886 = vmatprep.subr.mxu0 0.0
        %9887 = vmatpush1.msra.mxu0 0.0
        %9888 = vmatprep.subr.mxu0 0.0
        %9889 = vmatpush1.msra.mxu0 0.0
        %9890 = vmatprep.subr.mxu0 0.0
        %9891 = vmatpush1.msra.mxu0 0.0
        %9892 = vmatprep.subr.mxu0 0.0
        %9893 = vmatpush1.msra.mxu0 0.0
        %9894 = vmatprep.subr.mxu0 0.0
        %9895 = vmatpush1.msra.mxu0 0.0
        %9896 = vmatprep.subr.mxu0 0.0
        %9897 = vmatpush1.msra.mxu0 0.0
        %9898 = vmatprep.subr.mxu0 0.0
        %9899 = vmatpush1.msra.mxu0 0.0
        %9900 = vmatprep.subr.mxu0 0.0
        %9901 = vmatpush1.msra.mxu0 0.0
        %9902 = vmatprep.subr.mxu0 0.0
        %9903 = vmatpush1.msra.mxu0 0.0
        %9904 = vmatprep.subr.mxu0 0.0
        %9905 = vmatpush1.msra.mxu0 0.0
        %9906 = vmatprep.subr.mxu0 0.0
        %9907 = vmatpush1.msra.mxu0 0.0
        %9908 = vmatprep.subr.mxu0 0.0
        %9909 = vmatpush1.msra.mxu0 0.0
        %9910 = vmatprep.subr.mxu0 0.0
        %9911 = vmatpush1.msra.mxu0 0.0
        %9912 = vmatprep.subr.mxu0 0.0
        %9913 = vmatpush1.msra.mxu0 0.0
        %9914 = vmatprep.subr.mxu0 0.0
        %9915 = vmatpush1.msra.mxu0 0.0
        %9916 = vmatprep.subr.mxu0 0.0
        %9917 = vmatpush1.msra.mxu0 0.0
        %9918 = vmatprep.subr.mxu0 0.0
        %9919 = vmatpush1.msra.mxu0 0.0
        %9920 = vmatprep.subr.mxu0 0.0
        %9921 = vmatpush1.msra.mxu0 0.0
        %9922 = vmatprep.subr.mxu0 0.0
        %9923 = vmatpush1.msra.mxu0 0.0
        %9924 = vmatprep.subr.mxu0 0.0
        %9925 = vmatpush1.msra.mxu0 0.0
        %9926 = vmatprep.subr.mxu0 0.0
        %9927 = vmatpush1.msra.mxu0 0.0
        %9928 = vmatprep.subr.mxu0 0.0
        %9929 = vmatpush1.msra.mxu0 0.0
        %9930 = vmatprep.subr.mxu0 0.0
        %9931 = vmatpush1.msra.mxu0 0.0
        %9932 = vmatprep.subr.mxu0 0.0
        %9933 = vmatpush1.msra.mxu0 0.0
        %9934 = vmatprep.subr.mxu0 0.0
        %9935 = vmatpush1.msra.mxu0 0.0
        %9936 = vmatprep.mubr.f32.mxu0 0.0
        %v9937 = vand.u32 %v6684, 4294901760
        %v9938 = vsub.f32 %v6684, %v9937
        %v9939 = vand.u32 %v9938, 4294901760
        %9940 = vmatmul.mubr.f32.gmra.mrb[0].mxu0 %v9939
        %v9941 = vpop.f32.mrb[0].mxu0
        %v9942 = vadd.f32 %v9865, %v9941
        %v9943 = vpop.f32.mrb[0].mxu0
        %9944 = vdwg.mxu0
        %9945 = vmatprep.subr.mxu0 0.0
        %v9946 = vand.u32 %v431, 4294901760
        %v9947 = vsub.f32 %v431, %v9946
        %v9948 = vand.u32 %v9947, 4294901760
        %9949 = vmatpush1.msra.mxu0 %v9948
        %9950 = vmatprep.subr.mxu0 0.0
        %v9951 = vand.u32 %v432, 4294901760
        %v9952 = vsub.f32 %v432, %v9951
        %v9953 = vand.u32 %v9952, 4294901760
        %9954 = vmatpush1.msra.mxu0 %v9953
        %9955 = vmatprep.subr.mxu0 0.0
        %v9956 = vand.u32 %v433, 4294901760
        %v9957 = vsub.f32 %v433, %v9956
        %v9958 = vand.u32 %v9957, 4294901760
        %9959 = vmatpush1.msra.mxu0 %v9958
        %9960 = vmatprep.subr.mxu0 0.0
        %v9961 = vand.u32 %v434, 4294901760
        %v9962 = vsub.f32 %v434, %v9961
        %v9963 = vand.u32 %v9962, 4294901760
        %9964 = vmatpush1.msra.mxu0 %v9963
        %9965 = vmatprep.subr.mxu0 0.0
        %9966 = vmatpush1.msra.mxu0 0.0
        %9967 = vmatprep.subr.mxu0 0.0
        %9968 = vmatpush1.msra.mxu0 0.0
        %9969 = vmatprep.subr.mxu0 0.0
        %9970 = vmatpush1.msra.mxu0 0.0
        %9971 = vmatprep.subr.mxu0 0.0
        %9972 = vmatpush1.msra.mxu0 0.0
        %9973 = vmatprep.subr.mxu0 0.0
        %9974 = vmatpush1.msra.mxu0 0.0
        %9975 = vmatprep.subr.mxu0 0.0
        %9976 = vmatpush1.msra.mxu0 0.0
        %9977 = vmatprep.subr.mxu0 0.0
        %9978 = vmatpush1.msra.mxu0 0.0
        %9979 = vmatprep.subr.mxu0 0.0
        %9980 = vmatpush1.msra.mxu0 0.0
        %9981 = vmatprep.subr.mxu0 0.0
        %9982 = vmatpush1.msra.mxu0 0.0
        %9983 = vmatprep.subr.mxu0 0.0
        %9984 = vmatpush1.msra.mxu0 0.0
        %9985 = vmatprep.subr.mxu0 0.0
        %9986 = vmatpush1.msra.mxu0 0.0
        %9987 = vmatprep.subr.mxu0 0.0
        %9988 = vmatpush1.msra.mxu0 0.0
        %9989 = vmatprep.subr.mxu0 0.0
        %9990 = vmatpush1.msra.mxu0 0.0
        %9991 = vmatprep.subr.mxu0 0.0
        %9992 = vmatpush1.msra.mxu0 0.0
        %9993 = vmatprep.subr.mxu0 0.0
        %9994 = vmatpush1.msra.mxu0 0.0
        %9995 = vmatprep.subr.mxu0 0.0
        %9996 = vmatpush1.msra.mxu0 0.0
        %9997 = vmatprep.subr.mxu0 0.0
        %9998 = vmatpush1.msra.mxu0 0.0
        %9999 = vmatprep.subr.mxu0 0.0
        %10000 = vmatpush1.msra.mxu0 0.0
        %10001 = vmatprep.subr.mxu0 0.0
        %10002 = vmatpush1.msra.mxu0 0.0
        %10003 = vmatprep.subr.mxu0 0.0
        %10004 = vmatpush1.msra.mxu0 0.0
        %10005 = vmatprep.subr.mxu0 0.0
        %10006 = vmatpush1.msra.mxu0 0.0
        %10007 = vmatprep.subr.mxu0 0.0
        %10008 = vmatpush1.msra.mxu0 0.0
        %10009 = vmatprep.subr.mxu0 0.0
        %10010 = vmatpush1.msra.mxu0 0.0
        %10011 = vmatprep.subr.mxu0 0.0
        %10012 = vmatpush1.msra.mxu0 0.0
        %10013 = vmatprep.subr.mxu0 0.0
        %10014 = vmatpush1.msra.mxu0 0.0
        %10015 = vmatprep.subr.mxu0 0.0
        %10016 = vmatpush1.msra.mxu0 0.0
        %10017 = vmatprep.subr.mxu0 0.0
        %10018 = vmatpush1.msra.mxu0 0.0
        %10019 = vmatprep.subr.mxu0 0.0
        %10020 = vmatpush1.msra.mxu0 0.0
        %10021 = vmatprep.mubr.f32.mxu0 0.0
        %v10022 = vand.u32 %v6684, 4294901760
        %10023 = vmatmul.mubr.f32.gmra.mrb[0].mxu0 %v10022
        %v10024 = vpop.f32.mrb[0].mxu0
        %v10025 = vadd.f32 %v9942, %v10024
        %v10026 = vpop.f32.mrb[0].mxu0
        %10027 = vdwg.mxu0
        %10028 = vmatprep.subr.mxu0 0.0
        %v10029 = vand.u32 %v431, 4294901760
        %10030 = vmatpush1.msra.mxu0 %v10029
        %10031 = vmatprep.subr.mxu0 0.0
        %v10032 = vand.u32 %v432, 4294901760
        %10033 = vmatpush1.msra.mxu0 %v10032
        %10034 = vmatprep.subr.mxu0 0.0
        %v10035 = vand.u32 %v433, 4294901760
        %10036 = vmatpush1.msra.mxu0 %v10035
        %10037 = vmatprep.subr.mxu0 0.0
        %v10038 = vand.u32 %v434, 4294901760
        %10039 = vmatpush1.msra.mxu0 %v10038
        %10040 = vmatprep.subr.mxu0 0.0
        %10041 = vmatpush1.msra.mxu0 0.0
        %10042 = vmatprep.subr.mxu0 0.0
        %10043 = vmatpush1.msra.mxu0 0.0
        %10044 = vmatprep.subr.mxu0 0.0
        %10045 = vmatpush1.msra.mxu0 0.0
        %10046 = vmatprep.subr.mxu0 0.0
        %10047 = vmatpush1.msra.mxu0 0.0
        %10048 = vmatprep.subr.mxu0 0.0
        %10049 = vmatpush1.msra.mxu0 0.0
        %10050 = vmatprep.subr.mxu0 0.0
        %10051 = vmatpush1.msra.mxu0 0.0
        %10052 = vmatprep.subr.mxu0 0.0
        %10053 = vmatpush1.msra.mxu0 0.0
        %10054 = vmatprep.subr.mxu0 0.0
        %10055 = vmatpush1.msra.mxu0 0.0
        %10056 = vmatprep.subr.mxu0 0.0
        %10057 = vmatpush1.msra.mxu0 0.0
        %10058 = vmatprep.subr.mxu0 0.0
        %10059 = vmatpush1.msra.mxu0 0.0
        %10060 = vmatprep.subr.mxu0 0.0
        %10061 = vmatpush1.msra.mxu0 0.0
        %10062 = vmatprep.subr.mxu0 0.0
        %10063 = vmatpush1.msra.mxu0 0.0
        %10064 = vmatprep.subr.mxu0 0.0
        %10065 = vmatpush1.msra.mxu0 0.0
        %10066 = vmatprep.subr.mxu0 0.0
        %10067 = vmatpush1.msra.mxu0 0.0
        %10068 = vmatprep.subr.mxu0 0.0
        %10069 = vmatpush1.msra.mxu0 0.0
        %10070 = vmatprep.subr.mxu0 0.0
        %10071 = vmatpush1.msra.mxu0 0.0
        %10072 = vmatprep.subr.mxu0 0.0
        %10073 = vmatpush1.msra.mxu0 0.0
        %10074 = vmatprep.subr.mxu0 0.0
        %10075 = vmatpush1.msra.mxu0 0.0
        %10076 = vmatprep.subr.mxu0 0.0
        %10077 = vmatpush1.msra.mxu0 0.0
        %10078 = vmatprep.subr.mxu0 0.0
        %10079 = vmatpush1.msra.mxu0 0.0
        %10080 = vmatprep.subr.mxu0 0.0
        %10081 = vmatpush1.msra.mxu0 0.0
        %10082 = vmatprep.subr.mxu0 0.0
        %10083 = vmatpush1.msra.mxu0 0.0
        %10084 = vmatprep.subr.mxu0 0.0
        %10085 = vmatpush1.msra.mxu0 0.0
        %10086 = vmatprep.subr.mxu0 0.0
        %10087 = vmatpush1.msra.mxu0 0.0
        %10088 = vmatprep.subr.mxu0 0.0
        %10089 = vmatpush1.msra.mxu0 0.0
        %10090 = vmatprep.subr.mxu0 0.0
        %10091 = vmatpush1.msra.mxu0 0.0
        %10092 = vmatprep.subr.mxu0 0.0
        %10093 = vmatpush1.msra.mxu0 0.0
        %10094 = vmatprep.subr.mxu0 0.0
        %10095 = vmatpush1.msra.mxu0 0.0
        %10096 = vmatprep.mubr.f32.mxu0 0.0
        %v10097 = vand.u32 %v6684, 4294901760
        %10098 = vmatmul.mubr.f32.gmra.mrb[0].mxu0 %v10097
        %v10099 = vpop.f32.mrb[0].mxu0
        %v10100 = vadd.f32 %v10025, %v10099
        %v10101 = vpop.f32.mrb[0].mxu0
        %10102 = vdwg.mxu0
        %10103 = vmatprep.subr.mxu0 0.0
        %v10104 = vand.u32 %v427, 4294901760
        %10105 = vmatpush1.msra.mxu0 %v10104
        %10106 = vmatprep.subr.mxu0 0.0
        %v10107 = vand.u32 %v428, 4294901760
        %10108 = vmatpush1.msra.mxu0 %v10107
        %10109 = vmatprep.subr.mxu0 0.0
        %v10110 = vand.u32 %v429, 4294901760
        %10111 = vmatpush1.msra.mxu0 %v10110
        %10112 = vmatprep.subr.mxu0 0.0
        %v10113 = vand.u32 %v430, 4294901760
        %10114 = vmatpush1.msra.mxu0 %v10113
        %10115 = vmatprep.subr.mxu0 0.0
        %10116 = vmatpush1.msra.mxu0 0.0
        %10117 = vmatprep.subr.mxu0 0.0
        %10118 = vmatpush1.msra.mxu0 0.0
        %10119 = vmatprep.subr.mxu0 0.0
        %10120 = vmatpush1.msra.mxu0 0.0
        %10121 = vmatprep.subr.mxu0 0.0
        %10122 = vmatpush1.msra.mxu0 0.0
        %10123 = vmatprep.subr.mxu0 0.0
        %10124 = vmatpush1.msra.mxu0 0.0
        %10125 = vmatprep.subr.mxu0 0.0
        %10126 = vmatpush1.msra.mxu0 0.0
        %10127 = vmatprep.subr.mxu0 0.0
        %10128 = vmatpush1.msra.mxu0 0.0
        %10129 = vmatprep.subr.mxu0 0.0
        %10130 = vmatpush1.msra.mxu0 0.0
        %10131 = vmatprep.subr.mxu0 0.0
        %10132 = vmatpush1.msra.mxu0 0.0
        %10133 = vmatprep.subr.mxu0 0.0
        %10134 = vmatpush1.msra.mxu0 0.0
        %10135 = vmatprep.subr.mxu0 0.0
        %10136 = vmatpush1.msra.mxu0 0.0
        %10137 = vmatprep.subr.mxu0 0.0
        %10138 = vmatpush1.msra.mxu0 0.0
        %10139 = vmatprep.subr.mxu0 0.0
        %10140 = vmatpush1.msra.mxu0 0.0
        %10141 = vmatprep.subr.mxu0 0.0
        %10142 = vmatpush1.msra.mxu0 0.0
        %10143 = vmatprep.subr.mxu0 0.0
        %10144 = vmatpush1.msra.mxu0 0.0
        %10145 = vmatprep.subr.mxu0 0.0
        %10146 = vmatpush1.msra.mxu0 0.0
        %10147 = vmatprep.subr.mxu0 0.0
        %10148 = vmatpush1.msra.mxu0 0.0
        %10149 = vmatprep.subr.mxu0 0.0
        %10150 = vmatpush1.msra.mxu0 0.0
        %10151 = vmatprep.subr.mxu0 0.0
        %10152 = vmatpush1.msra.mxu0 0.0
        %10153 = vmatprep.subr.mxu0 0.0
        %10154 = vmatpush1.msra.mxu0 0.0
        %10155 = vmatprep.subr.mxu0 0.0
        %10156 = vmatpush1.msra.mxu0 0.0
        %10157 = vmatprep.subr.mxu0 0.0
        %10158 = vmatpush1.msra.mxu0 0.0
        %10159 = vmatprep.subr.mxu0 0.0
        %10160 = vmatpush1.msra.mxu0 0.0
        %10161 = vmatprep.subr.mxu0 0.0
        %10162 = vmatpush1.msra.mxu0 0.0
        %10163 = vmatprep.subr.mxu0 0.0
        %10164 = vmatpush1.msra.mxu0 0.0
        %10165 = vmatprep.subr.mxu0 0.0
        %10166 = vmatpush1.msra.mxu0 0.0
        %10167 = vmatprep.subr.mxu0 0.0
        %10168 = vmatpush1.msra.mxu0 0.0
        %10169 = vmatprep.subr.mxu0 0.0
        %10170 = vmatpush1.msra.mxu0 0.0
        %10171 = vmatprep.mubr.f32.mxu0 0.0
        %v10172 = vand.u32 %v7172, 4294901760
        %v10173 = vsub.f32 %v7172, %v10172
        %v10174 = vand.u32 %v10173, 4294901760
        %v10175 = vsub.f32 %v10173, %v10174
        %v10176 = vand.u32 %v10175, 4294901760
        %10177 = vmatmul.mubr.f32.gmra.mrb[0].mxu0 %v10176
        %v10178 = vpop.f32.mrb[0].mxu0
        %v10179 = vadd.f32 %v10100, %v10178
        %v10180 = vpop.f32.mrb[0].mxu0
        %10181 = vdwg.mxu0
        %10182 = vmatprep.subr.mxu0 0.0
        %v10183 = vand.u32 %v427, 4294901760
        %v10184 = vsub.f32 %v427, %v10183
        %v10185 = vand.u32 %v10184, 4294901760
        %v10186 = vsub.f32 %v10184, %v10185
        %v10187 = vand.u32 %v10186, 4294901760
        %10188 = vmatpush1.msra.mxu0 %v10187
        %10189 = vmatprep.subr.mxu0 0.0
        %v10190 = vand.u32 %v428, 4294901760
        %v10191 = vsub.f32 %v428, %v10190
        %v10192 = vand.u32 %v10191, 4294901760
        %v10193 = vsub.f32 %v10191, %v10192
        %v10194 = vand.u32 %v10193, 4294901760
        %10195 = vmatpush1.msra.mxu0 %v10194
        %10196 = vmatprep.subr.mxu0 0.0
        %v10197 = vand.u32 %v429, 4294901760
        %v10198 = vsub.f32 %v429, %v10197
        %v10199 = vand.u32 %v10198, 4294901760
        %v10200 = vsub.f32 %v10198, %v10199
        %v10201 = vand.u32 %v10200, 4294901760
        %10202 = vmatpush1.msra.mxu0 %v10201
        %10203 = vmatprep.subr.mxu0 0.0
        %v10204 = vand.u32 %v430, 4294901760
        %v10205 = vsub.f32 %v430, %v10204
        %v10206 = vand.u32 %v10205, 4294901760
        %v10207 = vsub.f32 %v10205, %v10206
        %v10208 = vand.u32 %v10207, 4294901760
        %10209 = vmatpush1.msra.mxu0 %v10208
        %10210 = vmatprep.subr.mxu0 0.0
        %10211 = vmatpush1.msra.mxu0 0.0
        %10212 = vmatprep.subr.mxu0 0.0
        %10213 = vmatpush1.msra.mxu0 0.0
        %10214 = vmatprep.subr.mxu0 0.0
        %10215 = vmatpush1.msra.mxu0 0.0
        %10216 = vmatprep.subr.mxu0 0.0
        %10217 = vmatpush1.msra.mxu0 0.0
        %10218 = vmatprep.subr.mxu0 0.0
        %10219 = vmatpush1.msra.mxu0 0.0
        %10220 = vmatprep.subr.mxu0 0.0
        %10221 = vmatpush1.msra.mxu0 0.0
        %10222 = vmatprep.subr.mxu0 0.0
        %10223 = vmatpush1.msra.mxu0 0.0
        %10224 = vmatprep.subr.mxu0 0.0
        %10225 = vmatpush1.msra.mxu0 0.0
        %10226 = vmatprep.subr.mxu0 0.0
        %10227 = vmatpush1.msra.mxu0 0.0
        %10228 = vmatprep.subr.mxu0 0.0
        %10229 = vmatpush1.msra.mxu0 0.0
        %10230 = vmatprep.subr.mxu0 0.0
        %10231 = vmatpush1.msra.mxu0 0.0
        %10232 = vmatprep.subr.mxu0 0.0
        %10233 = vmatpush1.msra.mxu0 0.0
        %10234 = vmatprep.subr.mxu0 0.0
        %10235 = vmatpush1.msra.mxu0 0.0
        %10236 = vmatprep.subr.mxu0 0.0
        %10237 = vmatpush1.msra.mxu0 0.0
        %10238 = vmatprep.subr.mxu0 0.0
        %10239 = vmatpush1.msra.mxu0 0.0
        %10240 = vmatprep.subr.mxu0 0.0
        %10241 = vmatpush1.msra.mxu0 0.0
        %10242 = vmatprep.subr.mxu0 0.0
        %10243 = vmatpush1.msra.mxu0 0.0
        %10244 = vmatprep.subr.mxu0 0.0
        %10245 = vmatpush1.msra.mxu0 0.0
        %10246 = vmatprep.subr.mxu0 0.0
        %10247 = vmatpush1.msra.mxu0 0.0
        %10248 = vmatprep.subr.mxu0 0.0
        %10249 = vmatpush1.msra.mxu0 0.0
        %10250 = vmatprep.subr.mxu0 0.0
        %10251 = vmatpush1.msra.mxu0 0.0
        %10252 = vmatprep.subr.mxu0 0.0
        %10253 = vmatpush1.msra.mxu0 0.0
        %10254 = vmatprep.subr.mxu0 0.0
        %10255 = vmatpush1.msra.mxu0 0.0
        %10256 = vmatprep.subr.mxu0 0.0
        %10257 = vmatpush1.msra.mxu0 0.0
        %10258 = vmatprep.subr.mxu0 0.0
        %10259 = vmatpush1.msra.mxu0 0.0
        %10260 = vmatprep.subr.mxu0 0.0
        %10261 = vmatpush1.msra.mxu0 0.0
        %10262 = vmatprep.subr.mxu0 0.0
        %10263 = vmatpush1.msra.mxu0 0.0
        %10264 = vmatprep.subr.mxu0 0.0
        %10265 = vmatpush1.msra.mxu0 0.0
        %10266 = vmatprep.mubr.f32.mxu0 0.0
        %v10267 = vand.u32 %v7172, 4294901760
        %10268 = vmatmul.mubr.f32.gmra.mrb[0].mxu0 %v10267
        %v10269 = vpop.f32.mrb[0].mxu0
        %v10270 = vadd.f32 %v10179, %v10269
        %v10271 = vpop.f32.mrb[0].mxu0
        %10272 = vdwg.mxu0
        %10273 = vmatprep.subr.mxu0 0.0
        %v10274 = vand.u32 %v427, 4294901760
        %v10275 = vsub.f32 %v427, %v10274
        %10276 = vmatpush1.msra.mxu0 %v10275
        %10277 = vmatprep.subr.mxu0 0.0
        %v10278 = vand.u32 %v428, 4294901760
        %v10279 = vsub.f32 %v428, %v10278
        %10280 = vmatpush1.msra.mxu0 %v10279
        %10281 = vmatprep.subr.mxu0 0.0
        %v10282 = vand.u32 %v429, 4294901760
        %v10283 = vsub.f32 %v429, %v10282
        %10284 = vmatpush1.msra.mxu0 %v10283
        %10285 = vmatprep.subr.mxu0 0.0
        %v10286 = vand.u32 %v430, 4294901760
        %v10287 = vsub.f32 %v430, %v10286
        %10288 = vmatpush1.msra.mxu0 %v10287
        %10289 = vmatprep.subr.mxu0 0.0
        %10290 = vmatpush1.msra.mxu0 0.0
        %10291 = vmatprep.subr.mxu0 0.0
        %10292 = vmatpush1.msra.mxu0 0.0
        %10293 = vmatprep.subr.mxu0 0.0
        %10294 = vmatpush1.msra.mxu0 0.0
        %10295 = vmatprep.subr.mxu0 0.0
        %10296 = vmatpush1.msra.mxu0 0.0
        %10297 = vmatprep.subr.mxu0 0.0
        %10298 = vmatpush1.msra.mxu0 0.0
        %10299 = vmatprep.subr.mxu0 0.0
        %10300 = vmatpush1.msra.mxu0 0.0
        %10301 = vmatprep.subr.mxu0 0.0
        %10302 = vmatpush1.msra.mxu0 0.0
        %10303 = vmatprep.subr.mxu0 0.0
        %10304 = vmatpush1.msra.mxu0 0.0
        %10305 = vmatprep.subr.mxu0 0.0
        %10306 = vmatpush1.msra.mxu0 0.0
        %10307 = vmatprep.subr.mxu0 0.0
        %10308 = vmatpush1.msra.mxu0 0.0
        %10309 = vmatprep.subr.mxu0 0.0
        %10310 = vmatpush1.msra.mxu0 0.0
        %10311 = vmatprep.subr.mxu0 0.0
        %10312 = vmatpush1.msra.mxu0 0.0
        %10313 = vmatprep.subr.mxu0 0.0
        %10314 = vmatpush1.msra.mxu0 0.0
        %10315 = vmatprep.subr.mxu0 0.0
        %10316 = vmatpush1.msra.mxu0 0.0
        %10317 = vmatprep.subr.mxu0 0.0
        %10318 = vmatpush1.msra.mxu0 0.0
        %10319 = vmatprep.subr.mxu0 0.0
        %10320 = vmatpush1.msra.mxu0 0.0
        %10321 = vmatprep.subr.mxu0 0.0
        %10322 = vmatpush1.msra.mxu0 0.0
        %10323 = vmatprep.subr.mxu0 0.0
        %10324 = vmatpush1.msra.mxu0 0.0
        %10325 = vmatprep.subr.mxu0 0.0
        %10326 = vmatpush1.msra.mxu0 0.0
        %10327 = vmatprep.subr.mxu0 0.0
        %10328 = vmatpush1.msra.mxu0 0.0
        %10329 = vmatprep.subr.mxu0 0.0
        %10330 = vmatpush1.msra.mxu0 0.0
        %10331 = vmatprep.subr.mxu0 0.0
        %10332 = vmatpush1.msra.mxu0 0.0
        %10333 = vmatprep.subr.mxu0 0.0
        %10334 = vmatpush1.msra.mxu0 0.0
        %10335 = vmatprep.subr.mxu0 0.0
        %10336 = vmatpush1.msra.mxu0 0.0
        %10337 = vmatprep.subr.mxu0 0.0
        %10338 = vmatpush1.msra.mxu0 0.0
        %10339 = vmatprep.subr.mxu0 0.0
        %10340 = vmatpush1.msra.mxu0 0.0
        %10341 = vmatprep.subr.mxu0 0.0
        %10342 = vmatpush1.msra.mxu0 0.0
        %10343 = vmatprep.subr.mxu0 0.0
        %10344 = vmatpush1.msra.mxu0 0.0
        %10345 = vmatprep.mubr.f32.mxu0 0.0
        %v10346 = vand.u32 %v7172, 4294901760
        %v10347 = vsub.f32 %v7172, %v10346
        %10348 = vmatmul.mubr.f32.gmra.mrb[0].mxu0 %v10347
        %v10349 = vpop.f32.mrb[0].mxu0
        %v10350 = vadd.f32 %v10270, %v10349
        %v10351 = vpop.f32.mrb[0].mxu0
        %10352 = vdwg.mxu0
        %10353 = vmatprep.subr.mxu0 0.0
        %v10354 = vand.u32 %v427, 4294901760
        %10355 = vmatpush1.msra.mxu0 %v10354
        %10356 = vmatprep.subr.mxu0 0.0
        %v10357 = vand.u32 %v428, 4294901760
        %10358 = vmatpush1.msra.mxu0 %v10357
        %10359 = vmatprep.subr.mxu0 0.0
        %v10360 = vand.u32 %v429, 4294901760
        %10361 = vmatpush1.msra.mxu0 %v10360
        %10362 = vmatprep.subr.mxu0 0.0
        %v10363 = vand.u32 %v430, 4294901760
        %10364 = vmatpush1.msra.mxu0 %v10363
        %10365 = vmatprep.subr.mxu0 0.0
        %10366 = vmatpush1.msra.mxu0 0.0
        %10367 = vmatprep.subr.mxu0 0.0
        %10368 = vmatpush1.msra.mxu0 0.0
        %10369 = vmatprep.subr.mxu0 0.0
        %10370 = vmatpush1.msra.mxu0 0.0
        %10371 = vmatprep.subr.mxu0 0.0
        %10372 = vmatpush1.msra.mxu0 0.0
        %10373 = vmatprep.subr.mxu0 0.0
        %10374 = vmatpush1.msra.mxu0 0.0
        %10375 = vmatprep.subr.mxu0 0.0
        %10376 = vmatpush1.msra.mxu0 0.0
        %10377 = vmatprep.subr.mxu0 0.0
        %10378 = vmatpush1.msra.mxu0 0.0
        %10379 = vmatprep.subr.mxu0 0.0
        %10380 = vmatpush1.msra.mxu0 0.0
        %10381 = vmatprep.subr.mxu0 0.0
        %10382 = vmatpush1.msra.mxu0 0.0
        %10383 = vmatprep.subr.mxu0 0.0
        %10384 = vmatpush1.msra.mxu0 0.0
        %10385 = vmatprep.subr.mxu0 0.0
        %10386 = vmatpush1.msra.mxu0 0.0
        %10387 = vmatprep.subr.mxu0 0.0
        %10388 = vmatpush1.msra.mxu0 0.0
        %10389 = vmatprep.subr.mxu0 0.0
        %10390 = vmatpush1.msra.mxu0 0.0
        %10391 = vmatprep.subr.mxu0 0.0
        %10392 = vmatpush1.msra.mxu0 0.0
        %10393 = vmatprep.subr.mxu0 0.0
        %10394 = vmatpush1.msra.mxu0 0.0
        %10395 = vmatprep.subr.mxu0 0.0
        %10396 = vmatpush1.msra.mxu0 0.0
        %10397 = vmatprep.subr.mxu0 0.0
        %10398 = vmatpush1.msra.mxu0 0.0
        %10399 = vmatprep.subr.mxu0 0.0
        %10400 = vmatpush1.msra.mxu0 0.0
        %10401 = vmatprep.subr.mxu0 0.0
        %10402 = vmatpush1.msra.mxu0 0.0
        %10403 = vmatprep.subr.mxu0 0.0
        %10404 = vmatpush1.msra.mxu0 0.0
        %10405 = vmatprep.subr.mxu0 0.0
        %10406 = vmatpush1.msra.mxu0 0.0
        %10407 = vmatprep.subr.mxu0 0.0
        %10408 = vmatpush1.msra.mxu0 0.0
        %10409 = vmatprep.subr.mxu0 0.0
        %10410 = vmatpush1.msra.mxu0 0.0
        %10411 = vmatprep.subr.mxu0 0.0
        %10412 = vmatpush1.msra.mxu0 0.0
        %10413 = vmatprep.subr.mxu0 0.0
        %10414 = vmatpush1.msra.mxu0 0.0
        %10415 = vmatprep.subr.mxu0 0.0
        %10416 = vmatpush1.msra.mxu0 0.0
        %10417 = vmatprep.subr.mxu0 0.0
        %10418 = vmatpush1.msra.mxu0 0.0
        %10419 = vmatprep.subr.mxu0 0.0
        %10420 = vmatpush1.msra.mxu0 0.0
        %10421 = vmatprep.mubr.f32.mxu0 0.0
        %v10422 = vand.u32 %v7172, 4294901760
        %v10423 = vsub.f32 %v7172, %v10422
        %v10424 = vand.u32 %v10423, 4294901760
        %10425 = vmatmul.mubr.f32.gmra.mrb[0].mxu0 %v10424
        %v10426 = vpop.f32.mrb[0].mxu0
        %v10427 = vadd.f32 %v10350, %v10426
        %v10428 = vpop.f32.mrb[0].mxu0
        %10429 = vdwg.mxu0
        %10430 = vmatprep.subr.mxu0 0.0
        %v10431 = vand.u32 %v427, 4294901760
        %v10432 = vsub.f32 %v427, %v10431
        %v10433 = vand.u32 %v10432, 4294901760
        %10434 = vmatpush1.msra.mxu0 %v10433
        %10435 = vmatprep.subr.mxu0 0.0
        %v10436 = vand.u32 %v428, 4294901760
        %v10437 = vsub.f32 %v428, %v10436
        %v10438 = vand.u32 %v10437, 4294901760
        %10439 = vmatpush1.msra.mxu0 %v10438
        %10440 = vmatprep.subr.mxu0 0.0
        %v10441 = vand.u32 %v429, 4294901760
        %v10442 = vsub.f32 %v429, %v10441
        %v10443 = vand.u32 %v10442, 4294901760
        %10444 = vmatpush1.msra.mxu0 %v10443
        %10445 = vmatprep.subr.mxu0 0.0
        %v10446 = vand.u32 %v430, 4294901760
        %v10447 = vsub.f32 %v430, %v10446
        %v10448 = vand.u32 %v10447, 4294901760
        %10449 = vmatpush1.msra.mxu0 %v10448
        %10450 = vmatprep.subr.mxu0 0.0
        %10451 = vmatpush1.msra.mxu0 0.0
        %10452 = vmatprep.subr.mxu0 0.0
        %10453 = vmatpush1.msra.mxu0 0.0
        %10454 = vmatprep.subr.mxu0 0.0
        %10455 = vmatpush1.msra.mxu0 0.0
        %10456 = vmatprep.subr.mxu0 0.0
        %10457 = vmatpush1.msra.mxu0 0.0
        %10458 = vmatprep.subr.mxu0 0.0
        %10459 = vmatpush1.msra.mxu0 0.0
        %10460 = vmatprep.subr.mxu0 0.0
        %10461 = vmatpush1.msra.mxu0 0.0
        %10462 = vmatprep.subr.mxu0 0.0
        %10463 = vmatpush1.msra.mxu0 0.0
        %10464 = vmatprep.subr.mxu0 0.0
        %10465 = vmatpush1.msra.mxu0 0.0
        %10466 = vmatprep.subr.mxu0 0.0
        %10467 = vmatpush1.msra.mxu0 0.0
        %10468 = vmatprep.subr.mxu0 0.0
        %10469 = vmatpush1.msra.mxu0 0.0
        %10470 = vmatprep.subr.mxu0 0.0
        %10471 = vmatpush1.msra.mxu0 0.0
        %10472 = vmatprep.subr.mxu0 0.0
        %10473 = vmatpush1.msra.mxu0 0.0
        %10474 = vmatprep.subr.mxu0 0.0
        %10475 = vmatpush1.msra.mxu0 0.0
        %10476 = vmatprep.subr.mxu0 0.0
        %10477 = vmatpush1.msra.mxu0 0.0
        %10478 = vmatprep.subr.mxu0 0.0
        %10479 = vmatpush1.msra.mxu0 0.0
        %10480 = vmatprep.subr.mxu0 0.0
        %10481 = vmatpush1.msra.mxu0 0.0
        %10482 = vmatprep.subr.mxu0 0.0
        %10483 = vmatpush1.msra.mxu0 0.0
        %10484 = vmatprep.subr.mxu0 0.0
        %10485 = vmatpush1.msra.mxu0 0.0
        %10486 = vmatprep.subr.mxu0 0.0
        %10487 = vmatpush1.msra.mxu0 0.0
        %10488 = vmatprep.subr.mxu0 0.0
        %10489 = vmatpush1.msra.mxu0 0.0
        %10490 = vmatprep.subr.mxu0 0.0
        %10491 = vmatpush1.msra.mxu0 0.0
        %10492 = vmatprep.subr.mxu0 0.0
        %10493 = vmatpush1.msra.mxu0 0.0
        %10494 = vmatprep.subr.mxu0 0.0
        %10495 = vmatpush1.msra.mxu0 0.0
        %10496 = vmatprep.subr.mxu0 0.0
        %10497 = vmatpush1.msra.mxu0 0.0
        %10498 = vmatprep.subr.mxu0 0.0
        %10499 = vmatpush1.msra.mxu0 0.0
        %10500 = vmatprep.subr.mxu0 0.0
        %10501 = vmatpush1.msra.mxu0 0.0
        %10502 = vmatprep.subr.mxu0 0.0
        %10503 = vmatpush1.msra.mxu0 0.0
        %10504 = vmatprep.subr.mxu0 0.0
        %10505 = vmatpush1.msra.mxu0 0.0
        %10506 = vmatprep.mubr.f32.mxu0 0.0
        %v10507 = vand.u32 %v7172, 4294901760
        %10508 = vmatmul.mubr.f32.gmra.mrb[0].mxu0 %v10507
        %v10509 = vpop.f32.mrb[0].mxu0
        %v10510 = vadd.f32 %v10427, %v10509
        %v10511 = vpop.f32.mrb[0].mxu0
        %10512 = vdwg.mxu0
        %10513 = vmatprep.subr.mxu0 0.0
        %v10514 = vand.u32 %v427, 4294901760
        %10515 = vmatpush1.msra.mxu0 %v10514
        %10516 = vmatprep.subr.mxu0 0.0
        %v10517 = vand.u32 %v428, 4294901760
        %10518 = vmatpush1.msra.mxu0 %v10517
        %10519 = vmatprep.subr.mxu0 0.0
        %v10520 = vand.u32 %v429, 4294901760
        %10521 = vmatpush1.msra.mxu0 %v10520
        %10522 = vmatprep.subr.mxu0 0.0
        %v10523 = vand.u32 %v430, 4294901760
        %10524 = vmatpush1.msra.mxu0 %v10523
        %10525 = vmatprep.subr.mxu0 0.0
        %10526 = vmatpush1.msra.mxu0 0.0
        %10527 = vmatprep.subr.mxu0 0.0
        %10528 = vmatpush1.msra.mxu0 0.0
        %10529 = vmatprep.subr.mxu0 0.0
        %10530 = vmatpush1.msra.mxu0 0.0
        %10531 = vmatprep.subr.mxu0 0.0
        %10532 = vmatpush1.msra.mxu0 0.0
        %10533 = vmatprep.subr.mxu0 0.0
        %10534 = vmatpush1.msra.mxu0 0.0
        %10535 = vmatprep.subr.mxu0 0.0
        %10536 = vmatpush1.msra.mxu0 0.0
        %10537 = vmatprep.subr.mxu0 0.0
        %10538 = vmatpush1.msra.mxu0 0.0
        %10539 = vmatprep.subr.mxu0 0.0
        %10540 = vmatpush1.msra.mxu0 0.0
        %10541 = vmatprep.subr.mxu0 0.0
        %10542 = vmatpush1.msra.mxu0 0.0
        %10543 = vmatprep.subr.mxu0 0.0
        %10544 = vmatpush1.msra.mxu0 0.0
        %10545 = vmatprep.subr.mxu0 0.0
        %10546 = vmatpush1.msra.mxu0 0.0
        %10547 = vmatprep.subr.mxu0 0.0
        %10548 = vmatpush1.msra.mxu0 0.0
        %10549 = vmatprep.subr.mxu0 0.0
        %10550 = vmatpush1.msra.mxu0 0.0
        %10551 = vmatprep.subr.mxu0 0.0
        %10552 = vmatpush1.msra.mxu0 0.0
        %10553 = vmatprep.subr.mxu0 0.0
        %10554 = vmatpush1.msra.mxu0 0.0
        %10555 = vmatprep.subr.mxu0 0.0
        %10556 = vmatpush1.msra.mxu0 0.0
        %10557 = vmatprep.subr.mxu0 0.0
        %10558 = vmatpush1.msra.mxu0 0.0
        %10559 = vmatprep.subr.mxu0 0.0
        %10560 = vmatpush1.msra.mxu0 0.0
        %10561 = vmatprep.subr.mxu0 0.0
        %10562 = vmatpush1.msra.mxu0 0.0
        %10563 = vmatprep.subr.mxu0 0.0
        %10564 = vmatpush1.msra.mxu0 0.0
        %10565 = vmatprep.subr.mxu0 0.0
        %10566 = vmatpush1.msra.mxu0 0.0
        %10567 = vmatprep.subr.mxu0 0.0
        %10568 = vmatpush1.msra.mxu0 0.0
        %10569 = vmatprep.subr.mxu0 0.0
        %10570 = vmatpush1.msra.mxu0 0.0
        %10571 = vmatprep.subr.mxu0 0.0
        %10572 = vmatpush1.msra.mxu0 0.0
        %10573 = vmatprep.subr.mxu0 0.0
        %10574 = vmatpush1.msra.mxu0 0.0
        %10575 = vmatprep.subr.mxu0 0.0
        %10576 = vmatpush1.msra.mxu0 0.0
        %10577 = vmatprep.subr.mxu0 0.0
        %10578 = vmatpush1.msra.mxu0 0.0
        %10579 = vmatprep.subr.mxu0 0.0
        %10580 = vmatpush1.msra.mxu0 0.0
        %10581 = vmatprep.mubr.f32.mxu0 0.0
        %v10582 = vand.u32 %v7172, 4294901760
        %10583 = vmatmul.mubr.f32.gmra.mrb[0].mxu0 %v10582
        %v10584 = vpop.f32.mrb[0].mxu0
        %v10585 = vadd.f32 %v10510, %v10584
        %v10586 = vpop.f32.mrb[0].mxu0
        %10587 = vdwg.mxu0
        %v10588 = vmul.f32 %v9617, %v5790
        %v10590 = vsel %vm1371, %v10588, 0
        %10592 = vmatprep.subr.mxu0 0.0
        %v10593 = vand.u32 %v435, 4294901760
        %10594 = vmatpush1.msra.mxu0 %v10593
        %10595 = vmatprep.subr.mxu0 0.0
        %v10596 = vand.u32 %v436, 4294901760
        %10597 = vmatpush1.msra.mxu0 %v10596
        %10598 = vmatprep.subr.mxu0 0.0
        %v10599 = vand.u32 %v437, 4294901760
        %10600 = vmatpush1.msra.mxu0 %v10599
        %10601 = vmatprep.subr.mxu0 0.0
        %v10602 = vand.u32 %v438, 4294901760
        %10603 = vmatpush1.msra.mxu0 %v10602
        %10604 = vmatprep.subr.mxu0 0.0
        %10605 = vmatpush1.msra.mxu0 0.0
        %10606 = vmatprep.subr.mxu0 0.0
        %10607 = vmatpush1.msra.mxu0 0.0
        %10608 = vmatprep.subr.mxu0 0.0
        %10609 = vmatpush1.msra.mxu0 0.0
        %10610 = vmatprep.subr.mxu0 0.0
        %10611 = vmatpush1.msra.mxu0 0.0
        %10612 = vmatprep.subr.mxu0 0.0
        %10613 = vmatpush1.msra.mxu0 0.0
        %10614 = vmatprep.subr.mxu0 0.0
        %10615 = vmatpush1.msra.mxu0 0.0
        %10616 = vmatprep.subr.mxu0 0.0
        %10617 = vmatpush1.msra.mxu0 0.0
        %10618 = vmatprep.subr.mxu0 0.0
        %10619 = vmatpush1.msra.mxu0 0.0
        %10620 = vmatprep.subr.mxu0 0.0
        %10621 = vmatpush1.msra.mxu0 0.0
        %10622 = vmatprep.subr.mxu0 0.0
        %10623 = vmatpush1.msra.mxu0 0.0
        %10624 = vmatprep.subr.mxu0 0.0
        %10625 = vmatpush1.msra.mxu0 0.0
        %10626 = vmatprep.subr.mxu0 0.0
        %10627 = vmatpush1.msra.mxu0 0.0
        %10628 = vmatprep.subr.mxu0 0.0
        %10629 = vmatpush1.msra.mxu0 0.0
        %10630 = vmatprep.subr.mxu0 0.0
        %10631 = vmatpush1.msra.mxu0 0.0
        %10632 = vmatprep.subr.mxu0 0.0
        %10633 = vmatpush1.msra.mxu0 0.0
        %10634 = vmatprep.subr.mxu0 0.0
        %10635 = vmatpush1.msra.mxu0 0.0
        %10636 = vmatprep.subr.mxu0 0.0
        %10637 = vmatpush1.msra.mxu0 0.0
        %10638 = vmatprep.subr.mxu0 0.0
        %10639 = vmatpush1.msra.mxu0 0.0
        %10640 = vmatprep.subr.mxu0 0.0
        %10641 = vmatpush1.msra.mxu0 0.0
        %10642 = vmatprep.subr.mxu0 0.0
        %10643 = vmatpush1.msra.mxu0 0.0
        %10644 = vmatprep.subr.mxu0 0.0
        %10645 = vmatpush1.msra.mxu0 0.0
        %10646 = vmatprep.subr.mxu0 0.0
        %10647 = vmatpush1.msra.mxu0 0.0
        %10648 = vmatprep.subr.mxu0 0.0
        %10649 = vmatpush1.msra.mxu0 0.0
        %10650 = vmatprep.subr.mxu0 0.0
        %10651 = vmatpush1.msra.mxu0 0.0
        %10652 = vmatprep.subr.mxu0 0.0
        %10653 = vmatpush1.msra.mxu0 0.0
        %10654 = vmatprep.subr.mxu0 0.0
        %10655 = vmatpush1.msra.mxu0 0.0
        %10656 = vmatprep.subr.mxu0 0.0
        %10657 = vmatpush1.msra.mxu0 0.0
        %10658 = vmatprep.subr.mxu0 0.0
        %10659 = vmatpush1.msra.mxu0 0.0
        %10660 = vmatprep.mubr.f32.mxu0 0.0
        %v10661 = vand.u32 %v10590, 4294901760
        %v10662 = vsub.f32 %v10590, %v10661
        %v10663 = vand.u32 %v10662, 4294901760
        %v10664 = vsub.f32 %v10662, %v10663
        %v10665 = vand.u32 %v10664, 4294901760
        %10666 = vmatmul.mubr.f32.gmra.mrb[0].mxu0 %v10665
        %v10667 = vpop.f32.mrb[0].mxu0
        %v10668 = vadd.f32 0.0, %v10667
        %v10669 = vpop.f32.mrb[0].mxu0
        %10670 = vdwg.mxu0
        %10671 = vmatprep.subr.mxu0 0.0
        %v10672 = vand.u32 %v435, 4294901760
        %v10673 = vsub.f32 %v435, %v10672
        %v10674 = vand.u32 %v10673, 4294901760
        %v10675 = vsub.f32 %v10673, %v10674
        %v10676 = vand.u32 %v10675, 4294901760
        %10677 = vmatpush1.msra.mxu0 %v10676
        %10678 = vmatprep.subr.mxu0 0.0
        %v10679 = vand.u32 %v436, 4294901760
        %v10680 = vsub.f32 %v436, %v10679
        %v10681 = vand.u32 %v10680, 4294901760
        %v10682 = vsub.f32 %v10680, %v10681
        %v10683 = vand.u32 %v10682, 4294901760
        %10684 = vmatpush1.msra.mxu0 %v10683
        %10685 = vmatprep.subr.mxu0 0.0
        %v10686 = vand.u32 %v437, 4294901760
        %v10687 = vsub.f32 %v437, %v10686
        %v10688 = vand.u32 %v10687, 4294901760
        %v10689 = vsub.f32 %v10687, %v10688
        %v10690 = vand.u32 %v10689, 4294901760
        %10691 = vmatpush1.msra.mxu0 %v10690
        %10692 = vmatprep.subr.mxu0 0.0
        %v10693 = vand.u32 %v438, 4294901760
        %v10694 = vsub.f32 %v438, %v10693
        %v10695 = vand.u32 %v10694, 4294901760
        %v10696 = vsub.f32 %v10694, %v10695
        %v10697 = vand.u32 %v10696, 4294901760
        %10698 = vmatpush1.msra.mxu0 %v10697
        %10699 = vmatprep.subr.mxu0 0.0
        %10700 = vmatpush1.msra.mxu0 0.0
        %10701 = vmatprep.subr.mxu0 0.0
        %10702 = vmatpush1.msra.mxu0 0.0
        %10703 = vmatprep.subr.mxu0 0.0
        %10704 = vmatpush1.msra.mxu0 0.0
        %10705 = vmatprep.subr.mxu0 0.0
        %10706 = vmatpush1.msra.mxu0 0.0
        %10707 = vmatprep.subr.mxu0 0.0
        %10708 = vmatpush1.msra.mxu0 0.0
        %10709 = vmatprep.subr.mxu0 0.0
        %10710 = vmatpush1.msra.mxu0 0.0
        %10711 = vmatprep.subr.mxu0 0.0
        %10712 = vmatpush1.msra.mxu0 0.0
        %10713 = vmatprep.subr.mxu0 0.0
        %10714 = vmatpush1.msra.mxu0 0.0
        %10715 = vmatprep.subr.mxu0 0.0
        %10716 = vmatpush1.msra.mxu0 0.0
        %10717 = vmatprep.subr.mxu0 0.0
        %10718 = vmatpush1.msra.mxu0 0.0
        %10719 = vmatprep.subr.mxu0 0.0
        %10720 = vmatpush1.msra.mxu0 0.0
        %10721 = vmatprep.subr.mxu0 0.0
        %10722 = vmatpush1.msra.mxu0 0.0
        %10723 = vmatprep.subr.mxu0 0.0
        %10724 = vmatpush1.msra.mxu0 0.0
        %10725 = vmatprep.subr.mxu0 0.0
        %10726 = vmatpush1.msra.mxu0 0.0
        %10727 = vmatprep.subr.mxu0 0.0
        %10728 = vmatpush1.msra.mxu0 0.0
        %10729 = vmatprep.subr.mxu0 0.0
        %10730 = vmatpush1.msra.mxu0 0.0
        %10731 = vmatprep.subr.mxu0 0.0
        %10732 = vmatpush1.msra.mxu0 0.0
        %10733 = vmatprep.subr.mxu0 0.0
        %10734 = vmatpush1.msra.mxu0 0.0
        %10735 = vmatprep.subr.mxu0 0.0
        %10736 = vmatpush1.msra.mxu0 0.0
        %10737 = vmatprep.subr.mxu0 0.0
        %10738 = vmatpush1.msra.mxu0 0.0
        %10739 = vmatprep.subr.mxu0 0.0
        %10740 = vmatpush1.msra.mxu0 0.0
        %10741 = vmatprep.subr.mxu0 0.0
        %10742 = vmatpush1.msra.mxu0 0.0
        %10743 = vmatprep.subr.mxu0 0.0
        %10744 = vmatpush1.msra.mxu0 0.0
        %10745 = vmatprep.subr.mxu0 0.0
        %10746 = vmatpush1.msra.mxu0 0.0
        %10747 = vmatprep.subr.mxu0 0.0
        %10748 = vmatpush1.msra.mxu0 0.0
        %10749 = vmatprep.subr.mxu0 0.0
        %10750 = vmatpush1.msra.mxu0 0.0
        %10751 = vmatprep.subr.mxu0 0.0
        %10752 = vmatpush1.msra.mxu0 0.0
        %10753 = vmatprep.subr.mxu0 0.0
        %10754 = vmatpush1.msra.mxu0 0.0
        %10755 = vmatprep.mubr.f32.mxu0 0.0
        %v10756 = vand.u32 %v10590, 4294901760
        %10757 = vmatmul.mubr.f32.gmra.mrb[0].mxu0 %v10756
        %v10758 = vpop.f32.mrb[0].mxu0
        %v10759 = vadd.f32 %v10668, %v10758
        %v10760 = vpop.f32.mrb[0].mxu0
        %10761 = vdwg.mxu0
        %10762 = vmatprep.subr.mxu0 0.0
        %v10763 = vand.u32 %v435, 4294901760
        %v10764 = vsub.f32 %v435, %v10763
        %10765 = vmatpush1.msra.mxu0 %v10764
        %10766 = vmatprep.subr.mxu0 0.0
        %v10767 = vand.u32 %v436, 4294901760
        %v10768 = vsub.f32 %v436, %v10767
        %10769 = vmatpush1.msra.mxu0 %v10768
        %10770 = vmatprep.subr.mxu0 0.0
        %v10771 = vand.u32 %v437, 4294901760
        %v10772 = vsub.f32 %v437, %v10771
        %10773 = vmatpush1.msra.mxu0 %v10772
        %10774 = vmatprep.subr.mxu0 0.0
        %v10775 = vand.u32 %v438, 4294901760
        %v10776 = vsub.f32 %v438, %v10775
        %10777 = vmatpush1.msra.mxu0 %v10776
        %10778 = vmatprep.subr.mxu0 0.0
        %10779 = vmatpush1.msra.mxu0 0.0
        %10780 = vmatprep.subr.mxu0 0.0
        %10781 = vmatpush1.msra.mxu0 0.0
        %10782 = vmatprep.subr.mxu0 0.0
        %10783 = vmatpush1.msra.mxu0 0.0
        %10784 = vmatprep.subr.mxu0 0.0
        %10785 = vmatpush1.msra.mxu0 0.0
        %10786 = vmatprep.subr.mxu0 0.0
        %10787 = vmatpush1.msra.mxu0 0.0
        %10788 = vmatprep.subr.mxu0 0.0
        %10789 = vmatpush1.msra.mxu0 0.0
        %10790 = vmatprep.subr.mxu0 0.0
        %10791 = vmatpush1.msra.mxu0 0.0
        %10792 = vmatprep.subr.mxu0 0.0
        %10793 = vmatpush1.msra.mxu0 0.0
        %10794 = vmatprep.subr.mxu0 0.0
        %10795 = vmatpush1.msra.mxu0 0.0
        %10796 = vmatprep.subr.mxu0 0.0
        %10797 = vmatpush1.msra.mxu0 0.0
        %10798 = vmatprep.subr.mxu0 0.0
        %10799 = vmatpush1.msra.mxu0 0.0
        %10800 = vmatprep.subr.mxu0 0.0
        %10801 = vmatpush1.msra.mxu0 0.0
        %10802 = vmatprep.subr.mxu0 0.0
        %10803 = vmatpush1.msra.mxu0 0.0
        %10804 = vmatprep.subr.mxu0 0.0
        %10805 = vmatpush1.msra.mxu0 0.0
        %10806 = vmatprep.subr.mxu0 0.0
        %10807 = vmatpush1.msra.mxu0 0.0
        %10808 = vmatprep.subr.mxu0 0.0
        %10809 = vmatpush1.msra.mxu0 0.0
        %10810 = vmatprep.subr.mxu0 0.0
        %10811 = vmatpush1.msra.mxu0 0.0
        %10812 = vmatprep.subr.mxu0 0.0
        %10813 = vmatpush1.msra.mxu0 0.0
        %10814 = vmatprep.subr.mxu0 0.0
        %10815 = vmatpush1.msra.mxu0 0.0
        %10816 = vmatprep.subr.mxu0 0.0
        %10817 = vmatpush1.msra.mxu0 0.0
        %10818 = vmatprep.subr.mxu0 0.0
        %10819 = vmatpush1.msra.mxu0 0.0
        %10820 = vmatprep.subr.mxu0 0.0
        %10821 = vmatpush1.msra.mxu0 0.0
        %10822 = vmatprep.subr.mxu0 0.0
        %10823 = vmatpush1.msra.mxu0 0.0
        %10824 = vmatprep.subr.mxu0 0.0
        %10825 = vmatpush1.msra.mxu0 0.0
        %10826 = vmatprep.subr.mxu0 0.0
        %10827 = vmatpush1.msra.mxu0 0.0
        %10828 = vmatprep.subr.mxu0 0.0
        %10829 = vmatpush1.msra.mxu0 0.0
        %10830 = vmatprep.subr.mxu0 0.0
        %10831 = vmatpush1.msra.mxu0 0.0
        %10832 = vmatprep.subr.mxu0 0.0
        %10833 = vmatpush1.msra.mxu0 0.0
        %10834 = vmatprep.mubr.f32.mxu0 0.0
        %v10835 = vand.u32 %v10590, 4294901760
        %v10836 = vsub.f32 %v10590, %v10835
        %10837 = vmatmul.mubr.f32.gmra.mrb[0].mxu0 %v10836
        %v10838 = vpop.f32.mrb[0].mxu0
        %v10839 = vadd.f32 %v10759, %v10838
        %v10840 = vpop.f32.mrb[0].mxu0
        %10841 = vdwg.mxu0
        %10842 = vmatprep.subr.mxu0 0.0
        %v10843 = vand.u32 %v435, 4294901760
        %10844 = vmatpush1.msra.mxu0 %v10843
        %10845 = vmatprep.subr.mxu0 0.0
        %v10846 = vand.u32 %v436, 4294901760
        %10847 = vmatpush1.msra.mxu0 %v10846
        %10848 = vmatprep.subr.mxu0 0.0
        %v10849 = vand.u32 %v437, 4294901760
        %10850 = vmatpush1.msra.mxu0 %v10849
        %10851 = vmatprep.subr.mxu0 0.0
        %v10852 = vand.u32 %v438, 4294901760
        %10853 = vmatpush1.msra.mxu0 %v10852
        %10854 = vmatprep.subr.mxu0 0.0
        %10855 = vmatpush1.msra.mxu0 0.0
        %10856 = vmatprep.subr.mxu0 0.0
        %10857 = vmatpush1.msra.mxu0 0.0
        %10858 = vmatprep.subr.mxu0 0.0
        %10859 = vmatpush1.msra.mxu0 0.0
        %10860 = vmatprep.subr.mxu0 0.0
        %10861 = vmatpush1.msra.mxu0 0.0
        %10862 = vmatprep.subr.mxu0 0.0
        %10863 = vmatpush1.msra.mxu0 0.0
        %10864 = vmatprep.subr.mxu0 0.0
        %10865 = vmatpush1.msra.mxu0 0.0
        %10866 = vmatprep.subr.mxu0 0.0
        %10867 = vmatpush1.msra.mxu0 0.0
        %10868 = vmatprep.subr.mxu0 0.0
        %10869 = vmatpush1.msra.mxu0 0.0
        %10870 = vmatprep.subr.mxu0 0.0
        %10871 = vmatpush1.msra.mxu0 0.0
        %10872 = vmatprep.subr.mxu0 0.0
        %10873 = vmatpush1.msra.mxu0 0.0
        %10874 = vmatprep.subr.mxu0 0.0
        %10875 = vmatpush1.msra.mxu0 0.0
        %10876 = vmatprep.subr.mxu0 0.0
        %10877 = vmatpush1.msra.mxu0 0.0
        %10878 = vmatprep.subr.mxu0 0.0
        %10879 = vmatpush1.msra.mxu0 0.0
        %10880 = vmatprep.subr.mxu0 0.0
        %10881 = vmatpush1.msra.mxu0 0.0
        %10882 = vmatprep.subr.mxu0 0.0
        %10883 = vmatpush1.msra.mxu0 0.0
        %10884 = vmatprep.subr.mxu0 0.0
        %10885 = vmatpush1.msra.mxu0 0.0
        %10886 = vmatprep.subr.mxu0 0.0
        %10887 = vmatpush1.msra.mxu0 0.0
        %10888 = vmatprep.subr.mxu0 0.0
        %10889 = vmatpush1.msra.mxu0 0.0
        %10890 = vmatprep.subr.mxu0 0.0
        %10891 = vmatpush1.msra.mxu0 0.0
        %10892 = vmatprep.subr.mxu0 0.0
        %10893 = vmatpush1.msra.mxu0 0.0
        %10894 = vmatprep.subr.mxu0 0.0
        %10895 = vmatpush1.msra.mxu0 0.0
        %10896 = vmatprep.subr.mxu0 0.0
        %10897 = vmatpush1.msra.mxu0 0.0
        %10898 = vmatprep.subr.mxu0 0.0
        %10899 = vmatpush1.msra.mxu0 0.0
        %10900 = vmatprep.subr.mxu0 0.0
        %10901 = vmatpush1.msra.mxu0 0.0
        %10902 = vmatprep.subr.mxu0 0.0
        %10903 = vmatpush1.msra.mxu0 0.0
        %10904 = vmatprep.subr.mxu0 0.0
        %10905 = vmatpush1.msra.mxu0 0.0
        %10906 = vmatprep.subr.mxu0 0.0
        %10907 = vmatpush1.msra.mxu0 0.0
        %10908 = vmatprep.subr.mxu0 0.0
        %10909 = vmatpush1.msra.mxu0 0.0
        %10910 = vmatprep.mubr.f32.mxu0 0.0
        %v10911 = vand.u32 %v10590, 4294901760
        %v10912 = vsub.f32 %v10590, %v10911
        %v10913 = vand.u32 %v10912, 4294901760
        %10914 = vmatmul.mubr.f32.gmra.mrb[0].mxu0 %v10913
        %v10915 = vpop.f32.mrb[0].mxu0
        %v10916 = vadd.f32 %v10839, %v10915
        %v10917 = vpop.f32.mrb[0].mxu0
        %10918 = vdwg.mxu0
        %10919 = vmatprep.subr.mxu0 0.0
        %v10920 = vand.u32 %v435, 4294901760
        %v10921 = vsub.f32 %v435, %v10920
        %v10922 = vand.u32 %v10921, 4294901760
        %10923 = vmatpush1.msra.mxu0 %v10922
        %10924 = vmatprep.subr.mxu0 0.0
        %v10925 = vand.u32 %v436, 4294901760
        %v10926 = vsub.f32 %v436, %v10925
        %v10927 = vand.u32 %v10926, 4294901760
        %10928 = vmatpush1.msra.mxu0 %v10927
        %10929 = vmatprep.subr.mxu0 0.0
        %v10930 = vand.u32 %v437, 4294901760
        %v10931 = vsub.f32 %v437, %v10930
        %v10932 = vand.u32 %v10931, 4294901760
        %10933 = vmatpush1.msra.mxu0 %v10932
        %10934 = vmatprep.subr.mxu0 0.0
        %v10935 = vand.u32 %v438, 4294901760
        %v10936 = vsub.f32 %v438, %v10935
        %v10937 = vand.u32 %v10936, 4294901760
        %10938 = vmatpush1.msra.mxu0 %v10937
        %10939 = vmatprep.subr.mxu0 0.0
        %10940 = vmatpush1.msra.mxu0 0.0
        %10941 = vmatprep.subr.mxu0 0.0
        %10942 = vmatpush1.msra.mxu0 0.0
        %10943 = vmatprep.subr.mxu0 0.0
        %10944 = vmatpush1.msra.mxu0 0.0
        %10945 = vmatprep.subr.mxu0 0.0
        %10946 = vmatpush1.msra.mxu0 0.0
        %10947 = vmatprep.subr.mxu0 0.0
        %10948 = vmatpush1.msra.mxu0 0.0
        %10949 = vmatprep.subr.mxu0 0.0
        %10950 = vmatpush1.msra.mxu0 0.0
        %10951 = vmatprep.subr.mxu0 0.0
        %10952 = vmatpush1.msra.mxu0 0.0
        %10953 = vmatprep.subr.mxu0 0.0
        %10954 = vmatpush1.msra.mxu0 0.0
        %10955 = vmatprep.subr.mxu0 0.0
        %10956 = vmatpush1.msra.mxu0 0.0
        %10957 = vmatprep.subr.mxu0 0.0
        %10958 = vmatpush1.msra.mxu0 0.0
        %10959 = vmatprep.subr.mxu0 0.0
        %10960 = vmatpush1.msra.mxu0 0.0
        %10961 = vmatprep.subr.mxu0 0.0
        %10962 = vmatpush1.msra.mxu0 0.0
        %10963 = vmatprep.subr.mxu0 0.0
        %10964 = vmatpush1.msra.mxu0 0.0
        %10965 = vmatprep.subr.mxu0 0.0
        %10966 = vmatpush1.msra.mxu0 0.0
        %10967 = vmatprep.subr.mxu0 0.0
        %10968 = vmatpush1.msra.mxu0 0.0
        %10969 = vmatprep.subr.mxu0 0.0
        %10970 = vmatpush1.msra.mxu0 0.0
        %10971 = vmatprep.subr.mxu0 0.0
        %10972 = vmatpush1.msra.mxu0 0.0
        %10973 = vmatprep.subr.mxu0 0.0
        %10974 = vmatpush1.msra.mxu0 0.0
        %10975 = vmatprep.subr.mxu0 0.0
        %10976 = vmatpush1.msra.mxu0 0.0
        %10977 = vmatprep.subr.mxu0 0.0
        %10978 = vmatpush1.msra.mxu0 0.0
        %10979 = vmatprep.subr.mxu0 0.0
        %10980 = vmatpush1.msra.mxu0 0.0
        %10981 = vmatprep.subr.mxu0 0.0
        %10982 = vmatpush1.msra.mxu0 0.0
        %10983 = vmatprep.subr.mxu0 0.0
        %10984 = vmatpush1.msra.mxu0 0.0
        %10985 = vmatprep.subr.mxu0 0.0
        %10986 = vmatpush1.msra.mxu0 0.0
        %10987 = vmatprep.subr.mxu0 0.0
        %10988 = vmatpush1.msra.mxu0 0.0
        %10989 = vmatprep.subr.mxu0 0.0
        %10990 = vmatpush1.msra.mxu0 0.0
        %10991 = vmatprep.subr.mxu0 0.0
        %10992 = vmatpush1.msra.mxu0 0.0
        %10993 = vmatprep.subr.mxu0 0.0
        %10994 = vmatpush1.msra.mxu0 0.0
        %10995 = vmatprep.mubr.f32.mxu0 0.0
        %v10996 = vand.u32 %v10590, 4294901760
        %10997 = vmatmul.mubr.f32.gmra.mrb[0].mxu0 %v10996
        %v10998 = vpop.f32.mrb[0].mxu0
        %v10999 = vadd.f32 %v10916, %v10998
        %v11000 = vpop.f32.mrb[0].mxu0
        %11001 = vdwg.mxu0
        %11002 = vmatprep.subr.mxu0 0.0
        %v11003 = vand.u32 %v435, 4294901760
        %11004 = vmatpush1.msra.mxu0 %v11003
        %11005 = vmatprep.subr.mxu0 0.0
        %v11006 = vand.u32 %v436, 4294901760
        %11007 = vmatpush1.msra.mxu0 %v11006
        %11008 = vmatprep.subr.mxu0 0.0
        %v11009 = vand.u32 %v437, 4294901760
        %11010 = vmatpush1.msra.mxu0 %v11009
        %11011 = vmatprep.subr.mxu0 0.0
        %v11012 = vand.u32 %v438, 4294901760
        %11013 = vmatpush1.msra.mxu0 %v11012
        %11014 = vmatprep.subr.mxu0 0.0
        %11015 = vmatpush1.msra.mxu0 0.0
        %11016 = vmatprep.subr.mxu0 0.0
        %11017 = vmatpush1.msra.mxu0 0.0
        %11018 = vmatprep.subr.mxu0 0.0
        %11019 = vmatpush1.msra.mxu0 0.0
        %11020 = vmatprep.subr.mxu0 0.0
        %11021 = vmatpush1.msra.mxu0 0.0
        %11022 = vmatprep.subr.mxu0 0.0
        %11023 = vmatpush1.msra.mxu0 0.0
        %11024 = vmatprep.subr.mxu0 0.0
        %11025 = vmatpush1.msra.mxu0 0.0
        %11026 = vmatprep.subr.mxu0 0.0
        %11027 = vmatpush1.msra.mxu0 0.0
        %11028 = vmatprep.subr.mxu0 0.0
        %11029 = vmatpush1.msra.mxu0 0.0
        %11030 = vmatprep.subr.mxu0 0.0
        %11031 = vmatpush1.msra.mxu0 0.0
        %11032 = vmatprep.subr.mxu0 0.0
        %11033 = vmatpush1.msra.mxu0 0.0
        %11034 = vmatprep.subr.mxu0 0.0
        %11035 = vmatpush1.msra.mxu0 0.0
        %11036 = vmatprep.subr.mxu0 0.0
        %11037 = vmatpush1.msra.mxu0 0.0
        %11038 = vmatprep.subr.mxu0 0.0
        %11039 = vmatpush1.msra.mxu0 0.0
        %11040 = vmatprep.subr.mxu0 0.0
        %11041 = vmatpush1.msra.mxu0 0.0
        %11042 = vmatprep.subr.mxu0 0.0
        %11043 = vmatpush1.msra.mxu0 0.0
        %11044 = vmatprep.subr.mxu0 0.0
        %11045 = vmatpush1.msra.mxu0 0.0
        %11046 = vmatprep.subr.mxu0 0.0
        %11047 = vmatpush1.msra.mxu0 0.0
        %11048 = vmatprep.subr.mxu0 0.0
        %11049 = vmatpush1.msra.mxu0 0.0
        %11050 = vmatprep.subr.mxu0 0.0
        %11051 = vmatpush1.msra.mxu0 0.0
        %11052 = vmatprep.subr.mxu0 0.0
        %11053 = vmatpush1.msra.mxu0 0.0
        %11054 = vmatprep.subr.mxu0 0.0
        %11055 = vmatpush1.msra.mxu0 0.0
        %11056 = vmatprep.subr.mxu0 0.0
        %11057 = vmatpush1.msra.mxu0 0.0
        %11058 = vmatprep.subr.mxu0 0.0
        %11059 = vmatpush1.msra.mxu0 0.0
        %11060 = vmatprep.subr.mxu0 0.0
        %11061 = vmatpush1.msra.mxu0 0.0
        %11062 = vmatprep.subr.mxu0 0.0
        %11063 = vmatpush1.msra.mxu0 0.0
        %11064 = vmatprep.subr.mxu0 0.0
        %11065 = vmatpush1.msra.mxu0 0.0
        %11066 = vmatprep.subr.mxu0 0.0
        %11067 = vmatpush1.msra.mxu0 0.0
        %11068 = vmatprep.subr.mxu0 0.0
        %11069 = vmatpush1.msra.mxu0 0.0
        %11070 = vmatprep.mubr.f32.mxu0 0.0
        %v11071 = vand.u32 %v10590, 4294901760
        %11072 = vmatmul.mubr.f32.gmra.mrb[0].mxu0 %v11071
        %v11073 = vpop.f32.mrb[0].mxu0
        %v11074 = vadd.f32 %v10999, %v11073
        %v11075 = vpop.f32.mrb[0].mxu0
        %11076 = vdwg.mxu0
        %v11077 = vadd.f32 %v10585, %v11074
        %v11078 = vadd.f32 %v11077, %v5783
        %v11079 = vtanh.pop %v11078
        %v11080 = vsub.f32 1.0, %v8154
        %v11081 = vmul.f32 %v11080, %v5790
        %v11082 = vmul.f32 %v8154, %v11079
        %v11083 = vadd.f32 %v11081, %v11082
        %11084 = vst.msk [vmem:[%s390] sm:$0xff] %vm1371, %v11083
        %s11085 = sand.u32 %s274, 1
        %s11086 = scalar_lea.sflag [#allocation3], %s11085
        %s11087 = sand.u32 %s274, 1
        %s11088 = smul.addr %s11087, 8
        %s11089 = scalar_lea.vmem [#allocation2], %s11088
        // Predicated region
        $region65: #{tpu_custom_call.1} parent=63 // pred_check
          %p11090 = pneg %p284
        $region66: #{tpu_custom_call.1} parent=63 // pred_check_branch
          %11092 = sbr.rel (%p11090) target = $region68
        $region67: #{tpu_custom_call.1} parent=63 // pred_region
          %s11094 = ssub.s32 128, 128
          %11095 = vsyncadd %s11086, %s11094
          %s11096 = smul.addr %s25, 128
          %s11097 = scalar_lea.hbm %s11, %s11096
          %s11099 = sshll.u32 %s11089, 4
          %s11100 = int_to_ptr.vmem [resolvable:$true] %s11099
          %11102 = dma.vmem_to_hbm [thread:$0]  %s11100, 128, %s11097, %s11086
        $region68: #{tpu_custom_call.1} parent=63 // pred_fallthru
          _
      $region64: #{tpu_custom_call.1} parent=5 // pred_fallthru
        _
      %p11103 = scmp.le.s32.totalorder 2, %s20
      // Predicated region
      $region69: #{tpu_custom_call.1} parent=5 // pred_check
        %p11104 = pneg %p11103
      $region70: #{tpu_custom_call.1} parent=5 // pred_check_branch
        %11106 = sbr.rel (%p11104) target = $region72
      $region71: #{tpu_custom_call.1} parent=5 // pred_region
        %s11107 = ssub.s32 %s20, 2
        // Predicated region
        $region73: #{tpu_custom_call.1} parent=71 // pred_check
          %p11108 = pneg %p290
        $region74: #{tpu_custom_call.1} parent=71 // pred_check_branch
          %11110 = sbr.rel (%p11108) target = $region76
        $region75: #{tpu_custom_call.1} parent=71 // pred_region
          %s11111 = sand.u32 %s275, 1
          %s11112 = scalar_lea.sflag [#allocation3], %s11111
          %s11113 = sand.u32 %s275, 1
          %s11114 = smul.addr %s11113, 8
          %s11115 = scalar_lea.vmem [#allocation2], %s11114
          %11116 = dma.done %s11112, 128
        $region76: #{tpu_custom_call.1} parent=71 // pred_fallthru
          _
      $region72: #{tpu_custom_call.1} parent=5 // pred_fallthru
        _
    $region6: #{tpu_custom_call.1} parent=1 // loop_footer
      %s24 = sadd.s32 1, %s20
    $region7: #{tpu_custom_call.1} parent=1 // loop_footer_branch
      %19 = sbr.rel target = $region3
    $region8: #{tpu_custom_call.1} parent=1 // loop_exit
      _
    %11117 = vsyncpa [#allocation3], 1
    %s11118 = scalar_lea.sflag [#allocation3], 1
    %11119 = vsyncpa %s11118, 1

</llo_original>
